<compile_context>
chip_gen: v7x
topology: tpu7x:2x2x1
jax: 0.10.0
libtpu: 0.0.40
codegen_flags: <defaults>
</compile_context>

<pallas_src>
import functools

import jax
import jax.numpy as jnp
from jax import lax
from jax.experimental import pallas as pl
from jax.experimental.pallas import tpu as pltpu


def _round_up(x, m):
    return ((x + m - 1) // m) * m


def _pad2(a, rows, cols):
    return jnp.pad(a, ((0, rows - a.shape[0]), (0, cols - a.shape[1])))


def _vmem_capacity_bytes():
    # Generation-aware VMEM budget (v5e/v6e: 128 MiB, v7x: 64 MiB per core).
    try:
        return int(pltpu.get_tpu_info().vmem_capacity_bytes)
    except Exception:
        return 64 << 20          # conservative fallback (v7x size)


# ----------------------------------------------------------------------------
# One-time parameter preparation: pad / concat / cast to bf16, choose tiles.
# ----------------------------------------------------------------------------
def prepare_params(raw, *, D, P_hint, T_hint):
    cap = _vmem_capacity_bytes()
    H1 = raw["w1"].shape[1]
    H2 = raw["w2"].shape[1]
    E = raw["wimg"].shape[1]
    Hl = raw["wh"].shape[0]
    V = raw["wout"].shape[1]

    H1p = _round_up(H1, 128)
    H2p = _round_up(H2, 128)
    Ep = _round_up(E, 128)
    Hlp = _round_up(Hl, 128)
    HD = 1 + 4 + E                              # obj(1) | box(4) | img(E)
    HP = _round_up(HD, 128)
    budget = int(0.75 * cap)

    # --- kernel A tiling: largest K tile (w1 stream) that fits VMEM ---------
    tn = 128
    resident_a = (2 * (H1p * H2p * 2 + H2p * HP * 2)   # w2 / whead (dbl-buf)
                  + 2 * (H1p + H2p + HP) * 4           # biases
                  + 2 * tn * HP * 4 + tn * H1p * 4)    # out tile + accumulator
    tk_cap = max(128, min(2048, _round_up(D, 128)))
    tk = 128
    for cand in (2048, 1024, 512, 256, 128):
        c = min(cand, tk_cap)
        if resident_a + 2 * (tn * c * 2 + c * H1p * 2) <= budget:
            tk = c
            break
    Dp = _round_up(D, tk)
    # TODO(synk): at full DenseCap scale (H1=H2=4096) on v7x the resident
    # w2/whead must also be tiled over an H2 grid axis (or single-buffered).

    # --- kernel B tiling: vocab tile for the LM output projection -----------
    Pp = _round_up(max(P_hint, 1), 8)
    R = (T_hint + 1) * Pp
    resident_b = (R * Ep * 2 + Ep * 4 * Hlp * 2 + Hlp * 4 * Hlp * 2
                  + 4 * Hlp * 4 + R * 4 * Hlp * 4 + R * Hlp * 4
                  + 2 * Pp * Hlp * 4)
    tv_cap = max(128, _round_up(V, 128))
    tv = 128
    for cand in (1024, 512, 256, 128):
        c = min(cand, tv_cap)
        if resident_b + 2 * (Hlp * c * 2 + c * 4 + R * c * 4) <= budget:
            tv = c
            break
    Vp = _round_up(V, tv)

    def gate_pad(w):   # keep the [i | f | g | o] gate blocks 128-lane aligned
        return jnp.concatenate(
            [_pad2(w[:, g * Hl:(g + 1) * Hl], w.shape[0], Hlp) for g in range(4)],
            axis=1)

    return {
        "w1": _pad2(raw["w1"], Dp, H1p).astype(jnp.bfloat16),
        "b1": _pad2(raw["b1"], 1, H1p),
        "w2": _pad2(raw["w2"], H1p, H2p).astype(jnp.bfloat16),
        "b2": _pad2(raw["b2"], 1, H2p),
        "whead": _pad2(jnp.concatenate(
            [raw["wobj"], raw["wbox"], raw["wimg"]], axis=1), H2p, HP
        ).astype(jnp.bfloat16),
        "bhead": _pad2(jnp.concatenate(
            [raw["bobj"], raw["bbox"], raw["bimg"]], axis=1), 1, HP),
        "embed": _pad2(raw["embed"], V, Ep).astype(jnp.bfloat16),
        "wx": _pad2(gate_pad(raw["wx"]), Ep, 4 * Hlp).astype(jnp.bfloat16),
        "wh": _pad2(gate_pad(raw["wh"]), Hlp, 4 * Hlp).astype(jnp.bfloat16),
        # TODO(synk): a real torch LSTM has b_ih + b_hh; fold their SUM here.
        "blstm": gate_pad(raw["blstm"]),
        "wout": _pad2(raw["wout"], Hlp, Vp).astype(jnp.bfloat16),
        "bout": _pad2(raw["bout"], 1, Vp),
        "meta": dict(D=D, Dp=Dp, tk=tk, H1p=H1p, H2p=H2p, HD=HD, HP=HP,
                     E=E, Ep=Ep, Hl=Hl, Hlp=Hlp, V=V, Vp=Vp, tv=tv,
                     vmem_cap=cap),
    }


# ----------------------------------------------------------------------------
# Kernel A: recog_base (Linear->ReLU->Linear->ReLU, Dropout = identity in eval)
# fused with ONE lane-dense head matmul producing
#   [objectness(1) | box_trans(4) | lm_image_vec(E) | zero-pad] per ROI row.
# Grid: (row tiles, K tiles over D) with an f32 h1 accumulator in VMEM.
# ----------------------------------------------------------------------------
def _fused_backbone_head_kernel(x_ref, w1_ref, b1_ref, w2_ref, b2_ref,
                                wh_ref, bh_ref, head_ref, h1_acc):
    k = pl.program_id(1)

    @pl.when(k == 0)
    def _():
        h1_acc[...] = jnp.zeros_like(h1_acc)

    # Stream K tiles of x / w1 and accumulate the first matmul in f32.
    h1_acc[...] += jnp.dot(x_ref[...], w1_ref[...],
                           preferred_element_type=jnp.float32)

    @pl.when(k == pl.num_programs(1) - 1)
    def _():
        h1 = jnp.maximum(h1_acc[...] + b1_ref[...], 0.0)            # ReLU
        codes = jnp.maximum(
            jnp.dot(h1.astype(w2_ref.dtype), w2_ref[...],
                    preferred_element_type=jnp.float32) + b2_ref[...], 0.0)
        head_ref[...] = (jnp.dot(codes.astype(wh_ref.dtype), wh_ref[...],
                                 preferred_element_type=jnp.float32)
                         + bh_ref[...])


def recog_base_and_heads(flat_feats, p):
    """Returns (objectness (N,1), box_trans (N,4), img_vec (N,E)) in f32."""
    m = p["meta"]
    N = flat_feats.shape[0]
    tk, Dp, H1p, H2p, HP, E = m["tk"], m["Dp"], m["H1p"], m["H2p"], m["HP"], m["E"]

    tn = min(128, _round_up(N, 8))
    Np = _round_up(N, tn)

    # Activations are the only per-call pad/cast left (weights are pre-baked).
    xp = _pad2(flat_feats, Np, Dp).astype(jnp.bfloat16)

    est = (2 * (tn * tk * 2 + tk * H1p * 2)              # streamed x / w1
           + 2 * (H1p * H2p * 2 + H2p * HP * 2)          # resident w2 / whead
           + 2 * (H1p + H2p + HP) * 4                    # biases
           + 2 * tn * HP * 4 + tn * H1p * 4)             # out tile + accumulator
    vmem_limit = int(min(max(est + (4 << 20), 32 << 20), m["vmem_cap"]))

    head = pl.pallas_call(
        _fused_backbone_head_kernel,
        out_shape=jax.ShapeDtypeStruct((Np, HP), jnp.float32),
        grid=(Np // tn, Dp // tk),
        in_specs=[
            pl.BlockSpec((tn, tk), lambda i, k: (i, k)),
            pl.BlockSpec((tk, H1p), lambda i, k: (k, 0)),
            pl.BlockSpec((1, H1p), lambda i, k: (0, 0)),
            pl.BlockSpec((H1p, H2p), lambda i, k: (0, 0)),
            pl.BlockSpec((1, H2p), lambda i, k: (0, 0)),
            pl.BlockSpec((H2p, HP), lambda i, k: (0, 0)),
            pl.BlockSpec((1, HP), lambda i, k: (0, 0)),
        ],
        out_specs=pl.BlockSpec((tn, HP), lambda i, k: (i, 0)),
        scratch_shapes=[pltpu.VMEM((tn, H1p), jnp.float32)],
        compiler_params=pltpu.CompilerParams(
            # Weight-stream bound: row-parallel megacore on v7x would make each
            # core re-stream the full w1 (2x HBM) — keep both axes sequential.
            # TODO(synk): megacore-split the H1 column axis of w1 instead.
            dimension_semantics=("arbitrary", "arbitrary"),
            vmem_limit_bytes=vmem_limit),
    )(xp, p["w1"], p["b1"], p["w2"], p["b2"], p["whead"], p["bhead"])

    head = head[:N]
    return head[:, 0:1], head[:, 1:5], head[:, 5:5 + E]


# ----------------------------------------------------------------------------
# Kernel B: language-model LSTM, vocab-tiled output projection.
#   grid step j == 0: batched input projection + fully-unrolled recurrence,
#                     hidden states kept in persistent VMEM scratch.
#   every grid step : lane-dense (T1*Pp, Hl) x (Hl, tv) vocab-tile matmul.
# ----------------------------------------------------------------------------
def _lstm_lm_kernel(x_ref, wx_ref, wh_ref, b_ref, wout_ref, bout_ref,
                    out_ref, xw_scr, hall_scr, h_scr, c_scr, *, T1, P):
    Hl = h_scr.shape[1]

    @pl.when(pl.program_id(0) == 0)
    def _():
        # Hoisted input projection for all T+1 steps: one big MXU matmul.
        xw_scr[...] = (jnp.dot(x_ref[...], wx_ref[...],
                               preferred_element_type=jnp.float32) + b_ref[...])
        h_scr[...] = jnp.zeros_like(h_scr)
        c_scr[...] = jnp.zeros_like(c_scr)

        def step(t, carry):
            row0 = t * P
            gates = xw_scr[pl.ds(row0, P), :] + jnp.dot(
                h_scr[...].astype(wh_ref.dtype), wh_ref[...],
                preferred_element_type=jnp.float32)                 # (P, 4*Hl)
            i = jax.nn.sigmoid(gates[:, 0 * Hl:1 * Hl])
            f = jax.nn.sigmoid(gates[:, 1 * Hl:2 * Hl])
            g = jnp.tanh(gates[:, 2 * Hl:3 * Hl])
            o = jax.nn.sigmoid(gates[:, 3 * Hl:4 * Hl])
            c = f * c_scr[...] + i * g
            h = o * jnp.tanh(c)
            c_scr[...] = c
            h_scr[...] = h
            hall_scr[pl.ds(row0, P), :] = h
            return carry

        lax.fori_loop(0, T1, step, 0, unroll=True)

    # Vocab tile: lane-dense matmul against the persistent hidden states.
    out_ref[...] = (jnp.dot(hall_scr[...].astype(wout_ref.dtype), wout_ref[...],
                            preferred_element_type=jnp.float32) + bout_ref[...])


def lstm_language_model(img_vec, gt_labels, p):
    m = p["meta"]
    P, T = gt_labels.shape
    T1 = T + 1
    Ep, Hlp, V, Vp, tv = m["Ep"], m["Hlp"], m["V"], m["Vp"], m["tv"]
    Pp = _round_up(P, 8)
    R = T1 * Pp

    # Time-major sequence [img_vec ; embed(gt_labels)], padded on ROI axis.
    # TODO(synk): DenseCap's LanguageModel also injects explicit START/END
    # tokens and masks padding; only the core encode->LSTM->logits path is kept.
    word_tm = jnp.take(p["embed"], gt_labels.T, axis=0)             # (T, P, Ep)
    img_p = _pad2(img_vec, P, Ep).astype(jnp.bfloat16)              # (P, Ep)
    x_tm = jnp.concatenate([img_p[None], word_tm], axis=0)          # (T1, P, Ep)
    x_tm = jnp.pad(x_tm, ((0, 0), (0, Pp - P), (0, 0)))
    x2d = x_tm.reshape(R, Ep)

    est = (R * Ep * 2 + Ep * 4 * Hlp * 2 + Hlp * 4 * Hlp * 2 + 4 * Hlp * 4
           + 2 * (Hlp * tv * 2 + tv * 4 + R * tv * 4)               # streamed
           + R * 4 * Hlp * 4 + R * Hlp * 4 + 2 * Pp * Hlp * 4)      # scratch
    vmem_limit = int(min(max(est + (4 << 20), 32 << 20), m["vmem_cap"]))

    out = pl.pallas_call(
        functools.partial(_lstm_lm_kernel, T1=T1, P=Pp),
        out_shape=jax.ShapeDtypeStruct((R, Vp), jnp.float32),
        grid=(Vp // tv,),
        in_specs=[
            pl.BlockSpec((R, Ep), lambda j: (0, 0)),
            pl.BlockSpec((Ep, 4 * Hlp), lambda j: (0, 0)),
            pl.BlockSpec((Hlp, 4 * Hlp), lambda j: (0, 0)),
            pl.BlockSpec((1, 4 * Hlp), lambda j: (0, 0)),
            pl.BlockSpec((Hlp, tv), lambda j: (0, j)),
            pl.BlockSpec((1, tv), lambda j: (0, j)),
        ],
        out_specs=pl.BlockSpec((R, tv), lambda j: (0, j)),
        scratch_shapes=[pltpu.VMEM((R, 4 * Hlp), jnp.float32),
                        pltpu.VMEM((R, Hlp), jnp.float32),
                        pltpu.VMEM((Pp, Hlp), jnp.float32),
                        pltpu.VMEM((Pp, Hlp), jnp.float32)],
        compiler_params=pltpu.CompilerParams(
            dimension_semantics=("arbitrary",),      # recurrence carried in scratch
            vmem_limit_bytes=vmem_limit),
    )(x2d, p["wx"], p["wh"], p["blstm"], p["wout"], p["bout"])

    # TODO(synk): at production sizes consumers should accept this time-major
    # layout directly; the transpose below is an XLA copy (tiny at demo scale).
    out = out[:, :V].reshape(T1, Pp, V)[:, :P]
    return out.transpose(1, 0, 2)                                   # (P, T1, V)


# ----------------------------------------------------------------------------
# RecogNet forward: Pallas kernels for the heavy matmul paths, thin JAX glue
# for slicing and the (P,4) elementwise box transform.
# ----------------------------------------------------------------------------
def recognet_forward(params, roi_feats, roi_boxes, gt_boxes, gt_labels):
    N = roi_feats.shape[0]
    P = gt_labels.shape[0]                       # number of positives (static)

    flat_roi_feats = roi_feats.reshape(N, -1)    # torch.flatten(roi_feats, 1)

    objectness_scores, box_trans_all, img_vec_all = recog_base_and_heads(
        flat_roi_feats, params)

    # PosSlicer: take the first P rows (P = number of ground-truth positives).
    # TODO(synk): DenseCap's PosSlicer selects by positive-sample index list.
    pos_roi_boxes = roi_boxes[:P]
    final_box_trans = box_trans_all[:P]
    img_vec = img_vec_all[:P]

    # ApplyBoxTransform — tiny (P,4) elementwise math, fused by XLA.
    xc, yc, w, h = (pos_roi_boxes[:, i] for i in range(4))
    tx, ty, tw, th = (final_box_trans[:, i] for i in range(4))
    final_boxes = jnp.stack(
        [xc + tx * w, yc + ty * h, w * jnp.exp(tw), h * jnp.exp(th)], axis=1)

    lm_output = lstm_language_model(img_vec, gt_labels, params)      # (P,T+1,V)

    return [objectness_scores, pos_roi_boxes, final_box_trans, final_boxes,
            lm_output, gt_boxes, gt_labels]


# ----------------------------------------------------------------------------
# Deterministic parameter construction (synthetic; no checkpoint load).
# ----------------------------------------------------------------------------
def make_params(key, D, H1, H2, E, Hl, V):
    ks = jax.random.split(key, 9)
    s = 0.05
    return {
        "w1":    s * jax.random.normal(ks[0], (D, H1), jnp.float32),
        "b1":    jnp.zeros((1, H1), jnp.float32),
        "w2":    s * jax.random.normal(ks[1], (H1, H2), jnp.float32),
        "b2":    jnp.zeros((1, H2), jnp.float32),
        "wobj":  s * jax.random.normal(ks[2], (H2, 1), jnp.float32),
        "bobj":  jnp.zeros((1, 1), jnp.float32),
        "wbox":  s * jax.random.normal(ks[3], (H2, 4), jnp.float32),
        "bbox":  jnp.zeros((1, 4), jnp.float32),
        "wimg":  s * jax.random.normal(ks[4], (H2, E), jnp.float32),
        "bimg":  jnp.zeros((1, E), jnp.float32),
        "embed": s * jax.random.normal(ks[5], (V, E), jnp.float32),
        "wx":    s * jax.random.normal(ks[6], (E, 4 * Hl), jnp.float32),
        "wh":    s * jax.random.normal(ks[7], (Hl, 4 * Hl), jnp.float32),
        "blstm": jnp.zeros((1, 4 * Hl), jnp.float32),
        "wout":  s * jax.random.normal(ks[8], (Hl, V), jnp.float32),
        "bout":  jnp.zeros((1, V), jnp.float32),
    }


if __name__ == "__main__":
    # Small, MXU-aligned shapes consistent with the DenseCap forward pass.
    N, C, HS, WS = 16, 64, 8, 8        # 16 ROIs, NCHW features -> D = 4096
    D = C * HS * WS                    # -> two K tiles at tk=2048
    H1 = H2 = 256                      # recog_base hidden dims (4096 in DenseCap)
    P, T = 4, 6                        # positives, caption length
    V, E, Hl = 2048, 128, 128          # vocab (-> two vocab tiles), embed, LSTM hidden

    key = jax.random.PRNGKey(0)
    kf, kb, kg, kl, kp = jax.random.split(key, 5)

    roi_feats = jax.random.normal(kf, (N, C, HS, WS), jnp.float32)        # NCHW
    roi_boxes = jnp.abs(jax.random.normal(kb, (N, 4), jnp.float32)) * 8.0 + 1.0
    gt_boxes  = jnp.abs(jax.random.normal(kg, (P, 4), jnp.float32)) * 8.0 + 1.0
    gt_labels = jax.random.randint(kl, (P, T), 1, V, jnp.int32)

    raw_params = make_params(kp, D, H1, H2, E, Hl, V)
    params = prepare_params(raw_params, D=D, P_hint=P, T_hint=T)   # one-time bf16 prep

    fwd = jax.jit(functools.partial(recognet_forward, params))
    outputs = jax.block_until_ready(fwd(roi_feats, roi_boxes, gt_boxes, gt_labels))

    (objectness_scores, pos_roi_boxes, final_box_trans,
     final_boxes, lm_output, gt_boxes_o, gt_labels_o) = outputs

    assert objectness_scores.shape == (N, 1)
    assert pos_roi_boxes.shape == (P, 4)
    assert final_box_trans.shape == (P, 4)
    assert final_boxes.shape == (P, 4)
    assert lm_output.shape == (P, T + 1, V)
    assert gt_boxes_o.shape == (P, 4)
    assert gt_labels_o.shape == (P, T)
    assert all(bool(jnp.all(jnp.isfinite(o))) for o in
               [objectness_scores, final_box_trans, final_boxes, lm_output])

    print("KERNEL_OK")
</pallas_src>

<mosaic_0001>
module attributes {stable_mosaic.version = 11 : i64} {
  func.func @_fused_backbone_head_kernel(%arg0: i32, %arg1: i32, %arg2: memref<16x2048xbf16, #tpu.memory_space<vmem>>, %arg3: memref<2048x256xbf16, #tpu.memory_space<vmem>>, %arg4: memref<1x256xf32, #tpu.memory_space<vmem>>, %arg5: memref<256x256xbf16, #tpu.memory_space<vmem>>, %arg6: memref<1x256xf32, #tpu.memory_space<vmem>>, %arg7: memref<256x256xbf16, #tpu.memory_space<vmem>>, %arg8: memref<1x256xf32, #tpu.memory_space<vmem>>, %arg9: memref<16x256xf32, #tpu.memory_space<vmem>>, %arg10: memref<16x256xf32, #tpu.memory_space<vmem>>) attributes {dimension_semantics = [#tpu.dimension_semantics<arbitrary>, #tpu.dimension_semantics<arbitrary>], iteration_bounds = array<i64: 1, 2>, scalar_prefetch = 0 : i64, scratch_operands = 1 : i64, tpu.core_type = #tpu.core_type<tc>, window_params = [{transform_indices = @transform_0, window_bounds = array<i64: 16, 2048>}, {transform_indices = @transform_1, window_bounds = array<i64: 2048, 256>}, {pipeline_mode = #tpu.pipeline_mode<synchronous>, transform_indices = @transform_2, window_bounds = array<i64: 1, 256>}, {pipeline_mode = #tpu.pipeline_mode<synchronous>, transform_indices = @transform_3, window_bounds = array<i64: 256, 256>}, {pipeline_mode = #tpu.pipeline_mode<synchronous>, transform_indices = @transform_4, window_bounds = array<i64: 1, 256>}, {pipeline_mode = #tpu.pipeline_mode<synchronous>, transform_indices = @transform_5, window_bounds = array<i64: 256, 256>}, {pipeline_mode = #tpu.pipeline_mode<synchronous>, transform_indices = @transform_6, window_bounds = array<i64: 1, 256>}, {transform_indices = @transform_7, window_bounds = array<i64: 16, 256>}]} {
    %c0_i32 = arith.constant 0 : i32
    %0 = arith.cmpi eq, %arg1, %c0_i32 : i32
    %1 = arith.extui %0 : i1 to i32
    %c0_i32_0 = arith.constant 0 : i32
    %2 = arith.cmpi ne, %1, %c0_i32_0 : i32
    scf.if %2 {
      %cst_9 = arith.constant 0.000000e+00 : f32
      %12 = vector.broadcast %cst_9 : f32 to vector<16x256xf32>
      %c0_10 = arith.constant 0 : index
      %c0_11 = arith.constant 0 : index
      %13 = vector.load %arg10[%c0_10, %c0_11] : memref<16x256xf32, #tpu.memory_space<vmem>>, vector<16x256xf32>
      tpu.vector_store %arg10[%c0_10, %c0_11], %12 {strides = array<i32>} : memref<16x256xf32, #tpu.memory_space<vmem>>, vector<16x256xf32>,
    } else {
    }
    %c0 = arith.constant 0 : index
    %c0_1 = arith.constant 0 : index
    %3 = vector.load %arg10[%c0, %c0_1] : memref<16x256xf32, #tpu.memory_space<vmem>>, vector<16x256xf32>
    %c0_2 = arith.constant 0 : index
    %c0_3 = arith.constant 0 : index
    %4 = vector.load %arg2[%c0_2, %c0_3] : memref<16x2048xbf16, #tpu.memory_space<vmem>>, vector<16x2048xbf16>
    %c0_4 = arith.constant 0 : index
    %c0_5 = arith.constant 0 : index
    %5 = vector.load %arg3[%c0_4, %c0_5] : memref<2048x256xbf16, #tpu.memory_space<vmem>>, vector<2048x256xbf16>
    %cst = arith.constant dense<0.000000e+00> : vector<16x256xf32>
    %6 = tpu.matmul %4, %5, %cst {dimension_numbers = #tpu.dot_dimension_numbers<[1], [0], [0], [1], [0, 0, 1, 1], [], []>} : vector<16x2048xbf16>, vector<2048x256xbf16>, vector<16x256xf32> -> vector<16x256xf32>
    %7 = arith.addf %3, %6 : vector<16x256xf32>
    %c0_6 = arith.constant 0 : index
    %c0_7 = arith.constant 0 : index
    %8 = vector.load %arg10[%c0_6, %c0_7] : memref<16x256xf32, #tpu.memory_space<vmem>>, vector<16x256xf32>
    tpu.vector_store %arg10[%c0_6, %c0_7], %7 {strides = array<i32>} : memref<16x256xf32, #tpu.memory_space<vmem>>, vector<16x256xf32>,
    %c1_i32 = arith.constant 1 : i32
    %9 = arith.cmpi eq, %arg1, %c1_i32 : i32
    %10 = arith.extui %9 : i1 to i32
    %c0_i32_8 = arith.constant 0 : i32
    %11 = arith.cmpi ne, %10, %c0_i32_8 : i32
    scf.if %11 {
      %c0_9 = arith.constant 0 : index
      %c0_10 = arith.constant 0 : index
      %12 = vector.load %arg10[%c0_9, %c0_10] : memref<16x256xf32, #tpu.memory_space<vmem>>, vector<16x256xf32>
      %c0_11 = arith.constant 0 : index
      %c0_12 = arith.constant 0 : index
      %13 = vector.load %arg4[%c0_11, %c0_12] : memref<1x256xf32, #tpu.memory_space<vmem>>, vector<1x256xf32>
      %14 = vector.broadcast %13 : vector<1x256xf32> to vector<16x256xf32>
      %15 = arith.addf %12, %14 : vector<16x256xf32>
      %cst_13 = arith.constant 0.000000e+00 : f32
      %16 = vector.broadcast %cst_13 : f32 to vector<16x256xf32>
      %17 = arith.maximumf %15, %16 : vector<16x256xf32>
      %18 = arith.truncf %17 : vector<16x256xf32> to vector<16x256xbf16>
      %c0_14 = arith.constant 0 : index
      %c0_15 = arith.constant 0 : index
      %19 = vector.load %arg5[%c0_14, %c0_15] : memref<256x256xbf16, #tpu.memory_space<vmem>>, vector<256x256xbf16>
      %cst_16 = arith.constant dense<0.000000e+00> : vector<16x256xf32>
      %20 = tpu.matmul %18, %19, %cst_16 {dimension_numbers = #tpu.dot_dimension_numbers<[1], [0], [0], [1], [0, 0, 1, 1], [], []>} : vector<16x256xbf16>, vector<256x256xbf16>, vector<16x256xf32> -> vector<16x256xf32>
      %c0_17 = arith.constant 0 : index
      %c0_18 = arith.constant 0 : index
      %21 = vector.load %arg6[%c0_17, %c0_18] : memref<1x256xf32, #tpu.memory_space<vmem>>, vector<1x256xf32>
      %22 = vector.broadcast %21 : vector<1x256xf32> to vector<16x256xf32>
      %23 = arith.addf %20, %22 : vector<16x256xf32>
      %cst_19 = arith.constant 0.000000e+00 : f32
      %24 = vector.broadcast %cst_19 : f32 to vector<16x256xf32>
      %25 = arith.maximumf %23, %24 : vector<16x256xf32>
      %26 = arith.truncf %25 : vector<16x256xf32> to vector<16x256xbf16>
      %c0_20 = arith.constant 0 : index
      %c0_21 = arith.constant 0 : index
      %27 = vector.load %arg7[%c0_20, %c0_21] : memref<256x256xbf16, #tpu.memory_space<vmem>>, vector<256x256xbf16>
      %cst_22 = arith.constant dense<0.000000e+00> : vector<16x256xf32>
      %28 = tpu.matmul %26, %27, %cst_22 {dimension_numbers = #tpu.dot_dimension_numbers<[1], [0], [0], [1], [0, 0, 1, 1], [], []>} : vector<16x256xbf16>, vector<256x256xbf16>, vector<16x256xf32> -> vector<16x256xf32>
      %c0_23 = arith.constant 0 : index
      %c0_24 = arith.constant 0 : index
      %29 = vector.load %arg8[%c0_23, %c0_24] : memref<1x256xf32, #tpu.memory_space<vmem>>, vector<1x256xf32>
      %30 = vector.broadcast %29 : vector<1x256xf32> to vector<16x256xf32>
      %31 = arith.addf %28, %30 : vector<16x256xf32>
      %c0_25 = arith.constant 0 : index
      %c0_26 = arith.constant 0 : index
      %32 = vector.load %arg9[%c0_25, %c0_26] : memref<16x256xf32, #tpu.memory_space<vmem>>, vector<16x256xf32>
      tpu.vector_store %arg9[%c0_25, %c0_26], %31 {strides = array<i32>} : memref<16x256xf32, #tpu.memory_space<vmem>>, vector<16x256xf32>,
    } else {
    }
    return
  }
  func.func @transform_0(%arg0: i32, %arg1: i32) -> (i32, i32) {
    %c0_i32 = arith.constant 0 : i32
    return %arg0, %arg1 : i32, i32
  }
  func.func @transform_1(%arg0: i32, %arg1: i32) -> (i32, i32) {
    %c0_i32 = arith.constant 0 : i32
    %c0_i32_0 = arith.constant 0 : i32
    return %arg1, %c0_i32 : i32, i32
  }
  func.func @transform_2(%arg0: i32, %arg1: i32) -> (i32, i32) {
    %c0_i32 = arith.constant 0 : i32
    %c0_i32_0 = arith.constant 0 : i32
    %c0_i32_1 = arith.constant 0 : i32
    return %c0_i32, %c0_i32_0 : i32, i32
  }
  func.func @transform_3(%arg0: i32, %arg1: i32) -> (i32, i32) {
    %c0_i32 = arith.constant 0 : i32
    %c0_i32_0 = arith.constant 0 : i32
    %c0_i32_1 = arith.constant 0 : i32
    return %c0_i32, %c0_i32_0 : i32, i32
  }
  func.func @transform_4(%arg0: i32, %arg1: i32) -> (i32, i32) {
    %c0_i32 = arith.constant 0 : i32
    %c0_i32_0 = arith.constant 0 : i32
    %c0_i32_1 = arith.constant 0 : i32
    return %c0_i32, %c0_i32_0 : i32, i32
  }
  func.func @transform_5(%arg0: i32, %arg1: i32) -> (i32, i32) {
    %c0_i32 = arith.constant 0 : i32
    %c0_i32_0 = arith.constant 0 : i32
    %c0_i32_1 = arith.constant 0 : i32
    return %c0_i32, %c0_i32_0 : i32, i32
  }
  func.func @transform_6(%arg0: i32, %arg1: i32) -> (i32, i32) {
    %c0_i32 = arith.constant 0 : i32
    %c0_i32_0 = arith.constant 0 : i32
    %c0_i32_1 = arith.constant 0 : i32
    return %c0_i32, %c0_i32_0 : i32, i32
  }
  func.func @transform_7(%arg0: i32, %arg1: i32) -> (i32, i32) {
    %c0_i32 = arith.constant 0 : i32
    %c0_i32_0 = arith.constant 0 : i32
    return %arg0, %c0_i32 : i32, i32
  }
}

module attributes {stable_mosaic.version = 11 : i64} {
  func.func @_lstm_lm_kernel(%arg0: i32, %arg1: memref<56x128xbf16, #tpu.memory_space<vmem>>, %arg2: memref<128x512xbf16, #tpu.memory_space<vmem>>, %arg3: memref<128x512xbf16, #tpu.memory_space<vmem>>, %arg4: memref<1x512xf32, #tpu.memory_space<vmem>>, %arg5: memref<128x1024xbf16, #tpu.memory_space<vmem>>, %arg6: memref<1x1024xf32, #tpu.memory_space<vmem>>, %arg7: memref<56x1024xf32, #tpu.memory_space<vmem>>, %arg8: memref<56x512xf32, #tpu.memory_space<vmem>>, %arg9: memref<56x128xf32, #tpu.memory_space<vmem>>, %arg10: memref<8x128xf32, #tpu.memory_space<vmem>>, %arg11: memref<8x128xf32, #tpu.memory_space<vmem>>) attributes {dimension_semantics = [#tpu.dimension_semantics<arbitrary>], iteration_bounds = array<i64: 2>, scalar_prefetch = 0 : i64, scratch_operands = 4 : i64, tpu.core_type = #tpu.core_type<tc>, window_params = [{pipeline_mode = #tpu.pipeline_mode<synchronous>, transform_indices = @transform_0, window_bounds = array<i64: 56, 128>}, {pipeline_mode = #tpu.pipeline_mode<synchronous>, transform_indices = @transform_1, window_bounds = array<i64: 128, 512>}, {pipeline_mode = #tpu.pipeline_mode<synchronous>, transform_indices = @transform_2, window_bounds = array<i64: 128, 512>}, {pipeline_mode = #tpu.pipeline_mode<synchronous>, transform_indices = @transform_3, window_bounds = array<i64: 1, 512>}, {transform_indices = @transform_4, window_bounds = array<i64: 128, 1024>}, {transform_indices = @transform_5, window_bounds = array<i64: 1, 1024>}, {transform_indices = @transform_6, window_bounds = array<i64: 56, 1024>}]} {
    %c0_i32 = arith.constant 0 : i32
    %0 = arith.cmpi eq, %arg0, %c0_i32 : i32
    %1 = arith.extui %0 : i1 to i32
    %c0_i32_0 = arith.constant 0 : i32
    %2 = arith.cmpi ne, %1, %c0_i32_0 : i32
    scf.if %2 {
      %c0_8 = arith.constant 0 : index
      %c0_9 = arith.constant 0 : index
      %11 = vector.load %arg1[%c0_8, %c0_9] : memref<56x128xbf16, #tpu.memory_space<vmem>>, vector<56x128xbf16>
      %c0_10 = arith.constant 0 : index
      %c0_11 = arith.constant 0 : index
      %12 = vector.load %arg2[%c0_10, %c0_11] : memref<128x512xbf16, #tpu.memory_space<vmem>>, vector<128x512xbf16>
      %cst_12 = arith.constant dense<0.000000e+00> : vector<56x512xf32>
      %13 = tpu.matmul %11, %12, %cst_12 {dimension_numbers = #tpu.dot_dimension_numbers<[1], [0], [0], [1], [0, 0, 1, 1], [], []>} : vector<56x128xbf16>, vector<128x512xbf16>, vector<56x512xf32> -> vector<56x512xf32>
      %c0_13 = arith.constant 0 : index
      %c0_14 = arith.constant 0 : index
      %14 = vector.load %arg4[%c0_13, %c0_14] : memref<1x512xf32, #tpu.memory_space<vmem>>, vector<1x512xf32>
      %15 = vector.broadcast %14 : vector<1x512xf32> to vector<56x512xf32>
      %16 = arith.addf %13, %15 : vector<56x512xf32>
      %c0_15 = arith.constant 0 : index
      %c0_16 = arith.constant 0 : index
      %17 = vector.load %arg8[%c0_15, %c0_16] : memref<56x512xf32, #tpu.memory_space<vmem>>, vector<56x512xf32>
      tpu.vector_store %arg8[%c0_15, %c0_16], %16 {strides = array<i32>} : memref<56x512xf32, #tpu.memory_space<vmem>>, vector<56x512xf32>,
      %cst_17 = arith.constant 0.000000e+00 : f32
      %18 = vector.broadcast %cst_17 : f32 to vector<8x128xf32>
      %c0_18 = arith.constant 0 : index
      %c0_19 = arith.constant 0 : index
      %19 = vector.load %arg10[%c0_18, %c0_19] : memref<8x128xf32, #tpu.memory_space<vmem>>, vector<8x128xf32>
      tpu.vector_store %arg10[%c0_18, %c0_19], %18 {strides = array<i32>} : memref<8x128xf32, #tpu.memory_space<vmem>>, vector<8x128xf32>,
      %cst_20 = arith.constant 0.000000e+00 : f32
      %20 = vector.broadcast %cst_20 : f32 to vector<8x128xf32>
      %c0_21 = arith.constant 0 : index
      %c0_22 = arith.constant 0 : index
      %21 = vector.load %arg11[%c0_21, %c0_22] : memref<8x128xf32, #tpu.memory_space<vmem>>, vector<8x128xf32>
      tpu.vector_store %arg11[%c0_21, %c0_22], %20 {strides = array<i32>} : memref<8x128xf32, #tpu.memory_space<vmem>>, vector<8x128xf32>,
      %c0_i32_23 = arith.constant 0 : i32
      %c8_i32 = arith.constant 8 : i32
      %22 = arith.muli %c0_i32_23, %c8_i32 : i32
      %23 = arith.index_cast %22 : i32 to index
      %c0_24 = arith.constant 0 : index
      %24 = vector.load %arg8[%23, %c0_24] : memref<56x512xf32, #tpu.memory_space<vmem>>, vector<8x512xf32>
      %c0_25 = arith.constant 0 : index
      %c0_26 = arith.constant 0 : index
      %25 = vector.load %arg10[%c0_25, %c0_26] : memref<8x128xf32, #tpu.memory_space<vmem>>, vector<8x128xf32>
      %26 = arith.truncf %25 : vector<8x128xf32> to vector<8x128xbf16>
      %c0_27 = arith.constant 0 : index
      %c0_28 = arith.constant 0 : index
      %27 = vector.load %arg3[%c0_27, %c0_28] : memref<128x512xbf16, #tpu.memory_space<vmem>>, vector<128x512xbf16>
      %cst_29 = arith.constant dense<0.000000e+00> : vector<8x512xf32>
      %28 = tpu.matmul %26, %27, %cst_29 {dimension_numbers = #tpu.dot_dimension_numbers<[1], [0], [0], [1], [0, 0, 1, 1], [], []>} : vector<8x128xbf16>, vector<128x512xbf16>, vector<8x512xf32> -> vector<8x512xf32>
      %29 = arith.addf %24, %28 : vector<8x512xf32>
      %30 = vector.extract_strided_slice %29 {offsets = [0, 0], sizes = [8, 128], strides = [1, 1]} : vector<8x512xf32> to vector<8x128xf32>
      %31 = arith.negf %30 : vector<8x128xf32>
      %32 = math.exp %31 : vector<8x128xf32>
      %cst_30 = arith.constant 1.000000e+00 : f32
      %33 = vector.broadcast %cst_30 : f32 to vector<8x128xf32>
      %34 = arith.addf %33, %32 : vector<8x128xf32>
      %35 = arith.divf %33, %34 : vector<8x128xf32>
      %36 = vector.extract_strided_slice %29 {offsets = [0, 128], sizes = [8, 128], strides = [1, 1]} : vector<8x512xf32> to vector<8x128xf32>
      %37 = arith.negf %36 : vector<8x128xf32>
      %38 = math.exp %37 : vector<8x128xf32>
      %cst_31 = arith.constant 1.000000e+00 : f32
      %39 = vector.broadcast %cst_31 : f32 to vector<8x128xf32>
      %40 = arith.addf %39, %38 : vector<8x128xf32>
      %41 = arith.divf %39, %40 : vector<8x128xf32>
      %42 = vector.extract_strided_slice %29 {offsets = [0, 256], sizes = [8, 128], strides = [1, 1]} : vector<8x512xf32> to vector<8x128xf32>
      %43 = math.tanh %42 : vector<8x128xf32>
      %44 = vector.extract_strided_slice %29 {offsets = [0, 384], sizes = [8, 128], strides = [1, 1]} : vector<8x512xf32> to vector<8x128xf32>
      %45 = arith.negf %44 : vector<8x128xf32>
      %46 = math.exp %45 : vector<8x128xf32>
      %cst_32 = arith.constant 1.000000e+00 : f32
      %47 = vector.broadcast %cst_32 : f32 to vector<8x128xf32>
      %48 = arith.addf %47, %46 : vector<8x128xf32>
      %49 = arith.divf %47, %48 : vector<8x128xf32>
      %c0_33 = arith.constant 0 : index
      %c0_34 = arith.constant 0 : index
      %50 = vector.load %arg11[%c0_33, %c0_34] : memref<8x128xf32, #tpu.memory_space<vmem>>, vector<8x128xf32>
      %51 = arith.mulf %41, %50 : vector<8x128xf32>
      %52 = arith.mulf %35, %43 : vector<8x128xf32>
      %53 = arith.addf %51, %52 : vector<8x128xf32>
      %54 = math.tanh %53 : vector<8x128xf32>
      %55 = arith.mulf %49, %54 : vector<8x128xf32>
      %c0_35 = arith.constant 0 : index
      %c0_36 = arith.constant 0 : index
      %56 = vector.load %arg11[%c0_35, %c0_36] : memref<8x128xf32, #tpu.memory_space<vmem>>, vector<8x128xf32>
      tpu.vector_store %arg11[%c0_35, %c0_36], %53 {strides = array<i32>} : memref<8x128xf32, #tpu.memory_space<vmem>>, vector<8x128xf32>,
      %c0_37 = arith.constant 0 : index
      %c0_38 = arith.constant 0 : index
      %57 = vector.load %arg10[%c0_37, %c0_38] : memref<8x128xf32, #tpu.memory_space<vmem>>, vector<8x128xf32>
      tpu.vector_store %arg10[%c0_37, %c0_38], %55 {strides = array<i32>} : memref<8x128xf32, #tpu.memory_space<vmem>>, vector<8x128xf32>,
      %58 = arith.index_cast %22 : i32 to index
      %c0_39 = arith.constant 0 : index
      %59 = vector.load %arg9[%58, %c0_39] : memref<56x128xf32, #tpu.memory_space<vmem>>, vector<8x128xf32>
      tpu.vector_store %arg9[%58, %c0_39], %55 {strides = array<i32>} : memref<56x128xf32, #tpu.memory_space<vmem>>, vector<8x128xf32>,
      %c1_i32 = arith.constant 1 : i32
      %c8_i32_40 = arith.constant 8 : i32
      %60 = arith.muli %c1_i32, %c8_i32_40 : i32
      %61 = arith.index_cast %60 : i32 to index
      %c0_41 = arith.constant 0 : index
      %62 = vector.load %arg8[%61, %c0_41] : memref<56x512xf32, #tpu.memory_space<vmem>>, vector<8x512xf32>
      %c0_42 = arith.constant 0 : index
      %c0_43 = arith.constant 0 : index
      %63 = vector.load %arg10[%c0_42, %c0_43] : memref<8x128xf32, #tpu.memory_space<vmem>>, vector<8x128xf32>
      %64 = arith.truncf %63 : vector<8x128xf32> to vector<8x128xbf16>
      %c0_44 = arith.constant 0 : index
      %c0_45 = arith.constant 0 : index
      %65 = vector.load %arg3[%c0_44, %c0_45] : memref<128x512xbf16, #tpu.memory_space<vmem>>, vector<128x512xbf16>
      %cst_46 = arith.constant dense<0.000000e+00> : vector<8x512xf32>
      %66 = tpu.matmul %64, %65, %cst_46 {dimension_numbers = #tpu.dot_dimension_numbers<[1], [0], [0], [1], [0, 0, 1, 1], [], []>} : vector<8x128xbf16>, vector<128x512xbf16>, vector<8x512xf32> -> vector<8x512xf32>
      %67 = arith.addf %62, %66 : vector<8x512xf32>
      %68 = vector.extract_strided_slice %67 {offsets = [0, 0], sizes = [8, 128], strides = [1, 1]} : vector<8x512xf32> to vector<8x128xf32>
      %69 = arith.negf %68 : vector<8x128xf32>
      %70 = math.exp %69 : vector<8x128xf32>
      %cst_47 = arith.constant 1.000000e+00 : f32
      %71 = vector.broadcast %cst_47 : f32 to vector<8x128xf32>
      %72 = arith.addf %71, %70 : vector<8x128xf32>
      %73 = arith.divf %71, %72 : vector<8x128xf32>
      %74 = vector.extract_strided_slice %67 {offsets = [0, 128], sizes = [8, 128], strides = [1, 1]} : vector<8x512xf32> to vector<8x128xf32>
      %75 = arith.negf %74 : vector<8x128xf32>
      %76 = math.exp %75 : vector<8x128xf32>
      %cst_48 = arith.constant 1.000000e+00 : f32
      %77 = vector.broadcast %cst_48 : f32 to vector<8x128xf32>
      %78 = arith.addf %77, %76 : vector<8x128xf32>
      %79 = arith.divf %77, %78 : vector<8x128xf32>
      %80 = vector.extract_strided_slice %67 {offsets = [0, 256], sizes = [8, 128], strides = [1, 1]} : vector<8x512xf32> to vector<8x128xf32>
      %81 = math.tanh %80 : vector<8x128xf32>
      %82 = vector.extract_strided_slice %67 {offsets = [0, 384], sizes = [8, 128], strides = [1, 1]} : vector<8x512xf32> to vector<8x128xf32>
      %83 = arith.negf %82 : vector<8x128xf32>
      %84 = math.exp %83 : vector<8x128xf32>
      %cst_49 = arith.constant 1.000000e+00 : f32
      %85 = vector.broadcast %cst_49 : f32 to vector<8x128xf32>
      %86 = arith.addf %85, %84 : vector<8x128xf32>
      %87 = arith.divf %85, %86 : vector<8x128xf32>
      %c0_50 = arith.constant 0 : index
      %c0_51 = arith.constant 0 : index
      %88 = vector.load %arg11[%c0_50, %c0_51] : memref<8x128xf32, #tpu.memory_space<vmem>>, vector<8x128xf32>
      %89 = arith.mulf %79, %88 : vector<8x128xf32>
      %90 = arith.mulf %73, %81 : vector<8x128xf32>
      %91 = arith.addf %89, %90 : vector<8x128xf32>
      %92 = math.tanh %91 : vector<8x128xf32>
      %93 = arith.mulf %87, %92 : vector<8x128xf32>
      %c0_52 = arith.constant 0 : index
      %c0_53 = arith.constant 0 : index
      %94 = vector.load %arg11[%c0_52, %c0_53] : memref<8x128xf32, #tpu.memory_space<vmem>>, vector<8x128xf32>
      tpu.vector_store %arg11[%c0_52, %c0_53], %91 {strides = array<i32>} : memref<8x128xf32, #tpu.memory_space<vmem>>, vector<8x128xf32>,
      %c0_54 = arith.constant 0 : index
      %c0_55 = arith.constant 0 : index
      %95 = vector.load %arg10[%c0_54, %c0_55] : memref<8x128xf32, #tpu.memory_space<vmem>>, vector<8x128xf32>
      tpu.vector_store %arg10[%c0_54, %c0_55], %93 {strides = array<i32>} : memref<8x128xf32, #tpu.memory_space<vmem>>, vector<8x128xf32>,
      %96 = arith.index_cast %60 : i32 to index
      %c0_56 = arith.constant 0 : index
      %97 = vector.load %arg9[%96, %c0_56] : memref<56x128xf32, #tpu.memory_space<vmem>>, vector<8x128xf32>
      tpu.vector_store %arg9[%96, %c0_56], %93 {strides = array<i32>} : memref<56x128xf32, #tpu.memory_space<vmem>>, vector<8x128xf32>,
      %c2_i32 = arith.constant 2 : i32
      %c8_i32_57 = arith.constant 8 : i32
      %98 = arith.muli %c2_i32, %c8_i32_57 : i32
      %99 = arith.index_cast %98 : i32 to index
      %c0_58 = arith.constant 0 : index
      %100 = vector.load %arg8[%99, %c0_58] : memref<56x512xf32, #tpu.memory_space<vmem>>, vector<8x512xf32>
      %c0_59 = arith.constant 0 : index
      %c0_60 = arith.constant 0 : index
      %101 = vector.load %arg10[%c0_59, %c0_60] : memref<8x128xf32, #tpu.memory_space<vmem>>, vector<8x128xf32>
      %102 = arith.truncf %101 : vector<8x128xf32> to vector<8x128xbf16>
      %c0_61 = arith.constant 0 : index
      %c0_62 = arith.constant 0 : index
      %103 = vector.load %arg3[%c0_61, %c0_62] : memref<128x512xbf16, #tpu.memory_space<vmem>>, vector<128x512xbf16>
      %cst_63 = arith.constant dense<0.000000e+00> : vector<8x512xf32>
      %104 = tpu.matmul %102, %103, %cst_63 {dimension_numbers = #tpu.dot_dimension_numbers<[1], [0], [0], [1], [0, 0, 1, 1], [], []>} : vector<8x128xbf16>, vector<128x512xbf16>, vector<8x512xf32> -> vector<8x512xf32>
      %105 = arith.addf %100, %104 : vector<8x512xf32>
      %106 = vector.extract_strided_slice %105 {offsets = [0, 0], sizes = [8, 128], strides = [1, 1]} : vector<8x512xf32> to vector<8x128xf32>
      %107 = arith.negf %106 : vector<8x128xf32>
      %108 = math.exp %107 : vector<8x128xf32>
      %cst_64 = arith.constant 1.000000e+00 : f32
      %109 = vector.broadcast %cst_64 : f32 to vector<8x128xf32>
      %110 = arith.addf %109, %108 : vector<8x128xf32>
      %111 = arith.divf %109, %110 : vector<8x128xf32>
      %112 = vector.extract_strided_slice %105 {offsets = [0, 128], sizes = [8, 128], strides = [1, 1]} : vector<8x512xf32> to vector<8x128xf32>
      %113 = arith.negf %112 : vector<8x128xf32>
      %114 = math.exp %113 : vector<8x128xf32>
      %cst_65 = arith.constant 1.000000e+00 : f32
      %115 = vector.broadcast %cst_65 : f32 to vector<8x128xf32>
      %116 = arith.addf %115, %114 : vector<8x128xf32>
      %117 = arith.divf %115, %116 : vector<8x128xf32>
      %118 = vector.extract_strided_slice %105 {offsets = [0, 256], sizes = [8, 128], strides = [1, 1]} : vector<8x512xf32> to vector<8x128xf32>
      %119 = math.tanh %118 : vector<8x128xf32>
      %120 = vector.extract_strided_slice %105 {offsets = [0, 384], sizes = [8, 128], strides = [1, 1]} : vector<8x512xf32> to vector<8x128xf32>
      %121 = arith.negf %120 : vector<8x128xf32>
      %122 = math.exp %121 : vector<8x128xf32>
      %cst_66 = arith.constant 1.000000e+00 : f32
      %123 = vector.broadcast %cst_66 : f32 to vector<8x128xf32>
      %124 = arith.addf %123, %122 : vector<8x128xf32>
      %125 = arith.divf %123, %124 : vector<8x128xf32>
      %c0_67 = arith.constant 0 : index
      %c0_68 = arith.constant 0 : index
      %126 = vector.load %arg11[%c0_67, %c0_68] : memref<8x128xf32, #tpu.memory_space<vmem>>, vector<8x128xf32>
      %127 = arith.mulf %117, %126 : vector<8x128xf32>
      %128 = arith.mulf %111, %119 : vector<8x128xf32>
      %129 = arith.addf %127, %128 : vector<8x128xf32>
      %130 = math.tanh %129 : vector<8x128xf32>
      %131 = arith.mulf %125, %130 : vector<8x128xf32>
      %c0_69 = arith.constant 0 : index
      %c0_70 = arith.constant 0 : index
      %132 = vector.load %arg11[%c0_69, %c0_70] : memref<8x128xf32, #tpu.memory_space<vmem>>, vector<8x128xf32>
      tpu.vector_store %arg11[%c0_69, %c0_70], %129 {strides = array<i32>} : memref<8x128xf32, #tpu.memory_space<vmem>>, vector<8x128xf32>,
      %c0_71 = arith.constant 0 : index
      %c0_72 = arith.constant 0 : index
      %133 = vector.load %arg10[%c0_71, %c0_72] : memref<8x128xf32, #tpu.memory_space<vmem>>, vector<8x128xf32>
      tpu.vector_store %arg10[%c0_71, %c0_72], %131 {strides = array<i32>} : memref<8x128xf32, #tpu.memory_space<vmem>>, vector<8x128xf32>,
      %134 = arith.index_cast %98 : i32 to index
      %c0_73 = arith.constant 0 : index
      %135 = vector.load %arg9[%134, %c0_73] : memref<56x128xf32, #tpu.memory_space<vmem>>, vector<8x128xf32>
      tpu.vector_store %arg9[%134, %c0_73], %131 {strides = array<i32>} : memref<56x128xf32, #tpu.memory_space<vmem>>, vector<8x128xf32>,
      %c3_i32 = arith.constant 3 : i32
      %c8_i32_74 = arith.constant 8 : i32
      %136 = arith.muli %c3_i32, %c8_i32_74 : i32
      %137 = arith.index_cast %136 : i32 to index
      %c0_75 = arith.constant 0 : index
      %138 = vector.load %arg8[%137, %c0_75] : memref<56x512xf32, #tpu.memory_space<vmem>>, vector<8x512xf32>
      %c0_76 = arith.constant 0 : index
      %c0_77 = arith.constant 0 : index
      %139 = vector.load %arg10[%c0_76, %c0_77] : memref<8x128xf32, #tpu.memory_space<vmem>>, vector<8x128xf32>
      %140 = arith.truncf %139 : vector<8x128xf32> to vector<8x128xbf16>
      %c0_78 = arith.constant 0 : index
      %c0_79 = arith.constant 0 : index
      %141 = vector.load %arg3[%c0_78, %c0_79] : memref<128x512xbf16, #tpu.memory_space<vmem>>, vector<128x512xbf16>
      %cst_80 = arith.constant dense<0.000000e+00> : vector<8x512xf32>
      %142 = tpu.matmul %140, %141, %cst_80 {dimension_numbers = #tpu.dot_dimension_numbers<[1], [0], [0], [1], [0, 0, 1, 1], [], []>} : vector<8x128xbf16>, vector<128x512xbf16>, vector<8x512xf32> -> vector<8x512xf32>
      %143 = arith.addf %138, %142 : vector<8x512xf32>
      %144 = vector.extract_strided_slice %143 {offsets = [0, 0], sizes = [8, 128], strides = [1, 1]} : vector<8x512xf32> to vector<8x128xf32>
      %145 = arith.negf %144 : vector<8x128xf32>
      %146 = math.exp %145 : vector<8x128xf32>
      %cst_81 = arith.constant 1.000000e+00 : f32
      %147 = vector.broadcast %cst_81 : f32 to vector<8x128xf32>
      %148 = arith.addf %147, %146 : vector<8x128xf32>
      %149 = arith.divf %147, %148 : vector<8x128xf32>
      %150 = vector.extract_strided_slice %143 {offsets = [0, 128], sizes = [8, 128], strides = [1, 1]} : vector<8x512xf32> to vector<8x128xf32>
      %151 = arith.negf %150 : vector<8x128xf32>
      %152 = math.exp %151 : vector<8x128xf32>
      %cst_82 = arith.constant 1.000000e+00 : f32
      %153 = vector.broadcast %cst_82 : f32 to vector<8x128xf32>
      %154 = arith.addf %153, %152 : vector<8x128xf32>
      %155 = arith.divf %153, %154 : vector<8x128xf32>
      %156 = vector.extract_strided_slice %143 {offsets = [0, 256], sizes = [8, 128], strides = [1, 1]} : vector<8x512xf32> to vector<8x128xf32>
      %157 = math.tanh %156 : vector<8x128xf32>
      %158 = vector.extract_strided_slice %143 {offsets = [0, 384], sizes = [8, 128], strides = [1, 1]} : vector<8x512xf32> to vector<8x128xf32>
      %159 = arith.negf %158 : vector<8x128xf32>
      %160 = math.exp %159 : vector<8x128xf32>
      %cst_83 = arith.constant 1.000000e+00 : f32
      %161 = vector.broadcast %cst_83 : f32 to vector<8x128xf32>
      %162 = arith.addf %161, %160 : vector<8x128xf32>
      %163 = arith.divf %161, %162 : vector<8x128xf32>
      %c0_84 = arith.constant 0 : index
      %c0_85 = arith.constant 0 : index
      %164 = vector.load %arg11[%c0_84, %c0_85] : memref<8x128xf32, #tpu.memory_space<vmem>>, vector<8x128xf32>
      %165 = arith.mulf %155, %164 : vector<8x128xf32>
      %166 = arith.mulf %149, %157 : vector<8x128xf32>
      %167 = arith.addf %165, %166 : vector<8x128xf32>
      %168 = math.tanh %167 : vector<8x128xf32>
      %169 = arith.mulf %163, %168 : vector<8x128xf32>
      %c0_86 = arith.constant 0 : index
      %c0_87 = arith.constant 0 : index
      %170 = vector.load %arg11[%c0_86, %c0_87] : memref<8x128xf32, #tpu.memory_space<vmem>>, vector<8x128xf32>
      tpu.vector_store %arg11[%c0_86, %c0_87], %167 {strides = array<i32>} : memref<8x128xf32, #tpu.memory_space<vmem>>, vector<8x128xf32>,
      %c0_88 = arith.constant 0 : index
      %c0_89 = arith.constant 0 : index
      %171 = vector.load %arg10[%c0_88, %c0_89] : memref<8x128xf32, #tpu.memory_space<vmem>>, vector<8x128xf32>
      tpu.vector_store %arg10[%c0_88, %c0_89], %169 {strides = array<i32>} : memref<8x128xf32, #tpu.memory_space<vmem>>, vector<8x128xf32>,
      %172 = arith.index_cast %136 : i32 to index
      %c0_90 = arith.constant 0 : index
      %173 = vector.load %arg9[%172, %c0_90] : memref<56x128xf32, #tpu.memory_space<vmem>>, vector<8x128xf32>
      tpu.vector_store %arg9[%172, %c0_90], %169 {strides = array<i32>} : memref<56x128xf32, #tpu.memory_space<vmem>>, vector<8x128xf32>,
      %c4_i32 = arith.constant 4 : i32
      %c8_i32_91 = arith.constant 8 : i32
      %174 = arith.muli %c4_i32, %c8_i32_91 : i32
      %175 = arith.index_cast %174 : i32 to index
      %c0_92 = arith.constant 0 : index
      %176 = vector.load %arg8[%175, %c0_92] : memref<56x512xf32, #tpu.memory_space<vmem>>, vector<8x512xf32>
      %c0_93 = arith.constant 0 : index
      %c0_94 = arith.constant 0 : index
      %177 = vector.load %arg10[%c0_93, %c0_94] : memref<8x128xf32, #tpu.memory_space<vmem>>, vector<8x128xf32>
      %178 = arith.truncf %177 : vector<8x128xf32> to vector<8x128xbf16>
      %c0_95 = arith.constant 0 : index
      %c0_96 = arith.constant 0 : index
      %179 = vector.load %arg3[%c0_95, %c0_96] : memref<128x512xbf16, #tpu.memory_space<vmem>>, vector<128x512xbf16>
      %cst_97 = arith.constant dense<0.000000e+00> : vector<8x512xf32>
      %180 = tpu.matmul %178, %179, %cst_97 {dimension_numbers = #tpu.dot_dimension_numbers<[1], [0], [0], [1], [0, 0, 1, 1], [], []>} : vector<8x128xbf16>, vector<128x512xbf16>, vector<8x512xf32> -> vector<8x512xf32>
      %181 = arith.addf %176, %180 : vector<8x512xf32>
      %182 = vector.extract_strided_slice %181 {offsets = [0, 0], sizes = [8, 128], strides = [1, 1]} : vector<8x512xf32> to vector<8x128xf32>
      %183 = arith.negf %182 : vector<8x128xf32>
      %184 = math.exp %183 : vector<8x128xf32>
      %cst_98 = arith.constant 1.000000e+00 : f32
      %185 = vector.broadcast %cst_98 : f32 to vector<8x128xf32>
      %186 = arith.addf %185, %184 : vector<8x128xf32>
      %187 = arith.divf %185, %186 : vector<8x128xf32>
      %188 = vector.extract_strided_slice %181 {offsets = [0, 128], sizes = [8, 128], strides = [1, 1]} : vector<8x512xf32> to vector<8x128xf32>
      %189 = arith.negf %188 : vector<8x128xf32>
      %190 = math.exp %189 : vector<8x128xf32>
      %cst_99 = arith.constant 1.000000e+00 : f32
      %191 = vector.broadcast %cst_99 : f32 to vector<8x128xf32>
      %192 = arith.addf %191, %190 : vector<8x128xf32>
      %193 = arith.divf %191, %192 : vector<8x128xf32>
      %194 = vector.extract_strided_slice %181 {offsets = [0, 256], sizes = [8, 128], strides = [1, 1]} : vector<8x512xf32> to vector<8x128xf32>
      %195 = math.tanh %194 : vector<8x128xf32>
      %196 = vector.extract_strided_slice %181 {offsets = [0, 384], sizes = [8, 128], strides = [1, 1]} : vector<8x512xf32> to vector<8x128xf32>
      %197 = arith.negf %196 : vector<8x128xf32>
      %198 = math.exp %197 : vector<8x128xf32>
      %cst_100 = arith.constant 1.000000e+00 : f32
      %199 = vector.broadcast %cst_100 : f32 to vector<8x128xf32>
      %200 = arith.addf %199, %198 : vector<8x128xf32>
      %201 = arith.divf %199, %200 : vector<8x128xf32>
      %c0_101 = arith.constant 0 : index
      %c0_102 = arith.constant 0 : index
      %202 = vector.load %arg11[%c0_101, %c0_102] : memref<8x128xf32, #tpu.memory_space<vmem>>, vector<8x128xf32>
      %203 = arith.mulf %193, %202 : vector<8x128xf32>
      %204 = arith.mulf %187, %195 : vector<8x128xf32>
      %205 = arith.addf %203, %204 : vector<8x128xf32>
      %206 = math.tanh %205 : vector<8x128xf32>
      %207 = arith.mulf %201, %206 : vector<8x128xf32>
      %c0_103 = arith.constant 0 : index
      %c0_104 = arith.constant 0 : index
      %208 = vector.load %arg11[%c0_103, %c0_104] : memref<8x128xf32, #tpu.memory_space<vmem>>, vector<8x128xf32>
      tpu.vector_store %arg11[%c0_103, %c0_104], %205 {strides = array<i32>} : memref<8x128xf32, #tpu.memory_space<vmem>>, vector<8x128xf32>,
      %c0_105 = arith.constant 0 : index
      %c0_106 = arith.constant 0 : index
      %209 = vector.load %arg10[%c0_105, %c0_106] : memref<8x128xf32, #tpu.memory_space<vmem>>, vector<8x128xf32>
      tpu.vector_store %arg10[%c0_105, %c0_106], %207 {strides = array<i32>} : memref<8x128xf32, #tpu.memory_space<vmem>>, vector<8x128xf32>,
      %210 = arith.index_cast %174 : i32 to index
      %c0_107 = arith.constant 0 : index
      %211 = vector.load %arg9[%210, %c0_107] : memref<56x128xf32, #tpu.memory_space<vmem>>, vector<8x128xf32>
      tpu.vector_store %arg9[%210, %c0_107], %207 {strides = array<i32>} : memref<56x128xf32, #tpu.memory_space<vmem>>, vector<8x128xf32>,
      %c5_i32 = arith.constant 5 : i32
      %c8_i32_108 = arith.constant 8 : i32
      %212 = arith.muli %c5_i32, %c8_i32_108 : i32
      %213 = arith.index_cast %212 : i32 to index
      %c0_109 = arith.constant 0 : index
      %214 = vector.load %arg8[%213, %c0_109] : memref<56x512xf32, #tpu.memory_space<vmem>>, vector<8x512xf32>
      %c0_110 = arith.constant 0 : index
      %c0_111 = arith.constant 0 : index
      %215 = vector.load %arg10[%c0_110, %c0_111] : memref<8x128xf32, #tpu.memory_space<vmem>>, vector<8x128xf32>
      %216 = arith.truncf %215 : vector<8x128xf32> to vector<8x128xbf16>
      %c0_112 = arith.constant 0 : index
      %c0_113 = arith.constant 0 : index
      %217 = vector.load %arg3[%c0_112, %c0_113] : memref<128x512xbf16, #tpu.memory_space<vmem>>, vector<128x512xbf16>
      %cst_114 = arith.constant dense<0.000000e+00> : vector<8x512xf32>
      %218 = tpu.matmul %216, %217, %cst_114 {dimension_numbers = #tpu.dot_dimension_numbers<[1], [0], [0], [1], [0, 0, 1, 1], [], []>} : vector<8x128xbf16>, vector<128x512xbf16>, vector<8x512xf32> -> vector<8x512xf32>
      %219 = arith.addf %214, %218 : vector<8x512xf32>
      %220 = vector.extract_strided_slice %219 {offsets = [0, 0], sizes = [8, 128], strides = [1, 1]} : vector<8x512xf32> to vector<8x128xf32>
      %221 = arith.negf %220 : vector<8x128xf32>
      %222 = math.exp %221 : vector<8x128xf32>
      %cst_115 = arith.constant 1.000000e+00 : f32
      %223 = vector.broadcast %cst_115 : f32 to vector<8x128xf32>
      %224 = arith.addf %223, %222 : vector<8x128xf32>
      %225 = arith.divf %223, %224 : vector<8x128xf32>
      %226 = vector.extract_strided_slice %219 {offsets = [0, 128], sizes = [8, 128], strides = [1, 1]} : vector<8x512xf32> to vector<8x128xf32>
      %227 = arith.negf %226 : vector<8x128xf32>
      %228 = math.exp %227 : vector<8x128xf32>
      %cst_116 = arith.constant 1.000000e+00 : f32
      %229 = vector.broadcast %cst_116 : f32 to vector<8x128xf32>
      %230 = arith.addf %229, %228 : vector<8x128xf32>
      %231 = arith.divf %229, %230 : vector<8x128xf32>
      %232 = vector.extract_strided_slice %219 {offsets = [0, 256], sizes = [8, 128], strides = [1, 1]} : vector<8x512xf32> to vector<8x128xf32>
      %233 = math.tanh %232 : vector<8x128xf32>
      %234 = vector.extract_strided_slice %219 {offsets = [0, 384], sizes = [8, 128], strides = [1, 1]} : vector<8x512xf32> to vector<8x128xf32>
      %235 = arith.negf %234 : vector<8x128xf32>
      %236 = math.exp %235 : vector<8x128xf32>
      %cst_117 = arith.constant 1.000000e+00 : f32
      %237 = vector.broadcast %cst_117 : f32 to vector<8x128xf32>
      %238 = arith.addf %237, %236 : vector<8x128xf32>
      %239 = arith.divf %237, %238 : vector<8x128xf32>
      %c0_118 = arith.constant 0 : index
      %c0_119 = arith.constant 0 : index
      %240 = vector.load %arg11[%c0_118, %c0_119] : memref<8x128xf32, #tpu.memory_space<vmem>>, vector<8x128xf32>
      %241 = arith.mulf %231, %240 : vector<8x128xf32>
      %242 = arith.mulf %225, %233 : vector<8x128xf32>
      %243 = arith.addf %241, %242 : vector<8x128xf32>
      %244 = math.tanh %243 : vector<8x128xf32>
      %245 = arith.mulf %239, %244 : vector<8x128xf32>
      %c0_120 = arith.constant 0 : index
      %c0_121 = arith.constant 0 : index
      %246 = vector.load %arg11[%c0_120, %c0_121] : memref<8x128xf32, #tpu.memory_space<vmem>>, vector<8x128xf32>
      tpu.vector_store %arg11[%c0_120, %c0_121], %243 {strides = array<i32>} : memref<8x128xf32, #tpu.memory_space<vmem>>, vector<8x128xf32>,
      %c0_122 = arith.constant 0 : index
      %c0_123 = arith.constant 0 : index
      %247 = vector.load %arg10[%c0_122, %c0_123] : memref<8x128xf32, #tpu.memory_space<vmem>>, vector<8x128xf32>
      tpu.vector_store %arg10[%c0_122, %c0_123], %245 {strides = array<i32>} : memref<8x128xf32, #tpu.memory_space<vmem>>, vector<8x128xf32>,
      %248 = arith.index_cast %212 : i32 to index
      %c0_124 = arith.constant 0 : index
      %249 = vector.load %arg9[%248, %c0_124] : memref<56x128xf32, #tpu.memory_space<vmem>>, vector<8x128xf32>
      tpu.vector_store %arg9[%248, %c0_124], %245 {strides = array<i32>} : memref<56x128xf32, #tpu.memory_space<vmem>>, vector<8x128xf32>,
      %c6_i32 = arith.constant 6 : i32
      %c8_i32_125 = arith.constant 8 : i32
      %250 = arith.muli %c6_i32, %c8_i32_125 : i32
      %251 = arith.index_cast %250 : i32 to index
      %c0_126 = arith.constant 0 : index
      %252 = vector.load %arg8[%251, %c0_126] : memref<56x512xf32, #tpu.memory_space<vmem>>, vector<8x512xf32>
      %c0_127 = arith.constant 0 : index
      %c0_128 = arith.constant 0 : index
      %253 = vector.load %arg10[%c0_127, %c0_128] : memref<8x128xf32, #tpu.memory_space<vmem>>, vector<8x128xf32>
      %254 = arith.truncf %253 : vector<8x128xf32> to vector<8x128xbf16>
      %c0_129 = arith.constant 0 : index
      %c0_130 = arith.constant 0 : index
      %255 = vector.load %arg3[%c0_129, %c0_130] : memref<128x512xbf16, #tpu.memory_space<vmem>>, vector<128x512xbf16>
      %cst_131 = arith.constant dense<0.000000e+00> : vector<8x512xf32>
      %256 = tpu.matmul %254, %255, %cst_131 {dimension_numbers = #tpu.dot_dimension_numbers<[1], [0], [0], [1], [0, 0, 1, 1], [], []>} : vector<8x128xbf16>, vector<128x512xbf16>, vector<8x512xf32> -> vector<8x512xf32>
      %257 = arith.addf %252, %256 : vector<8x512xf32>
      %258 = vector.extract_strided_slice %257 {offsets = [0, 0], sizes = [8, 128], strides = [1, 1]} : vector<8x512xf32> to vector<8x128xf32>
      %259 = arith.negf %258 : vector<8x128xf32>
      %260 = math.exp %259 : vector<8x128xf32>
      %cst_132 = arith.constant 1.000000e+00 : f32
      %261 = vector.broadcast %cst_132 : f32 to vector<8x128xf32>
      %262 = arith.addf %261, %260 : vector<8x128xf32>
      %263 = arith.divf %261, %262 : vector<8x128xf32>
      %264 = vector.extract_strided_slice %257 {offsets = [0, 128], sizes = [8, 128], strides = [1, 1]} : vector<8x512xf32> to vector<8x128xf32>
      %265 = arith.negf %264 : vector<8x128xf32>
      %266 = math.exp %265 : vector<8x128xf32>
      %cst_133 = arith.constant 1.000000e+00 : f32
      %267 = vector.broadcast %cst_133 : f32 to vector<8x128xf32>
      %268 = arith.addf %267, %266 : vector<8x128xf32>
      %269 = arith.divf %267, %268 : vector<8x128xf32>
      %270 = vector.extract_strided_slice %257 {offsets = [0, 256], sizes = [8, 128], strides = [1, 1]} : vector<8x512xf32> to vector<8x128xf32>
      %271 = math.tanh %270 : vector<8x128xf32>
      %272 = vector.extract_strided_slice %257 {offsets = [0, 384], sizes = [8, 128], strides = [1, 1]} : vector<8x512xf32> to vector<8x128xf32>
      %273 = arith.negf %272 : vector<8x128xf32>
      %274 = math.exp %273 : vector<8x128xf32>
      %cst_134 = arith.constant 1.000000e+00 : f32
      %275 = vector.broadcast %cst_134 : f32 to vector<8x128xf32>
      %276 = arith.addf %275, %274 : vector<8x128xf32>
      %277 = arith.divf %275, %276 : vector<8x128xf32>
      %c0_135 = arith.constant 0 : index
      %c0_136 = arith.constant 0 : index
      %278 = vector.load %arg11[%c0_135, %c0_136] : memref<8x128xf32, #tpu.memory_space<vmem>>, vector<8x128xf32>
      %279 = arith.mulf %269, %278 : vector<8x128xf32>
      %280 = arith.mulf %263, %271 : vector<8x128xf32>
      %281 = arith.addf %279, %280 : vector<8x128xf32>
      %282 = math.tanh %281 : vector<8x128xf32>
      %283 = arith.mulf %277, %282 : vector<8x128xf32>
      %c0_137 = arith.constant 0 : index
      %c0_138 = arith.constant 0 : index
      %284 = vector.load %arg11[%c0_137, %c0_138] : memref<8x128xf32, #tpu.memory_space<vmem>>, vector<8x128xf32>
      tpu.vector_store %arg11[%c0_137, %c0_138], %281 {strides = array<i32>} : memref<8x128xf32, #tpu.memory_space<vmem>>, vector<8x128xf32>,
      %c0_139 = arith.constant 0 : index
      %c0_140 = arith.constant 0 : index
      %285 = vector.load %arg10[%c0_139, %c0_140] : memref<8x128xf32, #tpu.memory_space<vmem>>, vector<8x128xf32>
      tpu.vector_store %arg10[%c0_139, %c0_140], %283 {strides = array<i32>} : memref<8x128xf32, #tpu.memory_space<vmem>>, vector<8x128xf32>,
      %286 = arith.index_cast %250 : i32 to index
      %c0_141 = arith.constant 0 : index
      %287 = vector.load %arg9[%286, %c0_141] : memref<56x128xf32, #tpu.memory_space<vmem>>, vector<8x128xf32>
      tpu.vector_store %arg9[%286, %c0_141], %283 {strides = array<i32>} : memref<56x128xf32, #tpu.memory_space<vmem>>, vector<8x128xf32>,
      %c7_i32 = arith.constant 7 : i32
    } else {
    }
    %c0 = arith.constant 0 : index
    %c0_1 = arith.constant 0 : index
    %3 = vector.load %arg9[%c0, %c0_1] : memref<56x128xf32, #tpu.memory_space<vmem>>, vector<56x128xf32>
    %4 = arith.truncf %3 : vector<56x128xf32> to vector<56x128xbf16>
    %c0_2 = arith.constant 0 : index
    %c0_3 = arith.constant 0 : index
    %5 = vector.load %arg5[%c0_2, %c0_3] : memref<128x1024xbf16, #tpu.memory_space<vmem>>, vector<128x1024xbf16>
    %cst = arith.constant dense<0.000000e+00> : vector<56x1024xf32>
    %6 = tpu.matmul %4, %5, %cst {dimension_numbers = #tpu.dot_dimension_numbers<[1], [0], [0], [1], [0, 0, 1, 1], [], []>} : vector<56x128xbf16>, vector<128x1024xbf16>, vector<56x1024xf32> -> vector<56x1024xf32>
    %c0_4 = arith.constant 0 : index
    %c0_5 = arith.constant 0 : index
    %7 = vector.load %arg6[%c0_4, %c0_5] : memref<1x1024xf32, #tpu.memory_space<vmem>>, vector<1x1024xf32>
    %8 = vector.broadcast %7 : vector<1x1024xf32> to vector<56x1024xf32>
    %9 = arith.addf %6, %8 : vector<56x1024xf32>
    %c0_6 = arith.constant 0 : index
    %c0_7 = arith.constant 0 : index
    %10 = vector.load %arg7[%c0_6, %c0_7] : memref<56x1024xf32, #tpu.memory_space<vmem>>, vector<56x1024xf32>
    tpu.vector_store %arg7[%c0_6, %c0_7], %9 {strides = array<i32>} : memref<56x1024xf32, #tpu.memory_space<vmem>>, vector<56x1024xf32>,
    return
  }
  func.func @transform_0(%arg0: i32) -> (i32, i32) {
    %c0_i32 = arith.constant 0 : i32
    %c0_i32_0 = arith.constant 0 : i32
    %c0_i32_1 = arith.constant 0 : i32
    return %c0_i32, %c0_i32_0 : i32, i32
  }
  func.func @transform_1(%arg0: i32) -> (i32, i32) {
    %c0_i32 = arith.constant 0 : i32
    %c0_i32_0 = arith.constant 0 : i32
    %c0_i32_1 = arith.constant 0 : i32
    return %c0_i32, %c0_i32_0 : i32, i32
  }
  func.func @transform_2(%arg0: i32) -> (i32, i32) {
    %c0_i32 = arith.constant 0 : i32
    %c0_i32_0 = arith.constant 0 : i32
    %c0_i32_1 = arith.constant 0 : i32
    return %c0_i32, %c0_i32_0 : i32, i32
  }
  func.func @transform_3(%arg0: i32) -> (i32, i32) {
    %c0_i32 = arith.constant 0 : i32
    %c0_i32_0 = arith.constant 0 : i32
    %c0_i32_1 = arith.constant 0 : i32
    return %c0_i32, %c0_i32_0 : i32, i32
  }
  func.func @transform_4(%arg0: i32) -> (i32, i32) {
    %c0_i32 = arith.constant 0 : i32
    %c0_i32_0 = arith.constant 0 : i32
    return %c0_i32, %arg0 : i32, i32
  }
  func.func @transform_5(%arg0: i32) -> (i32, i32) {
    %c0_i32 = arith.constant 0 : i32
    %c0_i32_0 = arith.constant 0 : i32
    return %c0_i32, %arg0 : i32, i32
  }
  func.func @transform_6(%arg0: i32) -> (i32, i32) {
    %c0_i32 = arith.constant 0 : i32
    %c0_i32_0 = arith.constant 0 : i32
    return %c0_i32, %arg0 : i32, i32
  }
}

</mosaic_0001>

<llo_original>
// kernel: recognet_forward.2
$region0: #{recognet_forward.2}
  #allocation0 [shape = 'u32[]', space=smem, size = 0x4, offset = 0x4, fixed_abs, tag = 'smem constant byte address 0x4 - core index']
  #allocation1 [shape = 'u32[144,128]{1,0:T(1,128)}', space=vmem, size = 0x12000, scoped, tag = 'internal scratch']
  #allocation2 [shape = 'f32[16,256]{1,0:T(8,128)}', space=vmem, size = 0x4000, scoped, tag = 'scratch operand']
  %s0 = inlined_call_operand.vmem [shape: bf16[16,4096], index: 0, kind: input, shape index: {}]
  %s1 = inlined_call_operand.vmem [shape: bf16[4096,256], index: 1, kind: input, shape index: {}]
  %s2 = inlined_call_operand.vmem [shape: f32[1,256], index: 2, kind: input, shape index: {}, may-alias: {2,4,6}]
  %s3 = inlined_call_operand.vmem [shape: bf16[256,256], index: 3, kind: input, shape index: {}]
  %s4 = inlined_call_operand.vmem [shape: f32[1,256], index: 4, kind: input, shape index: {}, may-alias: {2,4,6}]
  %s5 = inlined_call_operand.vmem [shape: bf16[256,256], index: 5, kind: input, shape index: {}]
  %s6 = inlined_call_operand.vmem [shape: f32[1,256], index: 6, kind: input, shape index: {}, may-alias: {2,4,6}]
  %s7 = inlined_call_operand.vmem [shape: f32[16,256], index: 7, kind: output, shape index: {}]
  %s8 = sld [smem:[#allocation0]]
  $region92: #{recognet_forward.2} parent=0
    _
  %s10 = ssub.s32 1, %s8
  %s11 = scalar_select 0, %s10, %s8
  $region1: #{recognet_forward.2} parent=0
    #allocation3 [shape = 'u8[131072]{0}', space=vmem, size = 0x20000, scoped, tag = 'input window, operand 0']
    loop: start=0, step=1, limit=4
    $region2: #{recognet_forward.2} parent=1 // loop_pre_header
      _
    $region3: #{recognet_forward.2} parent=1 // loop_header
      %s13 = sphi 0, %s17
      %p14 = scmp.ge.s32.totalorder %s13, 4
      %s20 = sphi 0, %s32
      %s21 = sphi 0, %s28
      %s22 = sphi 0, %s20
      %s23 = sphi 0, %s21
      %s24 = sphi 0, %s22
      %s25 = sphi 0, %s23
      %s37 = sphi 0, %s39
      %s40 = sphi 0, %s37
      %s41 = sphi 0, %s40
      %s57 = sphi 0, %s41
      %s63 = sphi 0, %s65
      %s66 = sphi 0, %s63
      %s67 = sphi 0, %s66
      %s83 = sphi 0, %s67
      %s87 = sphi 0, %s87
      %s89 = sphi 0, %s87
      %s90 = sphi 0, %s89
      %s104 = sphi 0, %s90
      %s108 = sphi 0, %s108
      %s110 = sphi 0, %s108
      %s111 = sphi 0, %s110
      %s125 = sphi 0, %s111
      %s129 = sphi 0, %s129
      %s131 = sphi 0, %s129
      %s132 = sphi 0, %s131
      %s146 = sphi 0, %s132
      %s150 = sphi 0, %s150
      %s152 = sphi 0, %s150
      %s153 = sphi 0, %s152
      %s167 = sphi 0, %s153
      %s171 = sphi 0, %s171
      %s173 = sphi 0, %s171
      %s174 = sphi 0, %s173
      %s188 = sphi 0, %s174
      %s194 = sphi 0, %s196
      %s197 = sphi 0, %s194
      %s198 = sphi 0, %s197
      %s214 = sphi 0, %s198
    $region4: #{recognet_forward.2} parent=1 // loop_header_branch
      %16 = sbr.rel (%p14) target = $region8
    $region5: #{recognet_forward.2} parent=1 // loop_body
      %s18 = ssub.s32 %s13, 1
      %s19 = ssub.s32 %s13, 2
      %s26 = sadd.s32 1, %s21
      %p27 = scmp.ge.s32.totalorder %s26, 2
      %s28 = scalar_select %p27, 0, %s26
      %s29 = sadd.s32 1, %s20
      %s30 = scalar_select %p27, %s29, %s20
      %p31 = scmp.ge.s32.totalorder %s30, 1
      %s32 = scalar_select %p31, 0, %s30
      %s33 = ssub.s32 %s20, %s32
      %s34 = ssub.s32 %s21, %s28
      %s35 = sor.u32 %s33, %s34
      %p36 = scmp.eq.s32.totalorder %s35, 0
      %s38 = sadd.s32 %s37, 1
      %s39 = scalar_select %p36, %s37, %s38
      %p42 = pneg %p36
      %p43 = scmp.eq.s32.totalorder %s13, 1
      %p44 = por %p42, %p43
      %p45 = scmp.ne.s32.totalorder %s37, %s40
      %p46 = scmp.eq.s32.totalorder %s13, 0
      %p47 = por %p45, %p46
      %p48 = scmp.ne.s32.totalorder %s37, %s40
      %p49 = scmp.eq.s32.totalorder %s18, 1
      %p50 = por %p48, %p49
      %p51 = scmp.ne.s32.totalorder %s40, %s41
      %p52 = scmp.eq.s32.totalorder %s18, 0
      %p53 = por %p51, %p52
      %p54 = scmp.ne.s32.totalorder %s40, %s41
      %p55 = scmp.eq.s32.totalorder %s19, 1
      %p56 = por %p54, %p55
      %p58 = scmp.ne.s32.totalorder %s41, %s57
      %p59 = scmp.eq.s32.totalorder %s19, 0
      %p60 = por %p58, %p59
      %s61 = ssub.s32 %s21, %s28
      %p62 = scmp.eq.s32.totalorder %s61, 0
      %s64 = sadd.s32 %s63, 1
      %s65 = scalar_select %p62, %s63, %s64
      %p68 = pneg %p62
      %p69 = scmp.eq.s32.totalorder %s13, 1
      %p70 = por %p68, %p69
      %p71 = scmp.ne.s32.totalorder %s63, %s66
      %p72 = scmp.eq.s32.totalorder %s13, 0
      %p73 = por %p71, %p72
      %p74 = scmp.ne.s32.totalorder %s63, %s66
      %p75 = scmp.eq.s32.totalorder %s18, 1
      %p76 = por %p74, %p75
      %p77 = scmp.ne.s32.totalorder %s66, %s67
      %p78 = scmp.eq.s32.totalorder %s18, 0
      %p79 = por %p77, %p78
      %p80 = scmp.ne.s32.totalorder %s66, %s67
      %p81 = scmp.eq.s32.totalorder %s19, 1
      %p82 = por %p80, %p81
      %p84 = scmp.ne.s32.totalorder %s67, %s83
      %p85 = scmp.eq.s32.totalorder %s19, 0
      %p86 = por %p84, %p85
      %s88 = sadd.s32 %s87, 1
      %p91 = scmp.eq.s32.totalorder %s13, 1
      %p92 = scmp.ne.s32.totalorder %s87, %s89
      %p93 = scmp.eq.s32.totalorder %s13, 0
      %p94 = por %p92, %p93
      %p95 = scmp.ne.s32.totalorder %s87, %s89
      %p96 = scmp.eq.s32.totalorder %s18, 1
      %p97 = por %p95, %p96
      %p98 = scmp.ne.s32.totalorder %s89, %s90
      %p99 = scmp.eq.s32.totalorder %s18, 0
      %p100 = por %p98, %p99
      %p101 = scmp.ne.s32.totalorder %s89, %s90
      %p102 = scmp.eq.s32.totalorder %s19, 1
      %p103 = por %p101, %p102
      %p105 = scmp.ne.s32.totalorder %s90, %s104
      %p106 = scmp.eq.s32.totalorder %s19, 0
      %p107 = por %p105, %p106
      %s109 = sadd.s32 %s108, 1
      %p112 = scmp.eq.s32.totalorder %s13, 1
      %p113 = scmp.ne.s32.totalorder %s108, %s110
      %p114 = scmp.eq.s32.totalorder %s13, 0
      %p115 = por %p113, %p114
      %p116 = scmp.ne.s32.totalorder %s108, %s110
      %p117 = scmp.eq.s32.totalorder %s18, 1
      %p118 = por %p116, %p117
      %p119 = scmp.ne.s32.totalorder %s110, %s111
      %p120 = scmp.eq.s32.totalorder %s18, 0
      %p121 = por %p119, %p120
      %p122 = scmp.ne.s32.totalorder %s110, %s111
      %p123 = scmp.eq.s32.totalorder %s19, 1
      %p124 = por %p122, %p123
      %p126 = scmp.ne.s32.totalorder %s111, %s125
      %p127 = scmp.eq.s32.totalorder %s19, 0
      %p128 = por %p126, %p127
      %s130 = sadd.s32 %s129, 1
      %p133 = scmp.eq.s32.totalorder %s13, 1
      %p134 = scmp.ne.s32.totalorder %s129, %s131
      %p135 = scmp.eq.s32.totalorder %s13, 0
      %p136 = por %p134, %p135
      %p137 = scmp.ne.s32.totalorder %s129, %s131
      %p138 = scmp.eq.s32.totalorder %s18, 1
      %p139 = por %p137, %p138
      %p140 = scmp.ne.s32.totalorder %s131, %s132
      %p141 = scmp.eq.s32.totalorder %s18, 0
      %p142 = por %p140, %p141
      %p143 = scmp.ne.s32.totalorder %s131, %s132
      %p144 = scmp.eq.s32.totalorder %s19, 1
      %p145 = por %p143, %p144
      %p147 = scmp.ne.s32.totalorder %s132, %s146
      %p148 = scmp.eq.s32.totalorder %s19, 0
      %p149 = por %p147, %p148
      %s151 = sadd.s32 %s150, 1
      %p154 = scmp.eq.s32.totalorder %s13, 1
      %p155 = scmp.ne.s32.totalorder %s150, %s152
      %p156 = scmp.eq.s32.totalorder %s13, 0
      %p157 = por %p155, %p156
      %p158 = scmp.ne.s32.totalorder %s150, %s152
      %p159 = scmp.eq.s32.totalorder %s18, 1
      %p160 = por %p158, %p159
      %p161 = scmp.ne.s32.totalorder %s152, %s153
      %p162 = scmp.eq.s32.totalorder %s18, 0
      %p163 = por %p161, %p162
      %p164 = scmp.ne.s32.totalorder %s152, %s153
      %p165 = scmp.eq.s32.totalorder %s19, 1
      %p166 = por %p164, %p165
      %p168 = scmp.ne.s32.totalorder %s153, %s167
      %p169 = scmp.eq.s32.totalorder %s19, 0
      %p170 = por %p168, %p169
      %s172 = sadd.s32 %s171, 1
      %p175 = scmp.eq.s32.totalorder %s13, 1
      %p176 = scmp.ne.s32.totalorder %s171, %s173
      %p177 = scmp.eq.s32.totalorder %s13, 0
      %p178 = por %p176, %p177
      %p179 = scmp.ne.s32.totalorder %s171, %s173
      %p180 = scmp.eq.s32.totalorder %s18, 1
      %p181 = por %p179, %p180
      %p182 = scmp.ne.s32.totalorder %s173, %s174
      %p183 = scmp.eq.s32.totalorder %s18, 0
      %p184 = por %p182, %p183
      %p185 = scmp.ne.s32.totalorder %s173, %s174
      %p186 = scmp.eq.s32.totalorder %s19, 1
      %p187 = por %p185, %p186
      %p189 = scmp.ne.s32.totalorder %s174, %s188
      %p190 = scmp.eq.s32.totalorder %s19, 0
      %p191 = por %p189, %p190
      %s192 = ssub.s32 %s20, %s32
      %p193 = scmp.eq.s32.totalorder %s192, 0
      %s195 = sadd.s32 %s194, 1
      %s196 = scalar_select %p193, %s194, %s195
      %p199 = pneg %p193
      %p200 = scmp.eq.s32.totalorder %s13, 1
      %p201 = por %p199, %p200
      %p202 = scmp.ne.s32.totalorder %s194, %s197
      %p203 = scmp.eq.s32.totalorder %s13, 0
      %p204 = por %p202, %p203
      %p205 = scmp.ne.s32.totalorder %s194, %s197
      %p206 = scmp.eq.s32.totalorder %s18, 1
      %p207 = por %p205, %p206
      %p208 = scmp.ne.s32.totalorder %s197, %s198
      %p209 = scmp.eq.s32.totalorder %s18, 0
      %p210 = por %p208, %p209
      %p211 = scmp.ne.s32.totalorder %s197, %s198
      %p212 = scmp.eq.s32.totalorder %s19, 1
      %p213 = por %p211, %p212
      %p215 = scmp.ne.s32.totalorder %s198, %s214
      %p216 = scmp.eq.s32.totalorder %s19, 0
      %p217 = por %p215, %p216
      %p218 = scmp.le.s32.totalorder 1, %s13
      %p219 = scmp.lt.s32.totalorder %s13, 3
      %p220 = pnand %p218, %p219
      %p221 = pneg %p220
      // Predicated region
      $region9: #{recognet_forward.2} parent=5 // pred_check
        _
      $region10: #{recognet_forward.2} parent=5 // pred_check_branch
        %223 = sbr.rel (%p220) target = $region12
      $region11: #{recognet_forward.2} parent=5 // pred_region
        %s224 = ssub.s32 %s13, 1
        // Predicated region
        $region13: #{recognet_forward.2} parent=11 // pred_check
          %p225 = pneg %p100
        $region14: #{recognet_forward.2} parent=11 // pred_check_branch
          %227 = sbr.rel (%p225) target = $region16
        $region15: #{recognet_forward.2} parent=11 // pred_region
          _
        $region16: #{recognet_forward.2} parent=11 // pred_fallthru
          _
        // Predicated region
        $region17: #{recognet_forward.2} parent=11 // pred_check
          %p228 = pneg %p121
        $region18: #{recognet_forward.2} parent=11 // pred_check_branch
          %230 = sbr.rel (%p228) target = $region20
        $region19: #{recognet_forward.2} parent=11 // pred_region
          _
        $region20: #{recognet_forward.2} parent=11 // pred_fallthru
          _
        // Predicated region
        $region21: #{recognet_forward.2} parent=11 // pred_check
          %p231 = pneg %p142
        $region22: #{recognet_forward.2} parent=11 // pred_check_branch
          %233 = sbr.rel (%p231) target = $region24
        $region23: #{recognet_forward.2} parent=11 // pred_region
          _
        $region24: #{recognet_forward.2} parent=11 // pred_fallthru
          _
        // Predicated region
        $region25: #{recognet_forward.2} parent=11 // pred_check
          %p234 = pneg %p163
        $region26: #{recognet_forward.2} parent=11 // pred_check_branch
          %236 = sbr.rel (%p234) target = $region28
        $region27: #{recognet_forward.2} parent=11 // pred_region
          _
        $region28: #{recognet_forward.2} parent=11 // pred_fallthru
          _
        // Predicated region
        $region29: #{recognet_forward.2} parent=11 // pred_check
          %p237 = pneg %p184
        $region30: #{recognet_forward.2} parent=11 // pred_check_branch
          %239 = sbr.rel (%p237) target = $region32
        $region31: #{recognet_forward.2} parent=11 // pred_region
          _
        $region32: #{recognet_forward.2} parent=11 // pred_fallthru
          _
      $region12: #{recognet_forward.2} parent=5 // pred_fallthru
        _
      %p240 = scmp.lt.s32.totalorder %s13, 2
      // Predicated region
      $region33: #{recognet_forward.2} parent=5 // pred_check
        %p241 = pneg %p240
      $region34: #{recognet_forward.2} parent=5 // pred_check_branch
        %243 = sbr.rel (%p241) target = $region36
      $region35: #{recognet_forward.2} parent=5 // pred_region
        // Predicated region
        $region37: #{recognet_forward.2} parent=35 // pred_check
          %p244 = pneg %p47
        $region38: #{recognet_forward.2} parent=35 // pred_check_branch
          %246 = sbr.rel (%p244) target = $region40
        $region39: #{recognet_forward.2} parent=35 // pred_region
          %s247 = sand.u32 %s37, 1
          %s248 = sand.u32 %s37, 1
          %s249 = smul.addr %s248, 128
          %s250 = scalar_lea.vmem [#allocation3], %s249
          %s251 = smul.u32 2, %s20
          %s252 = smul.u32 16, %s21
          %s253 = smul.addr %s251, 32
          %s254 = sadd.s32 %s252, %s253
          %s255 = smul.addr %s254, 4
          %s256 = scalar_lea.vmem %s0, %s255
          // Predicated region
          $region41: #{recognet_forward.2} parent=39 // pred_check
            _
          $region42: #{recognet_forward.2} parent=39 // pred_check_branch
            %258 = sbr.rel (0) target = $region44
          $region43: #{recognet_forward.2} parent=39 // pred_region
            // Predicated region
            $region45: #{recognet_forward.2} parent=43 // pred_check
              _
            $region46: #{recognet_forward.2} parent=43 // pred_check_branch
              %260 = sbr.rel (0) target = $region48
            $region47: #{recognet_forward.2} parent=43 // pred_region
              loop: start=0, step=1, limit=1
              $region49: #{recognet_forward.2} parent=47 // loop_pre_header
                _
              $region50: #{recognet_forward.2} parent=47 // loop_header
                %s262 = sphi 0, %s266
                %p263 = scmp.ge.s32.totalorder %s262, 1
                %s267 = sphi %s256, %s256
                %s268 = sphi %s250, %s250
              $region51: #{recognet_forward.2} parent=47 // loop_header_branch
                %265 = sbr.rel (%p263) target = $region55
              $region52: #{recognet_forward.2} parent=47 // loop_body
                %v269 = vld [vmem:[%s267] sm:$0xff]
                %270 = vst [vmem:[%s268] sm:$0xff] %v269
                %v271 = vld [vmem:[%s267 + $0x8] sm:$0xff]
                %272 = vst [vmem:[%s268 + $0x8] sm:$0xff] %v271
                %v273 = vld [vmem:[%s267 + $0x10] sm:$0xff]
                %274 = vst [vmem:[%s268 + $0x10] sm:$0xff] %v273
                %v275 = vld [vmem:[%s267 + $0x18] sm:$0xff]
                %276 = vst [vmem:[%s268 + $0x18] sm:$0xff] %v275
                %v277 = vld [vmem:[%s267 + $0x20] sm:$0xff]
                %278 = vst [vmem:[%s268 + $0x20] sm:$0xff] %v277
                %v279 = vld [vmem:[%s267 + $0x28] sm:$0xff]
                %280 = vst [vmem:[%s268 + $0x28] sm:$0xff] %v279
                %v281 = vld [vmem:[%s267 + $0x30] sm:$0xff]
                %282 = vst [vmem:[%s268 + $0x30] sm:$0xff] %v281
                %v283 = vld [vmem:[%s267 + $0x38] sm:$0xff]
                %284 = vst [vmem:[%s268 + $0x38] sm:$0xff] %v283
                %v285 = vld [vmem:[%s267 + $0x80] sm:$0xff]
                %286 = vst [vmem:[%s268 + $0x40] sm:$0xff] %v285
                %v287 = vld [vmem:[%s267 + $0x88] sm:$0xff]
                %288 = vst [vmem:[%s268 + $0x48] sm:$0xff] %v287
                %v289 = vld [vmem:[%s267 + $0x90] sm:$0xff]
                %290 = vst [vmem:[%s268 + $0x50] sm:$0xff] %v289
                %v291 = vld [vmem:[%s267 + $0x98] sm:$0xff]
                %292 = vst [vmem:[%s268 + $0x58] sm:$0xff] %v291
                %v293 = vld [vmem:[%s267 + $0xa0] sm:$0xff]
                %294 = vst [vmem:[%s268 + $0x60] sm:$0xff] %v293
                %v295 = vld [vmem:[%s267 + $0xa8] sm:$0xff]
                %296 = vst [vmem:[%s268 + $0x68] sm:$0xff] %v295
                %v297 = vld [vmem:[%s267 + $0xb0] sm:$0xff]
                %298 = vst [vmem:[%s268 + $0x70] sm:$0xff] %v297
                %v299 = vld [vmem:[%s267 + $0xb8] sm:$0xff]
                %300 = vst [vmem:[%s268 + $0x78] sm:$0xff] %v299
              $region53: #{recognet_forward.2} parent=47 // loop_footer
                %s266 = sadd.s32 1, %s262
              $region54: #{recognet_forward.2} parent=47 // loop_footer_branch
                %261 = sbr.rel target = $region50
              $region55: #{recognet_forward.2} parent=47 // loop_exit
                _
            $region48: #{recognet_forward.2} parent=43 // pred_fallthru
              _
            // Predicated region
            $region56: #{recognet_forward.2} parent=43 // pred_check
              _
            $region57: #{recognet_forward.2} parent=43 // pred_check_branch
              %302 = sbr.rel target = $region59
            $region58: #{recognet_forward.2} parent=43 // pred_region
              _
            $region59: #{recognet_forward.2} parent=43 // pred_fallthru
              _
          $region44: #{recognet_forward.2} parent=39 // pred_fallthru
            _
          %303 = vnop
        $region40: #{recognet_forward.2} parent=35 // pred_fallthru
          _
        // Predicated region
        $region60: #{recognet_forward.2} parent=35 // pred_check
          %p304 = pneg %p73
        $region61: #{recognet_forward.2} parent=35 // pred_check_branch
          %306 = sbr.rel (%p304) target = $region63
        $region62: #{recognet_forward.2} parent=35 // pred_region
          %s307 = smul.u32 256, %s21
          %p308 = scmp.lt.s32.totalorder %s307, 511
          %s309 = scalar_select %p308, %s307, 511
          %s310 = smul.addr %s309, 2
          %s311 = smul.addr %s310, 4
          %s312 = scalar_lea.vmem %s1, %s311
          %s313 = smul.u32 256, %s21
        $region63: #{recognet_forward.2} parent=35 // pred_fallthru
          _
      $region36: #{recognet_forward.2} parent=5 // pred_fallthru
        _
      %p314 = scmp.le.s32.totalorder 1, %s13
      %p315 = scmp.lt.s32.totalorder %s13, 3
      %p316 = pnand %p314, %p315
      %p317 = pneg %p316
      // Predicated region
      $region64: #{recognet_forward.2} parent=5 // pred_check
        _
      $region65: #{recognet_forward.2} parent=5 // pred_check_branch
        %319 = sbr.rel (%p316) target = $region67
      $region66: #{recognet_forward.2} parent=5 // pred_region
        %s320 = ssub.s32 %s13, 1
        %s321 = sand.u32 %s40, 1
        %s322 = sand.u32 %s40, 1
        %s323 = smul.addr %s322, 128
        %s324 = scalar_lea.vmem [#allocation3], %s323
        // Predicated region
        $region68: #{recognet_forward.2} parent=66 // pred_check
          %p325 = pneg %p53
        $region69: #{recognet_forward.2} parent=66 // pred_check_branch
          %327 = sbr.rel (%p325) target = $region71
        $region70: #{recognet_forward.2} parent=66 // pred_region
          _
        $region71: #{recognet_forward.2} parent=66 // pred_fallthru
          _
        %s328 = sand.u32 %s40, 1
        %s329 = sand.u32 %s40, 1
        %s330 = smul.addr %s329, 128
        %s331 = scalar_lea.vmem [#allocation3], %s330
        %p332 = pneg %p53
        %p333 = pneg %p50
        %s334 = smul.u32 256, %s23
        %p335 = scmp.lt.s32.totalorder %s334, 511
        %s336 = scalar_select %p335, %s334, 511
        %s337 = smul.addr %s336, 2
        %s338 = smul.addr %s337, 4
        %s339 = scalar_lea.vmem %s1, %s338
        %p340 = pneg %p79
        %p341 = pneg %p76
        %p342 = pneg %p100
        %p343 = pneg %p97
        %p344 = pneg %p121
        %p345 = pneg %p118
        %p346 = pneg %p142
        %p347 = pneg %p139
        %p348 = pneg %p163
        %p349 = pneg %p160
        %p350 = pneg %p184
        %p351 = pneg %p181
        %p352 = pneg %p210
        %p353 = pneg %p207
        %s354 = smul.u32 2, %s22
        %p355 = scmp.lt.s32.totalorder %s354, 1
        %s356 = scalar_select %p355, %s354, 1
        %s357 = smul.addr %s356, 2
        %s358 = smul.addr %s357, 8
        %s359 = scalar_lea.vmem %s7, %s358
        %s360 = smul.u32 2, %s22
        %s361 = smul.u32 16, %s23
        %s362 = smul.u32 256, %s23
        %p363 = scmp.lt.s32.totalorder %s362, 511
        %s364 = scalar_select %p363, %s362, 511
        %s365 = smul.addr %s364, 2
        %s366 = smul.addr %s365, 4
        %s367 = scalar_lea.vmem %s1, %s366
        %s368 = smul.u32 256, %s23
        %s369 = smul.u32 2, %s22
        %p370 = scmp.lt.s32.totalorder %s369, 1
        %s371 = scalar_select %p370, %s369, 1
        %s372 = smul.addr %s371, 2
        %s373 = smul.addr %s372, 8
        %s374 = scalar_lea.vmem %s7, %s373
        %s375 = smul.u32 2, %s22
        %p376 = scmp.eq.s32.totalorder %s23, 0
        // Predicated region
        $region72: #{recognet_forward.2} parent=66 // pred_check
          %p377 = pneg %p376
        $region73: #{recognet_forward.2} parent=66 // pred_check_branch
          %379 = sbr.rel (%p377) target = $region75
        $region74: #{recognet_forward.2} parent=66 // pred_region
          %380 = vst [vmem:[#allocation2] sm:$0xff] 0.0
          %381 = vst [vmem:[#allocation2 + $0x8] sm:$0xff] 0.0
          %382 = vst [vmem:[#allocation2 + $0x10] sm:$0xff] 0.0
          %383 = vst [vmem:[#allocation2 + $0x18] sm:$0xff] 0.0
        $region75: #{recognet_forward.2} parent=66 // pred_fallthru
          _
        %v384 = vld [vmem:[#allocation2] sm:$0xff]
        %v385 = vld [vmem:[#allocation2 + $0x8] sm:$0xff]
        %v386 = vld [vmem:[#allocation2 + $0x10] sm:$0xff]
        %v387 = vld [vmem:[#allocation2 + $0x18] sm:$0xff]
        %v388 = vld [vmem:[%s324] sm:$0xff]
        %v389 = vld [vmem:[%s324 + $0x8] sm:$0xff]
        %v390 = vld [vmem:[%s324 + $0x10] sm:$0xff]
        %v391 = vld [vmem:[%s324 + $0x18] sm:$0xff]
        %v392 = vld [vmem:[%s324 + $0x20] sm:$0xff]
        %v393 = vld [vmem:[%s324 + $0x28] sm:$0xff]
        %v394 = vld [vmem:[%s324 + $0x30] sm:$0xff]
        %v395 = vld [vmem:[%s324 + $0x38] sm:$0xff]
        %v396 = vld [vmem:[%s324 + $0x40] sm:$0xff]
        %v397 = vld [vmem:[%s324 + $0x48] sm:$0xff]
        %v398 = vld [vmem:[%s324 + $0x50] sm:$0xff]
        %v399 = vld [vmem:[%s324 + $0x58] sm:$0xff]
        %v400 = vld [vmem:[%s324 + $0x60] sm:$0xff]
        %v401 = vld [vmem:[%s324 + $0x68] sm:$0xff]
        %v402 = vld [vmem:[%s324 + $0x70] sm:$0xff]
        %v403 = vld [vmem:[%s324 + $0x78] sm:$0xff]
        %v404 = vld [vmem:[%s367] sm:$0xff]
        %v405 = vld [vmem:[%s367 + $0x8] sm:$0xff]
        %v406 = vld [vmem:[%s367 + $0x10] sm:$0xff]
        %v407 = vld [vmem:[%s367 + $0x18] sm:$0xff]
        %v408 = vld [vmem:[%s367 + $0x20] sm:$0xff]
        %v409 = vld [vmem:[%s367 + $0x28] sm:$0xff]
        %v410 = vld [vmem:[%s367 + $0x30] sm:$0xff]
        %v411 = vld [vmem:[%s367 + $0x38] sm:$0xff]
        %v412 = vld [vmem:[%s367 + $0x40] sm:$0xff]
        %v413 = vld [vmem:[%s367 + $0x48] sm:$0xff]
        %v414 = vld [vmem:[%s367 + $0x50] sm:$0xff]
        %v415 = vld [vmem:[%s367 + $0x58] sm:$0xff]
        %v416 = vld [vmem:[%s367 + $0x60] sm:$0xff]
        %v417 = vld [vmem:[%s367 + $0x68] sm:$0xff]
        %v418 = vld [vmem:[%s367 + $0x70] sm:$0xff]
        %v419 = vld [vmem:[%s367 + $0x78] sm:$0xff]
        %v420 = vld [vmem:[%s367 + $0x80] sm:$0xff]
        %v421 = vld [vmem:[%s367 + $0x88] sm:$0xff]
        %v422 = vld [vmem:[%s367 + $0x90] sm:$0xff]
        %v423 = vld [vmem:[%s367 + $0x98] sm:$0xff]
        %v424 = vld [vmem:[%s367 + $0xa0] sm:$0xff]
        %v425 = vld [vmem:[%s367 + $0xa8] sm:$0xff]
        %v426 = vld [vmem:[%s367 + $0xb0] sm:$0xff]
        %v427 = vld [vmem:[%s367 + $0xb8] sm:$0xff]
        %v428 = vld [vmem:[%s367 + $0xc0] sm:$0xff]
        %v429 = vld [vmem:[%s367 + $0xc8] sm:$0xff]
        %v430 = vld [vmem:[%s367 + $0xd0] sm:$0xff]
        %v431 = vld [vmem:[%s367 + $0xd8] sm:$0xff]
        %v432 = vld [vmem:[%s367 + $0xe0] sm:$0xff]
        %v433 = vld [vmem:[%s367 + $0xe8] sm:$0xff]
        %v434 = vld [vmem:[%s367 + $0xf0] sm:$0xff]
        %v435 = vld [vmem:[%s367 + $0xf8] sm:$0xff]
        %v436 = vld [vmem:[%s367 + $0x100] sm:$0xff]
        %v437 = vld [vmem:[%s367 + $0x108] sm:$0xff]
        %v438 = vld [vmem:[%s367 + $0x110] sm:$0xff]
        %v439 = vld [vmem:[%s367 + $0x118] sm:$0xff]
        %v440 = vld [vmem:[%s367 + $0x120] sm:$0xff]
        %v441 = vld [vmem:[%s367 + $0x128] sm:$0xff]
        %v442 = vld [vmem:[%s367 + $0x130] sm:$0xff]
        %v443 = vld [vmem:[%s367 + $0x138] sm:$0xff]
        %v444 = vld [vmem:[%s367 + $0x140] sm:$0xff]
        %v445 = vld [vmem:[%s367 + $0x148] sm:$0xff]
        %v446 = vld [vmem:[%s367 + $0x150] sm:$0xff]
        %v447 = vld [vmem:[%s367 + $0x158] sm:$0xff]
        %v448 = vld [vmem:[%s367 + $0x160] sm:$0xff]
        %v449 = vld [vmem:[%s367 + $0x168] sm:$0xff]
        %v450 = vld [vmem:[%s367 + $0x170] sm:$0xff]
        %v451 = vld [vmem:[%s367 + $0x178] sm:$0xff]
        %v452 = vld [vmem:[%s367 + $0x180] sm:$0xff]
        %v453 = vld [vmem:[%s367 + $0x188] sm:$0xff]
        %v454 = vld [vmem:[%s367 + $0x190] sm:$0xff]
        %v455 = vld [vmem:[%s367 + $0x198] sm:$0xff]
        %v456 = vld [vmem:[%s367 + $0x1a0] sm:$0xff]
        %v457 = vld [vmem:[%s367 + $0x1a8] sm:$0xff]
        %v458 = vld [vmem:[%s367 + $0x1b0] sm:$0xff]
        %v459 = vld [vmem:[%s367 + $0x1b8] sm:$0xff]
        %v460 = vld [vmem:[%s367 + $0x1c0] sm:$0xff]
        %v461 = vld [vmem:[%s367 + $0x1c8] sm:$0xff]
        %v462 = vld [vmem:[%s367 + $0x1d0] sm:$0xff]
        %v463 = vld [vmem:[%s367 + $0x1d8] sm:$0xff]
        %v464 = vld [vmem:[%s367 + $0x1e0] sm:$0xff]
        %v465 = vld [vmem:[%s367 + $0x1e8] sm:$0xff]
        %v466 = vld [vmem:[%s367 + $0x1f0] sm:$0xff]
        %v467 = vld [vmem:[%s367 + $0x1f8] sm:$0xff]
        %v468 = vld [vmem:[%s367 + $0x200] sm:$0xff]
        %v469 = vld [vmem:[%s367 + $0x208] sm:$0xff]
        %v470 = vld [vmem:[%s367 + $0x210] sm:$0xff]
        %v471 = vld [vmem:[%s367 + $0x218] sm:$0xff]
        %v472 = vld [vmem:[%s367 + $0x220] sm:$0xff]
        %v473 = vld [vmem:[%s367 + $0x228] sm:$0xff]
        %v474 = vld [vmem:[%s367 + $0x230] sm:$0xff]
        %v475 = vld [vmem:[%s367 + $0x238] sm:$0xff]
        %v476 = vld [vmem:[%s367 + $0x240] sm:$0xff]
        %v477 = vld [vmem:[%s367 + $0x248] sm:$0xff]
        %v478 = vld [vmem:[%s367 + $0x250] sm:$0xff]
        %v479 = vld [vmem:[%s367 + $0x258] sm:$0xff]
        %v480 = vld [vmem:[%s367 + $0x260] sm:$0xff]
        %v481 = vld [vmem:[%s367 + $0x268] sm:$0xff]
        %v482 = vld [vmem:[%s367 + $0x270] sm:$0xff]
        %v483 = vld [vmem:[%s367 + $0x278] sm:$0xff]
        %v484 = vld [vmem:[%s367 + $0x280] sm:$0xff]
        %v485 = vld [vmem:[%s367 + $0x288] sm:$0xff]
        %v486 = vld [vmem:[%s367 + $0x290] sm:$0xff]
        %v487 = vld [vmem:[%s367 + $0x298] sm:$0xff]
        %v488 = vld [vmem:[%s367 + $0x2a0] sm:$0xff]
        %v489 = vld [vmem:[%s367 + $0x2a8] sm:$0xff]
        %v490 = vld [vmem:[%s367 + $0x2b0] sm:$0xff]
        %v491 = vld [vmem:[%s367 + $0x2b8] sm:$0xff]
        %v492 = vld [vmem:[%s367 + $0x2c0] sm:$0xff]
        %v493 = vld [vmem:[%s367 + $0x2c8] sm:$0xff]
        %v494 = vld [vmem:[%s367 + $0x2d0] sm:$0xff]
        %v495 = vld [vmem:[%s367 + $0x2d8] sm:$0xff]
        %v496 = vld [vmem:[%s367 + $0x2e0] sm:$0xff]
        %v497 = vld [vmem:[%s367 + $0x2e8] sm:$0xff]
        %v498 = vld [vmem:[%s367 + $0x2f0] sm:$0xff]
        %v499 = vld [vmem:[%s367 + $0x2f8] sm:$0xff]
        %v500 = vld [vmem:[%s367 + $0x300] sm:$0xff]
        %v501 = vld [vmem:[%s367 + $0x308] sm:$0xff]
        %v502 = vld [vmem:[%s367 + $0x310] sm:$0xff]
        %v503 = vld [vmem:[%s367 + $0x318] sm:$0xff]
        %v504 = vld [vmem:[%s367 + $0x320] sm:$0xff]
        %v505 = vld [vmem:[%s367 + $0x328] sm:$0xff]
        %v506 = vld [vmem:[%s367 + $0x330] sm:$0xff]
        %v507 = vld [vmem:[%s367 + $0x338] sm:$0xff]
        %v508 = vld [vmem:[%s367 + $0x340] sm:$0xff]
        %v509 = vld [vmem:[%s367 + $0x348] sm:$0xff]
        %v510 = vld [vmem:[%s367 + $0x350] sm:$0xff]
        %v511 = vld [vmem:[%s367 + $0x358] sm:$0xff]
        %v512 = vld [vmem:[%s367 + $0x360] sm:$0xff]
        %v513 = vld [vmem:[%s367 + $0x368] sm:$0xff]
        %v514 = vld [vmem:[%s367 + $0x370] sm:$0xff]
        %v515 = vld [vmem:[%s367 + $0x378] sm:$0xff]
        %v516 = vld [vmem:[%s367 + $0x380] sm:$0xff]
        %v517 = vld [vmem:[%s367 + $0x388] sm:$0xff]
        %v518 = vld [vmem:[%s367 + $0x390] sm:$0xff]
        %v519 = vld [vmem:[%s367 + $0x398] sm:$0xff]
        %v520 = vld [vmem:[%s367 + $0x3a0] sm:$0xff]
        %v521 = vld [vmem:[%s367 + $0x3a8] sm:$0xff]
        %v522 = vld [vmem:[%s367 + $0x3b0] sm:$0xff]
        %v523 = vld [vmem:[%s367 + $0x3b8] sm:$0xff]
        %v524 = vld [vmem:[%s367 + $0x3c0] sm:$0xff]
        %v525 = vld [vmem:[%s367 + $0x3c8] sm:$0xff]
        %v526 = vld [vmem:[%s367 + $0x3d0] sm:$0xff]
        %v527 = vld [vmem:[%s367 + $0x3d8] sm:$0xff]
        %v528 = vld [vmem:[%s367 + $0x3e0] sm:$0xff]
        %v529 = vld [vmem:[%s367 + $0x3e8] sm:$0xff]
        %v530 = vld [vmem:[%s367 + $0x3f0] sm:$0xff]
        %v531 = vld [vmem:[%s367 + $0x3f8] sm:$0xff]
        %v532 = vld [vmem:[%s367 + $0x400] sm:$0xff]
        %v533 = vld [vmem:[%s367 + $0x408] sm:$0xff]
        %v534 = vld [vmem:[%s367 + $0x410] sm:$0xff]
        %v535 = vld [vmem:[%s367 + $0x418] sm:$0xff]
        %v536 = vld [vmem:[%s367 + $0x420] sm:$0xff]
        %v537 = vld [vmem:[%s367 + $0x428] sm:$0xff]
        %v538 = vld [vmem:[%s367 + $0x430] sm:$0xff]
        %v539 = vld [vmem:[%s367 + $0x438] sm:$0xff]
        %v540 = vld [vmem:[%s367 + $0x440] sm:$0xff]
        %v541 = vld [vmem:[%s367 + $0x448] sm:$0xff]
        %v542 = vld [vmem:[%s367 + $0x450] sm:$0xff]
        %v543 = vld [vmem:[%s367 + $0x458] sm:$0xff]
        %v544 = vld [vmem:[%s367 + $0x460] sm:$0xff]
        %v545 = vld [vmem:[%s367 + $0x468] sm:$0xff]
        %v546 = vld [vmem:[%s367 + $0x470] sm:$0xff]
        %v547 = vld [vmem:[%s367 + $0x478] sm:$0xff]
        %v548 = vld [vmem:[%s367 + $0x480] sm:$0xff]
        %v549 = vld [vmem:[%s367 + $0x488] sm:$0xff]
        %v550 = vld [vmem:[%s367 + $0x490] sm:$0xff]
        %v551 = vld [vmem:[%s367 + $0x498] sm:$0xff]
        %v552 = vld [vmem:[%s367 + $0x4a0] sm:$0xff]
        %v553 = vld [vmem:[%s367 + $0x4a8] sm:$0xff]
        %v554 = vld [vmem:[%s367 + $0x4b0] sm:$0xff]
        %v555 = vld [vmem:[%s367 + $0x4b8] sm:$0xff]
        %v556 = vld [vmem:[%s367 + $0x4c0] sm:$0xff]
        %v557 = vld [vmem:[%s367 + $0x4c8] sm:$0xff]
        %v558 = vld [vmem:[%s367 + $0x4d0] sm:$0xff]
        %v559 = vld [vmem:[%s367 + $0x4d8] sm:$0xff]
        %v560 = vld [vmem:[%s367 + $0x4e0] sm:$0xff]
        %v561 = vld [vmem:[%s367 + $0x4e8] sm:$0xff]
        %v562 = vld [vmem:[%s367 + $0x4f0] sm:$0xff]
        %v563 = vld [vmem:[%s367 + $0x4f8] sm:$0xff]
        %v564 = vld [vmem:[%s367 + $0x500] sm:$0xff]
        %v565 = vld [vmem:[%s367 + $0x508] sm:$0xff]
        %v566 = vld [vmem:[%s367 + $0x510] sm:$0xff]
        %v567 = vld [vmem:[%s367 + $0x518] sm:$0xff]
        %v568 = vld [vmem:[%s367 + $0x520] sm:$0xff]
        %v569 = vld [vmem:[%s367 + $0x528] sm:$0xff]
        %v570 = vld [vmem:[%s367 + $0x530] sm:$0xff]
        %v571 = vld [vmem:[%s367 + $0x538] sm:$0xff]
        %v572 = vld [vmem:[%s367 + $0x540] sm:$0xff]
        %v573 = vld [vmem:[%s367 + $0x548] sm:$0xff]
        %v574 = vld [vmem:[%s367 + $0x550] sm:$0xff]
        %v575 = vld [vmem:[%s367 + $0x558] sm:$0xff]
        %v576 = vld [vmem:[%s367 + $0x560] sm:$0xff]
        %v577 = vld [vmem:[%s367 + $0x568] sm:$0xff]
        %v578 = vld [vmem:[%s367 + $0x570] sm:$0xff]
        %v579 = vld [vmem:[%s367 + $0x578] sm:$0xff]
        %v580 = vld [vmem:[%s367 + $0x580] sm:$0xff]
        %v581 = vld [vmem:[%s367 + $0x588] sm:$0xff]
        %v582 = vld [vmem:[%s367 + $0x590] sm:$0xff]
        %v583 = vld [vmem:[%s367 + $0x598] sm:$0xff]
        %v584 = vld [vmem:[%s367 + $0x5a0] sm:$0xff]
        %v585 = vld [vmem:[%s367 + $0x5a8] sm:$0xff]
        %v586 = vld [vmem:[%s367 + $0x5b0] sm:$0xff]
        %v587 = vld [vmem:[%s367 + $0x5b8] sm:$0xff]
        %v588 = vld [vmem:[%s367 + $0x5c0] sm:$0xff]
        %v589 = vld [vmem:[%s367 + $0x5c8] sm:$0xff]
        %v590 = vld [vmem:[%s367 + $0x5d0] sm:$0xff]
        %v591 = vld [vmem:[%s367 + $0x5d8] sm:$0xff]
        %v592 = vld [vmem:[%s367 + $0x5e0] sm:$0xff]
        %v593 = vld [vmem:[%s367 + $0x5e8] sm:$0xff]
        %v594 = vld [vmem:[%s367 + $0x5f0] sm:$0xff]
        %v595 = vld [vmem:[%s367 + $0x5f8] sm:$0xff]
        %v596 = vld [vmem:[%s367 + $0x600] sm:$0xff]
        %v597 = vld [vmem:[%s367 + $0x608] sm:$0xff]
        %v598 = vld [vmem:[%s367 + $0x610] sm:$0xff]
        %v599 = vld [vmem:[%s367 + $0x618] sm:$0xff]
        %v600 = vld [vmem:[%s367 + $0x620] sm:$0xff]
        %v601 = vld [vmem:[%s367 + $0x628] sm:$0xff]
        %v602 = vld [vmem:[%s367 + $0x630] sm:$0xff]
        %v603 = vld [vmem:[%s367 + $0x638] sm:$0xff]
        %v604 = vld [vmem:[%s367 + $0x640] sm:$0xff]
        %v605 = vld [vmem:[%s367 + $0x648] sm:$0xff]
        %v606 = vld [vmem:[%s367 + $0x650] sm:$0xff]
        %v607 = vld [vmem:[%s367 + $0x658] sm:$0xff]
        %v608 = vld [vmem:[%s367 + $0x660] sm:$0xff]
        %v609 = vld [vmem:[%s367 + $0x668] sm:$0xff]
        %v610 = vld [vmem:[%s367 + $0x670] sm:$0xff]
        %v611 = vld [vmem:[%s367 + $0x678] sm:$0xff]
        %v612 = vld [vmem:[%s367 + $0x680] sm:$0xff]
        %v613 = vld [vmem:[%s367 + $0x688] sm:$0xff]
        %v614 = vld [vmem:[%s367 + $0x690] sm:$0xff]
        %v615 = vld [vmem:[%s367 + $0x698] sm:$0xff]
        %v616 = vld [vmem:[%s367 + $0x6a0] sm:$0xff]
        %v617 = vld [vmem:[%s367 + $0x6a8] sm:$0xff]
        %v618 = vld [vmem:[%s367 + $0x6b0] sm:$0xff]
        %v619 = vld [vmem:[%s367 + $0x6b8] sm:$0xff]
        %v620 = vld [vmem:[%s367 + $0x6c0] sm:$0xff]
        %v621 = vld [vmem:[%s367 + $0x6c8] sm:$0xff]
        %v622 = vld [vmem:[%s367 + $0x6d0] sm:$0xff]
        %v623 = vld [vmem:[%s367 + $0x6d8] sm:$0xff]
        %v624 = vld [vmem:[%s367 + $0x6e0] sm:$0xff]
        %v625 = vld [vmem:[%s367 + $0x6e8] sm:$0xff]
        %v626 = vld [vmem:[%s367 + $0x6f0] sm:$0xff]
        %v627 = vld [vmem:[%s367 + $0x6f8] sm:$0xff]
        %v628 = vld [vmem:[%s367 + $0x700] sm:$0xff]
        %v629 = vld [vmem:[%s367 + $0x708] sm:$0xff]
        %v630 = vld [vmem:[%s367 + $0x710] sm:$0xff]
        %v631 = vld [vmem:[%s367 + $0x718] sm:$0xff]
        %v632 = vld [vmem:[%s367 + $0x720] sm:$0xff]
        %v633 = vld [vmem:[%s367 + $0x728] sm:$0xff]
        %v634 = vld [vmem:[%s367 + $0x730] sm:$0xff]
        %v635 = vld [vmem:[%s367 + $0x738] sm:$0xff]
        %v636 = vld [vmem:[%s367 + $0x740] sm:$0xff]
        %v637 = vld [vmem:[%s367 + $0x748] sm:$0xff]
        %v638 = vld [vmem:[%s367 + $0x750] sm:$0xff]
        %v639 = vld [vmem:[%s367 + $0x758] sm:$0xff]
        %v640 = vld [vmem:[%s367 + $0x760] sm:$0xff]
        %v641 = vld [vmem:[%s367 + $0x768] sm:$0xff]
        %v642 = vld [vmem:[%s367 + $0x770] sm:$0xff]
        %v643 = vld [vmem:[%s367 + $0x778] sm:$0xff]
        %v644 = vld [vmem:[%s367 + $0x780] sm:$0xff]
        %v645 = vld [vmem:[%s367 + $0x788] sm:$0xff]
        %v646 = vld [vmem:[%s367 + $0x790] sm:$0xff]
        %v647 = vld [vmem:[%s367 + $0x798] sm:$0xff]
        %v648 = vld [vmem:[%s367 + $0x7a0] sm:$0xff]
        %v649 = vld [vmem:[%s367 + $0x7a8] sm:$0xff]
        %v650 = vld [vmem:[%s367 + $0x7b0] sm:$0xff]
        %v651 = vld [vmem:[%s367 + $0x7b8] sm:$0xff]
        %v652 = vld [vmem:[%s367 + $0x7c0] sm:$0xff]
        %v653 = vld [vmem:[%s367 + $0x7c8] sm:$0xff]
        %v654 = vld [vmem:[%s367 + $0x7d0] sm:$0xff]
        %v655 = vld [vmem:[%s367 + $0x7d8] sm:$0xff]
        %v656 = vld [vmem:[%s367 + $0x7e0] sm:$0xff]
        %v657 = vld [vmem:[%s367 + $0x7e8] sm:$0xff]
        %v658 = vld [vmem:[%s367 + $0x7f0] sm:$0xff]
        %v659 = vld [vmem:[%s367 + $0x7f8] sm:$0xff]
        %v676 = vunpack.c.l.b16 %v388
        %v677 = vunpack.c.h.b16 %v388
        %v678 = vunpack.c.l.b16 %v389
        %v679 = vunpack.c.h.b16 %v389
        %v680 = vunpack.c.l.b16 %v390
        %v681 = vunpack.c.h.b16 %v390
        %v682 = vunpack.c.l.b16 %v391
        %v683 = vunpack.c.h.b16 %v391
        %v684 = vunpack.c.l.b16 %v392
        %v685 = vunpack.c.h.b16 %v392
        %v686 = vunpack.c.l.b16 %v393
        %v687 = vunpack.c.h.b16 %v393
        %v688 = vunpack.c.l.b16 %v394
        %v689 = vunpack.c.h.b16 %v394
        %v690 = vunpack.c.l.b16 %v395
        %v691 = vunpack.c.h.b16 %v395
        %v692 = vunpack.c.l.b16 %v396
        %v693 = vunpack.c.h.b16 %v396
        %v694 = vunpack.c.l.b16 %v397
        %v695 = vunpack.c.h.b16 %v397
        %v696 = vunpack.c.l.b16 %v398
        %v697 = vunpack.c.h.b16 %v398
        %v698 = vunpack.c.l.b16 %v399
        %v699 = vunpack.c.h.b16 %v399
        %v700 = vunpack.c.l.b16 %v400
        %v701 = vunpack.c.h.b16 %v400
        %v702 = vunpack.c.l.b16 %v401
        %v703 = vunpack.c.h.b16 %v401
        %v704 = vunpack.c.l.b16 %v402
        %v705 = vunpack.c.h.b16 %v402
        %v706 = vunpack.c.l.b16 %v403
        %v707 = vunpack.c.h.b16 %v403
        %v708 = vpack.c.b16 %v692, %v676
        %v709 = vpack.c.b16 %v693, %v677
        %v710 = vpack.c.b16 %v694, %v678
        %v711 = vpack.c.b16 %v695, %v679
        %v712 = vpack.c.b16 %v696, %v680
        %v713 = vpack.c.b16 %v697, %v681
        %v714 = vpack.c.b16 %v698, %v682
        %v715 = vpack.c.b16 %v699, %v683
        %v716 = vpack.c.b16 %v700, %v684
        %v717 = vpack.c.b16 %v701, %v685
        %v718 = vpack.c.b16 %v702, %v686
        %v719 = vpack.c.b16 %v703, %v687
        %v720 = vpack.c.b16 %v704, %v688
        %v721 = vpack.c.b16 %v705, %v689
        %v722 = vpack.c.b16 %v706, %v690
        %v723 = vpack.c.b16 %v707, %v691
        %v996 = vunpack.c.l.b16 %v404
        %v997 = vunpack.c.h.b16 %v404
        %v998 = vunpack.c.l.b16 %v405
        %v999 = vunpack.c.h.b16 %v405
        %v1000 = vunpack.c.l.b16 %v406
        %v1001 = vunpack.c.h.b16 %v406
        %v1002 = vunpack.c.l.b16 %v407
        %v1003 = vunpack.c.h.b16 %v407
        %v1004 = vunpack.c.l.b16 %v408
        %v1005 = vunpack.c.h.b16 %v408
        %v1006 = vunpack.c.l.b16 %v409
        %v1007 = vunpack.c.h.b16 %v409
        %v1008 = vunpack.c.l.b16 %v410
        %v1009 = vunpack.c.h.b16 %v410
        %v1010 = vunpack.c.l.b16 %v411
        %v1011 = vunpack.c.h.b16 %v411
        %v1012 = vunpack.c.l.b16 %v412
        %v1013 = vunpack.c.h.b16 %v412
        %v1014 = vunpack.c.l.b16 %v413
        %v1015 = vunpack.c.h.b16 %v413
        %v1016 = vunpack.c.l.b16 %v414
        %v1017 = vunpack.c.h.b16 %v414
        %v1018 = vunpack.c.l.b16 %v415
        %v1019 = vunpack.c.h.b16 %v415
        %v1020 = vunpack.c.l.b16 %v416
        %v1021 = vunpack.c.h.b16 %v416
        %v1022 = vunpack.c.l.b16 %v417
        %v1023 = vunpack.c.h.b16 %v417
        %v1024 = vunpack.c.l.b16 %v418
        %v1025 = vunpack.c.h.b16 %v418
        %v1026 = vunpack.c.l.b16 %v419
        %v1027 = vunpack.c.h.b16 %v419
        %v1028 = vunpack.c.l.b16 %v420
        %v1029 = vunpack.c.h.b16 %v420
        %v1030 = vunpack.c.l.b16 %v421
        %v1031 = vunpack.c.h.b16 %v421
        %v1032 = vunpack.c.l.b16 %v422
        %v1033 = vunpack.c.h.b16 %v422
        %v1034 = vunpack.c.l.b16 %v423
        %v1035 = vunpack.c.h.b16 %v423
        %v1036 = vunpack.c.l.b16 %v424
        %v1037 = vunpack.c.h.b16 %v424
        %v1038 = vunpack.c.l.b16 %v425
        %v1039 = vunpack.c.h.b16 %v425
        %v1040 = vunpack.c.l.b16 %v426
        %v1041 = vunpack.c.h.b16 %v426
        %v1042 = vunpack.c.l.b16 %v427
        %v1043 = vunpack.c.h.b16 %v427
        %v1044 = vunpack.c.l.b16 %v428
        %v1045 = vunpack.c.h.b16 %v428
        %v1046 = vunpack.c.l.b16 %v429
        %v1047 = vunpack.c.h.b16 %v429
        %v1048 = vunpack.c.l.b16 %v430
        %v1049 = vunpack.c.h.b16 %v430
        %v1050 = vunpack.c.l.b16 %v431
        %v1051 = vunpack.c.h.b16 %v431
        %v1052 = vunpack.c.l.b16 %v432
        %v1053 = vunpack.c.h.b16 %v432
        %v1054 = vunpack.c.l.b16 %v433
        %v1055 = vunpack.c.h.b16 %v433
        %v1056 = vunpack.c.l.b16 %v434
        %v1057 = vunpack.c.h.b16 %v434
        %v1058 = vunpack.c.l.b16 %v435
        %v1059 = vunpack.c.h.b16 %v435
        %v1060 = vunpack.c.l.b16 %v436
        %v1061 = vunpack.c.h.b16 %v436
        %v1062 = vunpack.c.l.b16 %v437
        %v1063 = vunpack.c.h.b16 %v437
        %v1064 = vunpack.c.l.b16 %v438
        %v1065 = vunpack.c.h.b16 %v438
        %v1066 = vunpack.c.l.b16 %v439
        %v1067 = vunpack.c.h.b16 %v439
        %v1068 = vunpack.c.l.b16 %v440
        %v1069 = vunpack.c.h.b16 %v440
        %v1070 = vunpack.c.l.b16 %v441
        %v1071 = vunpack.c.h.b16 %v441
        %v1072 = vunpack.c.l.b16 %v442
        %v1073 = vunpack.c.h.b16 %v442
        %v1074 = vunpack.c.l.b16 %v443
        %v1075 = vunpack.c.h.b16 %v443
        %v1076 = vunpack.c.l.b16 %v444
        %v1077 = vunpack.c.h.b16 %v444
        %v1078 = vunpack.c.l.b16 %v445
        %v1079 = vunpack.c.h.b16 %v445
        %v1080 = vunpack.c.l.b16 %v446
        %v1081 = vunpack.c.h.b16 %v446
        %v1082 = vunpack.c.l.b16 %v447
        %v1083 = vunpack.c.h.b16 %v447
        %v1084 = vunpack.c.l.b16 %v448
        %v1085 = vunpack.c.h.b16 %v448
        %v1086 = vunpack.c.l.b16 %v449
        %v1087 = vunpack.c.h.b16 %v449
        %v1088 = vunpack.c.l.b16 %v450
        %v1089 = vunpack.c.h.b16 %v450
        %v1090 = vunpack.c.l.b16 %v451
        %v1091 = vunpack.c.h.b16 %v451
        %v1092 = vunpack.c.l.b16 %v452
        %v1093 = vunpack.c.h.b16 %v452
        %v1094 = vunpack.c.l.b16 %v453
        %v1095 = vunpack.c.h.b16 %v453
        %v1096 = vunpack.c.l.b16 %v454
        %v1097 = vunpack.c.h.b16 %v454
        %v1098 = vunpack.c.l.b16 %v455
        %v1099 = vunpack.c.h.b16 %v455
        %v1100 = vunpack.c.l.b16 %v456
        %v1101 = vunpack.c.h.b16 %v456
        %v1102 = vunpack.c.l.b16 %v457
        %v1103 = vunpack.c.h.b16 %v457
        %v1104 = vunpack.c.l.b16 %v458
        %v1105 = vunpack.c.h.b16 %v458
        %v1106 = vunpack.c.l.b16 %v459
        %v1107 = vunpack.c.h.b16 %v459
        %v1108 = vunpack.c.l.b16 %v460
        %v1109 = vunpack.c.h.b16 %v460
        %v1110 = vunpack.c.l.b16 %v461
        %v1111 = vunpack.c.h.b16 %v461
        %v1112 = vunpack.c.l.b16 %v462
        %v1113 = vunpack.c.h.b16 %v462
        %v1114 = vunpack.c.l.b16 %v463
        %v1115 = vunpack.c.h.b16 %v463
        %v1116 = vunpack.c.l.b16 %v464
        %v1117 = vunpack.c.h.b16 %v464
        %v1118 = vunpack.c.l.b16 %v465
        %v1119 = vunpack.c.h.b16 %v465
        %v1120 = vunpack.c.l.b16 %v466
        %v1121 = vunpack.c.h.b16 %v466
        %v1122 = vunpack.c.l.b16 %v467
        %v1123 = vunpack.c.h.b16 %v467
        %v1124 = vunpack.c.l.b16 %v468
        %v1125 = vunpack.c.h.b16 %v468
        %v1126 = vunpack.c.l.b16 %v469
        %v1127 = vunpack.c.h.b16 %v469
        %v1128 = vunpack.c.l.b16 %v470
        %v1129 = vunpack.c.h.b16 %v470
        %v1130 = vunpack.c.l.b16 %v471
        %v1131 = vunpack.c.h.b16 %v471
        %v1132 = vunpack.c.l.b16 %v472
        %v1133 = vunpack.c.h.b16 %v472
        %v1134 = vunpack.c.l.b16 %v473
        %v1135 = vunpack.c.h.b16 %v473
        %v1136 = vunpack.c.l.b16 %v474
        %v1137 = vunpack.c.h.b16 %v474
        %v1138 = vunpack.c.l.b16 %v475
        %v1139 = vunpack.c.h.b16 %v475
        %v1140 = vunpack.c.l.b16 %v476
        %v1141 = vunpack.c.h.b16 %v476
        %v1142 = vunpack.c.l.b16 %v477
        %v1143 = vunpack.c.h.b16 %v477
        %v1144 = vunpack.c.l.b16 %v478
        %v1145 = vunpack.c.h.b16 %v478
        %v1146 = vunpack.c.l.b16 %v479
        %v1147 = vunpack.c.h.b16 %v479
        %v1148 = vunpack.c.l.b16 %v480
        %v1149 = vunpack.c.h.b16 %v480
        %v1150 = vunpack.c.l.b16 %v481
        %v1151 = vunpack.c.h.b16 %v481
        %v1152 = vunpack.c.l.b16 %v482
        %v1153 = vunpack.c.h.b16 %v482
        %v1154 = vunpack.c.l.b16 %v483
        %v1155 = vunpack.c.h.b16 %v483
        %v1156 = vunpack.c.l.b16 %v484
        %v1157 = vunpack.c.h.b16 %v484
        %v1158 = vunpack.c.l.b16 %v485
        %v1159 = vunpack.c.h.b16 %v485
        %v1160 = vunpack.c.l.b16 %v486
        %v1161 = vunpack.c.h.b16 %v486
        %v1162 = vunpack.c.l.b16 %v487
        %v1163 = vunpack.c.h.b16 %v487
        %v1164 = vunpack.c.l.b16 %v488
        %v1165 = vunpack.c.h.b16 %v488
        %v1166 = vunpack.c.l.b16 %v489
        %v1167 = vunpack.c.h.b16 %v489
        %v1168 = vunpack.c.l.b16 %v490
        %v1169 = vunpack.c.h.b16 %v490
        %v1170 = vunpack.c.l.b16 %v491
        %v1171 = vunpack.c.h.b16 %v491
        %v1172 = vunpack.c.l.b16 %v492
        %v1173 = vunpack.c.h.b16 %v492
        %v1174 = vunpack.c.l.b16 %v493
        %v1175 = vunpack.c.h.b16 %v493
        %v1176 = vunpack.c.l.b16 %v494
        %v1177 = vunpack.c.h.b16 %v494
        %v1178 = vunpack.c.l.b16 %v495
        %v1179 = vunpack.c.h.b16 %v495
        %v1180 = vunpack.c.l.b16 %v496
        %v1181 = vunpack.c.h.b16 %v496
        %v1182 = vunpack.c.l.b16 %v497
        %v1183 = vunpack.c.h.b16 %v497
        %v1184 = vunpack.c.l.b16 %v498
        %v1185 = vunpack.c.h.b16 %v498
        %v1186 = vunpack.c.l.b16 %v499
        %v1187 = vunpack.c.h.b16 %v499
        %v1188 = vunpack.c.l.b16 %v500
        %v1189 = vunpack.c.h.b16 %v500
        %v1190 = vunpack.c.l.b16 %v501
        %v1191 = vunpack.c.h.b16 %v501
        %v1192 = vunpack.c.l.b16 %v502
        %v1193 = vunpack.c.h.b16 %v502
        %v1194 = vunpack.c.l.b16 %v503
        %v1195 = vunpack.c.h.b16 %v503
        %v1196 = vunpack.c.l.b16 %v504
        %v1197 = vunpack.c.h.b16 %v504
        %v1198 = vunpack.c.l.b16 %v505
        %v1199 = vunpack.c.h.b16 %v505
        %v1200 = vunpack.c.l.b16 %v506
        %v1201 = vunpack.c.h.b16 %v506
        %v1202 = vunpack.c.l.b16 %v507
        %v1203 = vunpack.c.h.b16 %v507
        %v1204 = vunpack.c.l.b16 %v508
        %v1205 = vunpack.c.h.b16 %v508
        %v1206 = vunpack.c.l.b16 %v509
        %v1207 = vunpack.c.h.b16 %v509
        %v1208 = vunpack.c.l.b16 %v510
        %v1209 = vunpack.c.h.b16 %v510
        %v1210 = vunpack.c.l.b16 %v511
        %v1211 = vunpack.c.h.b16 %v511
        %v1212 = vunpack.c.l.b16 %v512
        %v1213 = vunpack.c.h.b16 %v512
        %v1214 = vunpack.c.l.b16 %v513
        %v1215 = vunpack.c.h.b16 %v513
        %v1216 = vunpack.c.l.b16 %v514
        %v1217 = vunpack.c.h.b16 %v514
        %v1218 = vunpack.c.l.b16 %v515
        %v1219 = vunpack.c.h.b16 %v515
        %v1220 = vunpack.c.l.b16 %v516
        %v1221 = vunpack.c.h.b16 %v516
        %v1222 = vunpack.c.l.b16 %v517
        %v1223 = vunpack.c.h.b16 %v517
        %v1224 = vunpack.c.l.b16 %v518
        %v1225 = vunpack.c.h.b16 %v518
        %v1226 = vunpack.c.l.b16 %v519
        %v1227 = vunpack.c.h.b16 %v519
        %v1228 = vunpack.c.l.b16 %v520
        %v1229 = vunpack.c.h.b16 %v520
        %v1230 = vunpack.c.l.b16 %v521
        %v1231 = vunpack.c.h.b16 %v521
        %v1232 = vunpack.c.l.b16 %v522
        %v1233 = vunpack.c.h.b16 %v522
        %v1234 = vunpack.c.l.b16 %v523
        %v1235 = vunpack.c.h.b16 %v523
        %v1236 = vunpack.c.l.b16 %v524
        %v1237 = vunpack.c.h.b16 %v524
        %v1238 = vunpack.c.l.b16 %v525
        %v1239 = vunpack.c.h.b16 %v525
        %v1240 = vunpack.c.l.b16 %v526
        %v1241 = vunpack.c.h.b16 %v526
        %v1242 = vunpack.c.l.b16 %v527
        %v1243 = vunpack.c.h.b16 %v527
        %v1244 = vunpack.c.l.b16 %v528
        %v1245 = vunpack.c.h.b16 %v528
        %v1246 = vunpack.c.l.b16 %v529
        %v1247 = vunpack.c.h.b16 %v529
        %v1248 = vunpack.c.l.b16 %v530
        %v1249 = vunpack.c.h.b16 %v530
        %v1250 = vunpack.c.l.b16 %v531
        %v1251 = vunpack.c.h.b16 %v531
        %v1252 = vunpack.c.l.b16 %v532
        %v1253 = vunpack.c.h.b16 %v532
        %v1254 = vunpack.c.l.b16 %v533
        %v1255 = vunpack.c.h.b16 %v533
        %v1256 = vunpack.c.l.b16 %v534
        %v1257 = vunpack.c.h.b16 %v534
        %v1258 = vunpack.c.l.b16 %v535
        %v1259 = vunpack.c.h.b16 %v535
        %v1260 = vunpack.c.l.b16 %v536
        %v1261 = vunpack.c.h.b16 %v536
        %v1262 = vunpack.c.l.b16 %v537
        %v1263 = vunpack.c.h.b16 %v537
        %v1264 = vunpack.c.l.b16 %v538
        %v1265 = vunpack.c.h.b16 %v538
        %v1266 = vunpack.c.l.b16 %v539
        %v1267 = vunpack.c.h.b16 %v539
        %v1268 = vunpack.c.l.b16 %v540
        %v1269 = vunpack.c.h.b16 %v540
        %v1270 = vunpack.c.l.b16 %v541
        %v1271 = vunpack.c.h.b16 %v541
        %v1272 = vunpack.c.l.b16 %v542
        %v1273 = vunpack.c.h.b16 %v542
        %v1274 = vunpack.c.l.b16 %v543
        %v1275 = vunpack.c.h.b16 %v543
        %v1276 = vunpack.c.l.b16 %v544
        %v1277 = vunpack.c.h.b16 %v544
        %v1278 = vunpack.c.l.b16 %v545
        %v1279 = vunpack.c.h.b16 %v545
        %v1280 = vunpack.c.l.b16 %v546
        %v1281 = vunpack.c.h.b16 %v546
        %v1282 = vunpack.c.l.b16 %v547
        %v1283 = vunpack.c.h.b16 %v547
        %v1284 = vunpack.c.l.b16 %v548
        %v1285 = vunpack.c.h.b16 %v548
        %v1286 = vunpack.c.l.b16 %v549
        %v1287 = vunpack.c.h.b16 %v549
        %v1288 = vunpack.c.l.b16 %v550
        %v1289 = vunpack.c.h.b16 %v550
        %v1290 = vunpack.c.l.b16 %v551
        %v1291 = vunpack.c.h.b16 %v551
        %v1292 = vunpack.c.l.b16 %v552
        %v1293 = vunpack.c.h.b16 %v552
        %v1294 = vunpack.c.l.b16 %v553
        %v1295 = vunpack.c.h.b16 %v553
        %v1296 = vunpack.c.l.b16 %v554
        %v1297 = vunpack.c.h.b16 %v554
        %v1298 = vunpack.c.l.b16 %v555
        %v1299 = vunpack.c.h.b16 %v555
        %v1300 = vunpack.c.l.b16 %v556
        %v1301 = vunpack.c.h.b16 %v556
        %v1302 = vunpack.c.l.b16 %v557
        %v1303 = vunpack.c.h.b16 %v557
        %v1304 = vunpack.c.l.b16 %v558
        %v1305 = vunpack.c.h.b16 %v558
        %v1306 = vunpack.c.l.b16 %v559
        %v1307 = vunpack.c.h.b16 %v559
        %v1308 = vunpack.c.l.b16 %v560
        %v1309 = vunpack.c.h.b16 %v560
        %v1310 = vunpack.c.l.b16 %v561
        %v1311 = vunpack.c.h.b16 %v561
        %v1312 = vunpack.c.l.b16 %v562
        %v1313 = vunpack.c.h.b16 %v562
        %v1314 = vunpack.c.l.b16 %v563
        %v1315 = vunpack.c.h.b16 %v563
        %v1316 = vunpack.c.l.b16 %v564
        %v1317 = vunpack.c.h.b16 %v564
        %v1318 = vunpack.c.l.b16 %v565
        %v1319 = vunpack.c.h.b16 %v565
        %v1320 = vunpack.c.l.b16 %v566
        %v1321 = vunpack.c.h.b16 %v566
        %v1322 = vunpack.c.l.b16 %v567
        %v1323 = vunpack.c.h.b16 %v567
        %v1324 = vunpack.c.l.b16 %v568
        %v1325 = vunpack.c.h.b16 %v568
        %v1326 = vunpack.c.l.b16 %v569
        %v1327 = vunpack.c.h.b16 %v569
        %v1328 = vunpack.c.l.b16 %v570
        %v1329 = vunpack.c.h.b16 %v570
        %v1330 = vunpack.c.l.b16 %v571
        %v1331 = vunpack.c.h.b16 %v571
        %v1332 = vunpack.c.l.b16 %v572
        %v1333 = vunpack.c.h.b16 %v572
        %v1334 = vunpack.c.l.b16 %v573
        %v1335 = vunpack.c.h.b16 %v573
        %v1336 = vunpack.c.l.b16 %v574
        %v1337 = vunpack.c.h.b16 %v574
        %v1338 = vunpack.c.l.b16 %v575
        %v1339 = vunpack.c.h.b16 %v575
        %v1340 = vunpack.c.l.b16 %v576
        %v1341 = vunpack.c.h.b16 %v576
        %v1342 = vunpack.c.l.b16 %v577
        %v1343 = vunpack.c.h.b16 %v577
        %v1344 = vunpack.c.l.b16 %v578
        %v1345 = vunpack.c.h.b16 %v578
        %v1346 = vunpack.c.l.b16 %v579
        %v1347 = vunpack.c.h.b16 %v579
        %v1348 = vunpack.c.l.b16 %v580
        %v1349 = vunpack.c.h.b16 %v580
        %v1350 = vunpack.c.l.b16 %v581
        %v1351 = vunpack.c.h.b16 %v581
        %v1352 = vunpack.c.l.b16 %v582
        %v1353 = vunpack.c.h.b16 %v582
        %v1354 = vunpack.c.l.b16 %v583
        %v1355 = vunpack.c.h.b16 %v583
        %v1356 = vunpack.c.l.b16 %v584
        %v1357 = vunpack.c.h.b16 %v584
        %v1358 = vunpack.c.l.b16 %v585
        %v1359 = vunpack.c.h.b16 %v585
        %v1360 = vunpack.c.l.b16 %v586
        %v1361 = vunpack.c.h.b16 %v586
        %v1362 = vunpack.c.l.b16 %v587
        %v1363 = vunpack.c.h.b16 %v587
        %v1364 = vunpack.c.l.b16 %v588
        %v1365 = vunpack.c.h.b16 %v588
        %v1366 = vunpack.c.l.b16 %v589
        %v1367 = vunpack.c.h.b16 %v589
        %v1368 = vunpack.c.l.b16 %v590
        %v1369 = vunpack.c.h.b16 %v590
        %v1370 = vunpack.c.l.b16 %v591
        %v1371 = vunpack.c.h.b16 %v591
        %v1372 = vunpack.c.l.b16 %v592
        %v1373 = vunpack.c.h.b16 %v592
        %v1374 = vunpack.c.l.b16 %v593
        %v1375 = vunpack.c.h.b16 %v593
        %v1376 = vunpack.c.l.b16 %v594
        %v1377 = vunpack.c.h.b16 %v594
        %v1378 = vunpack.c.l.b16 %v595
        %v1379 = vunpack.c.h.b16 %v595
        %v1380 = vunpack.c.l.b16 %v596
        %v1381 = vunpack.c.h.b16 %v596
        %v1382 = vunpack.c.l.b16 %v597
        %v1383 = vunpack.c.h.b16 %v597
        %v1384 = vunpack.c.l.b16 %v598
        %v1385 = vunpack.c.h.b16 %v598
        %v1386 = vunpack.c.l.b16 %v599
        %v1387 = vunpack.c.h.b16 %v599
        %v1388 = vunpack.c.l.b16 %v600
        %v1389 = vunpack.c.h.b16 %v600
        %v1390 = vunpack.c.l.b16 %v601
        %v1391 = vunpack.c.h.b16 %v601
        %v1392 = vunpack.c.l.b16 %v602
        %v1393 = vunpack.c.h.b16 %v602
        %v1394 = vunpack.c.l.b16 %v603
        %v1395 = vunpack.c.h.b16 %v603
        %v1396 = vunpack.c.l.b16 %v604
        %v1397 = vunpack.c.h.b16 %v604
        %v1398 = vunpack.c.l.b16 %v605
        %v1399 = vunpack.c.h.b16 %v605
        %v1400 = vunpack.c.l.b16 %v606
        %v1401 = vunpack.c.h.b16 %v606
        %v1402 = vunpack.c.l.b16 %v607
        %v1403 = vunpack.c.h.b16 %v607
        %v1404 = vunpack.c.l.b16 %v608
        %v1405 = vunpack.c.h.b16 %v608
        %v1406 = vunpack.c.l.b16 %v609
        %v1407 = vunpack.c.h.b16 %v609
        %v1408 = vunpack.c.l.b16 %v610
        %v1409 = vunpack.c.h.b16 %v610
        %v1410 = vunpack.c.l.b16 %v611
        %v1411 = vunpack.c.h.b16 %v611
        %v1412 = vunpack.c.l.b16 %v612
        %v1413 = vunpack.c.h.b16 %v612
        %v1414 = vunpack.c.l.b16 %v613
        %v1415 = vunpack.c.h.b16 %v613
        %v1416 = vunpack.c.l.b16 %v614
        %v1417 = vunpack.c.h.b16 %v614
        %v1418 = vunpack.c.l.b16 %v615
        %v1419 = vunpack.c.h.b16 %v615
        %v1420 = vunpack.c.l.b16 %v616
        %v1421 = vunpack.c.h.b16 %v616
        %v1422 = vunpack.c.l.b16 %v617
        %v1423 = vunpack.c.h.b16 %v617
        %v1424 = vunpack.c.l.b16 %v618
        %v1425 = vunpack.c.h.b16 %v618
        %v1426 = vunpack.c.l.b16 %v619
        %v1427 = vunpack.c.h.b16 %v619
        %v1428 = vunpack.c.l.b16 %v620
        %v1429 = vunpack.c.h.b16 %v620
        %v1430 = vunpack.c.l.b16 %v621
        %v1431 = vunpack.c.h.b16 %v621
        %v1432 = vunpack.c.l.b16 %v622
        %v1433 = vunpack.c.h.b16 %v622
        %v1434 = vunpack.c.l.b16 %v623
        %v1435 = vunpack.c.h.b16 %v623
        %v1436 = vunpack.c.l.b16 %v624
        %v1437 = vunpack.c.h.b16 %v624
        %v1438 = vunpack.c.l.b16 %v625
        %v1439 = vunpack.c.h.b16 %v625
        %v1440 = vunpack.c.l.b16 %v626
        %v1441 = vunpack.c.h.b16 %v626
        %v1442 = vunpack.c.l.b16 %v627
        %v1443 = vunpack.c.h.b16 %v627
        %v1444 = vunpack.c.l.b16 %v628
        %v1445 = vunpack.c.h.b16 %v628
        %v1446 = vunpack.c.l.b16 %v629
        %v1447 = vunpack.c.h.b16 %v629
        %v1448 = vunpack.c.l.b16 %v630
        %v1449 = vunpack.c.h.b16 %v630
        %v1450 = vunpack.c.l.b16 %v631
        %v1451 = vunpack.c.h.b16 %v631
        %v1452 = vunpack.c.l.b16 %v632
        %v1453 = vunpack.c.h.b16 %v632
        %v1454 = vunpack.c.l.b16 %v633
        %v1455 = vunpack.c.h.b16 %v633
        %v1456 = vunpack.c.l.b16 %v634
        %v1457 = vunpack.c.h.b16 %v634
        %v1458 = vunpack.c.l.b16 %v635
        %v1459 = vunpack.c.h.b16 %v635
        %v1460 = vunpack.c.l.b16 %v636
        %v1461 = vunpack.c.h.b16 %v636
        %v1462 = vunpack.c.l.b16 %v637
        %v1463 = vunpack.c.h.b16 %v637
        %v1464 = vunpack.c.l.b16 %v638
        %v1465 = vunpack.c.h.b16 %v638
        %v1466 = vunpack.c.l.b16 %v639
        %v1467 = vunpack.c.h.b16 %v639
        %v1468 = vunpack.c.l.b16 %v640
        %v1469 = vunpack.c.h.b16 %v640
        %v1470 = vunpack.c.l.b16 %v641
        %v1471 = vunpack.c.h.b16 %v641
        %v1472 = vunpack.c.l.b16 %v642
        %v1473 = vunpack.c.h.b16 %v642
        %v1474 = vunpack.c.l.b16 %v643
        %v1475 = vunpack.c.h.b16 %v643
        %v1476 = vunpack.c.l.b16 %v644
        %v1477 = vunpack.c.h.b16 %v644
        %v1478 = vunpack.c.l.b16 %v645
        %v1479 = vunpack.c.h.b16 %v645
        %v1480 = vunpack.c.l.b16 %v646
        %v1481 = vunpack.c.h.b16 %v646
        %v1482 = vunpack.c.l.b16 %v647
        %v1483 = vunpack.c.h.b16 %v647
        %v1484 = vunpack.c.l.b16 %v648
        %v1485 = vunpack.c.h.b16 %v648
        %v1486 = vunpack.c.l.b16 %v649
        %v1487 = vunpack.c.h.b16 %v649
        %v1488 = vunpack.c.l.b16 %v650
        %v1489 = vunpack.c.h.b16 %v650
        %v1490 = vunpack.c.l.b16 %v651
        %v1491 = vunpack.c.h.b16 %v651
        %v1492 = vunpack.c.l.b16 %v652
        %v1493 = vunpack.c.h.b16 %v652
        %v1494 = vunpack.c.l.b16 %v653
        %v1495 = vunpack.c.h.b16 %v653
        %v1496 = vunpack.c.l.b16 %v654
        %v1497 = vunpack.c.h.b16 %v654
        %v1498 = vunpack.c.l.b16 %v655
        %v1499 = vunpack.c.h.b16 %v655
        %v1500 = vunpack.c.l.b16 %v656
        %v1501 = vunpack.c.h.b16 %v656
        %v1502 = vunpack.c.l.b16 %v657
        %v1503 = vunpack.c.h.b16 %v657
        %v1504 = vunpack.c.l.b16 %v658
        %v1505 = vunpack.c.h.b16 %v658
        %v1506 = vunpack.c.l.b16 %v659
        %v1507 = vunpack.c.h.b16 %v659
        %v1508 = vpack.c.b16 %v998, %v996
        %v1509 = vpack.c.b16 %v999, %v997
        %v1510 = vpack.c.b16 %v1002, %v1000
        %v1511 = vpack.c.b16 %v1003, %v1001
        %v1512 = vpack.c.b16 %v1006, %v1004
        %v1513 = vpack.c.b16 %v1007, %v1005
        %v1514 = vpack.c.b16 %v1010, %v1008
        %v1515 = vpack.c.b16 %v1011, %v1009
        %v1516 = vpack.c.b16 %v1014, %v1012
        %v1517 = vpack.c.b16 %v1015, %v1013
        %v1518 = vpack.c.b16 %v1018, %v1016
        %v1519 = vpack.c.b16 %v1019, %v1017
        %v1520 = vpack.c.b16 %v1022, %v1020
        %v1521 = vpack.c.b16 %v1023, %v1021
        %v1522 = vpack.c.b16 %v1026, %v1024
        %v1523 = vpack.c.b16 %v1027, %v1025
        %v1524 = vpack.c.b16 %v1030, %v1028
        %v1525 = vpack.c.b16 %v1031, %v1029
        %v1526 = vpack.c.b16 %v1034, %v1032
        %v1527 = vpack.c.b16 %v1035, %v1033
        %v1528 = vpack.c.b16 %v1038, %v1036
        %v1529 = vpack.c.b16 %v1039, %v1037
        %v1530 = vpack.c.b16 %v1042, %v1040
        %v1531 = vpack.c.b16 %v1043, %v1041
        %v1532 = vpack.c.b16 %v1046, %v1044
        %v1533 = vpack.c.b16 %v1047, %v1045
        %v1534 = vpack.c.b16 %v1050, %v1048
        %v1535 = vpack.c.b16 %v1051, %v1049
        %v1536 = vpack.c.b16 %v1054, %v1052
        %v1537 = vpack.c.b16 %v1055, %v1053
        %v1538 = vpack.c.b16 %v1058, %v1056
        %v1539 = vpack.c.b16 %v1059, %v1057
        %v1540 = vpack.c.b16 %v1062, %v1060
        %v1541 = vpack.c.b16 %v1063, %v1061
        %v1542 = vpack.c.b16 %v1066, %v1064
        %v1543 = vpack.c.b16 %v1067, %v1065
        %v1544 = vpack.c.b16 %v1070, %v1068
        %v1545 = vpack.c.b16 %v1071, %v1069
        %v1546 = vpack.c.b16 %v1074, %v1072
        %v1547 = vpack.c.b16 %v1075, %v1073
        %v1548 = vpack.c.b16 %v1078, %v1076
        %v1549 = vpack.c.b16 %v1079, %v1077
        %v1550 = vpack.c.b16 %v1082, %v1080
        %v1551 = vpack.c.b16 %v1083, %v1081
        %v1552 = vpack.c.b16 %v1086, %v1084
        %v1553 = vpack.c.b16 %v1087, %v1085
        %v1554 = vpack.c.b16 %v1090, %v1088
        %v1555 = vpack.c.b16 %v1091, %v1089
        %v1556 = vpack.c.b16 %v1094, %v1092
        %v1557 = vpack.c.b16 %v1095, %v1093
        %v1558 = vpack.c.b16 %v1098, %v1096
        %v1559 = vpack.c.b16 %v1099, %v1097
        %v1560 = vpack.c.b16 %v1102, %v1100
        %v1561 = vpack.c.b16 %v1103, %v1101
        %v1562 = vpack.c.b16 %v1106, %v1104
        %v1563 = vpack.c.b16 %v1107, %v1105
        %v1564 = vpack.c.b16 %v1110, %v1108
        %v1565 = vpack.c.b16 %v1111, %v1109
        %v1566 = vpack.c.b16 %v1114, %v1112
        %v1567 = vpack.c.b16 %v1115, %v1113
        %v1568 = vpack.c.b16 %v1118, %v1116
        %v1569 = vpack.c.b16 %v1119, %v1117
        %v1570 = vpack.c.b16 %v1122, %v1120
        %v1571 = vpack.c.b16 %v1123, %v1121
        %v1572 = vpack.c.b16 %v1126, %v1124
        %v1573 = vpack.c.b16 %v1127, %v1125
        %v1574 = vpack.c.b16 %v1130, %v1128
        %v1575 = vpack.c.b16 %v1131, %v1129
        %v1576 = vpack.c.b16 %v1134, %v1132
        %v1577 = vpack.c.b16 %v1135, %v1133
        %v1578 = vpack.c.b16 %v1138, %v1136
        %v1579 = vpack.c.b16 %v1139, %v1137
        %v1580 = vpack.c.b16 %v1142, %v1140
        %v1581 = vpack.c.b16 %v1143, %v1141
        %v1582 = vpack.c.b16 %v1146, %v1144
        %v1583 = vpack.c.b16 %v1147, %v1145
        %v1584 = vpack.c.b16 %v1150, %v1148
        %v1585 = vpack.c.b16 %v1151, %v1149
        %v1586 = vpack.c.b16 %v1154, %v1152
        %v1587 = vpack.c.b16 %v1155, %v1153
        %v1588 = vpack.c.b16 %v1158, %v1156
        %v1589 = vpack.c.b16 %v1159, %v1157
        %v1590 = vpack.c.b16 %v1162, %v1160
        %v1591 = vpack.c.b16 %v1163, %v1161
        %v1592 = vpack.c.b16 %v1166, %v1164
        %v1593 = vpack.c.b16 %v1167, %v1165
        %v1594 = vpack.c.b16 %v1170, %v1168
        %v1595 = vpack.c.b16 %v1171, %v1169
        %v1596 = vpack.c.b16 %v1174, %v1172
        %v1597 = vpack.c.b16 %v1175, %v1173
        %v1598 = vpack.c.b16 %v1178, %v1176
        %v1599 = vpack.c.b16 %v1179, %v1177
        %v1600 = vpack.c.b16 %v1182, %v1180
        %v1601 = vpack.c.b16 %v1183, %v1181
        %v1602 = vpack.c.b16 %v1186, %v1184
        %v1603 = vpack.c.b16 %v1187, %v1185
        %v1604 = vpack.c.b16 %v1190, %v1188
        %v1605 = vpack.c.b16 %v1191, %v1189
        %v1606 = vpack.c.b16 %v1194, %v1192
        %v1607 = vpack.c.b16 %v1195, %v1193
        %v1608 = vpack.c.b16 %v1198, %v1196
        %v1609 = vpack.c.b16 %v1199, %v1197
        %v1610 = vpack.c.b16 %v1202, %v1200
        %v1611 = vpack.c.b16 %v1203, %v1201
        %v1612 = vpack.c.b16 %v1206, %v1204
        %v1613 = vpack.c.b16 %v1207, %v1205
        %v1614 = vpack.c.b16 %v1210, %v1208
        %v1615 = vpack.c.b16 %v1211, %v1209
        %v1616 = vpack.c.b16 %v1214, %v1212
        %v1617 = vpack.c.b16 %v1215, %v1213
        %v1618 = vpack.c.b16 %v1218, %v1216
        %v1619 = vpack.c.b16 %v1219, %v1217
        %v1620 = vpack.c.b16 %v1222, %v1220
        %v1621 = vpack.c.b16 %v1223, %v1221
        %v1622 = vpack.c.b16 %v1226, %v1224
        %v1623 = vpack.c.b16 %v1227, %v1225
        %v1624 = vpack.c.b16 %v1230, %v1228
        %v1625 = vpack.c.b16 %v1231, %v1229
        %v1626 = vpack.c.b16 %v1234, %v1232
        %v1627 = vpack.c.b16 %v1235, %v1233
        %v1628 = vpack.c.b16 %v1238, %v1236
        %v1629 = vpack.c.b16 %v1239, %v1237
        %v1630 = vpack.c.b16 %v1242, %v1240
        %v1631 = vpack.c.b16 %v1243, %v1241
        %v1632 = vpack.c.b16 %v1246, %v1244
        %v1633 = vpack.c.b16 %v1247, %v1245
        %v1634 = vpack.c.b16 %v1250, %v1248
        %v1635 = vpack.c.b16 %v1251, %v1249
        %v1636 = vpack.c.b16 %v1254, %v1252
        %v1637 = vpack.c.b16 %v1255, %v1253
        %v1638 = vpack.c.b16 %v1258, %v1256
        %v1639 = vpack.c.b16 %v1259, %v1257
        %v1640 = vpack.c.b16 %v1262, %v1260
        %v1641 = vpack.c.b16 %v1263, %v1261
        %v1642 = vpack.c.b16 %v1266, %v1264
        %v1643 = vpack.c.b16 %v1267, %v1265
        %v1644 = vpack.c.b16 %v1270, %v1268
        %v1645 = vpack.c.b16 %v1271, %v1269
        %v1646 = vpack.c.b16 %v1274, %v1272
        %v1647 = vpack.c.b16 %v1275, %v1273
        %v1648 = vpack.c.b16 %v1278, %v1276
        %v1649 = vpack.c.b16 %v1279, %v1277
        %v1650 = vpack.c.b16 %v1282, %v1280
        %v1651 = vpack.c.b16 %v1283, %v1281
        %v1652 = vpack.c.b16 %v1286, %v1284
        %v1653 = vpack.c.b16 %v1287, %v1285
        %v1654 = vpack.c.b16 %v1290, %v1288
        %v1655 = vpack.c.b16 %v1291, %v1289
        %v1656 = vpack.c.b16 %v1294, %v1292
        %v1657 = vpack.c.b16 %v1295, %v1293
        %v1658 = vpack.c.b16 %v1298, %v1296
        %v1659 = vpack.c.b16 %v1299, %v1297
        %v1660 = vpack.c.b16 %v1302, %v1300
        %v1661 = vpack.c.b16 %v1303, %v1301
        %v1662 = vpack.c.b16 %v1306, %v1304
        %v1663 = vpack.c.b16 %v1307, %v1305
        %v1664 = vpack.c.b16 %v1310, %v1308
        %v1665 = vpack.c.b16 %v1311, %v1309
        %v1666 = vpack.c.b16 %v1314, %v1312
        %v1667 = vpack.c.b16 %v1315, %v1313
        %v1668 = vpack.c.b16 %v1318, %v1316
        %v1669 = vpack.c.b16 %v1319, %v1317
        %v1670 = vpack.c.b16 %v1322, %v1320
        %v1671 = vpack.c.b16 %v1323, %v1321
        %v1672 = vpack.c.b16 %v1326, %v1324
        %v1673 = vpack.c.b16 %v1327, %v1325
        %v1674 = vpack.c.b16 %v1330, %v1328
        %v1675 = vpack.c.b16 %v1331, %v1329
        %v1676 = vpack.c.b16 %v1334, %v1332
        %v1677 = vpack.c.b16 %v1335, %v1333
        %v1678 = vpack.c.b16 %v1338, %v1336
        %v1679 = vpack.c.b16 %v1339, %v1337
        %v1680 = vpack.c.b16 %v1342, %v1340
        %v1681 = vpack.c.b16 %v1343, %v1341
        %v1682 = vpack.c.b16 %v1346, %v1344
        %v1683 = vpack.c.b16 %v1347, %v1345
        %v1684 = vpack.c.b16 %v1350, %v1348
        %v1685 = vpack.c.b16 %v1351, %v1349
        %v1686 = vpack.c.b16 %v1354, %v1352
        %v1687 = vpack.c.b16 %v1355, %v1353
        %v1688 = vpack.c.b16 %v1358, %v1356
        %v1689 = vpack.c.b16 %v1359, %v1357
        %v1690 = vpack.c.b16 %v1362, %v1360
        %v1691 = vpack.c.b16 %v1363, %v1361
        %v1692 = vpack.c.b16 %v1366, %v1364
        %v1693 = vpack.c.b16 %v1367, %v1365
        %v1694 = vpack.c.b16 %v1370, %v1368
        %v1695 = vpack.c.b16 %v1371, %v1369
        %v1696 = vpack.c.b16 %v1374, %v1372
        %v1697 = vpack.c.b16 %v1375, %v1373
        %v1698 = vpack.c.b16 %v1378, %v1376
        %v1699 = vpack.c.b16 %v1379, %v1377
        %v1700 = vpack.c.b16 %v1382, %v1380
        %v1701 = vpack.c.b16 %v1383, %v1381
        %v1702 = vpack.c.b16 %v1386, %v1384
        %v1703 = vpack.c.b16 %v1387, %v1385
        %v1704 = vpack.c.b16 %v1390, %v1388
        %v1705 = vpack.c.b16 %v1391, %v1389
        %v1706 = vpack.c.b16 %v1394, %v1392
        %v1707 = vpack.c.b16 %v1395, %v1393
        %v1708 = vpack.c.b16 %v1398, %v1396
        %v1709 = vpack.c.b16 %v1399, %v1397
        %v1710 = vpack.c.b16 %v1402, %v1400
        %v1711 = vpack.c.b16 %v1403, %v1401
        %v1712 = vpack.c.b16 %v1406, %v1404
        %v1713 = vpack.c.b16 %v1407, %v1405
        %v1714 = vpack.c.b16 %v1410, %v1408
        %v1715 = vpack.c.b16 %v1411, %v1409
        %v1716 = vpack.c.b16 %v1414, %v1412
        %v1717 = vpack.c.b16 %v1415, %v1413
        %v1718 = vpack.c.b16 %v1418, %v1416
        %v1719 = vpack.c.b16 %v1419, %v1417
        %v1720 = vpack.c.b16 %v1422, %v1420
        %v1721 = vpack.c.b16 %v1423, %v1421
        %v1722 = vpack.c.b16 %v1426, %v1424
        %v1723 = vpack.c.b16 %v1427, %v1425
        %v1724 = vpack.c.b16 %v1430, %v1428
        %v1725 = vpack.c.b16 %v1431, %v1429
        %v1726 = vpack.c.b16 %v1434, %v1432
        %v1727 = vpack.c.b16 %v1435, %v1433
        %v1728 = vpack.c.b16 %v1438, %v1436
        %v1729 = vpack.c.b16 %v1439, %v1437
        %v1730 = vpack.c.b16 %v1442, %v1440
        %v1731 = vpack.c.b16 %v1443, %v1441
        %v1732 = vpack.c.b16 %v1446, %v1444
        %v1733 = vpack.c.b16 %v1447, %v1445
        %v1734 = vpack.c.b16 %v1450, %v1448
        %v1735 = vpack.c.b16 %v1451, %v1449
        %v1736 = vpack.c.b16 %v1454, %v1452
        %v1737 = vpack.c.b16 %v1455, %v1453
        %v1738 = vpack.c.b16 %v1458, %v1456
        %v1739 = vpack.c.b16 %v1459, %v1457
        %v1740 = vpack.c.b16 %v1462, %v1460
        %v1741 = vpack.c.b16 %v1463, %v1461
        %v1742 = vpack.c.b16 %v1466, %v1464
        %v1743 = vpack.c.b16 %v1467, %v1465
        %v1744 = vpack.c.b16 %v1470, %v1468
        %v1745 = vpack.c.b16 %v1471, %v1469
        %v1746 = vpack.c.b16 %v1474, %v1472
        %v1747 = vpack.c.b16 %v1475, %v1473
        %v1748 = vpack.c.b16 %v1478, %v1476
        %v1749 = vpack.c.b16 %v1479, %v1477
        %v1750 = vpack.c.b16 %v1482, %v1480
        %v1751 = vpack.c.b16 %v1483, %v1481
        %v1752 = vpack.c.b16 %v1486, %v1484
        %v1753 = vpack.c.b16 %v1487, %v1485
        %v1754 = vpack.c.b16 %v1490, %v1488
        %v1755 = vpack.c.b16 %v1491, %v1489
        %v1756 = vpack.c.b16 %v1494, %v1492
        %v1757 = vpack.c.b16 %v1495, %v1493
        %v1758 = vpack.c.b16 %v1498, %v1496
        %v1759 = vpack.c.b16 %v1499, %v1497
        %v1760 = vpack.c.b16 %v1502, %v1500
        %v1761 = vpack.c.b16 %v1503, %v1501
        %v1762 = vpack.c.b16 %v1506, %v1504
        %v1763 = vpack.c.b16 %v1507, %v1505
        %2020 = vmatprep.subr.bf16.mxu0 %v1509
        %2021 = vmatpush1.bf16.msra.mxu0 %v1508
        %2022 = vmatprep.subr.bf16.mxu0 %v1511
        %2023 = vmatpush1.bf16.msra.mxu0 %v1510
        %2024 = vmatprep.subr.bf16.mxu0 %v1513
        %2025 = vmatpush1.bf16.msra.mxu0 %v1512
        %2026 = vmatprep.subr.bf16.mxu0 %v1515
        %2027 = vmatpush1.bf16.msra.mxu0 %v1514
        %2028 = vmatprep.subr.bf16.mxu0 %v1517
        %2029 = vmatpush1.bf16.msra.mxu0 %v1516
        %2030 = vmatprep.subr.bf16.mxu0 %v1519
        %2031 = vmatpush1.bf16.msra.mxu0 %v1518
        %2032 = vmatprep.subr.bf16.mxu0 %v1521
        %2033 = vmatpush1.bf16.msra.mxu0 %v1520
        %2034 = vmatprep.subr.bf16.mxu0 %v1523
        %2035 = vmatpush1.bf16.msra.mxu0 %v1522
        %2036 = vmatprep.subr.bf16.mxu0 %v1525
        %2037 = vmatpush1.bf16.msra.mxu0 %v1524
        %2038 = vmatprep.subr.bf16.mxu0 %v1527
        %2039 = vmatpush1.bf16.msra.mxu0 %v1526
        %2040 = vmatprep.subr.bf16.mxu0 %v1529
        %2041 = vmatpush1.bf16.msra.mxu0 %v1528
        %2042 = vmatprep.subr.bf16.mxu0 %v1531
        %2043 = vmatpush1.bf16.msra.mxu0 %v1530
        %2044 = vmatprep.subr.bf16.mxu0 %v1533
        %2045 = vmatpush1.bf16.msra.mxu0 %v1532
        %2046 = vmatprep.subr.bf16.mxu0 %v1535
        %2047 = vmatpush1.bf16.msra.mxu0 %v1534
        %2048 = vmatprep.subr.bf16.mxu0 %v1537
        %2049 = vmatpush1.bf16.msra.mxu0 %v1536
        %2050 = vmatprep.subr.bf16.mxu0 %v1539
        %2051 = vmatpush1.bf16.msra.mxu0 %v1538
        %2052 = vmatprep.mubr.bf16.mxu0 %v709
        %2053 = vmatmul.mubr.bf16.gmra.mrb[0].mxu0 %v708
        %v2054 = vpop.f32.mrb[0].mxu0
        %v2055 = vadd.f32 0.0, %v2054
        %v2056 = vpop.f32.mrb[0].mxu0
        %v2057 = vadd.f32 0.0, %v2056
        %v2058 = vpop.f32.mrb[0].mxu0
        %v2059 = vadd.f32 0.0, %v2058
        %v2060 = vpop.f32.mrb[0].mxu0
        %v2061 = vadd.f32 0.0, %v2060
        %2062 = vdwg.mxu0
        %2063 = vmatprep.subr.bf16.mxu0 %v1541
        %2064 = vmatpush1.bf16.msra.mxu0 %v1540
        %2065 = vmatprep.subr.bf16.mxu0 %v1543
        %2066 = vmatpush1.bf16.msra.mxu0 %v1542
        %2067 = vmatprep.subr.bf16.mxu0 %v1545
        %2068 = vmatpush1.bf16.msra.mxu0 %v1544
        %2069 = vmatprep.subr.bf16.mxu0 %v1547
        %2070 = vmatpush1.bf16.msra.mxu0 %v1546
        %2071 = vmatprep.subr.bf16.mxu0 %v1549
        %2072 = vmatpush1.bf16.msra.mxu0 %v1548
        %2073 = vmatprep.subr.bf16.mxu0 %v1551
        %2074 = vmatpush1.bf16.msra.mxu0 %v1550
        %2075 = vmatprep.subr.bf16.mxu0 %v1553
        %2076 = vmatpush1.bf16.msra.mxu0 %v1552
        %2077 = vmatprep.subr.bf16.mxu0 %v1555
        %2078 = vmatpush1.bf16.msra.mxu0 %v1554
        %2079 = vmatprep.subr.bf16.mxu0 %v1557
        %2080 = vmatpush1.bf16.msra.mxu0 %v1556
        %2081 = vmatprep.subr.bf16.mxu0 %v1559
        %2082 = vmatpush1.bf16.msra.mxu0 %v1558
        %2083 = vmatprep.subr.bf16.mxu0 %v1561
        %2084 = vmatpush1.bf16.msra.mxu0 %v1560
        %2085 = vmatprep.subr.bf16.mxu0 %v1563
        %2086 = vmatpush1.bf16.msra.mxu0 %v1562
        %2087 = vmatprep.subr.bf16.mxu0 %v1565
        %2088 = vmatpush1.bf16.msra.mxu0 %v1564
        %2089 = vmatprep.subr.bf16.mxu0 %v1567
        %2090 = vmatpush1.bf16.msra.mxu0 %v1566
        %2091 = vmatprep.subr.bf16.mxu0 %v1569
        %2092 = vmatpush1.bf16.msra.mxu0 %v1568
        %2093 = vmatprep.subr.bf16.mxu0 %v1571
        %2094 = vmatpush1.bf16.msra.mxu0 %v1570
        %2095 = vmatprep.mubr.bf16.mxu0 %v711
        %2096 = vmatmul.mubr.bf16.gmra.mrb[0].mxu0 %v710
        %v2097 = vpop.f32.mrb[0].mxu0
        %v2098 = vadd.f32 %v2055, %v2097
        %v2099 = vpop.f32.mrb[0].mxu0
        %v2100 = vadd.f32 %v2057, %v2099
        %v2101 = vpop.f32.mrb[0].mxu0
        %v2102 = vadd.f32 %v2059, %v2101
        %v2103 = vpop.f32.mrb[0].mxu0
        %v2104 = vadd.f32 %v2061, %v2103
        %2105 = vdwg.mxu0
        %2106 = vmatprep.subr.bf16.mxu0 %v1573
        %2107 = vmatpush1.bf16.msra.mxu0 %v1572
        %2108 = vmatprep.subr.bf16.mxu0 %v1575
        %2109 = vmatpush1.bf16.msra.mxu0 %v1574
        %2110 = vmatprep.subr.bf16.mxu0 %v1577
        %2111 = vmatpush1.bf16.msra.mxu0 %v1576
        %2112 = vmatprep.subr.bf16.mxu0 %v1579
        %2113 = vmatpush1.bf16.msra.mxu0 %v1578
        %2114 = vmatprep.subr.bf16.mxu0 %v1581
        %2115 = vmatpush1.bf16.msra.mxu0 %v1580
        %2116 = vmatprep.subr.bf16.mxu0 %v1583
        %2117 = vmatpush1.bf16.msra.mxu0 %v1582
        %2118 = vmatprep.subr.bf16.mxu0 %v1585
        %2119 = vmatpush1.bf16.msra.mxu0 %v1584
        %2120 = vmatprep.subr.bf16.mxu0 %v1587
        %2121 = vmatpush1.bf16.msra.mxu0 %v1586
        %2122 = vmatprep.subr.bf16.mxu0 %v1589
        %2123 = vmatpush1.bf16.msra.mxu0 %v1588
        %2124 = vmatprep.subr.bf16.mxu0 %v1591
        %2125 = vmatpush1.bf16.msra.mxu0 %v1590
        %2126 = vmatprep.subr.bf16.mxu0 %v1593
        %2127 = vmatpush1.bf16.msra.mxu0 %v1592
        %2128 = vmatprep.subr.bf16.mxu0 %v1595
        %2129 = vmatpush1.bf16.msra.mxu0 %v1594
        %2130 = vmatprep.subr.bf16.mxu0 %v1597
        %2131 = vmatpush1.bf16.msra.mxu0 %v1596
        %2132 = vmatprep.subr.bf16.mxu0 %v1599
        %2133 = vmatpush1.bf16.msra.mxu0 %v1598
        %2134 = vmatprep.subr.bf16.mxu0 %v1601
        %2135 = vmatpush1.bf16.msra.mxu0 %v1600
        %2136 = vmatprep.subr.bf16.mxu0 %v1603
        %2137 = vmatpush1.bf16.msra.mxu0 %v1602
        %2138 = vmatprep.mubr.bf16.mxu0 %v713
        %2139 = vmatmul.mubr.bf16.gmra.mrb[0].mxu0 %v712
        %v2140 = vpop.f32.mrb[0].mxu0
        %v2141 = vadd.f32 %v2098, %v2140
        %v2142 = vpop.f32.mrb[0].mxu0
        %v2143 = vadd.f32 %v2100, %v2142
        %v2144 = vpop.f32.mrb[0].mxu0
        %v2145 = vadd.f32 %v2102, %v2144
        %v2146 = vpop.f32.mrb[0].mxu0
        %v2147 = vadd.f32 %v2104, %v2146
        %2148 = vdwg.mxu0
        %2149 = vmatprep.subr.bf16.mxu0 %v1605
        %2150 = vmatpush1.bf16.msra.mxu0 %v1604
        %2151 = vmatprep.subr.bf16.mxu0 %v1607
        %2152 = vmatpush1.bf16.msra.mxu0 %v1606
        %2153 = vmatprep.subr.bf16.mxu0 %v1609
        %2154 = vmatpush1.bf16.msra.mxu0 %v1608
        %2155 = vmatprep.subr.bf16.mxu0 %v1611
        %2156 = vmatpush1.bf16.msra.mxu0 %v1610
        %2157 = vmatprep.subr.bf16.mxu0 %v1613
        %2158 = vmatpush1.bf16.msra.mxu0 %v1612
        %2159 = vmatprep.subr.bf16.mxu0 %v1615
        %2160 = vmatpush1.bf16.msra.mxu0 %v1614
        %2161 = vmatprep.subr.bf16.mxu0 %v1617
        %2162 = vmatpush1.bf16.msra.mxu0 %v1616
        %2163 = vmatprep.subr.bf16.mxu0 %v1619
        %2164 = vmatpush1.bf16.msra.mxu0 %v1618
        %2165 = vmatprep.subr.bf16.mxu0 %v1621
        %2166 = vmatpush1.bf16.msra.mxu0 %v1620
        %2167 = vmatprep.subr.bf16.mxu0 %v1623
        %2168 = vmatpush1.bf16.msra.mxu0 %v1622
        %2169 = vmatprep.subr.bf16.mxu0 %v1625
        %2170 = vmatpush1.bf16.msra.mxu0 %v1624
        %2171 = vmatprep.subr.bf16.mxu0 %v1627
        %2172 = vmatpush1.bf16.msra.mxu0 %v1626
        %2173 = vmatprep.subr.bf16.mxu0 %v1629
        %2174 = vmatpush1.bf16.msra.mxu0 %v1628
        %2175 = vmatprep.subr.bf16.mxu0 %v1631
        %2176 = vmatpush1.bf16.msra.mxu0 %v1630
        %2177 = vmatprep.subr.bf16.mxu0 %v1633
        %2178 = vmatpush1.bf16.msra.mxu0 %v1632
        %2179 = vmatprep.subr.bf16.mxu0 %v1635
        %2180 = vmatpush1.bf16.msra.mxu0 %v1634
        %2181 = vmatprep.mubr.bf16.mxu0 %v715
        %2182 = vmatmul.mubr.bf16.gmra.mrb[0].mxu0 %v714
        %v2183 = vpop.f32.mrb[0].mxu0
        %v2184 = vadd.f32 %v2141, %v2183
        %v2185 = vpop.f32.mrb[0].mxu0
        %v2186 = vadd.f32 %v2143, %v2185
        %v2187 = vpop.f32.mrb[0].mxu0
        %v2188 = vadd.f32 %v2145, %v2187
        %v2189 = vpop.f32.mrb[0].mxu0
        %v2190 = vadd.f32 %v2147, %v2189
        %2191 = vdwg.mxu0
        %2192 = vmatprep.subr.bf16.mxu0 %v1637
        %2193 = vmatpush1.bf16.msra.mxu0 %v1636
        %2194 = vmatprep.subr.bf16.mxu0 %v1639
        %2195 = vmatpush1.bf16.msra.mxu0 %v1638
        %2196 = vmatprep.subr.bf16.mxu0 %v1641
        %2197 = vmatpush1.bf16.msra.mxu0 %v1640
        %2198 = vmatprep.subr.bf16.mxu0 %v1643
        %2199 = vmatpush1.bf16.msra.mxu0 %v1642
        %2200 = vmatprep.subr.bf16.mxu0 %v1645
        %2201 = vmatpush1.bf16.msra.mxu0 %v1644
        %2202 = vmatprep.subr.bf16.mxu0 %v1647
        %2203 = vmatpush1.bf16.msra.mxu0 %v1646
        %2204 = vmatprep.subr.bf16.mxu0 %v1649
        %2205 = vmatpush1.bf16.msra.mxu0 %v1648
        %2206 = vmatprep.subr.bf16.mxu0 %v1651
        %2207 = vmatpush1.bf16.msra.mxu0 %v1650
        %2208 = vmatprep.subr.bf16.mxu0 %v1653
        %2209 = vmatpush1.bf16.msra.mxu0 %v1652
        %2210 = vmatprep.subr.bf16.mxu0 %v1655
        %2211 = vmatpush1.bf16.msra.mxu0 %v1654
        %2212 = vmatprep.subr.bf16.mxu0 %v1657
        %2213 = vmatpush1.bf16.msra.mxu0 %v1656
        %2214 = vmatprep.subr.bf16.mxu0 %v1659
        %2215 = vmatpush1.bf16.msra.mxu0 %v1658
        %2216 = vmatprep.subr.bf16.mxu0 %v1661
        %2217 = vmatpush1.bf16.msra.mxu0 %v1660
        %2218 = vmatprep.subr.bf16.mxu0 %v1663
        %2219 = vmatpush1.bf16.msra.mxu0 %v1662
        %2220 = vmatprep.subr.bf16.mxu0 %v1665
        %2221 = vmatpush1.bf16.msra.mxu0 %v1664
        %2222 = vmatprep.subr.bf16.mxu0 %v1667
        %2223 = vmatpush1.bf16.msra.mxu0 %v1666
        %2224 = vmatprep.mubr.bf16.mxu0 %v717
        %2225 = vmatmul.mubr.bf16.gmra.mrb[0].mxu0 %v716
        %v2226 = vpop.f32.mrb[0].mxu0
        %v2227 = vadd.f32 %v2184, %v2226
        %v2228 = vpop.f32.mrb[0].mxu0
        %v2229 = vadd.f32 %v2186, %v2228
        %v2230 = vpop.f32.mrb[0].mxu0
        %v2231 = vadd.f32 %v2188, %v2230
        %v2232 = vpop.f32.mrb[0].mxu0
        %v2233 = vadd.f32 %v2190, %v2232
        %2234 = vdwg.mxu0
        %2235 = vmatprep.subr.bf16.mxu0 %v1669
        %2236 = vmatpush1.bf16.msra.mxu0 %v1668
        %2237 = vmatprep.subr.bf16.mxu0 %v1671
        %2238 = vmatpush1.bf16.msra.mxu0 %v1670
        %2239 = vmatprep.subr.bf16.mxu0 %v1673
        %2240 = vmatpush1.bf16.msra.mxu0 %v1672
        %2241 = vmatprep.subr.bf16.mxu0 %v1675
        %2242 = vmatpush1.bf16.msra.mxu0 %v1674
        %2243 = vmatprep.subr.bf16.mxu0 %v1677
        %2244 = vmatpush1.bf16.msra.mxu0 %v1676
        %2245 = vmatprep.subr.bf16.mxu0 %v1679
        %2246 = vmatpush1.bf16.msra.mxu0 %v1678
        %2247 = vmatprep.subr.bf16.mxu0 %v1681
        %2248 = vmatpush1.bf16.msra.mxu0 %v1680
        %2249 = vmatprep.subr.bf16.mxu0 %v1683
        %2250 = vmatpush1.bf16.msra.mxu0 %v1682
        %2251 = vmatprep.subr.bf16.mxu0 %v1685
        %2252 = vmatpush1.bf16.msra.mxu0 %v1684
        %2253 = vmatprep.subr.bf16.mxu0 %v1687
        %2254 = vmatpush1.bf16.msra.mxu0 %v1686
        %2255 = vmatprep.subr.bf16.mxu0 %v1689
        %2256 = vmatpush1.bf16.msra.mxu0 %v1688
        %2257 = vmatprep.subr.bf16.mxu0 %v1691
        %2258 = vmatpush1.bf16.msra.mxu0 %v1690
        %2259 = vmatprep.subr.bf16.mxu0 %v1693
        %2260 = vmatpush1.bf16.msra.mxu0 %v1692
        %2261 = vmatprep.subr.bf16.mxu0 %v1695
        %2262 = vmatpush1.bf16.msra.mxu0 %v1694
        %2263 = vmatprep.subr.bf16.mxu0 %v1697
        %2264 = vmatpush1.bf16.msra.mxu0 %v1696
        %2265 = vmatprep.subr.bf16.mxu0 %v1699
        %2266 = vmatpush1.bf16.msra.mxu0 %v1698
        %2267 = vmatprep.mubr.bf16.mxu0 %v719
        %2268 = vmatmul.mubr.bf16.gmra.mrb[0].mxu0 %v718
        %v2269 = vpop.f32.mrb[0].mxu0
        %v2270 = vadd.f32 %v2227, %v2269
        %v2271 = vpop.f32.mrb[0].mxu0
        %v2272 = vadd.f32 %v2229, %v2271
        %v2273 = vpop.f32.mrb[0].mxu0
        %v2274 = vadd.f32 %v2231, %v2273
        %v2275 = vpop.f32.mrb[0].mxu0
        %v2276 = vadd.f32 %v2233, %v2275
        %2277 = vdwg.mxu0
        %2278 = vmatprep.subr.bf16.mxu0 %v1701
        %2279 = vmatpush1.bf16.msra.mxu0 %v1700
        %2280 = vmatprep.subr.bf16.mxu0 %v1703
        %2281 = vmatpush1.bf16.msra.mxu0 %v1702
        %2282 = vmatprep.subr.bf16.mxu0 %v1705
        %2283 = vmatpush1.bf16.msra.mxu0 %v1704
        %2284 = vmatprep.subr.bf16.mxu0 %v1707
        %2285 = vmatpush1.bf16.msra.mxu0 %v1706
        %2286 = vmatprep.subr.bf16.mxu0 %v1709
        %2287 = vmatpush1.bf16.msra.mxu0 %v1708
        %2288 = vmatprep.subr.bf16.mxu0 %v1711
        %2289 = vmatpush1.bf16.msra.mxu0 %v1710
        %2290 = vmatprep.subr.bf16.mxu0 %v1713
        %2291 = vmatpush1.bf16.msra.mxu0 %v1712
        %2292 = vmatprep.subr.bf16.mxu0 %v1715
        %2293 = vmatpush1.bf16.msra.mxu0 %v1714
        %2294 = vmatprep.subr.bf16.mxu0 %v1717
        %2295 = vmatpush1.bf16.msra.mxu0 %v1716
        %2296 = vmatprep.subr.bf16.mxu0 %v1719
        %2297 = vmatpush1.bf16.msra.mxu0 %v1718
        %2298 = vmatprep.subr.bf16.mxu0 %v1721
        %2299 = vmatpush1.bf16.msra.mxu0 %v1720
        %2300 = vmatprep.subr.bf16.mxu0 %v1723
        %2301 = vmatpush1.bf16.msra.mxu0 %v1722
        %2302 = vmatprep.subr.bf16.mxu0 %v1725
        %2303 = vmatpush1.bf16.msra.mxu0 %v1724
        %2304 = vmatprep.subr.bf16.mxu0 %v1727
        %2305 = vmatpush1.bf16.msra.mxu0 %v1726
        %2306 = vmatprep.subr.bf16.mxu0 %v1729
        %2307 = vmatpush1.bf16.msra.mxu0 %v1728
        %2308 = vmatprep.subr.bf16.mxu0 %v1731
        %2309 = vmatpush1.bf16.msra.mxu0 %v1730
        %2310 = vmatprep.mubr.bf16.mxu0 %v721
        %2311 = vmatmul.mubr.bf16.gmra.mrb[0].mxu0 %v720
        %v2312 = vpop.f32.mrb[0].mxu0
        %v2313 = vadd.f32 %v2270, %v2312
        %v2314 = vpop.f32.mrb[0].mxu0
        %v2315 = vadd.f32 %v2272, %v2314
        %v2316 = vpop.f32.mrb[0].mxu0
        %v2317 = vadd.f32 %v2274, %v2316
        %v2318 = vpop.f32.mrb[0].mxu0
        %v2319 = vadd.f32 %v2276, %v2318
        %2320 = vdwg.mxu0
        %2321 = vmatprep.subr.bf16.mxu0 %v1733
        %2322 = vmatpush1.bf16.msra.mxu0 %v1732
        %2323 = vmatprep.subr.bf16.mxu0 %v1735
        %2324 = vmatpush1.bf16.msra.mxu0 %v1734
        %2325 = vmatprep.subr.bf16.mxu0 %v1737
        %2326 = vmatpush1.bf16.msra.mxu0 %v1736
        %2327 = vmatprep.subr.bf16.mxu0 %v1739
        %2328 = vmatpush1.bf16.msra.mxu0 %v1738
        %2329 = vmatprep.subr.bf16.mxu0 %v1741
        %2330 = vmatpush1.bf16.msra.mxu0 %v1740
        %2331 = vmatprep.subr.bf16.mxu0 %v1743
        %2332 = vmatpush1.bf16.msra.mxu0 %v1742
        %2333 = vmatprep.subr.bf16.mxu0 %v1745
        %2334 = vmatpush1.bf16.msra.mxu0 %v1744
        %2335 = vmatprep.subr.bf16.mxu0 %v1747
        %2336 = vmatpush1.bf16.msra.mxu0 %v1746
        %2337 = vmatprep.subr.bf16.mxu0 %v1749
        %2338 = vmatpush1.bf16.msra.mxu0 %v1748
        %2339 = vmatprep.subr.bf16.mxu0 %v1751
        %2340 = vmatpush1.bf16.msra.mxu0 %v1750
        %2341 = vmatprep.subr.bf16.mxu0 %v1753
        %2342 = vmatpush1.bf16.msra.mxu0 %v1752
        %2343 = vmatprep.subr.bf16.mxu0 %v1755
        %2344 = vmatpush1.bf16.msra.mxu0 %v1754
        %2345 = vmatprep.subr.bf16.mxu0 %v1757
        %2346 = vmatpush1.bf16.msra.mxu0 %v1756
        %2347 = vmatprep.subr.bf16.mxu0 %v1759
        %2348 = vmatpush1.bf16.msra.mxu0 %v1758
        %2349 = vmatprep.subr.bf16.mxu0 %v1761
        %2350 = vmatpush1.bf16.msra.mxu0 %v1760
        %2351 = vmatprep.subr.bf16.mxu0 %v1763
        %2352 = vmatpush1.bf16.msra.mxu0 %v1762
        %2353 = vmatprep.mubr.bf16.mxu0 %v723
        %2354 = vmatmul.mubr.bf16.gmra.mrb[0].mxu0 %v722
        %v2355 = vpop.f32.mrb[0].mxu0
        %v2356 = vadd.f32 %v2313, %v2355
        %v2357 = vpop.f32.mrb[0].mxu0
        %v2358 = vadd.f32 %v2315, %v2357
        %v2359 = vpop.f32.mrb[0].mxu0
        %v2360 = vadd.f32 %v2317, %v2359
        %v2361 = vpop.f32.mrb[0].mxu0
        %v2362 = vadd.f32 %v2319, %v2361
        %2363 = vdwg.mxu0
        %v2364 = vadd.f32 %v384, %v2356
        %v2365 = vadd.f32 %v385, %v2358
        %v2366 = vadd.f32 %v386, %v2360
        %v2367 = vadd.f32 %v387, %v2362
        %2368 = vst [vmem:[#allocation2] sm:$0xff] %v2364
        %2369 = vst [vmem:[#allocation2 + $0x8] sm:$0xff] %v2365
        %2370 = vst [vmem:[#allocation2 + $0x10] sm:$0xff] %v2366
        %2371 = vst [vmem:[#allocation2 + $0x18] sm:$0xff] %v2367
        %p2372 = scmp.eq.s32.totalorder %s23, 1
        // Predicated region
        $region76: #{recognet_forward.2} parent=66 // pred_check
          %p2373 = pneg %p2372
        $region77: #{recognet_forward.2} parent=66 // pred_check_branch
          %2375 = sbr.rel (%p2373) target = $region79
        $region78: #{recognet_forward.2} parent=66 // pred_region
          %v2376 = vld [vmem:[#allocation2] sm:$0xff]
          %v2377 = vld [vmem:[#allocation2 + $0x8] sm:$0xff]
          %v2378 = vld [vmem:[#allocation2 + $0x10] sm:$0xff]
          %v2379 = vld [vmem:[#allocation2 + $0x18] sm:$0xff]
          %v2380 = vld [vmem:[%s2] sm:$0x3]
          %v2382 = vlaneseq
          %v2383 = vshrl.u32 %v2382, 7
          %v2384 = vsub.s32 0, %v2383
          %v2385 = vrot.slane %v2380, %v2384
          %v2386 = vlaneseq
          %v2387 = vshrl.u32 %v2386, 7
          %v2388 = vsub.s32 1, %v2387
          %v2389 = vrot.slane %v2380, %v2388
          %v2392 = vadd.f32 %v2376, %v2385
          %v2393 = vadd.f32 %v2377, %v2389
          %v2394 = vadd.f32 %v2378, %v2385
          %v2395 = vadd.f32 %v2379, %v2389
          %v2396 = vmax.f32 %v2392, 0.0
          %v2397 = vmax.f32 %v2393, 0.0
          %v2398 = vmax.f32 %v2394, 0.0
          %v2399 = vmax.f32 %v2395, 0.0
          %v2400 = vpack.c.bf16 %v2398, %v2396
          %v2401 = vpack.c.bf16 %v2399, %v2397
          %v2402 = vld [vmem:[%s3] sm:$0xff]
          %v2403 = vld [vmem:[%s3 + $0x8] sm:$0xff]
          %v2404 = vld [vmem:[%s3 + $0x10] sm:$0xff]
          %v2405 = vld [vmem:[%s3 + $0x18] sm:$0xff]
          %v2406 = vld [vmem:[%s3 + $0x20] sm:$0xff]
          %v2407 = vld [vmem:[%s3 + $0x28] sm:$0xff]
          %v2408 = vld [vmem:[%s3 + $0x30] sm:$0xff]
          %v2409 = vld [vmem:[%s3 + $0x38] sm:$0xff]
          %v2410 = vld [vmem:[%s3 + $0x40] sm:$0xff]
          %v2411 = vld [vmem:[%s3 + $0x48] sm:$0xff]
          %v2412 = vld [vmem:[%s3 + $0x50] sm:$0xff]
          %v2413 = vld [vmem:[%s3 + $0x58] sm:$0xff]
          %v2414 = vld [vmem:[%s3 + $0x60] sm:$0xff]
          %v2415 = vld [vmem:[%s3 + $0x68] sm:$0xff]
          %v2416 = vld [vmem:[%s3 + $0x70] sm:$0xff]
          %v2417 = vld [vmem:[%s3 + $0x78] sm:$0xff]
          %v2418 = vld [vmem:[%s3 + $0x80] sm:$0xff]
          %v2419 = vld [vmem:[%s3 + $0x88] sm:$0xff]
          %v2420 = vld [vmem:[%s3 + $0x90] sm:$0xff]
          %v2421 = vld [vmem:[%s3 + $0x98] sm:$0xff]
          %v2422 = vld [vmem:[%s3 + $0xa0] sm:$0xff]
          %v2423 = vld [vmem:[%s3 + $0xa8] sm:$0xff]
          %v2424 = vld [vmem:[%s3 + $0xb0] sm:$0xff]
          %v2425 = vld [vmem:[%s3 + $0xb8] sm:$0xff]
          %v2426 = vld [vmem:[%s3 + $0xc0] sm:$0xff]
          %v2427 = vld [vmem:[%s3 + $0xc8] sm:$0xff]
          %v2428 = vld [vmem:[%s3 + $0xd0] sm:$0xff]
          %v2429 = vld [vmem:[%s3 + $0xd8] sm:$0xff]
          %v2430 = vld [vmem:[%s3 + $0xe0] sm:$0xff]
          %v2431 = vld [vmem:[%s3 + $0xe8] sm:$0xff]
          %v2432 = vld [vmem:[%s3 + $0xf0] sm:$0xff]
          %v2433 = vld [vmem:[%s3 + $0xf8] sm:$0xff]
          %v2434 = vld [vmem:[%s4] sm:$0x3]
          %v2436 = vlaneseq
          %v2437 = vshrl.u32 %v2436, 7
          %v2438 = vsub.s32 0, %v2437
          %v2439 = vrot.slane %v2434, %v2438
          %v2440 = vlaneseq
          %v2441 = vshrl.u32 %v2440, 7
          %v2442 = vsub.s32 1, %v2441
          %v2443 = vrot.slane %v2434, %v2442
          %v2478 = vunpack.c.l.b16 %v2402
          %v2479 = vunpack.c.h.b16 %v2402
          %v2480 = vunpack.c.l.b16 %v2403
          %v2481 = vunpack.c.h.b16 %v2403
          %v2482 = vunpack.c.l.b16 %v2404
          %v2483 = vunpack.c.h.b16 %v2404
          %v2484 = vunpack.c.l.b16 %v2405
          %v2485 = vunpack.c.h.b16 %v2405
          %v2486 = vunpack.c.l.b16 %v2406
          %v2487 = vunpack.c.h.b16 %v2406
          %v2488 = vunpack.c.l.b16 %v2407
          %v2489 = vunpack.c.h.b16 %v2407
          %v2490 = vunpack.c.l.b16 %v2408
          %v2491 = vunpack.c.h.b16 %v2408
          %v2492 = vunpack.c.l.b16 %v2409
          %v2493 = vunpack.c.h.b16 %v2409
          %v2494 = vunpack.c.l.b16 %v2410
          %v2495 = vunpack.c.h.b16 %v2410
          %v2496 = vunpack.c.l.b16 %v2411
          %v2497 = vunpack.c.h.b16 %v2411
          %v2498 = vunpack.c.l.b16 %v2412
          %v2499 = vunpack.c.h.b16 %v2412
          %v2500 = vunpack.c.l.b16 %v2413
          %v2501 = vunpack.c.h.b16 %v2413
          %v2502 = vunpack.c.l.b16 %v2414
          %v2503 = vunpack.c.h.b16 %v2414
          %v2504 = vunpack.c.l.b16 %v2415
          %v2505 = vunpack.c.h.b16 %v2415
          %v2506 = vunpack.c.l.b16 %v2416
          %v2507 = vunpack.c.h.b16 %v2416
          %v2508 = vunpack.c.l.b16 %v2417
          %v2509 = vunpack.c.h.b16 %v2417
          %v2510 = vunpack.c.l.b16 %v2418
          %v2511 = vunpack.c.h.b16 %v2418
          %v2512 = vunpack.c.l.b16 %v2419
          %v2513 = vunpack.c.h.b16 %v2419
          %v2514 = vunpack.c.l.b16 %v2420
          %v2515 = vunpack.c.h.b16 %v2420
          %v2516 = vunpack.c.l.b16 %v2421
          %v2517 = vunpack.c.h.b16 %v2421
          %v2518 = vunpack.c.l.b16 %v2422
          %v2519 = vunpack.c.h.b16 %v2422
          %v2520 = vunpack.c.l.b16 %v2423
          %v2521 = vunpack.c.h.b16 %v2423
          %v2522 = vunpack.c.l.b16 %v2424
          %v2523 = vunpack.c.h.b16 %v2424
          %v2524 = vunpack.c.l.b16 %v2425
          %v2525 = vunpack.c.h.b16 %v2425
          %v2526 = vunpack.c.l.b16 %v2426
          %v2527 = vunpack.c.h.b16 %v2426
          %v2528 = vunpack.c.l.b16 %v2427
          %v2529 = vunpack.c.h.b16 %v2427
          %v2530 = vunpack.c.l.b16 %v2428
          %v2531 = vunpack.c.h.b16 %v2428
          %v2532 = vunpack.c.l.b16 %v2429
          %v2533 = vunpack.c.h.b16 %v2429
          %v2534 = vunpack.c.l.b16 %v2430
          %v2535 = vunpack.c.h.b16 %v2430
          %v2536 = vunpack.c.l.b16 %v2431
          %v2537 = vunpack.c.h.b16 %v2431
          %v2538 = vunpack.c.l.b16 %v2432
          %v2539 = vunpack.c.h.b16 %v2432
          %v2540 = vunpack.c.l.b16 %v2433
          %v2541 = vunpack.c.h.b16 %v2433
          %v2542 = vpack.c.b16 %v2480, %v2478
          %v2543 = vpack.c.b16 %v2481, %v2479
          %v2544 = vpack.c.b16 %v2484, %v2482
          %v2545 = vpack.c.b16 %v2485, %v2483
          %v2546 = vpack.c.b16 %v2488, %v2486
          %v2547 = vpack.c.b16 %v2489, %v2487
          %v2548 = vpack.c.b16 %v2492, %v2490
          %v2549 = vpack.c.b16 %v2493, %v2491
          %v2550 = vpack.c.b16 %v2496, %v2494
          %v2551 = vpack.c.b16 %v2497, %v2495
          %v2552 = vpack.c.b16 %v2500, %v2498
          %v2553 = vpack.c.b16 %v2501, %v2499
          %v2554 = vpack.c.b16 %v2504, %v2502
          %v2555 = vpack.c.b16 %v2505, %v2503
          %v2556 = vpack.c.b16 %v2508, %v2506
          %v2557 = vpack.c.b16 %v2509, %v2507
          %v2558 = vpack.c.b16 %v2512, %v2510
          %v2559 = vpack.c.b16 %v2513, %v2511
          %v2560 = vpack.c.b16 %v2516, %v2514
          %v2561 = vpack.c.b16 %v2517, %v2515
          %v2562 = vpack.c.b16 %v2520, %v2518
          %v2563 = vpack.c.b16 %v2521, %v2519
          %v2564 = vpack.c.b16 %v2524, %v2522
          %v2565 = vpack.c.b16 %v2525, %v2523
          %v2566 = vpack.c.b16 %v2528, %v2526
          %v2567 = vpack.c.b16 %v2529, %v2527
          %v2568 = vpack.c.b16 %v2532, %v2530
          %v2569 = vpack.c.b16 %v2533, %v2531
          %v2570 = vpack.c.b16 %v2536, %v2534
          %v2571 = vpack.c.b16 %v2537, %v2535
          %v2572 = vpack.c.b16 %v2540, %v2538
          %v2573 = vpack.c.b16 %v2541, %v2539
          %2606 = vmatprep.subr.bf16.mxu0 %v2543
          %2607 = vmatpush1.bf16.msra.mxu0 %v2542
          %2608 = vmatprep.subr.bf16.mxu0 %v2545
          %2609 = vmatpush1.bf16.msra.mxu0 %v2544
          %2610 = vmatprep.subr.bf16.mxu0 %v2547
          %2611 = vmatpush1.bf16.msra.mxu0 %v2546
          %2612 = vmatprep.subr.bf16.mxu0 %v2549
          %2613 = vmatpush1.bf16.msra.mxu0 %v2548
          %2614 = vmatprep.subr.bf16.mxu0 %v2551
          %2615 = vmatpush1.bf16.msra.mxu0 %v2550
          %2616 = vmatprep.subr.bf16.mxu0 %v2553
          %2617 = vmatpush1.bf16.msra.mxu0 %v2552
          %2618 = vmatprep.subr.bf16.mxu0 %v2555
          %2619 = vmatpush1.bf16.msra.mxu0 %v2554
          %2620 = vmatprep.subr.bf16.mxu0 %v2557
          %2621 = vmatpush1.bf16.msra.mxu0 %v2556
          %2622 = vmatprep.subr.bf16.mxu0 %v2559
          %2623 = vmatpush1.bf16.msra.mxu0 %v2558
          %2624 = vmatprep.subr.bf16.mxu0 %v2561
          %2625 = vmatpush1.bf16.msra.mxu0 %v2560
          %2626 = vmatprep.subr.bf16.mxu0 %v2563
          %2627 = vmatpush1.bf16.msra.mxu0 %v2562
          %2628 = vmatprep.subr.bf16.mxu0 %v2565
          %2629 = vmatpush1.bf16.msra.mxu0 %v2564
          %2630 = vmatprep.subr.bf16.mxu0 %v2567
          %2631 = vmatpush1.bf16.msra.mxu0 %v2566
          %2632 = vmatprep.subr.bf16.mxu0 %v2569
          %2633 = vmatpush1.bf16.msra.mxu0 %v2568
          %2634 = vmatprep.subr.bf16.mxu0 %v2571
          %2635 = vmatpush1.bf16.msra.mxu0 %v2570
          %2636 = vmatprep.subr.bf16.mxu0 %v2573
          %2637 = vmatpush1.bf16.msra.mxu0 %v2572
          %2638 = vmatprep.mubr.bf16.mxu0 %v2401
          %2639 = vmatmul.mubr.bf16.gmra.mrb[0].mxu0 %v2400
          %v2640 = vpop.f32.mrb[0].mxu0
          %v2641 = vadd.f32 %v2439, %v2640
          %v2642 = vpop.f32.mrb[0].mxu0
          %v2643 = vadd.f32 %v2443, %v2642
          %v2644 = vpop.f32.mrb[0].mxu0
          %v2645 = vadd.f32 %v2439, %v2644
          %v2646 = vpop.f32.mrb[0].mxu0
          %v2647 = vadd.f32 %v2443, %v2646
          %2648 = vdwg.mxu0
          %v2649 = vmax.f32 %v2641, 0.0
          %v2650 = vmax.f32 %v2643, 0.0
          %v2651 = vmax.f32 %v2645, 0.0
          %v2652 = vmax.f32 %v2647, 0.0
          %v2653 = vpack.c.bf16 %v2651, %v2649
          %v2654 = vpack.c.bf16 %v2652, %v2650
          %v2655 = vld [vmem:[%s5] sm:$0xff]
          %v2656 = vld [vmem:[%s5 + $0x8] sm:$0xff]
          %v2657 = vld [vmem:[%s5 + $0x10] sm:$0xff]
          %v2658 = vld [vmem:[%s5 + $0x18] sm:$0xff]
          %v2659 = vld [vmem:[%s5 + $0x20] sm:$0xff]
          %v2660 = vld [vmem:[%s5 + $0x28] sm:$0xff]
          %v2661 = vld [vmem:[%s5 + $0x30] sm:$0xff]
          %v2662 = vld [vmem:[%s5 + $0x38] sm:$0xff]
          %v2663 = vld [vmem:[%s5 + $0x40] sm:$0xff]
          %v2664 = vld [vmem:[%s5 + $0x48] sm:$0xff]
          %v2665 = vld [vmem:[%s5 + $0x50] sm:$0xff]
          %v2666 = vld [vmem:[%s5 + $0x58] sm:$0xff]
          %v2667 = vld [vmem:[%s5 + $0x60] sm:$0xff]
          %v2668 = vld [vmem:[%s5 + $0x68] sm:$0xff]
          %v2669 = vld [vmem:[%s5 + $0x70] sm:$0xff]
          %v2670 = vld [vmem:[%s5 + $0x78] sm:$0xff]
          %v2671 = vld [vmem:[%s5 + $0x80] sm:$0xff]
          %v2672 = vld [vmem:[%s5 + $0x88] sm:$0xff]
          %v2673 = vld [vmem:[%s5 + $0x90] sm:$0xff]
          %v2674 = vld [vmem:[%s5 + $0x98] sm:$0xff]
          %v2675 = vld [vmem:[%s5 + $0xa0] sm:$0xff]
          %v2676 = vld [vmem:[%s5 + $0xa8] sm:$0xff]
          %v2677 = vld [vmem:[%s5 + $0xb0] sm:$0xff]
          %v2678 = vld [vmem:[%s5 + $0xb8] sm:$0xff]
          %v2679 = vld [vmem:[%s5 + $0xc0] sm:$0xff]
          %v2680 = vld [vmem:[%s5 + $0xc8] sm:$0xff]
          %v2681 = vld [vmem:[%s5 + $0xd0] sm:$0xff]
          %v2682 = vld [vmem:[%s5 + $0xd8] sm:$0xff]
          %v2683 = vld [vmem:[%s5 + $0xe0] sm:$0xff]
          %v2684 = vld [vmem:[%s5 + $0xe8] sm:$0xff]
          %v2685 = vld [vmem:[%s5 + $0xf0] sm:$0xff]
          %v2686 = vld [vmem:[%s5 + $0xf8] sm:$0xff]
          %v2687 = vld [vmem:[%s6] sm:$0x3]
          %v2689 = vlaneseq
          %v2690 = vshrl.u32 %v2689, 7
          %v2691 = vsub.s32 0, %v2690
          %v2692 = vrot.slane %v2687, %v2691
          %v2693 = vlaneseq
          %v2694 = vshrl.u32 %v2693, 7
          %v2695 = vsub.s32 1, %v2694
          %v2696 = vrot.slane %v2687, %v2695
          %v2731 = vunpack.c.l.b16 %v2655
          %v2732 = vunpack.c.h.b16 %v2655
          %v2733 = vunpack.c.l.b16 %v2656
          %v2734 = vunpack.c.h.b16 %v2656
          %v2735 = vunpack.c.l.b16 %v2657
          %v2736 = vunpack.c.h.b16 %v2657
          %v2737 = vunpack.c.l.b16 %v2658
          %v2738 = vunpack.c.h.b16 %v2658
          %v2739 = vunpack.c.l.b16 %v2659
          %v2740 = vunpack.c.h.b16 %v2659
          %v2741 = vunpack.c.l.b16 %v2660
          %v2742 = vunpack.c.h.b16 %v2660
          %v2743 = vunpack.c.l.b16 %v2661
          %v2744 = vunpack.c.h.b16 %v2661
          %v2745 = vunpack.c.l.b16 %v2662
          %v2746 = vunpack.c.h.b16 %v2662
          %v2747 = vunpack.c.l.b16 %v2663
          %v2748 = vunpack.c.h.b16 %v2663
          %v2749 = vunpack.c.l.b16 %v2664
          %v2750 = vunpack.c.h.b16 %v2664
          %v2751 = vunpack.c.l.b16 %v2665
          %v2752 = vunpack.c.h.b16 %v2665
          %v2753 = vunpack.c.l.b16 %v2666
          %v2754 = vunpack.c.h.b16 %v2666
          %v2755 = vunpack.c.l.b16 %v2667
          %v2756 = vunpack.c.h.b16 %v2667
          %v2757 = vunpack.c.l.b16 %v2668
          %v2758 = vunpack.c.h.b16 %v2668
          %v2759 = vunpack.c.l.b16 %v2669
          %v2760 = vunpack.c.h.b16 %v2669
          %v2761 = vunpack.c.l.b16 %v2670
          %v2762 = vunpack.c.h.b16 %v2670
          %v2763 = vunpack.c.l.b16 %v2671
          %v2764 = vunpack.c.h.b16 %v2671
          %v2765 = vunpack.c.l.b16 %v2672
          %v2766 = vunpack.c.h.b16 %v2672
          %v2767 = vunpack.c.l.b16 %v2673
          %v2768 = vunpack.c.h.b16 %v2673
          %v2769 = vunpack.c.l.b16 %v2674
          %v2770 = vunpack.c.h.b16 %v2674
          %v2771 = vunpack.c.l.b16 %v2675
          %v2772 = vunpack.c.h.b16 %v2675
          %v2773 = vunpack.c.l.b16 %v2676
          %v2774 = vunpack.c.h.b16 %v2676
          %v2775 = vunpack.c.l.b16 %v2677
          %v2776 = vunpack.c.h.b16 %v2677
          %v2777 = vunpack.c.l.b16 %v2678
          %v2778 = vunpack.c.h.b16 %v2678
          %v2779 = vunpack.c.l.b16 %v2679
          %v2780 = vunpack.c.h.b16 %v2679
          %v2781 = vunpack.c.l.b16 %v2680
          %v2782 = vunpack.c.h.b16 %v2680
          %v2783 = vunpack.c.l.b16 %v2681
          %v2784 = vunpack.c.h.b16 %v2681
          %v2785 = vunpack.c.l.b16 %v2682
          %v2786 = vunpack.c.h.b16 %v2682
          %v2787 = vunpack.c.l.b16 %v2683
          %v2788 = vunpack.c.h.b16 %v2683
          %v2789 = vunpack.c.l.b16 %v2684
          %v2790 = vunpack.c.h.b16 %v2684
          %v2791 = vunpack.c.l.b16 %v2685
          %v2792 = vunpack.c.h.b16 %v2685
          %v2793 = vunpack.c.l.b16 %v2686
          %v2794 = vunpack.c.h.b16 %v2686
          %v2795 = vpack.c.b16 %v2733, %v2731
          %v2796 = vpack.c.b16 %v2734, %v2732
          %v2797 = vpack.c.b16 %v2737, %v2735
          %v2798 = vpack.c.b16 %v2738, %v2736
          %v2799 = vpack.c.b16 %v2741, %v2739
          %v2800 = vpack.c.b16 %v2742, %v2740
          %v2801 = vpack.c.b16 %v2745, %v2743
          %v2802 = vpack.c.b16 %v2746, %v2744
          %v2803 = vpack.c.b16 %v2749, %v2747
          %v2804 = vpack.c.b16 %v2750, %v2748
          %v2805 = vpack.c.b16 %v2753, %v2751
          %v2806 = vpack.c.b16 %v2754, %v2752
          %v2807 = vpack.c.b16 %v2757, %v2755
          %v2808 = vpack.c.b16 %v2758, %v2756
          %v2809 = vpack.c.b16 %v2761, %v2759
          %v2810 = vpack.c.b16 %v2762, %v2760
          %v2811 = vpack.c.b16 %v2765, %v2763
          %v2812 = vpack.c.b16 %v2766, %v2764
          %v2813 = vpack.c.b16 %v2769, %v2767
          %v2814 = vpack.c.b16 %v2770, %v2768
          %v2815 = vpack.c.b16 %v2773, %v2771
          %v2816 = vpack.c.b16 %v2774, %v2772
          %v2817 = vpack.c.b16 %v2777, %v2775
          %v2818 = vpack.c.b16 %v2778, %v2776
          %v2819 = vpack.c.b16 %v2781, %v2779
          %v2820 = vpack.c.b16 %v2782, %v2780
          %v2821 = vpack.c.b16 %v2785, %v2783
          %v2822 = vpack.c.b16 %v2786, %v2784
          %v2823 = vpack.c.b16 %v2789, %v2787
          %v2824 = vpack.c.b16 %v2790, %v2788
          %v2825 = vpack.c.b16 %v2793, %v2791
          %v2826 = vpack.c.b16 %v2794, %v2792
          %2859 = vmatprep.subr.bf16.mxu0 %v2796
          %2860 = vmatpush1.bf16.msra.mxu0 %v2795
          %2861 = vmatprep.subr.bf16.mxu0 %v2798
          %2862 = vmatpush1.bf16.msra.mxu0 %v2797
          %2863 = vmatprep.subr.bf16.mxu0 %v2800
          %2864 = vmatpush1.bf16.msra.mxu0 %v2799
          %2865 = vmatprep.subr.bf16.mxu0 %v2802
          %2866 = vmatpush1.bf16.msra.mxu0 %v2801
          %2867 = vmatprep.subr.bf16.mxu0 %v2804
          %2868 = vmatpush1.bf16.msra.mxu0 %v2803
          %2869 = vmatprep.subr.bf16.mxu0 %v2806
          %2870 = vmatpush1.bf16.msra.mxu0 %v2805
          %2871 = vmatprep.subr.bf16.mxu0 %v2808
          %2872 = vmatpush1.bf16.msra.mxu0 %v2807
          %2873 = vmatprep.subr.bf16.mxu0 %v2810
          %2874 = vmatpush1.bf16.msra.mxu0 %v2809
          %2875 = vmatprep.subr.bf16.mxu0 %v2812
          %2876 = vmatpush1.bf16.msra.mxu0 %v2811
          %2877 = vmatprep.subr.bf16.mxu0 %v2814
          %2878 = vmatpush1.bf16.msra.mxu0 %v2813
          %2879 = vmatprep.subr.bf16.mxu0 %v2816
          %2880 = vmatpush1.bf16.msra.mxu0 %v2815
          %2881 = vmatprep.subr.bf16.mxu0 %v2818
          %2882 = vmatpush1.bf16.msra.mxu0 %v2817
          %2883 = vmatprep.subr.bf16.mxu0 %v2820
          %2884 = vmatpush1.bf16.msra.mxu0 %v2819
          %2885 = vmatprep.subr.bf16.mxu0 %v2822
          %2886 = vmatpush1.bf16.msra.mxu0 %v2821
          %2887 = vmatprep.subr.bf16.mxu0 %v2824
          %2888 = vmatpush1.bf16.msra.mxu0 %v2823
          %2889 = vmatprep.subr.bf16.mxu0 %v2826
          %2890 = vmatpush1.bf16.msra.mxu0 %v2825
          %2891 = vmatprep.mubr.bf16.mxu0 %v2654
          %2892 = vmatmul.mubr.bf16.gmra.mrb[0].mxu0 %v2653
          %v2893 = vpop.f32.mrb[0].mxu0
          %v2894 = vadd.f32 %v2692, %v2893
          %v2895 = vpop.f32.mrb[0].mxu0
          %v2896 = vadd.f32 %v2696, %v2895
          %v2897 = vpop.f32.mrb[0].mxu0
          %v2898 = vadd.f32 %v2692, %v2897
          %v2899 = vpop.f32.mrb[0].mxu0
          %v2900 = vadd.f32 %v2696, %v2899
          %2901 = vdwg.mxu0
          %2902 = vst [vmem:[%s374] sm:$0xff] %v2894
          %2903 = vst [vmem:[%s374 + $0x8] sm:$0xff] %v2896
          %2904 = vst [vmem:[%s374 + $0x10] sm:$0xff] %v2898
          %2905 = vst [vmem:[%s374 + $0x18] sm:$0xff] %v2900
        $region79: #{recognet_forward.2} parent=66 // pred_fallthru
          _
        %s2906 = smul.u32 2, %s22
        %p2907 = scmp.lt.s32.totalorder %s2906, 1
        %s2908 = scalar_select %p2907, %s2906, 1
        %s2909 = smul.addr %s2908, 2
        %s2910 = smul.addr %s2909, 8
        %s2911 = scalar_lea.vmem %s7, %s2910
        // Predicated region
        $region80: #{recognet_forward.2} parent=66 // pred_check
          %p2912 = pneg %p207
        $region81: #{recognet_forward.2} parent=66 // pred_check_branch
          %2914 = sbr.rel (%p2912) target = $region83
        $region82: #{recognet_forward.2} parent=66 // pred_region
          %s2915 = smul.u32 2, %s22
        $region83: #{recognet_forward.2} parent=66 // pred_fallthru
          _
        // Predicated region
        $region84: #{recognet_forward.2} parent=66 // pred_check
          %p2916 = pneg %p207
        $region85: #{recognet_forward.2} parent=66 // pred_check_branch
          %2918 = sbr.rel (%p2916) target = $region87
        $region86: #{recognet_forward.2} parent=66 // pred_region
          %s2919 = smul.u32 2, %s22
          %p2920 = scmp.lt.s32.totalorder %s2919, 1
          %s2921 = scalar_select %p2920, %s2919, 1
          %s2922 = smul.addr %s2921, 2
          %s2923 = smul.addr %s2922, 8
          %s2924 = scalar_lea.vmem %s7, %s2923
        $region87: #{recognet_forward.2} parent=66 // pred_fallthru
          _
      $region67: #{recognet_forward.2} parent=5 // pred_fallthru
        _
      %p2925 = scmp.le.s32.totalorder 2, %s13
      // Predicated region
      $region88: #{recognet_forward.2} parent=5 // pred_check
        %p2926 = pneg %p2925
      $region89: #{recognet_forward.2} parent=5 // pred_check_branch
        %2928 = sbr.rel (%p2926) target = $region91
      $region90: #{recognet_forward.2} parent=5 // pred_region
        %s2929 = ssub.s32 %s13, 2
      $region91: #{recognet_forward.2} parent=5 // pred_fallthru
        _
    $region6: #{recognet_forward.2} parent=1 // loop_footer
      %s17 = sadd.s32 1, %s13
    $region7: #{recognet_forward.2} parent=1 // loop_footer_branch
      %12 = sbr.rel target = $region3
    $region8: #{recognet_forward.2} parent=1 // loop_exit
      _

// kernel: recognet_forward.3
$region0: #{recognet_forward.3}
  #allocation0 [shape = 'u32[]', space=smem, size = 0x4, offset = 0x4, fixed_abs, tag = 'smem constant byte address 0x4 - core index']
  #allocation1 [shape = 'u32[144,128]{1,0:T(1,128)}', space=vmem, size = 0x12000, scoped, tag = 'internal scratch']
  #allocation2 [shape = 'f32[56,512]{1,0:T(8,128)}', space=vmem, size = 0x1c000, scoped, tag = 'scratch operand']
  #allocation3 [shape = 'f32[56,128]{1,0:T(8,128)}', space=vmem, size = 0x7000, scoped, tag = 'scratch operand']
  #allocation4 [shape = 'f32[8,128]{1,0:T(8,128)}', space=vmem, size = 0x1000, scoped, tag = 'scratch operand']
  #allocation5 [shape = 'f32[8,128]{1,0:T(8,128)}', space=vmem, size = 0x1000, scoped, tag = 'scratch operand']
  %s0 = inlined_call_operand.vmem [shape: bf16[56,128], index: 0, kind: input, shape index: {}]
  %s1 = inlined_call_operand.vmem [shape: bf16[128,512], index: 1, kind: input, shape index: {}]
  %s2 = inlined_call_operand.vmem [shape: bf16[128,512], index: 2, kind: input, shape index: {}]
  %s3 = inlined_call_operand.vmem [shape: f32[1,512], index: 3, kind: input, shape index: {}]
  %s4 = inlined_call_operand.vmem [shape: bf16[128,2048], index: 4, kind: input, shape index: {}]
  %s5 = inlined_call_operand.vmem [shape: f32[1,2048], index: 5, kind: input, shape index: {}]
  %s6 = inlined_call_operand.vmem [shape: f32[56,2048], index: 6, kind: output, shape index: {}]
  %s7 = sld [smem:[#allocation0]]
  $region103: #{recognet_forward.3} parent=0
    _
  %s9 = ssub.s32 1, %s7
  %s10 = scalar_select 0, %s9, %s7
  $region1: #{recognet_forward.3} parent=0
    #allocation6 [shape = 'u8[524288]{0}', space=vmem, size = 0x80000, scoped, tag = 'input window, operand 4']
    #allocation7 [shape = 'u8[458752]{0}', space=vmem, size = 0x70000, scoped, tag = 'output window, operand 0']
    loop: start=0, step=1, limit=4
    $region2: #{recognet_forward.3} parent=1 // loop_pre_header
      _
    $region3: #{recognet_forward.3} parent=1 // loop_header
      %s12 = sphi 0, %s16
      %p13 = scmp.ge.s32.totalorder %s12, 4
      %s20 = sphi 0, %s20
      %s22 = sphi 0, %s20
      %s23 = sphi 0, %s22
      %s37 = sphi 0, %s23
      %s41 = sphi 0, %s41
      %s43 = sphi 0, %s41
      %s44 = sphi 0, %s43
      %s58 = sphi 0, %s44
      %s62 = sphi 0, %s62
      %s64 = sphi 0, %s62
      %s65 = sphi 0, %s64
      %s79 = sphi 0, %s65
      %s83 = sphi 0, %s83
      %s85 = sphi 0, %s83
      %s86 = sphi 0, %s85
      %s100 = sphi 0, %s86
      %s106 = sphi 0, %s108
      %s109 = sphi 0, %s106
      %s110 = sphi 0, %s109
      %s126 = sphi 0, %s110
      %s132 = sphi 0, %s134
      %s135 = sphi 0, %s132
      %s136 = sphi 0, %s135
      %s152 = sphi 0, %s136
      %s158 = sphi 0, %s160
      %s161 = sphi 0, %s158
      %s162 = sphi 0, %s161
      %s178 = sphi 0, %s162
    $region4: #{recognet_forward.3} parent=1 // loop_header_branch
      %15 = sbr.rel (%p13) target = $region8
    $region5: #{recognet_forward.3} parent=1 // loop_body
      %s17 = ssub.s32 %s12, 1
      %s18 = ssub.s32 %s12, 2
      %s19 = sadd.s32 %s12, 1
      %s21 = sadd.s32 %s20, 1
      %p24 = scmp.eq.s32.totalorder %s12, 1
      %p25 = scmp.ne.s32.totalorder %s20, %s22
      %p26 = scmp.eq.s32.totalorder %s12, 0
      %p27 = por %p25, %p26
      %p28 = scmp.ne.s32.totalorder %s20, %s22
      %p29 = scmp.eq.s32.totalorder %s17, 1
      %p30 = por %p28, %p29
      %p31 = scmp.ne.s32.totalorder %s22, %s23
      %p32 = scmp.eq.s32.totalorder %s17, 0
      %p33 = por %p31, %p32
      %p34 = scmp.ne.s32.totalorder %s22, %s23
      %p35 = scmp.eq.s32.totalorder %s18, 1
      %p36 = por %p34, %p35
      %p38 = scmp.ne.s32.totalorder %s23, %s37
      %p39 = scmp.eq.s32.totalorder %s18, 0
      %p40 = por %p38, %p39
      %s42 = sadd.s32 %s41, 1
      %p45 = scmp.eq.s32.totalorder %s12, 1
      %p46 = scmp.ne.s32.totalorder %s41, %s43
      %p47 = scmp.eq.s32.totalorder %s12, 0
      %p48 = por %p46, %p47
      %p49 = scmp.ne.s32.totalorder %s41, %s43
      %p50 = scmp.eq.s32.totalorder %s17, 1
      %p51 = por %p49, %p50
      %p52 = scmp.ne.s32.totalorder %s43, %s44
      %p53 = scmp.eq.s32.totalorder %s17, 0
      %p54 = por %p52, %p53
      %p55 = scmp.ne.s32.totalorder %s43, %s44
      %p56 = scmp.eq.s32.totalorder %s18, 1
      %p57 = por %p55, %p56
      %p59 = scmp.ne.s32.totalorder %s44, %s58
      %p60 = scmp.eq.s32.totalorder %s18, 0
      %p61 = por %p59, %p60
      %s63 = sadd.s32 %s62, 1
      %p66 = scmp.eq.s32.totalorder %s12, 1
      %p67 = scmp.ne.s32.totalorder %s62, %s64
      %p68 = scmp.eq.s32.totalorder %s12, 0
      %p69 = por %p67, %p68
      %p70 = scmp.ne.s32.totalorder %s62, %s64
      %p71 = scmp.eq.s32.totalorder %s17, 1
      %p72 = por %p70, %p71
      %p73 = scmp.ne.s32.totalorder %s64, %s65
      %p74 = scmp.eq.s32.totalorder %s17, 0
      %p75 = por %p73, %p74
      %p76 = scmp.ne.s32.totalorder %s64, %s65
      %p77 = scmp.eq.s32.totalorder %s18, 1
      %p78 = por %p76, %p77
      %p80 = scmp.ne.s32.totalorder %s65, %s79
      %p81 = scmp.eq.s32.totalorder %s18, 0
      %p82 = por %p80, %p81
      %s84 = sadd.s32 %s83, 1
      %p87 = scmp.eq.s32.totalorder %s12, 1
      %p88 = scmp.ne.s32.totalorder %s83, %s85
      %p89 = scmp.eq.s32.totalorder %s12, 0
      %p90 = por %p88, %p89
      %p91 = scmp.ne.s32.totalorder %s83, %s85
      %p92 = scmp.eq.s32.totalorder %s17, 1
      %p93 = por %p91, %p92
      %p94 = scmp.ne.s32.totalorder %s85, %s86
      %p95 = scmp.eq.s32.totalorder %s17, 0
      %p96 = por %p94, %p95
      %p97 = scmp.ne.s32.totalorder %s85, %s86
      %p98 = scmp.eq.s32.totalorder %s18, 1
      %p99 = por %p97, %p98
      %p101 = scmp.ne.s32.totalorder %s86, %s100
      %p102 = scmp.eq.s32.totalorder %s18, 0
      %p103 = por %p101, %p102
      %s104 = ssub.s32 %s12, %s19
      %p105 = scmp.eq.s32.totalorder %s104, 0
      %s107 = sadd.s32 %s106, 1
      %s108 = scalar_select %p105, %s106, %s107
      %p111 = pneg %p105
      %p112 = scmp.eq.s32.totalorder %s12, 1
      %p113 = por %p111, %p112
      %p114 = scmp.ne.s32.totalorder %s106, %s109
      %p115 = scmp.eq.s32.totalorder %s12, 0
      %p116 = por %p114, %p115
      %p117 = scmp.ne.s32.totalorder %s106, %s109
      %p118 = scmp.eq.s32.totalorder %s17, 1
      %p119 = por %p117, %p118
      %p120 = scmp.ne.s32.totalorder %s109, %s110
      %p121 = scmp.eq.s32.totalorder %s17, 0
      %p122 = por %p120, %p121
      %p123 = scmp.ne.s32.totalorder %s109, %s110
      %p124 = scmp.eq.s32.totalorder %s18, 1
      %p125 = por %p123, %p124
      %p127 = scmp.ne.s32.totalorder %s110, %s126
      %p128 = scmp.eq.s32.totalorder %s18, 0
      %p129 = por %p127, %p128
      %s130 = ssub.s32 %s12, %s19
      %p131 = scmp.eq.s32.totalorder %s130, 0
      %s133 = sadd.s32 %s132, 1
      %s134 = scalar_select %p131, %s132, %s133
      %p137 = pneg %p131
      %p138 = scmp.eq.s32.totalorder %s12, 1
      %p139 = por %p137, %p138
      %p140 = scmp.ne.s32.totalorder %s132, %s135
      %p141 = scmp.eq.s32.totalorder %s12, 0
      %p142 = por %p140, %p141
      %p143 = scmp.ne.s32.totalorder %s132, %s135
      %p144 = scmp.eq.s32.totalorder %s17, 1
      %p145 = por %p143, %p144
      %p146 = scmp.ne.s32.totalorder %s135, %s136
      %p147 = scmp.eq.s32.totalorder %s17, 0
      %p148 = por %p146, %p147
      %p149 = scmp.ne.s32.totalorder %s135, %s136
      %p150 = scmp.eq.s32.totalorder %s18, 1
      %p151 = por %p149, %p150
      %p153 = scmp.ne.s32.totalorder %s136, %s152
      %p154 = scmp.eq.s32.totalorder %s18, 0
      %p155 = por %p153, %p154
      %s156 = ssub.s32 %s12, %s19
      %p157 = scmp.eq.s32.totalorder %s156, 0
      %s159 = sadd.s32 %s158, 1
      %s160 = scalar_select %p157, %s158, %s159
      %p163 = pneg %p157
      %p164 = scmp.eq.s32.totalorder %s12, 1
      %p165 = por %p163, %p164
      %p166 = scmp.ne.s32.totalorder %s158, %s161
      %p167 = scmp.eq.s32.totalorder %s12, 0
      %p168 = por %p166, %p167
      %p169 = scmp.ne.s32.totalorder %s158, %s161
      %p170 = scmp.eq.s32.totalorder %s17, 1
      %p171 = por %p169, %p170
      %p172 = scmp.ne.s32.totalorder %s161, %s162
      %p173 = scmp.eq.s32.totalorder %s17, 0
      %p174 = por %p172, %p173
      %p175 = scmp.ne.s32.totalorder %s161, %s162
      %p176 = scmp.eq.s32.totalorder %s18, 1
      %p177 = por %p175, %p176
      %p179 = scmp.ne.s32.totalorder %s162, %s178
      %p180 = scmp.eq.s32.totalorder %s18, 0
      %p181 = por %p179, %p180
      %p182 = scmp.le.s32.totalorder 1, %s12
      %p183 = scmp.lt.s32.totalorder %s12, 3
      %p184 = pnand %p182, %p183
      %p185 = pneg %p184
      // Predicated region
      $region9: #{recognet_forward.3} parent=5 // pred_check
        _
      $region10: #{recognet_forward.3} parent=5 // pred_check_branch
        %187 = sbr.rel (%p184) target = $region12
      $region11: #{recognet_forward.3} parent=5 // pred_region
        %s188 = ssub.s32 %s12, 1
        // Predicated region
        $region13: #{recognet_forward.3} parent=11 // pred_check
          %p189 = pneg %p33
        $region14: #{recognet_forward.3} parent=11 // pred_check_branch
          %191 = sbr.rel (%p189) target = $region16
        $region15: #{recognet_forward.3} parent=11 // pred_region
          _
        $region16: #{recognet_forward.3} parent=11 // pred_fallthru
          _
        // Predicated region
        $region17: #{recognet_forward.3} parent=11 // pred_check
          %p192 = pneg %p54
        $region18: #{recognet_forward.3} parent=11 // pred_check_branch
          %194 = sbr.rel (%p192) target = $region20
        $region19: #{recognet_forward.3} parent=11 // pred_region
          _
        $region20: #{recognet_forward.3} parent=11 // pred_fallthru
          _
        // Predicated region
        $region21: #{recognet_forward.3} parent=11 // pred_check
          %p195 = pneg %p75
        $region22: #{recognet_forward.3} parent=11 // pred_check_branch
          %197 = sbr.rel (%p195) target = $region24
        $region23: #{recognet_forward.3} parent=11 // pred_region
          _
        $region24: #{recognet_forward.3} parent=11 // pred_fallthru
          _
        // Predicated region
        $region25: #{recognet_forward.3} parent=11 // pred_check
          %p198 = pneg %p96
        $region26: #{recognet_forward.3} parent=11 // pred_check_branch
          %200 = sbr.rel (%p198) target = $region28
        $region27: #{recognet_forward.3} parent=11 // pred_region
          _
        $region28: #{recognet_forward.3} parent=11 // pred_fallthru
          _
      $region12: #{recognet_forward.3} parent=5 // pred_fallthru
        _
      %p201 = scmp.lt.s32.totalorder %s12, 2
      // Predicated region
      $region29: #{recognet_forward.3} parent=5 // pred_check
        %p202 = pneg %p201
      $region30: #{recognet_forward.3} parent=5 // pred_check_branch
        %204 = sbr.rel (%p202) target = $region32
      $region31: #{recognet_forward.3} parent=5 // pred_region
        // Predicated region
        $region33: #{recognet_forward.3} parent=31 // pred_check
          %p205 = pneg %p116
        $region34: #{recognet_forward.3} parent=31 // pred_check_branch
          %207 = sbr.rel (%p205) target = $region36
        $region35: #{recognet_forward.3} parent=31 // pred_region
          %s208 = sand.u32 %s106, 1
          %s209 = sand.u32 %s106, 1
          %s210 = smul.addr %s209, 512
          %s211 = scalar_lea.vmem [#allocation6], %s210
          %s212 = smul.u32 8, %s12
          %s213 = smul.addr %s212, 4
          %s214 = scalar_lea.vmem %s4, %s213
          // Predicated region
          $region37: #{recognet_forward.3} parent=35 // pred_check
            _
          $region38: #{recognet_forward.3} parent=35 // pred_check_branch
            %216 = sbr.rel (0) target = $region40
          $region39: #{recognet_forward.3} parent=35 // pred_region
            // Predicated region
            $region41: #{recognet_forward.3} parent=39 // pred_check
              _
            $region42: #{recognet_forward.3} parent=39 // pred_check_branch
              %218 = sbr.rel (0) target = $region44
            $region43: #{recognet_forward.3} parent=39 // pred_region
              loop: start=0, step=1, limit=1
              $region45: #{recognet_forward.3} parent=43 // loop_pre_header
                _
              $region46: #{recognet_forward.3} parent=43 // loop_header
                %s220 = sphi 0, %s224
                %p221 = scmp.ge.s32.totalorder %s220, 1
                %s225 = sphi %s214, %s214
                %s226 = sphi %s211, %s211
              $region47: #{recognet_forward.3} parent=43 // loop_header_branch
                %223 = sbr.rel (%p221) target = $region51
              $region48: #{recognet_forward.3} parent=43 // loop_body
                %v227 = vld [vmem:[%s225] sm:$0xff]
                %228 = vst [vmem:[%s226] sm:$0xff] %v227
                %v229 = vld [vmem:[%s225 + $0x8] sm:$0xff]
                %230 = vst [vmem:[%s226 + $0x8] sm:$0xff] %v229
                %v231 = vld [vmem:[%s225 + $0x10] sm:$0xff]
                %232 = vst [vmem:[%s226 + $0x10] sm:$0xff] %v231
                %v233 = vld [vmem:[%s225 + $0x18] sm:$0xff]
                %234 = vst [vmem:[%s226 + $0x18] sm:$0xff] %v233
                %v235 = vld [vmem:[%s225 + $0x40] sm:$0xff]
                %236 = vst [vmem:[%s226 + $0x20] sm:$0xff] %v235
                %v237 = vld [vmem:[%s225 + $0x48] sm:$0xff]
                %238 = vst [vmem:[%s226 + $0x28] sm:$0xff] %v237
                %v239 = vld [vmem:[%s225 + $0x50] sm:$0xff]
                %240 = vst [vmem:[%s226 + $0x30] sm:$0xff] %v239
                %v241 = vld [vmem:[%s225 + $0x58] sm:$0xff]
                %242 = vst [vmem:[%s226 + $0x38] sm:$0xff] %v241
                %v243 = vld [vmem:[%s225 + $0x80] sm:$0xff]
                %244 = vst [vmem:[%s226 + $0x40] sm:$0xff] %v243
                %v245 = vld [vmem:[%s225 + $0x88] sm:$0xff]
                %246 = vst [vmem:[%s226 + $0x48] sm:$0xff] %v245
                %v247 = vld [vmem:[%s225 + $0x90] sm:$0xff]
                %248 = vst [vmem:[%s226 + $0x50] sm:$0xff] %v247
                %v249 = vld [vmem:[%s225 + $0x98] sm:$0xff]
                %250 = vst [vmem:[%s226 + $0x58] sm:$0xff] %v249
                %v251 = vld [vmem:[%s225 + $0xc0] sm:$0xff]
                %252 = vst [vmem:[%s226 + $0x60] sm:$0xff] %v251
                %v253 = vld [vmem:[%s225 + $0xc8] sm:$0xff]
                %254 = vst [vmem:[%s226 + $0x68] sm:$0xff] %v253
                %v255 = vld [vmem:[%s225 + $0xd0] sm:$0xff]
                %256 = vst [vmem:[%s226 + $0x70] sm:$0xff] %v255
                %v257 = vld [vmem:[%s225 + $0xd8] sm:$0xff]
                %258 = vst [vmem:[%s226 + $0x78] sm:$0xff] %v257
                %v259 = vld [vmem:[%s225 + $0x100] sm:$0xff]
                %260 = vst [vmem:[%s226 + $0x80] sm:$0xff] %v259
                %v261 = vld [vmem:[%s225 + $0x108] sm:$0xff]
                %262 = vst [vmem:[%s226 + $0x88] sm:$0xff] %v261
                %v263 = vld [vmem:[%s225 + $0x110] sm:$0xff]
                %264 = vst [vmem:[%s226 + $0x90] sm:$0xff] %v263
                %v265 = vld [vmem:[%s225 + $0x118] sm:$0xff]
                %266 = vst [vmem:[%s226 + $0x98] sm:$0xff] %v265
                %v267 = vld [vmem:[%s225 + $0x140] sm:$0xff]
                %268 = vst [vmem:[%s226 + $0xa0] sm:$0xff] %v267
                %v269 = vld [vmem:[%s225 + $0x148] sm:$0xff]
                %270 = vst [vmem:[%s226 + $0xa8] sm:$0xff] %v269
                %v271 = vld [vmem:[%s225 + $0x150] sm:$0xff]
                %272 = vst [vmem:[%s226 + $0xb0] sm:$0xff] %v271
                %v273 = vld [vmem:[%s225 + $0x158] sm:$0xff]
                %274 = vst [vmem:[%s226 + $0xb8] sm:$0xff] %v273
                %v275 = vld [vmem:[%s225 + $0x180] sm:$0xff]
                %276 = vst [vmem:[%s226 + $0xc0] sm:$0xff] %v275
                %v277 = vld [vmem:[%s225 + $0x188] sm:$0xff]
                %278 = vst [vmem:[%s226 + $0xc8] sm:$0xff] %v277
                %v279 = vld [vmem:[%s225 + $0x190] sm:$0xff]
                %280 = vst [vmem:[%s226 + $0xd0] sm:$0xff] %v279
                %v281 = vld [vmem:[%s225 + $0x198] sm:$0xff]
                %282 = vst [vmem:[%s226 + $0xd8] sm:$0xff] %v281
                %v283 = vld [vmem:[%s225 + $0x1c0] sm:$0xff]
                %284 = vst [vmem:[%s226 + $0xe0] sm:$0xff] %v283
                %v285 = vld [vmem:[%s225 + $0x1c8] sm:$0xff]
                %286 = vst [vmem:[%s226 + $0xe8] sm:$0xff] %v285
                %v287 = vld [vmem:[%s225 + $0x1d0] sm:$0xff]
                %288 = vst [vmem:[%s226 + $0xf0] sm:$0xff] %v287
                %v289 = vld [vmem:[%s225 + $0x1d8] sm:$0xff]
                %290 = vst [vmem:[%s226 + $0xf8] sm:$0xff] %v289
                %v291 = vld [vmem:[%s225 + $0x200] sm:$0xff]
                %292 = vst [vmem:[%s226 + $0x100] sm:$0xff] %v291
                %v293 = vld [vmem:[%s225 + $0x208] sm:$0xff]
                %294 = vst [vmem:[%s226 + $0x108] sm:$0xff] %v293
                %v295 = vld [vmem:[%s225 + $0x210] sm:$0xff]
                %296 = vst [vmem:[%s226 + $0x110] sm:$0xff] %v295
                %v297 = vld [vmem:[%s225 + $0x218] sm:$0xff]
                %298 = vst [vmem:[%s226 + $0x118] sm:$0xff] %v297
                %v299 = vld [vmem:[%s225 + $0x240] sm:$0xff]
                %300 = vst [vmem:[%s226 + $0x120] sm:$0xff] %v299
                %v301 = vld [vmem:[%s225 + $0x248] sm:$0xff]
                %302 = vst [vmem:[%s226 + $0x128] sm:$0xff] %v301
                %v303 = vld [vmem:[%s225 + $0x250] sm:$0xff]
                %304 = vst [vmem:[%s226 + $0x130] sm:$0xff] %v303
                %v305 = vld [vmem:[%s225 + $0x258] sm:$0xff]
                %306 = vst [vmem:[%s226 + $0x138] sm:$0xff] %v305
                %v307 = vld [vmem:[%s225 + $0x280] sm:$0xff]
                %308 = vst [vmem:[%s226 + $0x140] sm:$0xff] %v307
                %v309 = vld [vmem:[%s225 + $0x288] sm:$0xff]
                %310 = vst [vmem:[%s226 + $0x148] sm:$0xff] %v309
                %v311 = vld [vmem:[%s225 + $0x290] sm:$0xff]
                %312 = vst [vmem:[%s226 + $0x150] sm:$0xff] %v311
                %v313 = vld [vmem:[%s225 + $0x298] sm:$0xff]
                %314 = vst [vmem:[%s226 + $0x158] sm:$0xff] %v313
                %v315 = vld [vmem:[%s225 + $0x2c0] sm:$0xff]
                %316 = vst [vmem:[%s226 + $0x160] sm:$0xff] %v315
                %v317 = vld [vmem:[%s225 + $0x2c8] sm:$0xff]
                %318 = vst [vmem:[%s226 + $0x168] sm:$0xff] %v317
                %v319 = vld [vmem:[%s225 + $0x2d0] sm:$0xff]
                %320 = vst [vmem:[%s226 + $0x170] sm:$0xff] %v319
                %v321 = vld [vmem:[%s225 + $0x2d8] sm:$0xff]
                %322 = vst [vmem:[%s226 + $0x178] sm:$0xff] %v321
                %v323 = vld [vmem:[%s225 + $0x300] sm:$0xff]
                %324 = vst [vmem:[%s226 + $0x180] sm:$0xff] %v323
                %v325 = vld [vmem:[%s225 + $0x308] sm:$0xff]
                %326 = vst [vmem:[%s226 + $0x188] sm:$0xff] %v325
                %v327 = vld [vmem:[%s225 + $0x310] sm:$0xff]
                %328 = vst [vmem:[%s226 + $0x190] sm:$0xff] %v327
                %v329 = vld [vmem:[%s225 + $0x318] sm:$0xff]
                %330 = vst [vmem:[%s226 + $0x198] sm:$0xff] %v329
                %v331 = vld [vmem:[%s225 + $0x340] sm:$0xff]
                %332 = vst [vmem:[%s226 + $0x1a0] sm:$0xff] %v331
                %v333 = vld [vmem:[%s225 + $0x348] sm:$0xff]
                %334 = vst [vmem:[%s226 + $0x1a8] sm:$0xff] %v333
                %v335 = vld [vmem:[%s225 + $0x350] sm:$0xff]
                %336 = vst [vmem:[%s226 + $0x1b0] sm:$0xff] %v335
                %v337 = vld [vmem:[%s225 + $0x358] sm:$0xff]
                %338 = vst [vmem:[%s226 + $0x1b8] sm:$0xff] %v337
                %v339 = vld [vmem:[%s225 + $0x380] sm:$0xff]
                %340 = vst [vmem:[%s226 + $0x1c0] sm:$0xff] %v339
                %v341 = vld [vmem:[%s225 + $0x388] sm:$0xff]
                %342 = vst [vmem:[%s226 + $0x1c8] sm:$0xff] %v341
                %v343 = vld [vmem:[%s225 + $0x390] sm:$0xff]
                %344 = vst [vmem:[%s226 + $0x1d0] sm:$0xff] %v343
                %v345 = vld [vmem:[%s225 + $0x398] sm:$0xff]
                %346 = vst [vmem:[%s226 + $0x1d8] sm:$0xff] %v345
                %v347 = vld [vmem:[%s225 + $0x3c0] sm:$0xff]
                %348 = vst [vmem:[%s226 + $0x1e0] sm:$0xff] %v347
                %v349 = vld [vmem:[%s225 + $0x3c8] sm:$0xff]
                %350 = vst [vmem:[%s226 + $0x1e8] sm:$0xff] %v349
                %v351 = vld [vmem:[%s225 + $0x3d0] sm:$0xff]
                %352 = vst [vmem:[%s226 + $0x1f0] sm:$0xff] %v351
                %v353 = vld [vmem:[%s225 + $0x3d8] sm:$0xff]
                %354 = vst [vmem:[%s226 + $0x1f8] sm:$0xff] %v353
              $region49: #{recognet_forward.3} parent=43 // loop_footer
                %s224 = sadd.s32 1, %s220
              $region50: #{recognet_forward.3} parent=43 // loop_footer_branch
                %219 = sbr.rel target = $region46
              $region51: #{recognet_forward.3} parent=43 // loop_exit
                _
            $region44: #{recognet_forward.3} parent=39 // pred_fallthru
              _
            // Predicated region
            $region52: #{recognet_forward.3} parent=39 // pred_check
              _
            $region53: #{recognet_forward.3} parent=39 // pred_check_branch
              %356 = sbr.rel target = $region55
            $region54: #{recognet_forward.3} parent=39 // pred_region
              _
            $region55: #{recognet_forward.3} parent=39 // pred_fallthru
              _
          $region40: #{recognet_forward.3} parent=35 // pred_fallthru
            _
          %357 = vnop
        $region36: #{recognet_forward.3} parent=31 // pred_fallthru
          _
        // Predicated region
        $region56: #{recognet_forward.3} parent=31 // pred_check
          %p358 = pneg %p142
        $region57: #{recognet_forward.3} parent=31 // pred_check_branch
          %360 = sbr.rel (%p358) target = $region59
        $region58: #{recognet_forward.3} parent=31 // pred_region
          %s361 = smul.u32 8, %s12
          %p362 = scmp.lt.s32.totalorder %s361, 15
          %s363 = scalar_select %p362, %s361, 15
          %s364 = scalar_lea.vmem %s5, %s363
          %s365 = smul.u32 8, %s12
        $region59: #{recognet_forward.3} parent=31 // pred_fallthru
          _
      $region32: #{recognet_forward.3} parent=5 // pred_fallthru
        _
      %p366 = scmp.le.s32.totalorder 1, %s12
      %p367 = scmp.lt.s32.totalorder %s12, 3
      %p368 = pnand %p366, %p367
      %p369 = pneg %p368
      // Predicated region
      $region60: #{recognet_forward.3} parent=5 // pred_check
        _
      $region61: #{recognet_forward.3} parent=5 // pred_check_branch
        %371 = sbr.rel (%p368) target = $region63
      $region62: #{recognet_forward.3} parent=5 // pred_region
        %s372 = ssub.s32 %s12, 1
        %s373 = sand.u32 %s109, 1
        %s374 = sand.u32 %s109, 1
        %s375 = smul.addr %s374, 512
        %s376 = scalar_lea.vmem [#allocation6], %s375
        // Predicated region
        $region64: #{recognet_forward.3} parent=62 // pred_check
          %p377 = pneg %p122
        $region65: #{recognet_forward.3} parent=62 // pred_check_branch
          %379 = sbr.rel (%p377) target = $region67
        $region66: #{recognet_forward.3} parent=62 // pred_region
          _
        $region67: #{recognet_forward.3} parent=62 // pred_fallthru
          _
        %p380 = pneg %p33
        %p381 = pneg %p30
        %p382 = pneg %p54
        %p383 = pneg %p51
        %p384 = pneg %p75
        %p385 = pneg %p72
        %p386 = pneg %p96
        %p387 = pneg %p93
        %s388 = sand.u32 %s109, 1
        %s389 = sand.u32 %s109, 1
        %s390 = smul.addr %s389, 512
        %s391 = scalar_lea.vmem [#allocation6], %s390
        %p392 = pneg %p122
        %p393 = pneg %p119
        %s394 = smul.u32 8, %s17
        %p395 = scmp.lt.s32.totalorder %s394, 15
        %s396 = scalar_select %p395, %s394, 15
        %s397 = scalar_lea.vmem %s5, %s396
        %p398 = pneg %p148
        %p399 = pneg %p145
        %p400 = pneg %p174
        %p401 = pneg %p171
        %s402 = sand.u32 %s161, 1
        %s403 = sand.u32 %s161, 1
        %s404 = smul.addr %s403, 448
        %s405 = scalar_lea.vmem [#allocation7], %s404
        %s406 = smul.u32 8, %s17
        %s407 = smul.u32 8, %s17
        %p408 = scmp.lt.s32.totalorder %s407, 15
        %s409 = scalar_select %p408, %s407, 15
        %s410 = scalar_lea.vmem %s5, %s409
        %s411 = smul.u32 8, %s17
        %s412 = smul.u32 8, %s17
        %p414 = scmp.eq.s32.totalorder %s17, 0
        // Predicated region
        $region68: #{recognet_forward.3} parent=62 // pred_check
          %p415 = pneg %p414
        $region69: #{recognet_forward.3} parent=62 // pred_check_branch
          %417 = sbr.rel (%p415) target = $region71
        $region70: #{recognet_forward.3} parent=62 // pred_region
          %v418 = vld [vmem:[%s0] sm:$0xf]
          %v419 = vld [vmem:[%s0 + $0x4] sm:$0xf]
          %v420 = vld [vmem:[%s0 + $0x8] sm:$0xf]
          %v421 = vld [vmem:[%s0 + $0xc] sm:$0xf]
          %v422 = vld [vmem:[%s0 + $0x10] sm:$0xf]
          %v423 = vld [vmem:[%s0 + $0x14] sm:$0xf]
          %v424 = vld [vmem:[%s0 + $0x18] sm:$0xf]
          %v425 = vld [vmem:[%s1] sm:$0xff]
          %v426 = vld [vmem:[%s1 + $0x8] sm:$0xff]
          %v427 = vld [vmem:[%s1 + $0x10] sm:$0xff]
          %v428 = vld [vmem:[%s1 + $0x18] sm:$0xff]
          %v429 = vld [vmem:[%s1 + $0x20] sm:$0xff]
          %v430 = vld [vmem:[%s1 + $0x28] sm:$0xff]
          %v431 = vld [vmem:[%s1 + $0x30] sm:$0xff]
          %v432 = vld [vmem:[%s1 + $0x38] sm:$0xff]
          %v433 = vld [vmem:[%s1 + $0x40] sm:$0xff]
          %v434 = vld [vmem:[%s1 + $0x48] sm:$0xff]
          %v435 = vld [vmem:[%s1 + $0x50] sm:$0xff]
          %v436 = vld [vmem:[%s1 + $0x58] sm:$0xff]
          %v437 = vld [vmem:[%s1 + $0x60] sm:$0xff]
          %v438 = vld [vmem:[%s1 + $0x68] sm:$0xff]
          %v439 = vld [vmem:[%s1 + $0x70] sm:$0xff]
          %v440 = vld [vmem:[%s1 + $0x78] sm:$0xff]
          %v441 = vld [vmem:[%s1 + $0x80] sm:$0xff]
          %v442 = vld [vmem:[%s1 + $0x88] sm:$0xff]
          %v443 = vld [vmem:[%s1 + $0x90] sm:$0xff]
          %v444 = vld [vmem:[%s1 + $0x98] sm:$0xff]
          %v445 = vld [vmem:[%s1 + $0xa0] sm:$0xff]
          %v446 = vld [vmem:[%s1 + $0xa8] sm:$0xff]
          %v447 = vld [vmem:[%s1 + $0xb0] sm:$0xff]
          %v448 = vld [vmem:[%s1 + $0xb8] sm:$0xff]
          %v449 = vld [vmem:[%s1 + $0xc0] sm:$0xff]
          %v450 = vld [vmem:[%s1 + $0xc8] sm:$0xff]
          %v451 = vld [vmem:[%s1 + $0xd0] sm:$0xff]
          %v452 = vld [vmem:[%s1 + $0xd8] sm:$0xff]
          %v453 = vld [vmem:[%s1 + $0xe0] sm:$0xff]
          %v454 = vld [vmem:[%s1 + $0xe8] sm:$0xff]
          %v455 = vld [vmem:[%s1 + $0xf0] sm:$0xff]
          %v456 = vld [vmem:[%s1 + $0xf8] sm:$0xff]
          %v457 = vld [vmem:[%s3] sm:$0xf]
          %v459 = vlaneseq
          %v460 = vshrl.u32 %v459, 7
          %v461 = vsub.s32 0, %v460
          %v462 = vrot.slane %v457, %v461
          %v463 = vlaneseq
          %v464 = vshrl.u32 %v463, 7
          %v465 = vsub.s32 1, %v464
          %v466 = vrot.slane %v457, %v465
          %v467 = vlaneseq
          %v468 = vshrl.u32 %v467, 7
          %v469 = vsub.s32 2, %v468
          %v470 = vrot.slane %v457, %v469
          %v471 = vlaneseq
          %v472 = vshrl.u32 %v471, 7
          %v473 = vsub.s32 3, %v472
          %v474 = vrot.slane %v457, %v473
          %v486 = vunpack.c.l.b16 %v418
          %v487 = vunpack.c.l.b16 %v419
          %v488 = vunpack.c.l.b16 %v420
          %v489 = vunpack.c.l.b16 %v421
          %v490 = vunpack.c.l.b16 %v422
          %v491 = vunpack.c.l.b16 %v423
          %v492 = vunpack.c.l.b16 %v424
          %v493 = vpack.c.b16 %v487, %v486
          %v494 = vpack.c.b16 %v489, %v488
          %v495 = vpack.c.b16 %v491, %v490
          %v496 = vpack.c.b16 %v492, %v492
          %v533 = vunpack.c.l.b16 %v425
          %v534 = vunpack.c.h.b16 %v425
          %v535 = vunpack.c.l.b16 %v426
          %v536 = vunpack.c.h.b16 %v426
          %v537 = vunpack.c.l.b16 %v427
          %v538 = vunpack.c.h.b16 %v427
          %v539 = vunpack.c.l.b16 %v428
          %v540 = vunpack.c.h.b16 %v428
          %v541 = vunpack.c.l.b16 %v429
          %v542 = vunpack.c.h.b16 %v429
          %v543 = vunpack.c.l.b16 %v430
          %v544 = vunpack.c.h.b16 %v430
          %v545 = vunpack.c.l.b16 %v431
          %v546 = vunpack.c.h.b16 %v431
          %v547 = vunpack.c.l.b16 %v432
          %v548 = vunpack.c.h.b16 %v432
          %v549 = vunpack.c.l.b16 %v433
          %v550 = vunpack.c.h.b16 %v433
          %v551 = vunpack.c.l.b16 %v434
          %v552 = vunpack.c.h.b16 %v434
          %v553 = vunpack.c.l.b16 %v435
          %v554 = vunpack.c.h.b16 %v435
          %v555 = vunpack.c.l.b16 %v436
          %v556 = vunpack.c.h.b16 %v436
          %v557 = vunpack.c.l.b16 %v437
          %v558 = vunpack.c.h.b16 %v437
          %v559 = vunpack.c.l.b16 %v438
          %v560 = vunpack.c.h.b16 %v438
          %v561 = vunpack.c.l.b16 %v439
          %v562 = vunpack.c.h.b16 %v439
          %v563 = vunpack.c.l.b16 %v440
          %v564 = vunpack.c.h.b16 %v440
          %v565 = vunpack.c.l.b16 %v441
          %v566 = vunpack.c.h.b16 %v441
          %v567 = vunpack.c.l.b16 %v442
          %v568 = vunpack.c.h.b16 %v442
          %v569 = vunpack.c.l.b16 %v443
          %v570 = vunpack.c.h.b16 %v443
          %v571 = vunpack.c.l.b16 %v444
          %v572 = vunpack.c.h.b16 %v444
          %v573 = vunpack.c.l.b16 %v445
          %v574 = vunpack.c.h.b16 %v445
          %v575 = vunpack.c.l.b16 %v446
          %v576 = vunpack.c.h.b16 %v446
          %v577 = vunpack.c.l.b16 %v447
          %v578 = vunpack.c.h.b16 %v447
          %v579 = vunpack.c.l.b16 %v448
          %v580 = vunpack.c.h.b16 %v448
          %v581 = vunpack.c.l.b16 %v449
          %v582 = vunpack.c.h.b16 %v449
          %v583 = vunpack.c.l.b16 %v450
          %v584 = vunpack.c.h.b16 %v450
          %v585 = vunpack.c.l.b16 %v451
          %v586 = vunpack.c.h.b16 %v451
          %v587 = vunpack.c.l.b16 %v452
          %v588 = vunpack.c.h.b16 %v452
          %v589 = vunpack.c.l.b16 %v453
          %v590 = vunpack.c.h.b16 %v453
          %v591 = vunpack.c.l.b16 %v454
          %v592 = vunpack.c.h.b16 %v454
          %v593 = vunpack.c.l.b16 %v455
          %v594 = vunpack.c.h.b16 %v455
          %v595 = vunpack.c.l.b16 %v456
          %v596 = vunpack.c.h.b16 %v456
          %v597 = vpack.c.b16 %v537, %v533
          %v598 = vpack.c.b16 %v538, %v534
          %v599 = vpack.c.b16 %v539, %v535
          %v600 = vpack.c.b16 %v540, %v536
          %v601 = vpack.c.b16 %v545, %v541
          %v602 = vpack.c.b16 %v546, %v542
          %v603 = vpack.c.b16 %v547, %v543
          %v604 = vpack.c.b16 %v548, %v544
          %v605 = vpack.c.b16 %v553, %v549
          %v606 = vpack.c.b16 %v554, %v550
          %v607 = vpack.c.b16 %v555, %v551
          %v608 = vpack.c.b16 %v556, %v552
          %v609 = vpack.c.b16 %v561, %v557
          %v610 = vpack.c.b16 %v562, %v558
          %v611 = vpack.c.b16 %v563, %v559
          %v612 = vpack.c.b16 %v564, %v560
          %v613 = vpack.c.b16 %v569, %v565
          %v614 = vpack.c.b16 %v570, %v566
          %v615 = vpack.c.b16 %v571, %v567
          %v616 = vpack.c.b16 %v572, %v568
          %v617 = vpack.c.b16 %v577, %v573
          %v618 = vpack.c.b16 %v578, %v574
          %v619 = vpack.c.b16 %v579, %v575
          %v620 = vpack.c.b16 %v580, %v576
          %v621 = vpack.c.b16 %v585, %v581
          %v622 = vpack.c.b16 %v586, %v582
          %v623 = vpack.c.b16 %v587, %v583
          %v624 = vpack.c.b16 %v588, %v584
          %v625 = vpack.c.b16 %v593, %v589
          %v626 = vpack.c.b16 %v594, %v590
          %v627 = vpack.c.b16 %v595, %v591
          %v628 = vpack.c.b16 %v596, %v592
          %661 = vmatprep.subr.bf16.mxu0 %v598
          %662 = vmatpush1.bf16.msra.mxu0 %v597
          %663 = vmatprep.subr.bf16.mxu0 %v602
          %664 = vmatpush1.bf16.msra.mxu0 %v601
          %665 = vmatprep.subr.bf16.mxu0 %v606
          %666 = vmatpush1.bf16.msra.mxu0 %v605
          %667 = vmatprep.subr.bf16.mxu0 %v610
          %668 = vmatpush1.bf16.msra.mxu0 %v609
          %669 = vmatprep.subr.bf16.mxu0 %v614
          %670 = vmatpush1.bf16.msra.mxu0 %v613
          %671 = vmatprep.subr.bf16.mxu0 %v618
          %672 = vmatpush1.bf16.msra.mxu0 %v617
          %673 = vmatprep.subr.bf16.mxu0 %v622
          %674 = vmatpush1.bf16.msra.mxu0 %v621
          %675 = vmatprep.subr.bf16.mxu0 %v626
          %676 = vmatpush1.bf16.msra.mxu0 %v625
          %677 = vmatprep.subr.bf16.mxu0 0
          %678 = vmatpush1.bf16.msra.mxu0 0
          %679 = vmatprep.subr.bf16.mxu0 0
          %680 = vmatpush1.bf16.msra.mxu0 0
          %681 = vmatprep.subr.bf16.mxu0 0
          %682 = vmatpush1.bf16.msra.mxu0 0
          %683 = vmatprep.subr.bf16.mxu0 0
          %684 = vmatpush1.bf16.msra.mxu0 0
          %685 = vmatprep.subr.bf16.mxu0 0
          %686 = vmatpush1.bf16.msra.mxu0 0
          %687 = vmatprep.subr.bf16.mxu0 0
          %688 = vmatpush1.bf16.msra.mxu0 0
          %689 = vmatprep.subr.bf16.mxu0 0
          %690 = vmatpush1.bf16.msra.mxu0 0
          %691 = vmatprep.subr.bf16.mxu0 0
          %692 = vmatpush1.bf16.msra.mxu0 0
          %693 = vmatprep.mubr.bf16.mxu0 0
          %694 = vmatmul.mubr.bf16.gmra.mrb[0].mxu0 %v493
          %v695 = vpop.f32.mrb[0].mxu0
          %v696 = vadd.f32 %v462, %v695
          %v697 = vpop.f32.mrb[0].mxu0
          %v698 = vadd.f32 %v466, %v697
          %v699 = vpop.f32.mrb[0].mxu0
          %v700 = vadd.f32 %v462, %v699
          %v701 = vpop.f32.mrb[0].mxu0
          %v702 = vadd.f32 %v466, %v701
          %703 = vmatprep.mubr.bf16.mxu0 0
          %704 = vmatmul.mubr.bf16.gmra.mrb[0].mxu0 %v494
          %v705 = vpop.f32.mrb[0].mxu0
          %v706 = vadd.f32 %v462, %v705
          %v707 = vpop.f32.mrb[0].mxu0
          %v708 = vadd.f32 %v466, %v707
          %v709 = vpop.f32.mrb[0].mxu0
          %v710 = vadd.f32 %v462, %v709
          %v711 = vpop.f32.mrb[0].mxu0
          %v712 = vadd.f32 %v466, %v711
          %713 = vmatprep.mubr.bf16.mxu0 0
          %714 = vmatmul.mubr.bf16.gmra.mrb[0].mxu0 %v495
          %v715 = vpop.f32.mrb[0].mxu0
          %v716 = vadd.f32 %v462, %v715
          %v717 = vpop.f32.mrb[0].mxu0
          %v718 = vadd.f32 %v466, %v717
          %v719 = vpop.f32.mrb[0].mxu0
          %v720 = vadd.f32 %v462, %v719
          %v721 = vpop.f32.mrb[0].mxu0
          %v722 = vadd.f32 %v466, %v721
          %723 = vmatprep.mubr.bf16.mxu0 0
          %724 = vmatmul.mubr.bf16.gmra.mrb[0].mxu0 %v496
          %v725 = vpop.f32.mrb[0].mxu0
          %v726 = vadd.f32 %v462, %v725
          %v727 = vpop.f32.mrb[0].mxu0
          %v728 = vadd.f32 %v466, %v727
          %v729 = vpop.f32.mrb[0].mxu0
          %v730 = vpop.f32.mrb[0].mxu0
          %731 = vdwg.mxu0
          %732 = vmatprep.subr.bf16.mxu0 %v600
          %733 = vmatpush1.bf16.msra.mxu0 %v599
          %734 = vmatprep.subr.bf16.mxu0 %v604
          %735 = vmatpush1.bf16.msra.mxu0 %v603
          %736 = vmatprep.subr.bf16.mxu0 %v608
          %737 = vmatpush1.bf16.msra.mxu0 %v607
          %738 = vmatprep.subr.bf16.mxu0 %v612
          %739 = vmatpush1.bf16.msra.mxu0 %v611
          %740 = vmatprep.subr.bf16.mxu0 %v616
          %741 = vmatpush1.bf16.msra.mxu0 %v615
          %742 = vmatprep.subr.bf16.mxu0 %v620
          %743 = vmatpush1.bf16.msra.mxu0 %v619
          %744 = vmatprep.subr.bf16.mxu0 %v624
          %745 = vmatpush1.bf16.msra.mxu0 %v623
          %746 = vmatprep.subr.bf16.mxu0 %v628
          %747 = vmatpush1.bf16.msra.mxu0 %v627
          %748 = vmatprep.subr.bf16.mxu0 0
          %749 = vmatpush1.bf16.msra.mxu0 0
          %750 = vmatprep.subr.bf16.mxu0 0
          %751 = vmatpush1.bf16.msra.mxu0 0
          %752 = vmatprep.subr.bf16.mxu0 0
          %753 = vmatpush1.bf16.msra.mxu0 0
          %754 = vmatprep.subr.bf16.mxu0 0
          %755 = vmatpush1.bf16.msra.mxu0 0
          %756 = vmatprep.subr.bf16.mxu0 0
          %757 = vmatpush1.bf16.msra.mxu0 0
          %758 = vmatprep.subr.bf16.mxu0 0
          %759 = vmatpush1.bf16.msra.mxu0 0
          %760 = vmatprep.subr.bf16.mxu0 0
          %761 = vmatpush1.bf16.msra.mxu0 0
          %762 = vmatprep.subr.bf16.mxu0 0
          %763 = vmatpush1.bf16.msra.mxu0 0
          %764 = vmatprep.mubr.bf16.mxu0 0
          %765 = vmatmul.mubr.bf16.gmra.mrb[0].mxu0 %v493
          %v766 = vpop.f32.mrb[0].mxu0
          %v767 = vadd.f32 %v470, %v766
          %v768 = vpop.f32.mrb[0].mxu0
          %v769 = vadd.f32 %v474, %v768
          %v770 = vpop.f32.mrb[0].mxu0
          %v771 = vadd.f32 %v470, %v770
          %v772 = vpop.f32.mrb[0].mxu0
          %v773 = vadd.f32 %v474, %v772
          %774 = vmatprep.mubr.bf16.mxu0 0
          %775 = vmatmul.mubr.bf16.gmra.mrb[0].mxu0 %v494
          %v776 = vpop.f32.mrb[0].mxu0
          %v777 = vadd.f32 %v470, %v776
          %v778 = vpop.f32.mrb[0].mxu0
          %v779 = vadd.f32 %v474, %v778
          %v780 = vpop.f32.mrb[0].mxu0
          %v781 = vadd.f32 %v470, %v780
          %v782 = vpop.f32.mrb[0].mxu0
          %v783 = vadd.f32 %v474, %v782
          %784 = vmatprep.mubr.bf16.mxu0 0
          %785 = vmatmul.mubr.bf16.gmra.mrb[0].mxu0 %v495
          %v786 = vpop.f32.mrb[0].mxu0
          %v787 = vadd.f32 %v470, %v786
          %v788 = vpop.f32.mrb[0].mxu0
          %v789 = vadd.f32 %v474, %v788
          %v790 = vpop.f32.mrb[0].mxu0
          %v791 = vadd.f32 %v470, %v790
          %v792 = vpop.f32.mrb[0].mxu0
          %v793 = vadd.f32 %v474, %v792
          %794 = vmatprep.mubr.bf16.mxu0 0
          %795 = vmatmul.mubr.bf16.gmra.mrb[0].mxu0 %v496
          %v796 = vpop.f32.mrb[0].mxu0
          %v797 = vadd.f32 %v470, %v796
          %v798 = vpop.f32.mrb[0].mxu0
          %v799 = vadd.f32 %v474, %v798
          %v800 = vpop.f32.mrb[0].mxu0
          %v801 = vpop.f32.mrb[0].mxu0
          %802 = vdwg.mxu0
          %803 = vst [vmem:[#allocation2] sm:$0xff] %v696
          %804 = vst [vmem:[#allocation2 + $0x8] sm:$0xff] %v698
          %805 = vst [vmem:[#allocation2 + $0x10] sm:$0xff] %v767
          %806 = vst [vmem:[#allocation2 + $0x18] sm:$0xff] %v769
          %807 = vst [vmem:[#allocation2 + $0x20] sm:$0xff] %v700
          %808 = vst [vmem:[#allocation2 + $0x28] sm:$0xff] %v702
          %809 = vst [vmem:[#allocation2 + $0x30] sm:$0xff] %v771
          %810 = vst [vmem:[#allocation2 + $0x38] sm:$0xff] %v773
          %811 = vst [vmem:[#allocation2 + $0x40] sm:$0xff] %v706
          %812 = vst [vmem:[#allocation2 + $0x48] sm:$0xff] %v708
          %813 = vst [vmem:[#allocation2 + $0x50] sm:$0xff] %v777
          %814 = vst [vmem:[#allocation2 + $0x58] sm:$0xff] %v779
          %815 = vst [vmem:[#allocation2 + $0x60] sm:$0xff] %v710
          %816 = vst [vmem:[#allocation2 + $0x68] sm:$0xff] %v712
          %817 = vst [vmem:[#allocation2 + $0x70] sm:$0xff] %v781
          %818 = vst [vmem:[#allocation2 + $0x78] sm:$0xff] %v783
          %819 = vst [vmem:[#allocation2 + $0x80] sm:$0xff] %v716
          %820 = vst [vmem:[#allocation2 + $0x88] sm:$0xff] %v718
          %821 = vst [vmem:[#allocation2 + $0x90] sm:$0xff] %v787
          %822 = vst [vmem:[#allocation2 + $0x98] sm:$0xff] %v789
          %823 = vst [vmem:[#allocation2 + $0xa0] sm:$0xff] %v720
          %824 = vst [vmem:[#allocation2 + $0xa8] sm:$0xff] %v722
          %825 = vst [vmem:[#allocation2 + $0xb0] sm:$0xff] %v791
          %826 = vst [vmem:[#allocation2 + $0xb8] sm:$0xff] %v793
          %827 = vst [vmem:[#allocation2 + $0xc0] sm:$0xff] %v726
          %828 = vst [vmem:[#allocation2 + $0xc8] sm:$0xff] %v728
          %829 = vst [vmem:[#allocation2 + $0xd0] sm:$0xff] %v797
          %830 = vst [vmem:[#allocation2 + $0xd8] sm:$0xff] %v799
          %831 = vst [vmem:[#allocation4] sm:$0xff] 0.0
          %832 = vst [vmem:[#allocation5] sm:$0xff] 0.0
          %v833 = vld [vmem:[#allocation2] sm:$0xff]
          %v834 = vld [vmem:[#allocation2 + $0x8] sm:$0xff]
          %v835 = vld [vmem:[#allocation2 + $0x10] sm:$0xff]
          %v836 = vld [vmem:[#allocation2 + $0x18] sm:$0xff]
          %v837 = vld [vmem:[#allocation4] sm:$0xff]
          %v838 = vpack.c.bf16 %v837, %v837
          %v839 = vld [vmem:[%s2] sm:$0xff]
          %v840 = vld [vmem:[%s2 + $0x8] sm:$0xff]
          %v841 = vld [vmem:[%s2 + $0x10] sm:$0xff]
          %v842 = vld [vmem:[%s2 + $0x18] sm:$0xff]
          %v843 = vld [vmem:[%s2 + $0x20] sm:$0xff]
          %v844 = vld [vmem:[%s2 + $0x28] sm:$0xff]
          %v845 = vld [vmem:[%s2 + $0x30] sm:$0xff]
          %v846 = vld [vmem:[%s2 + $0x38] sm:$0xff]
          %v847 = vld [vmem:[%s2 + $0x40] sm:$0xff]
          %v848 = vld [vmem:[%s2 + $0x48] sm:$0xff]
          %v849 = vld [vmem:[%s2 + $0x50] sm:$0xff]
          %v850 = vld [vmem:[%s2 + $0x58] sm:$0xff]
          %v851 = vld [vmem:[%s2 + $0x60] sm:$0xff]
          %v852 = vld [vmem:[%s2 + $0x68] sm:$0xff]
          %v853 = vld [vmem:[%s2 + $0x70] sm:$0xff]
          %v854 = vld [vmem:[%s2 + $0x78] sm:$0xff]
          %v855 = vld [vmem:[%s2 + $0x80] sm:$0xff]
          %v856 = vld [vmem:[%s2 + $0x88] sm:$0xff]
          %v857 = vld [vmem:[%s2 + $0x90] sm:$0xff]
          %v858 = vld [vmem:[%s2 + $0x98] sm:$0xff]
          %v859 = vld [vmem:[%s2 + $0xa0] sm:$0xff]
          %v860 = vld [vmem:[%s2 + $0xa8] sm:$0xff]
          %v861 = vld [vmem:[%s2 + $0xb0] sm:$0xff]
          %v862 = vld [vmem:[%s2 + $0xb8] sm:$0xff]
          %v863 = vld [vmem:[%s2 + $0xc0] sm:$0xff]
          %v864 = vld [vmem:[%s2 + $0xc8] sm:$0xff]
          %v865 = vld [vmem:[%s2 + $0xd0] sm:$0xff]
          %v866 = vld [vmem:[%s2 + $0xd8] sm:$0xff]
          %v867 = vld [vmem:[%s2 + $0xe0] sm:$0xff]
          %v868 = vld [vmem:[%s2 + $0xe8] sm:$0xff]
          %v869 = vld [vmem:[%s2 + $0xf0] sm:$0xff]
          %v870 = vld [vmem:[%s2 + $0xf8] sm:$0xff]
          %v903 = vunpack.c.l.b16 %v839
          %v904 = vunpack.c.h.b16 %v839
          %v905 = vunpack.c.l.b16 %v840
          %v906 = vunpack.c.h.b16 %v840
          %v907 = vunpack.c.l.b16 %v841
          %v908 = vunpack.c.h.b16 %v841
          %v909 = vunpack.c.l.b16 %v842
          %v910 = vunpack.c.h.b16 %v842
          %v911 = vunpack.c.l.b16 %v843
          %v912 = vunpack.c.h.b16 %v843
          %v913 = vunpack.c.l.b16 %v844
          %v914 = vunpack.c.h.b16 %v844
          %v915 = vunpack.c.l.b16 %v845
          %v916 = vunpack.c.h.b16 %v845
          %v917 = vunpack.c.l.b16 %v846
          %v918 = vunpack.c.h.b16 %v846
          %v919 = vunpack.c.l.b16 %v847
          %v920 = vunpack.c.h.b16 %v847
          %v921 = vunpack.c.l.b16 %v848
          %v922 = vunpack.c.h.b16 %v848
          %v923 = vunpack.c.l.b16 %v849
          %v924 = vunpack.c.h.b16 %v849
          %v925 = vunpack.c.l.b16 %v850
          %v926 = vunpack.c.h.b16 %v850
          %v927 = vunpack.c.l.b16 %v851
          %v928 = vunpack.c.h.b16 %v851
          %v929 = vunpack.c.l.b16 %v852
          %v930 = vunpack.c.h.b16 %v852
          %v931 = vunpack.c.l.b16 %v853
          %v932 = vunpack.c.h.b16 %v853
          %v933 = vunpack.c.l.b16 %v854
          %v934 = vunpack.c.h.b16 %v854
          %v935 = vunpack.c.l.b16 %v855
          %v936 = vunpack.c.h.b16 %v855
          %v937 = vunpack.c.l.b16 %v856
          %v938 = vunpack.c.h.b16 %v856
          %v939 = vunpack.c.l.b16 %v857
          %v940 = vunpack.c.h.b16 %v857
          %v941 = vunpack.c.l.b16 %v858
          %v942 = vunpack.c.h.b16 %v858
          %v943 = vunpack.c.l.b16 %v859
          %v944 = vunpack.c.h.b16 %v859
          %v945 = vunpack.c.l.b16 %v860
          %v946 = vunpack.c.h.b16 %v860
          %v947 = vunpack.c.l.b16 %v861
          %v948 = vunpack.c.h.b16 %v861
          %v949 = vunpack.c.l.b16 %v862
          %v950 = vunpack.c.h.b16 %v862
          %v951 = vunpack.c.l.b16 %v863
          %v952 = vunpack.c.h.b16 %v863
          %v953 = vunpack.c.l.b16 %v864
          %v954 = vunpack.c.h.b16 %v864
          %v955 = vunpack.c.l.b16 %v865
          %v956 = vunpack.c.h.b16 %v865
          %v957 = vunpack.c.l.b16 %v866
          %v958 = vunpack.c.h.b16 %v866
          %v959 = vunpack.c.l.b16 %v867
          %v960 = vunpack.c.h.b16 %v867
          %v961 = vunpack.c.l.b16 %v868
          %v962 = vunpack.c.h.b16 %v868
          %v963 = vunpack.c.l.b16 %v869
          %v964 = vunpack.c.h.b16 %v869
          %v965 = vunpack.c.l.b16 %v870
          %v966 = vunpack.c.h.b16 %v870
          %v967 = vpack.c.b16 %v907, %v903
          %v968 = vpack.c.b16 %v908, %v904
          %v969 = vpack.c.b16 %v909, %v905
          %v970 = vpack.c.b16 %v910, %v906
          %v971 = vpack.c.b16 %v915, %v911
          %v972 = vpack.c.b16 %v916, %v912
          %v973 = vpack.c.b16 %v917, %v913
          %v974 = vpack.c.b16 %v918, %v914
          %v975 = vpack.c.b16 %v923, %v919
          %v976 = vpack.c.b16 %v924, %v920
          %v977 = vpack.c.b16 %v925, %v921
          %v978 = vpack.c.b16 %v926, %v922
          %v979 = vpack.c.b16 %v931, %v927
          %v980 = vpack.c.b16 %v932, %v928
          %v981 = vpack.c.b16 %v933, %v929
          %v982 = vpack.c.b16 %v934, %v930
          %v983 = vpack.c.b16 %v939, %v935
          %v984 = vpack.c.b16 %v940, %v936
          %v985 = vpack.c.b16 %v941, %v937
          %v986 = vpack.c.b16 %v942, %v938
          %v987 = vpack.c.b16 %v947, %v943
          %v988 = vpack.c.b16 %v948, %v944
          %v989 = vpack.c.b16 %v949, %v945
          %v990 = vpack.c.b16 %v950, %v946
          %v991 = vpack.c.b16 %v955, %v951
          %v992 = vpack.c.b16 %v956, %v952
          %v993 = vpack.c.b16 %v957, %v953
          %v994 = vpack.c.b16 %v958, %v954
          %v995 = vpack.c.b16 %v963, %v959
          %v996 = vpack.c.b16 %v964, %v960
          %v997 = vpack.c.b16 %v965, %v961
          %v998 = vpack.c.b16 %v966, %v962
          %1031 = vmatprep.subr.bf16.mxu0 %v968
          %1032 = vmatpush1.bf16.msra.mxu0 %v967
          %1033 = vmatprep.subr.bf16.mxu0 %v972
          %1034 = vmatpush1.bf16.msra.mxu0 %v971
          %1035 = vmatprep.subr.bf16.mxu0 %v976
          %1036 = vmatpush1.bf16.msra.mxu0 %v975
          %1037 = vmatprep.subr.bf16.mxu0 %v980
          %1038 = vmatpush1.bf16.msra.mxu0 %v979
          %1039 = vmatprep.subr.bf16.mxu0 %v984
          %1040 = vmatpush1.bf16.msra.mxu0 %v983
          %1041 = vmatprep.subr.bf16.mxu0 %v988
          %1042 = vmatpush1.bf16.msra.mxu0 %v987
          %1043 = vmatprep.subr.bf16.mxu0 %v992
          %1044 = vmatpush1.bf16.msra.mxu0 %v991
          %1045 = vmatprep.subr.bf16.mxu0 %v996
          %1046 = vmatpush1.bf16.msra.mxu0 %v995
          %1047 = vmatprep.subr.bf16.mxu0 0
          %1048 = vmatpush1.bf16.msra.mxu0 0
          %1049 = vmatprep.subr.bf16.mxu0 0
          %1050 = vmatpush1.bf16.msra.mxu0 0
          %1051 = vmatprep.subr.bf16.mxu0 0
          %1052 = vmatpush1.bf16.msra.mxu0 0
          %1053 = vmatprep.subr.bf16.mxu0 0
          %1054 = vmatpush1.bf16.msra.mxu0 0
          %1055 = vmatprep.subr.bf16.mxu0 0
          %1056 = vmatpush1.bf16.msra.mxu0 0
          %1057 = vmatprep.subr.bf16.mxu0 0
          %1058 = vmatpush1.bf16.msra.mxu0 0
          %1059 = vmatprep.subr.bf16.mxu0 0
          %1060 = vmatpush1.bf16.msra.mxu0 0
          %1061 = vmatprep.subr.bf16.mxu0 0
          %1062 = vmatpush1.bf16.msra.mxu0 0
          %1063 = vmatprep.mubr.bf16.mxu0 0
          %1064 = vmatmul.mubr.bf16.gmra.mrb[0].mxu0 %v838
          %v1065 = vpop.f32.mrb[0].mxu0
          %v1066 = vadd.f32 0.0, %v1065
          %v1067 = vpop.f32.mrb[0].mxu0
          %v1068 = vadd.f32 0.0, %v1067
          %v1069 = vpop.f32.mrb[0].mxu0
          %v1070 = vpop.f32.mrb[0].mxu0
          %1071 = vdwg.mxu0
          %1072 = vmatprep.subr.bf16.mxu0 %v970
          %1073 = vmatpush1.bf16.msra.mxu0 %v969
          %1074 = vmatprep.subr.bf16.mxu0 %v974
          %1075 = vmatpush1.bf16.msra.mxu0 %v973
          %1076 = vmatprep.subr.bf16.mxu0 %v978
          %1077 = vmatpush1.bf16.msra.mxu0 %v977
          %1078 = vmatprep.subr.bf16.mxu0 %v982
          %1079 = vmatpush1.bf16.msra.mxu0 %v981
          %1080 = vmatprep.subr.bf16.mxu0 %v986
          %1081 = vmatpush1.bf16.msra.mxu0 %v985
          %1082 = vmatprep.subr.bf16.mxu0 %v990
          %1083 = vmatpush1.bf16.msra.mxu0 %v989
          %1084 = vmatprep.subr.bf16.mxu0 %v994
          %1085 = vmatpush1.bf16.msra.mxu0 %v993
          %1086 = vmatprep.subr.bf16.mxu0 %v998
          %1087 = vmatpush1.bf16.msra.mxu0 %v997
          %1088 = vmatprep.subr.bf16.mxu0 0
          %1089 = vmatpush1.bf16.msra.mxu0 0
          %1090 = vmatprep.subr.bf16.mxu0 0
          %1091 = vmatpush1.bf16.msra.mxu0 0
          %1092 = vmatprep.subr.bf16.mxu0 0
          %1093 = vmatpush1.bf16.msra.mxu0 0
          %1094 = vmatprep.subr.bf16.mxu0 0
          %1095 = vmatpush1.bf16.msra.mxu0 0
          %1096 = vmatprep.subr.bf16.mxu0 0
          %1097 = vmatpush1.bf16.msra.mxu0 0
          %1098 = vmatprep.subr.bf16.mxu0 0
          %1099 = vmatpush1.bf16.msra.mxu0 0
          %1100 = vmatprep.subr.bf16.mxu0 0
          %1101 = vmatpush1.bf16.msra.mxu0 0
          %1102 = vmatprep.subr.bf16.mxu0 0
          %1103 = vmatpush1.bf16.msra.mxu0 0
          %1104 = vmatprep.mubr.bf16.mxu0 0
          %1105 = vmatmul.mubr.bf16.gmra.mrb[0].mxu0 %v838
          %v1106 = vpop.f32.mrb[0].mxu0
          %v1107 = vadd.f32 0.0, %v1106
          %v1108 = vpop.f32.mrb[0].mxu0
          %v1109 = vadd.f32 0.0, %v1108
          %v1110 = vpop.f32.mrb[0].mxu0
          %v1111 = vpop.f32.mrb[0].mxu0
          %1112 = vdwg.mxu0
          %v1113 = vadd.f32 %v833, %v1066
          %v1114 = vadd.f32 %v834, %v1068
          %v1115 = vadd.f32 %v835, %v1107
          %v1116 = vadd.f32 %v836, %v1109
          %v1117 = vxor.u32 %v1113, 2147483648
          %v1118 = vmul.f32 %v1117, 1.442695
          %v1119 = vpow.pop %v1118
          %v1120 = vadd.f32 %v1119, 1.0
          %v1121 = vrcp.pop %v1120
          %v1122 = vmul.f32 1.0, %v1121
          %v1123 = vxor.u32 %v1114, 2147483648
          %v1124 = vmul.f32 %v1123, 1.442695
          %v1125 = vpow.pop %v1124
          %v1126 = vadd.f32 %v1125, 1.0
          %v1127 = vrcp.pop %v1126
          %v1128 = vmul.f32 1.0, %v1127
          %v1129 = vtanh.pop %v1115
          %v1130 = vxor.u32 %v1116, 2147483648
          %v1131 = vmul.f32 %v1130, 1.442695
          %v1132 = vpow.pop %v1131
          %v1133 = vadd.f32 %v1132, 1.0
          %v1134 = vrcp.pop %v1133
          %v1135 = vmul.f32 1.0, %v1134
          %v1136 = vld [vmem:[#allocation5] sm:$0xff]
          %v1137 = vmul.f32 %v1128, %v1136
          %v1138 = vmul.f32 %v1122, %v1129
          %v1139 = vadd.f32 %v1137, %v1138
          %v1140 = vtanh.pop %v1139
          %v1141 = vmul.f32 %v1135, %v1140
          %1142 = vst [vmem:[#allocation5] sm:$0xff] %v1139
          %1143 = vst [vmem:[#allocation4] sm:$0xff] %v1141
          %1144 = vst [vmem:[#allocation3] sm:$0xff] %v1141
          %v1145 = vld [vmem:[#allocation2 + $0x20] sm:$0xff]
          %v1146 = vld [vmem:[#allocation2 + $0x28] sm:$0xff]
          %v1147 = vld [vmem:[#allocation2 + $0x30] sm:$0xff]
          %v1148 = vld [vmem:[#allocation2 + $0x38] sm:$0xff]
          %v1149 = vld [vmem:[#allocation4] sm:$0xff]
          %v1150 = vpack.c.bf16 %v1149, %v1149
          %v1151 = vld [vmem:[%s2] sm:$0xff]
          %v1152 = vld [vmem:[%s2 + $0x8] sm:$0xff]
          %v1153 = vld [vmem:[%s2 + $0x10] sm:$0xff]
          %v1154 = vld [vmem:[%s2 + $0x18] sm:$0xff]
          %v1155 = vld [vmem:[%s2 + $0x20] sm:$0xff]
          %v1156 = vld [vmem:[%s2 + $0x28] sm:$0xff]
          %v1157 = vld [vmem:[%s2 + $0x30] sm:$0xff]
          %v1158 = vld [vmem:[%s2 + $0x38] sm:$0xff]
          %v1159 = vld [vmem:[%s2 + $0x40] sm:$0xff]
          %v1160 = vld [vmem:[%s2 + $0x48] sm:$0xff]
          %v1161 = vld [vmem:[%s2 + $0x50] sm:$0xff]
          %v1162 = vld [vmem:[%s2 + $0x58] sm:$0xff]
          %v1163 = vld [vmem:[%s2 + $0x60] sm:$0xff]
          %v1164 = vld [vmem:[%s2 + $0x68] sm:$0xff]
          %v1165 = vld [vmem:[%s2 + $0x70] sm:$0xff]
          %v1166 = vld [vmem:[%s2 + $0x78] sm:$0xff]
          %v1167 = vld [vmem:[%s2 + $0x80] sm:$0xff]
          %v1168 = vld [vmem:[%s2 + $0x88] sm:$0xff]
          %v1169 = vld [vmem:[%s2 + $0x90] sm:$0xff]
          %v1170 = vld [vmem:[%s2 + $0x98] sm:$0xff]
          %v1171 = vld [vmem:[%s2 + $0xa0] sm:$0xff]
          %v1172 = vld [vmem:[%s2 + $0xa8] sm:$0xff]
          %v1173 = vld [vmem:[%s2 + $0xb0] sm:$0xff]
          %v1174 = vld [vmem:[%s2 + $0xb8] sm:$0xff]
          %v1175 = vld [vmem:[%s2 + $0xc0] sm:$0xff]
          %v1176 = vld [vmem:[%s2 + $0xc8] sm:$0xff]
          %v1177 = vld [vmem:[%s2 + $0xd0] sm:$0xff]
          %v1178 = vld [vmem:[%s2 + $0xd8] sm:$0xff]
          %v1179 = vld [vmem:[%s2 + $0xe0] sm:$0xff]
          %v1180 = vld [vmem:[%s2 + $0xe8] sm:$0xff]
          %v1181 = vld [vmem:[%s2 + $0xf0] sm:$0xff]
          %v1182 = vld [vmem:[%s2 + $0xf8] sm:$0xff]
          %v1215 = vunpack.c.l.b16 %v1151
          %v1216 = vunpack.c.h.b16 %v1151
          %v1217 = vunpack.c.l.b16 %v1152
          %v1218 = vunpack.c.h.b16 %v1152
          %v1219 = vunpack.c.l.b16 %v1153
          %v1220 = vunpack.c.h.b16 %v1153
          %v1221 = vunpack.c.l.b16 %v1154
          %v1222 = vunpack.c.h.b16 %v1154
          %v1223 = vunpack.c.l.b16 %v1155
          %v1224 = vunpack.c.h.b16 %v1155
          %v1225 = vunpack.c.l.b16 %v1156
          %v1226 = vunpack.c.h.b16 %v1156
          %v1227 = vunpack.c.l.b16 %v1157
          %v1228 = vunpack.c.h.b16 %v1157
          %v1229 = vunpack.c.l.b16 %v1158
          %v1230 = vunpack.c.h.b16 %v1158
          %v1231 = vunpack.c.l.b16 %v1159
          %v1232 = vunpack.c.h.b16 %v1159
          %v1233 = vunpack.c.l.b16 %v1160
          %v1234 = vunpack.c.h.b16 %v1160
          %v1235 = vunpack.c.l.b16 %v1161
          %v1236 = vunpack.c.h.b16 %v1161
          %v1237 = vunpack.c.l.b16 %v1162
          %v1238 = vunpack.c.h.b16 %v1162
          %v1239 = vunpack.c.l.b16 %v1163
          %v1240 = vunpack.c.h.b16 %v1163
          %v1241 = vunpack.c.l.b16 %v1164
          %v1242 = vunpack.c.h.b16 %v1164
          %v1243 = vunpack.c.l.b16 %v1165
          %v1244 = vunpack.c.h.b16 %v1165
          %v1245 = vunpack.c.l.b16 %v1166
          %v1246 = vunpack.c.h.b16 %v1166
          %v1247 = vunpack.c.l.b16 %v1167
          %v1248 = vunpack.c.h.b16 %v1167
          %v1249 = vunpack.c.l.b16 %v1168
          %v1250 = vunpack.c.h.b16 %v1168
          %v1251 = vunpack.c.l.b16 %v1169
          %v1252 = vunpack.c.h.b16 %v1169
          %v1253 = vunpack.c.l.b16 %v1170
          %v1254 = vunpack.c.h.b16 %v1170
          %v1255 = vunpack.c.l.b16 %v1171
          %v1256 = vunpack.c.h.b16 %v1171
          %v1257 = vunpack.c.l.b16 %v1172
          %v1258 = vunpack.c.h.b16 %v1172
          %v1259 = vunpack.c.l.b16 %v1173
          %v1260 = vunpack.c.h.b16 %v1173
          %v1261 = vunpack.c.l.b16 %v1174
          %v1262 = vunpack.c.h.b16 %v1174
          %v1263 = vunpack.c.l.b16 %v1175
          %v1264 = vunpack.c.h.b16 %v1175
          %v1265 = vunpack.c.l.b16 %v1176
          %v1266 = vunpack.c.h.b16 %v1176
          %v1267 = vunpack.c.l.b16 %v1177
          %v1268 = vunpack.c.h.b16 %v1177
          %v1269 = vunpack.c.l.b16 %v1178
          %v1270 = vunpack.c.h.b16 %v1178
          %v1271 = vunpack.c.l.b16 %v1179
          %v1272 = vunpack.c.h.b16 %v1179
          %v1273 = vunpack.c.l.b16 %v1180
          %v1274 = vunpack.c.h.b16 %v1180
          %v1275 = vunpack.c.l.b16 %v1181
          %v1276 = vunpack.c.h.b16 %v1181
          %v1277 = vunpack.c.l.b16 %v1182
          %v1278 = vunpack.c.h.b16 %v1182
          %v1279 = vpack.c.b16 %v1219, %v1215
          %v1280 = vpack.c.b16 %v1220, %v1216
          %v1281 = vpack.c.b16 %v1221, %v1217
          %v1282 = vpack.c.b16 %v1222, %v1218
          %v1283 = vpack.c.b16 %v1227, %v1223
          %v1284 = vpack.c.b16 %v1228, %v1224
          %v1285 = vpack.c.b16 %v1229, %v1225
          %v1286 = vpack.c.b16 %v1230, %v1226
          %v1287 = vpack.c.b16 %v1235, %v1231
          %v1288 = vpack.c.b16 %v1236, %v1232
          %v1289 = vpack.c.b16 %v1237, %v1233
          %v1290 = vpack.c.b16 %v1238, %v1234
          %v1291 = vpack.c.b16 %v1243, %v1239
          %v1292 = vpack.c.b16 %v1244, %v1240
          %v1293 = vpack.c.b16 %v1245, %v1241
          %v1294 = vpack.c.b16 %v1246, %v1242
          %v1295 = vpack.c.b16 %v1251, %v1247
          %v1296 = vpack.c.b16 %v1252, %v1248
          %v1297 = vpack.c.b16 %v1253, %v1249
          %v1298 = vpack.c.b16 %v1254, %v1250
          %v1299 = vpack.c.b16 %v1259, %v1255
          %v1300 = vpack.c.b16 %v1260, %v1256
          %v1301 = vpack.c.b16 %v1261, %v1257
          %v1302 = vpack.c.b16 %v1262, %v1258
          %v1303 = vpack.c.b16 %v1267, %v1263
          %v1304 = vpack.c.b16 %v1268, %v1264
          %v1305 = vpack.c.b16 %v1269, %v1265
          %v1306 = vpack.c.b16 %v1270, %v1266
          %v1307 = vpack.c.b16 %v1275, %v1271
          %v1308 = vpack.c.b16 %v1276, %v1272
          %v1309 = vpack.c.b16 %v1277, %v1273
          %v1310 = vpack.c.b16 %v1278, %v1274
          %1343 = vmatprep.subr.bf16.mxu0 %v1280
          %1344 = vmatpush1.bf16.msra.mxu0 %v1279
          %1345 = vmatprep.subr.bf16.mxu0 %v1284
          %1346 = vmatpush1.bf16.msra.mxu0 %v1283
          %1347 = vmatprep.subr.bf16.mxu0 %v1288
          %1348 = vmatpush1.bf16.msra.mxu0 %v1287
          %1349 = vmatprep.subr.bf16.mxu0 %v1292
          %1350 = vmatpush1.bf16.msra.mxu0 %v1291
          %1351 = vmatprep.subr.bf16.mxu0 %v1296
          %1352 = vmatpush1.bf16.msra.mxu0 %v1295
          %1353 = vmatprep.subr.bf16.mxu0 %v1300
          %1354 = vmatpush1.bf16.msra.mxu0 %v1299
          %1355 = vmatprep.subr.bf16.mxu0 %v1304
          %1356 = vmatpush1.bf16.msra.mxu0 %v1303
          %1357 = vmatprep.subr.bf16.mxu0 %v1308
          %1358 = vmatpush1.bf16.msra.mxu0 %v1307
          %1359 = vmatprep.subr.bf16.mxu0 0
          %1360 = vmatpush1.bf16.msra.mxu0 0
          %1361 = vmatprep.subr.bf16.mxu0 0
          %1362 = vmatpush1.bf16.msra.mxu0 0
          %1363 = vmatprep.subr.bf16.mxu0 0
          %1364 = vmatpush1.bf16.msra.mxu0 0
          %1365 = vmatprep.subr.bf16.mxu0 0
          %1366 = vmatpush1.bf16.msra.mxu0 0
          %1367 = vmatprep.subr.bf16.mxu0 0
          %1368 = vmatpush1.bf16.msra.mxu0 0
          %1369 = vmatprep.subr.bf16.mxu0 0
          %1370 = vmatpush1.bf16.msra.mxu0 0
          %1371 = vmatprep.subr.bf16.mxu0 0
          %1372 = vmatpush1.bf16.msra.mxu0 0
          %1373 = vmatprep.subr.bf16.mxu0 0
          %1374 = vmatpush1.bf16.msra.mxu0 0
          %1375 = vmatprep.mubr.bf16.mxu0 0
          %1376 = vmatmul.mubr.bf16.gmra.mrb[0].mxu0 %v1150
          %v1377 = vpop.f32.mrb[0].mxu0
          %v1378 = vadd.f32 0.0, %v1377
          %v1379 = vpop.f32.mrb[0].mxu0
          %v1380 = vadd.f32 0.0, %v1379
          %v1381 = vpop.f32.mrb[0].mxu0
          %v1382 = vpop.f32.mrb[0].mxu0
          %1383 = vdwg.mxu0
          %1384 = vmatprep.subr.bf16.mxu0 %v1282
          %1385 = vmatpush1.bf16.msra.mxu0 %v1281
          %1386 = vmatprep.subr.bf16.mxu0 %v1286
          %1387 = vmatpush1.bf16.msra.mxu0 %v1285
          %1388 = vmatprep.subr.bf16.mxu0 %v1290
          %1389 = vmatpush1.bf16.msra.mxu0 %v1289
          %1390 = vmatprep.subr.bf16.mxu0 %v1294
          %1391 = vmatpush1.bf16.msra.mxu0 %v1293
          %1392 = vmatprep.subr.bf16.mxu0 %v1298
          %1393 = vmatpush1.bf16.msra.mxu0 %v1297
          %1394 = vmatprep.subr.bf16.mxu0 %v1302
          %1395 = vmatpush1.bf16.msra.mxu0 %v1301
          %1396 = vmatprep.subr.bf16.mxu0 %v1306
          %1397 = vmatpush1.bf16.msra.mxu0 %v1305
          %1398 = vmatprep.subr.bf16.mxu0 %v1310
          %1399 = vmatpush1.bf16.msra.mxu0 %v1309
          %1400 = vmatprep.subr.bf16.mxu0 0
          %1401 = vmatpush1.bf16.msra.mxu0 0
          %1402 = vmatprep.subr.bf16.mxu0 0
          %1403 = vmatpush1.bf16.msra.mxu0 0
          %1404 = vmatprep.subr.bf16.mxu0 0
          %1405 = vmatpush1.bf16.msra.mxu0 0
          %1406 = vmatprep.subr.bf16.mxu0 0
          %1407 = vmatpush1.bf16.msra.mxu0 0
          %1408 = vmatprep.subr.bf16.mxu0 0
          %1409 = vmatpush1.bf16.msra.mxu0 0
          %1410 = vmatprep.subr.bf16.mxu0 0
          %1411 = vmatpush1.bf16.msra.mxu0 0
          %1412 = vmatprep.subr.bf16.mxu0 0
          %1413 = vmatpush1.bf16.msra.mxu0 0
          %1414 = vmatprep.subr.bf16.mxu0 0
          %1415 = vmatpush1.bf16.msra.mxu0 0
          %1416 = vmatprep.mubr.bf16.mxu0 0
          %1417 = vmatmul.mubr.bf16.gmra.mrb[0].mxu0 %v1150
          %v1418 = vpop.f32.mrb[0].mxu0
          %v1419 = vadd.f32 0.0, %v1418
          %v1420 = vpop.f32.mrb[0].mxu0
          %v1421 = vadd.f32 0.0, %v1420
          %v1422 = vpop.f32.mrb[0].mxu0
          %v1423 = vpop.f32.mrb[0].mxu0
          %1424 = vdwg.mxu0
          %v1425 = vadd.f32 %v1145, %v1378
          %v1426 = vadd.f32 %v1146, %v1380
          %v1427 = vadd.f32 %v1147, %v1419
          %v1428 = vadd.f32 %v1148, %v1421
          %v1429 = vxor.u32 %v1425, 2147483648
          %v1430 = vmul.f32 %v1429, 1.442695
          %v1431 = vpow.pop %v1430
          %v1432 = vadd.f32 %v1431, 1.0
          %v1433 = vrcp.pop %v1432
          %v1434 = vmul.f32 1.0, %v1433
          %v1435 = vxor.u32 %v1426, 2147483648
          %v1436 = vmul.f32 %v1435, 1.442695
          %v1437 = vpow.pop %v1436
          %v1438 = vadd.f32 %v1437, 1.0
          %v1439 = vrcp.pop %v1438
          %v1440 = vmul.f32 1.0, %v1439
          %v1441 = vtanh.pop %v1427
          %v1442 = vxor.u32 %v1428, 2147483648
          %v1443 = vmul.f32 %v1442, 1.442695
          %v1444 = vpow.pop %v1443
          %v1445 = vadd.f32 %v1444, 1.0
          %v1446 = vrcp.pop %v1445
          %v1447 = vmul.f32 1.0, %v1446
          %v1448 = vld [vmem:[#allocation5] sm:$0xff]
          %v1449 = vmul.f32 %v1440, %v1448
          %v1450 = vmul.f32 %v1434, %v1441
          %v1451 = vadd.f32 %v1449, %v1450
          %v1452 = vtanh.pop %v1451
          %v1453 = vmul.f32 %v1447, %v1452
          %1454 = vst [vmem:[#allocation5] sm:$0xff] %v1451
          %1455 = vst [vmem:[#allocation4] sm:$0xff] %v1453
          %1456 = vst [vmem:[#allocation3 + $0x8] sm:$0xff] %v1453
          %v1457 = vld [vmem:[#allocation2 + $0x40] sm:$0xff]
          %v1458 = vld [vmem:[#allocation2 + $0x48] sm:$0xff]
          %v1459 = vld [vmem:[#allocation2 + $0x50] sm:$0xff]
          %v1460 = vld [vmem:[#allocation2 + $0x58] sm:$0xff]
          %v1461 = vld [vmem:[#allocation4] sm:$0xff]
          %v1462 = vpack.c.bf16 %v1461, %v1461
          %v1463 = vld [vmem:[%s2] sm:$0xff]
          %v1464 = vld [vmem:[%s2 + $0x8] sm:$0xff]
          %v1465 = vld [vmem:[%s2 + $0x10] sm:$0xff]
          %v1466 = vld [vmem:[%s2 + $0x18] sm:$0xff]
          %v1467 = vld [vmem:[%s2 + $0x20] sm:$0xff]
          %v1468 = vld [vmem:[%s2 + $0x28] sm:$0xff]
          %v1469 = vld [vmem:[%s2 + $0x30] sm:$0xff]
          %v1470 = vld [vmem:[%s2 + $0x38] sm:$0xff]
          %v1471 = vld [vmem:[%s2 + $0x40] sm:$0xff]
          %v1472 = vld [vmem:[%s2 + $0x48] sm:$0xff]
          %v1473 = vld [vmem:[%s2 + $0x50] sm:$0xff]
          %v1474 = vld [vmem:[%s2 + $0x58] sm:$0xff]
          %v1475 = vld [vmem:[%s2 + $0x60] sm:$0xff]
          %v1476 = vld [vmem:[%s2 + $0x68] sm:$0xff]
          %v1477 = vld [vmem:[%s2 + $0x70] sm:$0xff]
          %v1478 = vld [vmem:[%s2 + $0x78] sm:$0xff]
          %v1479 = vld [vmem:[%s2 + $0x80] sm:$0xff]
          %v1480 = vld [vmem:[%s2 + $0x88] sm:$0xff]
          %v1481 = vld [vmem:[%s2 + $0x90] sm:$0xff]
          %v1482 = vld [vmem:[%s2 + $0x98] sm:$0xff]
          %v1483 = vld [vmem:[%s2 + $0xa0] sm:$0xff]
          %v1484 = vld [vmem:[%s2 + $0xa8] sm:$0xff]
          %v1485 = vld [vmem:[%s2 + $0xb0] sm:$0xff]
          %v1486 = vld [vmem:[%s2 + $0xb8] sm:$0xff]
          %v1487 = vld [vmem:[%s2 + $0xc0] sm:$0xff]
          %v1488 = vld [vmem:[%s2 + $0xc8] sm:$0xff]
          %v1489 = vld [vmem:[%s2 + $0xd0] sm:$0xff]
          %v1490 = vld [vmem:[%s2 + $0xd8] sm:$0xff]
          %v1491 = vld [vmem:[%s2 + $0xe0] sm:$0xff]
          %v1492 = vld [vmem:[%s2 + $0xe8] sm:$0xff]
          %v1493 = vld [vmem:[%s2 + $0xf0] sm:$0xff]
          %v1494 = vld [vmem:[%s2 + $0xf8] sm:$0xff]
          %v1527 = vunpack.c.l.b16 %v1463
          %v1528 = vunpack.c.h.b16 %v1463
          %v1529 = vunpack.c.l.b16 %v1464
          %v1530 = vunpack.c.h.b16 %v1464
          %v1531 = vunpack.c.l.b16 %v1465
          %v1532 = vunpack.c.h.b16 %v1465
          %v1533 = vunpack.c.l.b16 %v1466
          %v1534 = vunpack.c.h.b16 %v1466
          %v1535 = vunpack.c.l.b16 %v1467
          %v1536 = vunpack.c.h.b16 %v1467
          %v1537 = vunpack.c.l.b16 %v1468
          %v1538 = vunpack.c.h.b16 %v1468
          %v1539 = vunpack.c.l.b16 %v1469
          %v1540 = vunpack.c.h.b16 %v1469
          %v1541 = vunpack.c.l.b16 %v1470
          %v1542 = vunpack.c.h.b16 %v1470
          %v1543 = vunpack.c.l.b16 %v1471
          %v1544 = vunpack.c.h.b16 %v1471
          %v1545 = vunpack.c.l.b16 %v1472
          %v1546 = vunpack.c.h.b16 %v1472
          %v1547 = vunpack.c.l.b16 %v1473
          %v1548 = vunpack.c.h.b16 %v1473
          %v1549 = vunpack.c.l.b16 %v1474
          %v1550 = vunpack.c.h.b16 %v1474
          %v1551 = vunpack.c.l.b16 %v1475
          %v1552 = vunpack.c.h.b16 %v1475
          %v1553 = vunpack.c.l.b16 %v1476
          %v1554 = vunpack.c.h.b16 %v1476
          %v1555 = vunpack.c.l.b16 %v1477
          %v1556 = vunpack.c.h.b16 %v1477
          %v1557 = vunpack.c.l.b16 %v1478
          %v1558 = vunpack.c.h.b16 %v1478
          %v1559 = vunpack.c.l.b16 %v1479
          %v1560 = vunpack.c.h.b16 %v1479
          %v1561 = vunpack.c.l.b16 %v1480
          %v1562 = vunpack.c.h.b16 %v1480
          %v1563 = vunpack.c.l.b16 %v1481
          %v1564 = vunpack.c.h.b16 %v1481
          %v1565 = vunpack.c.l.b16 %v1482
          %v1566 = vunpack.c.h.b16 %v1482
          %v1567 = vunpack.c.l.b16 %v1483
          %v1568 = vunpack.c.h.b16 %v1483
          %v1569 = vunpack.c.l.b16 %v1484
          %v1570 = vunpack.c.h.b16 %v1484
          %v1571 = vunpack.c.l.b16 %v1485
          %v1572 = vunpack.c.h.b16 %v1485
          %v1573 = vunpack.c.l.b16 %v1486
          %v1574 = vunpack.c.h.b16 %v1486
          %v1575 = vunpack.c.l.b16 %v1487
          %v1576 = vunpack.c.h.b16 %v1487
          %v1577 = vunpack.c.l.b16 %v1488
          %v1578 = vunpack.c.h.b16 %v1488
          %v1579 = vunpack.c.l.b16 %v1489
          %v1580 = vunpack.c.h.b16 %v1489
          %v1581 = vunpack.c.l.b16 %v1490
          %v1582 = vunpack.c.h.b16 %v1490
          %v1583 = vunpack.c.l.b16 %v1491
          %v1584 = vunpack.c.h.b16 %v1491
          %v1585 = vunpack.c.l.b16 %v1492
          %v1586 = vunpack.c.h.b16 %v1492
          %v1587 = vunpack.c.l.b16 %v1493
          %v1588 = vunpack.c.h.b16 %v1493
          %v1589 = vunpack.c.l.b16 %v1494
          %v1590 = vunpack.c.h.b16 %v1494
          %v1591 = vpack.c.b16 %v1531, %v1527
          %v1592 = vpack.c.b16 %v1532, %v1528
          %v1593 = vpack.c.b16 %v1533, %v1529
          %v1594 = vpack.c.b16 %v1534, %v1530
          %v1595 = vpack.c.b16 %v1539, %v1535
          %v1596 = vpack.c.b16 %v1540, %v1536
          %v1597 = vpack.c.b16 %v1541, %v1537
          %v1598 = vpack.c.b16 %v1542, %v1538
          %v1599 = vpack.c.b16 %v1547, %v1543
          %v1600 = vpack.c.b16 %v1548, %v1544
          %v1601 = vpack.c.b16 %v1549, %v1545
          %v1602 = vpack.c.b16 %v1550, %v1546
          %v1603 = vpack.c.b16 %v1555, %v1551
          %v1604 = vpack.c.b16 %v1556, %v1552
          %v1605 = vpack.c.b16 %v1557, %v1553
          %v1606 = vpack.c.b16 %v1558, %v1554
          %v1607 = vpack.c.b16 %v1563, %v1559
          %v1608 = vpack.c.b16 %v1564, %v1560
          %v1609 = vpack.c.b16 %v1565, %v1561
          %v1610 = vpack.c.b16 %v1566, %v1562
          %v1611 = vpack.c.b16 %v1571, %v1567
          %v1612 = vpack.c.b16 %v1572, %v1568
          %v1613 = vpack.c.b16 %v1573, %v1569
          %v1614 = vpack.c.b16 %v1574, %v1570
          %v1615 = vpack.c.b16 %v1579, %v1575
          %v1616 = vpack.c.b16 %v1580, %v1576
          %v1617 = vpack.c.b16 %v1581, %v1577
          %v1618 = vpack.c.b16 %v1582, %v1578
          %v1619 = vpack.c.b16 %v1587, %v1583
          %v1620 = vpack.c.b16 %v1588, %v1584
          %v1621 = vpack.c.b16 %v1589, %v1585
          %v1622 = vpack.c.b16 %v1590, %v1586
          %1655 = vmatprep.subr.bf16.mxu0 %v1592
          %1656 = vmatpush1.bf16.msra.mxu0 %v1591
          %1657 = vmatprep.subr.bf16.mxu0 %v1596
          %1658 = vmatpush1.bf16.msra.mxu0 %v1595
          %1659 = vmatprep.subr.bf16.mxu0 %v1600
          %1660 = vmatpush1.bf16.msra.mxu0 %v1599
          %1661 = vmatprep.subr.bf16.mxu0 %v1604
          %1662 = vmatpush1.bf16.msra.mxu0 %v1603
          %1663 = vmatprep.subr.bf16.mxu0 %v1608
          %1664 = vmatpush1.bf16.msra.mxu0 %v1607
          %1665 = vmatprep.subr.bf16.mxu0 %v1612
          %1666 = vmatpush1.bf16.msra.mxu0 %v1611
          %1667 = vmatprep.subr.bf16.mxu0 %v1616
          %1668 = vmatpush1.bf16.msra.mxu0 %v1615
          %1669 = vmatprep.subr.bf16.mxu0 %v1620
          %1670 = vmatpush1.bf16.msra.mxu0 %v1619
          %1671 = vmatprep.subr.bf16.mxu0 0
          %1672 = vmatpush1.bf16.msra.mxu0 0
          %1673 = vmatprep.subr.bf16.mxu0 0
          %1674 = vmatpush1.bf16.msra.mxu0 0
          %1675 = vmatprep.subr.bf16.mxu0 0
          %1676 = vmatpush1.bf16.msra.mxu0 0
          %1677 = vmatprep.subr.bf16.mxu0 0
          %1678 = vmatpush1.bf16.msra.mxu0 0
          %1679 = vmatprep.subr.bf16.mxu0 0
          %1680 = vmatpush1.bf16.msra.mxu0 0
          %1681 = vmatprep.subr.bf16.mxu0 0
          %1682 = vmatpush1.bf16.msra.mxu0 0
          %1683 = vmatprep.subr.bf16.mxu0 0
          %1684 = vmatpush1.bf16.msra.mxu0 0
          %1685 = vmatprep.subr.bf16.mxu0 0
          %1686 = vmatpush1.bf16.msra.mxu0 0
          %1687 = vmatprep.mubr.bf16.mxu0 0
          %1688 = vmatmul.mubr.bf16.gmra.mrb[0].mxu0 %v1462
          %v1689 = vpop.f32.mrb[0].mxu0
          %v1690 = vadd.f32 0.0, %v1689
          %v1691 = vpop.f32.mrb[0].mxu0
          %v1692 = vadd.f32 0.0, %v1691
          %v1693 = vpop.f32.mrb[0].mxu0
          %v1694 = vpop.f32.mrb[0].mxu0
          %1695 = vdwg.mxu0
          %1696 = vmatprep.subr.bf16.mxu0 %v1594
          %1697 = vmatpush1.bf16.msra.mxu0 %v1593
          %1698 = vmatprep.subr.bf16.mxu0 %v1598
          %1699 = vmatpush1.bf16.msra.mxu0 %v1597
          %1700 = vmatprep.subr.bf16.mxu0 %v1602
          %1701 = vmatpush1.bf16.msra.mxu0 %v1601
          %1702 = vmatprep.subr.bf16.mxu0 %v1606
          %1703 = vmatpush1.bf16.msra.mxu0 %v1605
          %1704 = vmatprep.subr.bf16.mxu0 %v1610
          %1705 = vmatpush1.bf16.msra.mxu0 %v1609
          %1706 = vmatprep.subr.bf16.mxu0 %v1614
          %1707 = vmatpush1.bf16.msra.mxu0 %v1613
          %1708 = vmatprep.subr.bf16.mxu0 %v1618
          %1709 = vmatpush1.bf16.msra.mxu0 %v1617
          %1710 = vmatprep.subr.bf16.mxu0 %v1622
          %1711 = vmatpush1.bf16.msra.mxu0 %v1621
          %1712 = vmatprep.subr.bf16.mxu0 0
          %1713 = vmatpush1.bf16.msra.mxu0 0
          %1714 = vmatprep.subr.bf16.mxu0 0
          %1715 = vmatpush1.bf16.msra.mxu0 0
          %1716 = vmatprep.subr.bf16.mxu0 0
          %1717 = vmatpush1.bf16.msra.mxu0 0
          %1718 = vmatprep.subr.bf16.mxu0 0
          %1719 = vmatpush1.bf16.msra.mxu0 0
          %1720 = vmatprep.subr.bf16.mxu0 0
          %1721 = vmatpush1.bf16.msra.mxu0 0
          %1722 = vmatprep.subr.bf16.mxu0 0
          %1723 = vmatpush1.bf16.msra.mxu0 0
          %1724 = vmatprep.subr.bf16.mxu0 0
          %1725 = vmatpush1.bf16.msra.mxu0 0
          %1726 = vmatprep.subr.bf16.mxu0 0
          %1727 = vmatpush1.bf16.msra.mxu0 0
          %1728 = vmatprep.mubr.bf16.mxu0 0
          %1729 = vmatmul.mubr.bf16.gmra.mrb[0].mxu0 %v1462
          %v1730 = vpop.f32.mrb[0].mxu0
          %v1731 = vadd.f32 0.0, %v1730
          %v1732 = vpop.f32.mrb[0].mxu0
          %v1733 = vadd.f32 0.0, %v1732
          %v1734 = vpop.f32.mrb[0].mxu0
          %v1735 = vpop.f32.mrb[0].mxu0
          %1736 = vdwg.mxu0
          %v1737 = vadd.f32 %v1457, %v1690
          %v1738 = vadd.f32 %v1458, %v1692
          %v1739 = vadd.f32 %v1459, %v1731
          %v1740 = vadd.f32 %v1460, %v1733
          %v1741 = vxor.u32 %v1737, 2147483648
          %v1742 = vmul.f32 %v1741, 1.442695
          %v1743 = vpow.pop %v1742
          %v1744 = vadd.f32 %v1743, 1.0
          %v1745 = vrcp.pop %v1744
          %v1746 = vmul.f32 1.0, %v1745
          %v1747 = vxor.u32 %v1738, 2147483648
          %v1748 = vmul.f32 %v1747, 1.442695
          %v1749 = vpow.pop %v1748
          %v1750 = vadd.f32 %v1749, 1.0
          %v1751 = vrcp.pop %v1750
          %v1752 = vmul.f32 1.0, %v1751
          %v1753 = vtanh.pop %v1739
          %v1754 = vxor.u32 %v1740, 2147483648
          %v1755 = vmul.f32 %v1754, 1.442695
          %v1756 = vpow.pop %v1755
          %v1757 = vadd.f32 %v1756, 1.0
          %v1758 = vrcp.pop %v1757
          %v1759 = vmul.f32 1.0, %v1758
          %v1760 = vld [vmem:[#allocation5] sm:$0xff]
          %v1761 = vmul.f32 %v1752, %v1760
          %v1762 = vmul.f32 %v1746, %v1753
          %v1763 = vadd.f32 %v1761, %v1762
          %v1764 = vtanh.pop %v1763
          %v1765 = vmul.f32 %v1759, %v1764
          %1766 = vst [vmem:[#allocation5] sm:$0xff] %v1763
          %1767 = vst [vmem:[#allocation4] sm:$0xff] %v1765
          %1768 = vst [vmem:[#allocation3 + $0x10] sm:$0xff] %v1765
          %v1769 = vld [vmem:[#allocation2 + $0x60] sm:$0xff]
          %v1770 = vld [vmem:[#allocation2 + $0x68] sm:$0xff]
          %v1771 = vld [vmem:[#allocation2 + $0x70] sm:$0xff]
          %v1772 = vld [vmem:[#allocation2 + $0x78] sm:$0xff]
          %v1773 = vld [vmem:[#allocation4] sm:$0xff]
          %v1774 = vpack.c.bf16 %v1773, %v1773
          %v1775 = vld [vmem:[%s2] sm:$0xff]
          %v1776 = vld [vmem:[%s2 + $0x8] sm:$0xff]
          %v1777 = vld [vmem:[%s2 + $0x10] sm:$0xff]
          %v1778 = vld [vmem:[%s2 + $0x18] sm:$0xff]
          %v1779 = vld [vmem:[%s2 + $0x20] sm:$0xff]
          %v1780 = vld [vmem:[%s2 + $0x28] sm:$0xff]
          %v1781 = vld [vmem:[%s2 + $0x30] sm:$0xff]
          %v1782 = vld [vmem:[%s2 + $0x38] sm:$0xff]
          %v1783 = vld [vmem:[%s2 + $0x40] sm:$0xff]
          %v1784 = vld [vmem:[%s2 + $0x48] sm:$0xff]
          %v1785 = vld [vmem:[%s2 + $0x50] sm:$0xff]
          %v1786 = vld [vmem:[%s2 + $0x58] sm:$0xff]
          %v1787 = vld [vmem:[%s2 + $0x60] sm:$0xff]
          %v1788 = vld [vmem:[%s2 + $0x68] sm:$0xff]
          %v1789 = vld [vmem:[%s2 + $0x70] sm:$0xff]
          %v1790 = vld [vmem:[%s2 + $0x78] sm:$0xff]
          %v1791 = vld [vmem:[%s2 + $0x80] sm:$0xff]
          %v1792 = vld [vmem:[%s2 + $0x88] sm:$0xff]
          %v1793 = vld [vmem:[%s2 + $0x90] sm:$0xff]
          %v1794 = vld [vmem:[%s2 + $0x98] sm:$0xff]
          %v1795 = vld [vmem:[%s2 + $0xa0] sm:$0xff]
          %v1796 = vld [vmem:[%s2 + $0xa8] sm:$0xff]
          %v1797 = vld [vmem:[%s2 + $0xb0] sm:$0xff]
          %v1798 = vld [vmem:[%s2 + $0xb8] sm:$0xff]
          %v1799 = vld [vmem:[%s2 + $0xc0] sm:$0xff]
          %v1800 = vld [vmem:[%s2 + $0xc8] sm:$0xff]
          %v1801 = vld [vmem:[%s2 + $0xd0] sm:$0xff]
          %v1802 = vld [vmem:[%s2 + $0xd8] sm:$0xff]
          %v1803 = vld [vmem:[%s2 + $0xe0] sm:$0xff]
          %v1804 = vld [vmem:[%s2 + $0xe8] sm:$0xff]
          %v1805 = vld [vmem:[%s2 + $0xf0] sm:$0xff]
          %v1806 = vld [vmem:[%s2 + $0xf8] sm:$0xff]
          %v1839 = vunpack.c.l.b16 %v1775
          %v1840 = vunpack.c.h.b16 %v1775
          %v1841 = vunpack.c.l.b16 %v1776
          %v1842 = vunpack.c.h.b16 %v1776
          %v1843 = vunpack.c.l.b16 %v1777
          %v1844 = vunpack.c.h.b16 %v1777
          %v1845 = vunpack.c.l.b16 %v1778
          %v1846 = vunpack.c.h.b16 %v1778
          %v1847 = vunpack.c.l.b16 %v1779
          %v1848 = vunpack.c.h.b16 %v1779
          %v1849 = vunpack.c.l.b16 %v1780
          %v1850 = vunpack.c.h.b16 %v1780
          %v1851 = vunpack.c.l.b16 %v1781
          %v1852 = vunpack.c.h.b16 %v1781
          %v1853 = vunpack.c.l.b16 %v1782
          %v1854 = vunpack.c.h.b16 %v1782
          %v1855 = vunpack.c.l.b16 %v1783
          %v1856 = vunpack.c.h.b16 %v1783
          %v1857 = vunpack.c.l.b16 %v1784
          %v1858 = vunpack.c.h.b16 %v1784
          %v1859 = vunpack.c.l.b16 %v1785
          %v1860 = vunpack.c.h.b16 %v1785
          %v1861 = vunpack.c.l.b16 %v1786
          %v1862 = vunpack.c.h.b16 %v1786
          %v1863 = vunpack.c.l.b16 %v1787
          %v1864 = vunpack.c.h.b16 %v1787
          %v1865 = vunpack.c.l.b16 %v1788
          %v1866 = vunpack.c.h.b16 %v1788
          %v1867 = vunpack.c.l.b16 %v1789
          %v1868 = vunpack.c.h.b16 %v1789
          %v1869 = vunpack.c.l.b16 %v1790
          %v1870 = vunpack.c.h.b16 %v1790
          %v1871 = vunpack.c.l.b16 %v1791
          %v1872 = vunpack.c.h.b16 %v1791
          %v1873 = vunpack.c.l.b16 %v1792
          %v1874 = vunpack.c.h.b16 %v1792
          %v1875 = vunpack.c.l.b16 %v1793
          %v1876 = vunpack.c.h.b16 %v1793
          %v1877 = vunpack.c.l.b16 %v1794
          %v1878 = vunpack.c.h.b16 %v1794
          %v1879 = vunpack.c.l.b16 %v1795
          %v1880 = vunpack.c.h.b16 %v1795
          %v1881 = vunpack.c.l.b16 %v1796
          %v1882 = vunpack.c.h.b16 %v1796
          %v1883 = vunpack.c.l.b16 %v1797
          %v1884 = vunpack.c.h.b16 %v1797
          %v1885 = vunpack.c.l.b16 %v1798
          %v1886 = vunpack.c.h.b16 %v1798
          %v1887 = vunpack.c.l.b16 %v1799
          %v1888 = vunpack.c.h.b16 %v1799
          %v1889 = vunpack.c.l.b16 %v1800
          %v1890 = vunpack.c.h.b16 %v1800
          %v1891 = vunpack.c.l.b16 %v1801
          %v1892 = vunpack.c.h.b16 %v1801
          %v1893 = vunpack.c.l.b16 %v1802
          %v1894 = vunpack.c.h.b16 %v1802
          %v1895 = vunpack.c.l.b16 %v1803
          %v1896 = vunpack.c.h.b16 %v1803
          %v1897 = vunpack.c.l.b16 %v1804
          %v1898 = vunpack.c.h.b16 %v1804
          %v1899 = vunpack.c.l.b16 %v1805
          %v1900 = vunpack.c.h.b16 %v1805
          %v1901 = vunpack.c.l.b16 %v1806
          %v1902 = vunpack.c.h.b16 %v1806
          %v1903 = vpack.c.b16 %v1843, %v1839
          %v1904 = vpack.c.b16 %v1844, %v1840
          %v1905 = vpack.c.b16 %v1845, %v1841
          %v1906 = vpack.c.b16 %v1846, %v1842
          %v1907 = vpack.c.b16 %v1851, %v1847
          %v1908 = vpack.c.b16 %v1852, %v1848
          %v1909 = vpack.c.b16 %v1853, %v1849
          %v1910 = vpack.c.b16 %v1854, %v1850
          %v1911 = vpack.c.b16 %v1859, %v1855
          %v1912 = vpack.c.b16 %v1860, %v1856
          %v1913 = vpack.c.b16 %v1861, %v1857
          %v1914 = vpack.c.b16 %v1862, %v1858
          %v1915 = vpack.c.b16 %v1867, %v1863
          %v1916 = vpack.c.b16 %v1868, %v1864
          %v1917 = vpack.c.b16 %v1869, %v1865
          %v1918 = vpack.c.b16 %v1870, %v1866
          %v1919 = vpack.c.b16 %v1875, %v1871
          %v1920 = vpack.c.b16 %v1876, %v1872
          %v1921 = vpack.c.b16 %v1877, %v1873
          %v1922 = vpack.c.b16 %v1878, %v1874
          %v1923 = vpack.c.b16 %v1883, %v1879
          %v1924 = vpack.c.b16 %v1884, %v1880
          %v1925 = vpack.c.b16 %v1885, %v1881
          %v1926 = vpack.c.b16 %v1886, %v1882
          %v1927 = vpack.c.b16 %v1891, %v1887
          %v1928 = vpack.c.b16 %v1892, %v1888
          %v1929 = vpack.c.b16 %v1893, %v1889
          %v1930 = vpack.c.b16 %v1894, %v1890
          %v1931 = vpack.c.b16 %v1899, %v1895
          %v1932 = vpack.c.b16 %v1900, %v1896
          %v1933 = vpack.c.b16 %v1901, %v1897
          %v1934 = vpack.c.b16 %v1902, %v1898
          %1967 = vmatprep.subr.bf16.mxu0 %v1904
          %1968 = vmatpush1.bf16.msra.mxu0 %v1903
          %1969 = vmatprep.subr.bf16.mxu0 %v1908
          %1970 = vmatpush1.bf16.msra.mxu0 %v1907
          %1971 = vmatprep.subr.bf16.mxu0 %v1912
          %1972 = vmatpush1.bf16.msra.mxu0 %v1911
          %1973 = vmatprep.subr.bf16.mxu0 %v1916
          %1974 = vmatpush1.bf16.msra.mxu0 %v1915
          %1975 = vmatprep.subr.bf16.mxu0 %v1920
          %1976 = vmatpush1.bf16.msra.mxu0 %v1919
          %1977 = vmatprep.subr.bf16.mxu0 %v1924
          %1978 = vmatpush1.bf16.msra.mxu0 %v1923
          %1979 = vmatprep.subr.bf16.mxu0 %v1928
          %1980 = vmatpush1.bf16.msra.mxu0 %v1927
          %1981 = vmatprep.subr.bf16.mxu0 %v1932
          %1982 = vmatpush1.bf16.msra.mxu0 %v1931
          %1983 = vmatprep.subr.bf16.mxu0 0
          %1984 = vmatpush1.bf16.msra.mxu0 0
          %1985 = vmatprep.subr.bf16.mxu0 0
          %1986 = vmatpush1.bf16.msra.mxu0 0
          %1987 = vmatprep.subr.bf16.mxu0 0
          %1988 = vmatpush1.bf16.msra.mxu0 0
          %1989 = vmatprep.subr.bf16.mxu0 0
          %1990 = vmatpush1.bf16.msra.mxu0 0
          %1991 = vmatprep.subr.bf16.mxu0 0
          %1992 = vmatpush1.bf16.msra.mxu0 0
          %1993 = vmatprep.subr.bf16.mxu0 0
          %1994 = vmatpush1.bf16.msra.mxu0 0
          %1995 = vmatprep.subr.bf16.mxu0 0
          %1996 = vmatpush1.bf16.msra.mxu0 0
          %1997 = vmatprep.subr.bf16.mxu0 0
          %1998 = vmatpush1.bf16.msra.mxu0 0
          %1999 = vmatprep.mubr.bf16.mxu0 0
          %2000 = vmatmul.mubr.bf16.gmra.mrb[0].mxu0 %v1774
          %v2001 = vpop.f32.mrb[0].mxu0
          %v2002 = vadd.f32 0.0, %v2001
          %v2003 = vpop.f32.mrb[0].mxu0
          %v2004 = vadd.f32 0.0, %v2003
          %v2005 = vpop.f32.mrb[0].mxu0
          %v2006 = vpop.f32.mrb[0].mxu0
          %2007 = vdwg.mxu0
          %2008 = vmatprep.subr.bf16.mxu0 %v1906
          %2009 = vmatpush1.bf16.msra.mxu0 %v1905
          %2010 = vmatprep.subr.bf16.mxu0 %v1910
          %2011 = vmatpush1.bf16.msra.mxu0 %v1909
          %2012 = vmatprep.subr.bf16.mxu0 %v1914
          %2013 = vmatpush1.bf16.msra.mxu0 %v1913
          %2014 = vmatprep.subr.bf16.mxu0 %v1918
          %2015 = vmatpush1.bf16.msra.mxu0 %v1917
          %2016 = vmatprep.subr.bf16.mxu0 %v1922
          %2017 = vmatpush1.bf16.msra.mxu0 %v1921
          %2018 = vmatprep.subr.bf16.mxu0 %v1926
          %2019 = vmatpush1.bf16.msra.mxu0 %v1925
          %2020 = vmatprep.subr.bf16.mxu0 %v1930
          %2021 = vmatpush1.bf16.msra.mxu0 %v1929
          %2022 = vmatprep.subr.bf16.mxu0 %v1934
          %2023 = vmatpush1.bf16.msra.mxu0 %v1933
          %2024 = vmatprep.subr.bf16.mxu0 0
          %2025 = vmatpush1.bf16.msra.mxu0 0
          %2026 = vmatprep.subr.bf16.mxu0 0
          %2027 = vmatpush1.bf16.msra.mxu0 0
          %2028 = vmatprep.subr.bf16.mxu0 0
          %2029 = vmatpush1.bf16.msra.mxu0 0
          %2030 = vmatprep.subr.bf16.mxu0 0
          %2031 = vmatpush1.bf16.msra.mxu0 0
          %2032 = vmatprep.subr.bf16.mxu0 0
          %2033 = vmatpush1.bf16.msra.mxu0 0
          %2034 = vmatprep.subr.bf16.mxu0 0
          %2035 = vmatpush1.bf16.msra.mxu0 0
          %2036 = vmatprep.subr.bf16.mxu0 0
          %2037 = vmatpush1.bf16.msra.mxu0 0
          %2038 = vmatprep.subr.bf16.mxu0 0
          %2039 = vmatpush1.bf16.msra.mxu0 0
          %2040 = vmatprep.mubr.bf16.mxu0 0
          %2041 = vmatmul.mubr.bf16.gmra.mrb[0].mxu0 %v1774
          %v2042 = vpop.f32.mrb[0].mxu0
          %v2043 = vadd.f32 0.0, %v2042
          %v2044 = vpop.f32.mrb[0].mxu0
          %v2045 = vadd.f32 0.0, %v2044
          %v2046 = vpop.f32.mrb[0].mxu0
          %v2047 = vpop.f32.mrb[0].mxu0
          %2048 = vdwg.mxu0
          %v2049 = vadd.f32 %v1769, %v2002
          %v2050 = vadd.f32 %v1770, %v2004
          %v2051 = vadd.f32 %v1771, %v2043
          %v2052 = vadd.f32 %v1772, %v2045
          %v2053 = vxor.u32 %v2049, 2147483648
          %v2054 = vmul.f32 %v2053, 1.442695
          %v2055 = vpow.pop %v2054
          %v2056 = vadd.f32 %v2055, 1.0
          %v2057 = vrcp.pop %v2056
          %v2058 = vmul.f32 1.0, %v2057
          %v2059 = vxor.u32 %v2050, 2147483648
          %v2060 = vmul.f32 %v2059, 1.442695
          %v2061 = vpow.pop %v2060
          %v2062 = vadd.f32 %v2061, 1.0
          %v2063 = vrcp.pop %v2062
          %v2064 = vmul.f32 1.0, %v2063
          %v2065 = vtanh.pop %v2051
          %v2066 = vxor.u32 %v2052, 2147483648
          %v2067 = vmul.f32 %v2066, 1.442695
          %v2068 = vpow.pop %v2067
          %v2069 = vadd.f32 %v2068, 1.0
          %v2070 = vrcp.pop %v2069
          %v2071 = vmul.f32 1.0, %v2070
          %v2072 = vld [vmem:[#allocation5] sm:$0xff]
          %v2073 = vmul.f32 %v2064, %v2072
          %v2074 = vmul.f32 %v2058, %v2065
          %v2075 = vadd.f32 %v2073, %v2074
          %v2076 = vtanh.pop %v2075
          %v2077 = vmul.f32 %v2071, %v2076
          %2078 = vst [vmem:[#allocation5] sm:$0xff] %v2075
          %2079 = vst [vmem:[#allocation4] sm:$0xff] %v2077
          %2080 = vst [vmem:[#allocation3 + $0x18] sm:$0xff] %v2077
          %v2081 = vld [vmem:[#allocation2 + $0x80] sm:$0xff]
          %v2082 = vld [vmem:[#allocation2 + $0x88] sm:$0xff]
          %v2083 = vld [vmem:[#allocation2 + $0x90] sm:$0xff]
          %v2084 = vld [vmem:[#allocation2 + $0x98] sm:$0xff]
          %v2085 = vld [vmem:[#allocation4] sm:$0xff]
          %v2086 = vpack.c.bf16 %v2085, %v2085
          %v2087 = vld [vmem:[%s2] sm:$0xff]
          %v2088 = vld [vmem:[%s2 + $0x8] sm:$0xff]
          %v2089 = vld [vmem:[%s2 + $0x10] sm:$0xff]
          %v2090 = vld [vmem:[%s2 + $0x18] sm:$0xff]
          %v2091 = vld [vmem:[%s2 + $0x20] sm:$0xff]
          %v2092 = vld [vmem:[%s2 + $0x28] sm:$0xff]
          %v2093 = vld [vmem:[%s2 + $0x30] sm:$0xff]
          %v2094 = vld [vmem:[%s2 + $0x38] sm:$0xff]
          %v2095 = vld [vmem:[%s2 + $0x40] sm:$0xff]
          %v2096 = vld [vmem:[%s2 + $0x48] sm:$0xff]
          %v2097 = vld [vmem:[%s2 + $0x50] sm:$0xff]
          %v2098 = vld [vmem:[%s2 + $0x58] sm:$0xff]
          %v2099 = vld [vmem:[%s2 + $0x60] sm:$0xff]
          %v2100 = vld [vmem:[%s2 + $0x68] sm:$0xff]
          %v2101 = vld [vmem:[%s2 + $0x70] sm:$0xff]
          %v2102 = vld [vmem:[%s2 + $0x78] sm:$0xff]
          %v2103 = vld [vmem:[%s2 + $0x80] sm:$0xff]
          %v2104 = vld [vmem:[%s2 + $0x88] sm:$0xff]
          %v2105 = vld [vmem:[%s2 + $0x90] sm:$0xff]
          %v2106 = vld [vmem:[%s2 + $0x98] sm:$0xff]
          %v2107 = vld [vmem:[%s2 + $0xa0] sm:$0xff]
          %v2108 = vld [vmem:[%s2 + $0xa8] sm:$0xff]
          %v2109 = vld [vmem:[%s2 + $0xb0] sm:$0xff]
          %v2110 = vld [vmem:[%s2 + $0xb8] sm:$0xff]
          %v2111 = vld [vmem:[%s2 + $0xc0] sm:$0xff]
          %v2112 = vld [vmem:[%s2 + $0xc8] sm:$0xff]
          %v2113 = vld [vmem:[%s2 + $0xd0] sm:$0xff]
          %v2114 = vld [vmem:[%s2 + $0xd8] sm:$0xff]
          %v2115 = vld [vmem:[%s2 + $0xe0] sm:$0xff]
          %v2116 = vld [vmem:[%s2 + $0xe8] sm:$0xff]
          %v2117 = vld [vmem:[%s2 + $0xf0] sm:$0xff]
          %v2118 = vld [vmem:[%s2 + $0xf8] sm:$0xff]
          %v2151 = vunpack.c.l.b16 %v2087
          %v2152 = vunpack.c.h.b16 %v2087
          %v2153 = vunpack.c.l.b16 %v2088
          %v2154 = vunpack.c.h.b16 %v2088
          %v2155 = vunpack.c.l.b16 %v2089
          %v2156 = vunpack.c.h.b16 %v2089
          %v2157 = vunpack.c.l.b16 %v2090
          %v2158 = vunpack.c.h.b16 %v2090
          %v2159 = vunpack.c.l.b16 %v2091
          %v2160 = vunpack.c.h.b16 %v2091
          %v2161 = vunpack.c.l.b16 %v2092
          %v2162 = vunpack.c.h.b16 %v2092
          %v2163 = vunpack.c.l.b16 %v2093
          %v2164 = vunpack.c.h.b16 %v2093
          %v2165 = vunpack.c.l.b16 %v2094
          %v2166 = vunpack.c.h.b16 %v2094
          %v2167 = vunpack.c.l.b16 %v2095
          %v2168 = vunpack.c.h.b16 %v2095
          %v2169 = vunpack.c.l.b16 %v2096
          %v2170 = vunpack.c.h.b16 %v2096
          %v2171 = vunpack.c.l.b16 %v2097
          %v2172 = vunpack.c.h.b16 %v2097
          %v2173 = vunpack.c.l.b16 %v2098
          %v2174 = vunpack.c.h.b16 %v2098
          %v2175 = vunpack.c.l.b16 %v2099
          %v2176 = vunpack.c.h.b16 %v2099
          %v2177 = vunpack.c.l.b16 %v2100
          %v2178 = vunpack.c.h.b16 %v2100
          %v2179 = vunpack.c.l.b16 %v2101
          %v2180 = vunpack.c.h.b16 %v2101
          %v2181 = vunpack.c.l.b16 %v2102
          %v2182 = vunpack.c.h.b16 %v2102
          %v2183 = vunpack.c.l.b16 %v2103
          %v2184 = vunpack.c.h.b16 %v2103
          %v2185 = vunpack.c.l.b16 %v2104
          %v2186 = vunpack.c.h.b16 %v2104
          %v2187 = vunpack.c.l.b16 %v2105
          %v2188 = vunpack.c.h.b16 %v2105
          %v2189 = vunpack.c.l.b16 %v2106
          %v2190 = vunpack.c.h.b16 %v2106
          %v2191 = vunpack.c.l.b16 %v2107
          %v2192 = vunpack.c.h.b16 %v2107
          %v2193 = vunpack.c.l.b16 %v2108
          %v2194 = vunpack.c.h.b16 %v2108
          %v2195 = vunpack.c.l.b16 %v2109
          %v2196 = vunpack.c.h.b16 %v2109
          %v2197 = vunpack.c.l.b16 %v2110
          %v2198 = vunpack.c.h.b16 %v2110
          %v2199 = vunpack.c.l.b16 %v2111
          %v2200 = vunpack.c.h.b16 %v2111
          %v2201 = vunpack.c.l.b16 %v2112
          %v2202 = vunpack.c.h.b16 %v2112
          %v2203 = vunpack.c.l.b16 %v2113
          %v2204 = vunpack.c.h.b16 %v2113
          %v2205 = vunpack.c.l.b16 %v2114
          %v2206 = vunpack.c.h.b16 %v2114
          %v2207 = vunpack.c.l.b16 %v2115
          %v2208 = vunpack.c.h.b16 %v2115
          %v2209 = vunpack.c.l.b16 %v2116
          %v2210 = vunpack.c.h.b16 %v2116
          %v2211 = vunpack.c.l.b16 %v2117
          %v2212 = vunpack.c.h.b16 %v2117
          %v2213 = vunpack.c.l.b16 %v2118
          %v2214 = vunpack.c.h.b16 %v2118
          %v2215 = vpack.c.b16 %v2155, %v2151
          %v2216 = vpack.c.b16 %v2156, %v2152
          %v2217 = vpack.c.b16 %v2157, %v2153
          %v2218 = vpack.c.b16 %v2158, %v2154
          %v2219 = vpack.c.b16 %v2163, %v2159
          %v2220 = vpack.c.b16 %v2164, %v2160
          %v2221 = vpack.c.b16 %v2165, %v2161
          %v2222 = vpack.c.b16 %v2166, %v2162
          %v2223 = vpack.c.b16 %v2171, %v2167
          %v2224 = vpack.c.b16 %v2172, %v2168
          %v2225 = vpack.c.b16 %v2173, %v2169
          %v2226 = vpack.c.b16 %v2174, %v2170
          %v2227 = vpack.c.b16 %v2179, %v2175
          %v2228 = vpack.c.b16 %v2180, %v2176
          %v2229 = vpack.c.b16 %v2181, %v2177
          %v2230 = vpack.c.b16 %v2182, %v2178
          %v2231 = vpack.c.b16 %v2187, %v2183
          %v2232 = vpack.c.b16 %v2188, %v2184
          %v2233 = vpack.c.b16 %v2189, %v2185
          %v2234 = vpack.c.b16 %v2190, %v2186
          %v2235 = vpack.c.b16 %v2195, %v2191
          %v2236 = vpack.c.b16 %v2196, %v2192
          %v2237 = vpack.c.b16 %v2197, %v2193
          %v2238 = vpack.c.b16 %v2198, %v2194
          %v2239 = vpack.c.b16 %v2203, %v2199
          %v2240 = vpack.c.b16 %v2204, %v2200
          %v2241 = vpack.c.b16 %v2205, %v2201
          %v2242 = vpack.c.b16 %v2206, %v2202
          %v2243 = vpack.c.b16 %v2211, %v2207
          %v2244 = vpack.c.b16 %v2212, %v2208
          %v2245 = vpack.c.b16 %v2213, %v2209
          %v2246 = vpack.c.b16 %v2214, %v2210
          %2279 = vmatprep.subr.bf16.mxu0 %v2216
          %2280 = vmatpush1.bf16.msra.mxu0 %v2215
          %2281 = vmatprep.subr.bf16.mxu0 %v2220
          %2282 = vmatpush1.bf16.msra.mxu0 %v2219
          %2283 = vmatprep.subr.bf16.mxu0 %v2224
          %2284 = vmatpush1.bf16.msra.mxu0 %v2223
          %2285 = vmatprep.subr.bf16.mxu0 %v2228
          %2286 = vmatpush1.bf16.msra.mxu0 %v2227
          %2287 = vmatprep.subr.bf16.mxu0 %v2232
          %2288 = vmatpush1.bf16.msra.mxu0 %v2231
          %2289 = vmatprep.subr.bf16.mxu0 %v2236
          %2290 = vmatpush1.bf16.msra.mxu0 %v2235
          %2291 = vmatprep.subr.bf16.mxu0 %v2240
          %2292 = vmatpush1.bf16.msra.mxu0 %v2239
          %2293 = vmatprep.subr.bf16.mxu0 %v2244
          %2294 = vmatpush1.bf16.msra.mxu0 %v2243
          %2295 = vmatprep.subr.bf16.mxu0 0
          %2296 = vmatpush1.bf16.msra.mxu0 0
          %2297 = vmatprep.subr.bf16.mxu0 0
          %2298 = vmatpush1.bf16.msra.mxu0 0
          %2299 = vmatprep.subr.bf16.mxu0 0
          %2300 = vmatpush1.bf16.msra.mxu0 0
          %2301 = vmatprep.subr.bf16.mxu0 0
          %2302 = vmatpush1.bf16.msra.mxu0 0
          %2303 = vmatprep.subr.bf16.mxu0 0
          %2304 = vmatpush1.bf16.msra.mxu0 0
          %2305 = vmatprep.subr.bf16.mxu0 0
          %2306 = vmatpush1.bf16.msra.mxu0 0
          %2307 = vmatprep.subr.bf16.mxu0 0
          %2308 = vmatpush1.bf16.msra.mxu0 0
          %2309 = vmatprep.subr.bf16.mxu0 0
          %2310 = vmatpush1.bf16.msra.mxu0 0
          %2311 = vmatprep.mubr.bf16.mxu0 0
          %2312 = vmatmul.mubr.bf16.gmra.mrb[0].mxu0 %v2086
          %v2313 = vpop.f32.mrb[0].mxu0
          %v2314 = vadd.f32 0.0, %v2313
          %v2315 = vpop.f32.mrb[0].mxu0
          %v2316 = vadd.f32 0.0, %v2315
          %v2317 = vpop.f32.mrb[0].mxu0
          %v2318 = vpop.f32.mrb[0].mxu0
          %2319 = vdwg.mxu0
          %2320 = vmatprep.subr.bf16.mxu0 %v2218
          %2321 = vmatpush1.bf16.msra.mxu0 %v2217
          %2322 = vmatprep.subr.bf16.mxu0 %v2222
          %2323 = vmatpush1.bf16.msra.mxu0 %v2221
          %2324 = vmatprep.subr.bf16.mxu0 %v2226
          %2325 = vmatpush1.bf16.msra.mxu0 %v2225
          %2326 = vmatprep.subr.bf16.mxu0 %v2230
          %2327 = vmatpush1.bf16.msra.mxu0 %v2229
          %2328 = vmatprep.subr.bf16.mxu0 %v2234
          %2329 = vmatpush1.bf16.msra.mxu0 %v2233
          %2330 = vmatprep.subr.bf16.mxu0 %v2238
          %2331 = vmatpush1.bf16.msra.mxu0 %v2237
          %2332 = vmatprep.subr.bf16.mxu0 %v2242
          %2333 = vmatpush1.bf16.msra.mxu0 %v2241
          %2334 = vmatprep.subr.bf16.mxu0 %v2246
          %2335 = vmatpush1.bf16.msra.mxu0 %v2245
          %2336 = vmatprep.subr.bf16.mxu0 0
          %2337 = vmatpush1.bf16.msra.mxu0 0
          %2338 = vmatprep.subr.bf16.mxu0 0
          %2339 = vmatpush1.bf16.msra.mxu0 0
          %2340 = vmatprep.subr.bf16.mxu0 0
          %2341 = vmatpush1.bf16.msra.mxu0 0
          %2342 = vmatprep.subr.bf16.mxu0 0
          %2343 = vmatpush1.bf16.msra.mxu0 0
          %2344 = vmatprep.subr.bf16.mxu0 0
          %2345 = vmatpush1.bf16.msra.mxu0 0
          %2346 = vmatprep.subr.bf16.mxu0 0
          %2347 = vmatpush1.bf16.msra.mxu0 0
          %2348 = vmatprep.subr.bf16.mxu0 0
          %2349 = vmatpush1.bf16.msra.mxu0 0
          %2350 = vmatprep.subr.bf16.mxu0 0
          %2351 = vmatpush1.bf16.msra.mxu0 0
          %2352 = vmatprep.mubr.bf16.mxu0 0
          %2353 = vmatmul.mubr.bf16.gmra.mrb[0].mxu0 %v2086
          %v2354 = vpop.f32.mrb[0].mxu0
          %v2355 = vadd.f32 0.0, %v2354
          %v2356 = vpop.f32.mrb[0].mxu0
          %v2357 = vadd.f32 0.0, %v2356
          %v2358 = vpop.f32.mrb[0].mxu0
          %v2359 = vpop.f32.mrb[0].mxu0
          %2360 = vdwg.mxu0
          %v2361 = vadd.f32 %v2081, %v2314
          %v2362 = vadd.f32 %v2082, %v2316
          %v2363 = vadd.f32 %v2083, %v2355
          %v2364 = vadd.f32 %v2084, %v2357
          %v2365 = vxor.u32 %v2361, 2147483648
          %v2366 = vmul.f32 %v2365, 1.442695
          %v2367 = vpow.pop %v2366
          %v2368 = vadd.f32 %v2367, 1.0
          %v2369 = vrcp.pop %v2368
          %v2370 = vmul.f32 1.0, %v2369
          %v2371 = vxor.u32 %v2362, 2147483648
          %v2372 = vmul.f32 %v2371, 1.442695
          %v2373 = vpow.pop %v2372
          %v2374 = vadd.f32 %v2373, 1.0
          %v2375 = vrcp.pop %v2374
          %v2376 = vmul.f32 1.0, %v2375
          %v2377 = vtanh.pop %v2363
          %v2378 = vxor.u32 %v2364, 2147483648
          %v2379 = vmul.f32 %v2378, 1.442695
          %v2380 = vpow.pop %v2379
          %v2381 = vadd.f32 %v2380, 1.0
          %v2382 = vrcp.pop %v2381
          %v2383 = vmul.f32 1.0, %v2382
          %v2384 = vld [vmem:[#allocation5] sm:$0xff]
          %v2385 = vmul.f32 %v2376, %v2384
          %v2386 = vmul.f32 %v2370, %v2377
          %v2387 = vadd.f32 %v2385, %v2386
          %v2388 = vtanh.pop %v2387
          %v2389 = vmul.f32 %v2383, %v2388
          %2390 = vst [vmem:[#allocation5] sm:$0xff] %v2387
          %2391 = vst [vmem:[#allocation4] sm:$0xff] %v2389
          %2392 = vst [vmem:[#allocation3 + $0x20] sm:$0xff] %v2389
          %v2393 = vld [vmem:[#allocation2 + $0xa0] sm:$0xff]
          %v2394 = vld [vmem:[#allocation2 + $0xa8] sm:$0xff]
          %v2395 = vld [vmem:[#allocation2 + $0xb0] sm:$0xff]
          %v2396 = vld [vmem:[#allocation2 + $0xb8] sm:$0xff]
          %v2397 = vld [vmem:[#allocation4] sm:$0xff]
          %v2398 = vpack.c.bf16 %v2397, %v2397
          %v2399 = vld [vmem:[%s2] sm:$0xff]
          %v2400 = vld [vmem:[%s2 + $0x8] sm:$0xff]
          %v2401 = vld [vmem:[%s2 + $0x10] sm:$0xff]
          %v2402 = vld [vmem:[%s2 + $0x18] sm:$0xff]
          %v2403 = vld [vmem:[%s2 + $0x20] sm:$0xff]
          %v2404 = vld [vmem:[%s2 + $0x28] sm:$0xff]
          %v2405 = vld [vmem:[%s2 + $0x30] sm:$0xff]
          %v2406 = vld [vmem:[%s2 + $0x38] sm:$0xff]
          %v2407 = vld [vmem:[%s2 + $0x40] sm:$0xff]
          %v2408 = vld [vmem:[%s2 + $0x48] sm:$0xff]
          %v2409 = vld [vmem:[%s2 + $0x50] sm:$0xff]
          %v2410 = vld [vmem:[%s2 + $0x58] sm:$0xff]
          %v2411 = vld [vmem:[%s2 + $0x60] sm:$0xff]
          %v2412 = vld [vmem:[%s2 + $0x68] sm:$0xff]
          %v2413 = vld [vmem:[%s2 + $0x70] sm:$0xff]
          %v2414 = vld [vmem:[%s2 + $0x78] sm:$0xff]
          %v2415 = vld [vmem:[%s2 + $0x80] sm:$0xff]
          %v2416 = vld [vmem:[%s2 + $0x88] sm:$0xff]
          %v2417 = vld [vmem:[%s2 + $0x90] sm:$0xff]
          %v2418 = vld [vmem:[%s2 + $0x98] sm:$0xff]
          %v2419 = vld [vmem:[%s2 + $0xa0] sm:$0xff]
          %v2420 = vld [vmem:[%s2 + $0xa8] sm:$0xff]
          %v2421 = vld [vmem:[%s2 + $0xb0] sm:$0xff]
          %v2422 = vld [vmem:[%s2 + $0xb8] sm:$0xff]
          %v2423 = vld [vmem:[%s2 + $0xc0] sm:$0xff]
          %v2424 = vld [vmem:[%s2 + $0xc8] sm:$0xff]
          %v2425 = vld [vmem:[%s2 + $0xd0] sm:$0xff]
          %v2426 = vld [vmem:[%s2 + $0xd8] sm:$0xff]
          %v2427 = vld [vmem:[%s2 + $0xe0] sm:$0xff]
          %v2428 = vld [vmem:[%s2 + $0xe8] sm:$0xff]
          %v2429 = vld [vmem:[%s2 + $0xf0] sm:$0xff]
          %v2430 = vld [vmem:[%s2 + $0xf8] sm:$0xff]
          %v2463 = vunpack.c.l.b16 %v2399
          %v2464 = vunpack.c.h.b16 %v2399
          %v2465 = vunpack.c.l.b16 %v2400
          %v2466 = vunpack.c.h.b16 %v2400
          %v2467 = vunpack.c.l.b16 %v2401
          %v2468 = vunpack.c.h.b16 %v2401
          %v2469 = vunpack.c.l.b16 %v2402
          %v2470 = vunpack.c.h.b16 %v2402
          %v2471 = vunpack.c.l.b16 %v2403
          %v2472 = vunpack.c.h.b16 %v2403
          %v2473 = vunpack.c.l.b16 %v2404
          %v2474 = vunpack.c.h.b16 %v2404
          %v2475 = vunpack.c.l.b16 %v2405
          %v2476 = vunpack.c.h.b16 %v2405
          %v2477 = vunpack.c.l.b16 %v2406
          %v2478 = vunpack.c.h.b16 %v2406
          %v2479 = vunpack.c.l.b16 %v2407
          %v2480 = vunpack.c.h.b16 %v2407
          %v2481 = vunpack.c.l.b16 %v2408
          %v2482 = vunpack.c.h.b16 %v2408
          %v2483 = vunpack.c.l.b16 %v2409
          %v2484 = vunpack.c.h.b16 %v2409
          %v2485 = vunpack.c.l.b16 %v2410
          %v2486 = vunpack.c.h.b16 %v2410
          %v2487 = vunpack.c.l.b16 %v2411
          %v2488 = vunpack.c.h.b16 %v2411
          %v2489 = vunpack.c.l.b16 %v2412
          %v2490 = vunpack.c.h.b16 %v2412
          %v2491 = vunpack.c.l.b16 %v2413
          %v2492 = vunpack.c.h.b16 %v2413
          %v2493 = vunpack.c.l.b16 %v2414
          %v2494 = vunpack.c.h.b16 %v2414
          %v2495 = vunpack.c.l.b16 %v2415
          %v2496 = vunpack.c.h.b16 %v2415
          %v2497 = vunpack.c.l.b16 %v2416
          %v2498 = vunpack.c.h.b16 %v2416
          %v2499 = vunpack.c.l.b16 %v2417
          %v2500 = vunpack.c.h.b16 %v2417
          %v2501 = vunpack.c.l.b16 %v2418
          %v2502 = vunpack.c.h.b16 %v2418
          %v2503 = vunpack.c.l.b16 %v2419
          %v2504 = vunpack.c.h.b16 %v2419
          %v2505 = vunpack.c.l.b16 %v2420
          %v2506 = vunpack.c.h.b16 %v2420
          %v2507 = vunpack.c.l.b16 %v2421
          %v2508 = vunpack.c.h.b16 %v2421
          %v2509 = vunpack.c.l.b16 %v2422
          %v2510 = vunpack.c.h.b16 %v2422
          %v2511 = vunpack.c.l.b16 %v2423
          %v2512 = vunpack.c.h.b16 %v2423
          %v2513 = vunpack.c.l.b16 %v2424
          %v2514 = vunpack.c.h.b16 %v2424
          %v2515 = vunpack.c.l.b16 %v2425
          %v2516 = vunpack.c.h.b16 %v2425
          %v2517 = vunpack.c.l.b16 %v2426
          %v2518 = vunpack.c.h.b16 %v2426
          %v2519 = vunpack.c.l.b16 %v2427
          %v2520 = vunpack.c.h.b16 %v2427
          %v2521 = vunpack.c.l.b16 %v2428
          %v2522 = vunpack.c.h.b16 %v2428
          %v2523 = vunpack.c.l.b16 %v2429
          %v2524 = vunpack.c.h.b16 %v2429
          %v2525 = vunpack.c.l.b16 %v2430
          %v2526 = vunpack.c.h.b16 %v2430
          %v2527 = vpack.c.b16 %v2467, %v2463
          %v2528 = vpack.c.b16 %v2468, %v2464
          %v2529 = vpack.c.b16 %v2469, %v2465
          %v2530 = vpack.c.b16 %v2470, %v2466
          %v2531 = vpack.c.b16 %v2475, %v2471
          %v2532 = vpack.c.b16 %v2476, %v2472
          %v2533 = vpack.c.b16 %v2477, %v2473
          %v2534 = vpack.c.b16 %v2478, %v2474
          %v2535 = vpack.c.b16 %v2483, %v2479
          %v2536 = vpack.c.b16 %v2484, %v2480
          %v2537 = vpack.c.b16 %v2485, %v2481
          %v2538 = vpack.c.b16 %v2486, %v2482
          %v2539 = vpack.c.b16 %v2491, %v2487
          %v2540 = vpack.c.b16 %v2492, %v2488
          %v2541 = vpack.c.b16 %v2493, %v2489
          %v2542 = vpack.c.b16 %v2494, %v2490
          %v2543 = vpack.c.b16 %v2499, %v2495
          %v2544 = vpack.c.b16 %v2500, %v2496
          %v2545 = vpack.c.b16 %v2501, %v2497
          %v2546 = vpack.c.b16 %v2502, %v2498
          %v2547 = vpack.c.b16 %v2507, %v2503
          %v2548 = vpack.c.b16 %v2508, %v2504
          %v2549 = vpack.c.b16 %v2509, %v2505
          %v2550 = vpack.c.b16 %v2510, %v2506
          %v2551 = vpack.c.b16 %v2515, %v2511
          %v2552 = vpack.c.b16 %v2516, %v2512
          %v2553 = vpack.c.b16 %v2517, %v2513
          %v2554 = vpack.c.b16 %v2518, %v2514
          %v2555 = vpack.c.b16 %v2523, %v2519
          %v2556 = vpack.c.b16 %v2524, %v2520
          %v2557 = vpack.c.b16 %v2525, %v2521
          %v2558 = vpack.c.b16 %v2526, %v2522
          %2591 = vmatprep.subr.bf16.mxu0 %v2528
          %2592 = vmatpush1.bf16.msra.mxu0 %v2527
          %2593 = vmatprep.subr.bf16.mxu0 %v2532
          %2594 = vmatpush1.bf16.msra.mxu0 %v2531
          %2595 = vmatprep.subr.bf16.mxu0 %v2536
          %2596 = vmatpush1.bf16.msra.mxu0 %v2535
          %2597 = vmatprep.subr.bf16.mxu0 %v2540
          %2598 = vmatpush1.bf16.msra.mxu0 %v2539
          %2599 = vmatprep.subr.bf16.mxu0 %v2544
          %2600 = vmatpush1.bf16.msra.mxu0 %v2543
          %2601 = vmatprep.subr.bf16.mxu0 %v2548
          %2602 = vmatpush1.bf16.msra.mxu0 %v2547
          %2603 = vmatprep.subr.bf16.mxu0 %v2552
          %2604 = vmatpush1.bf16.msra.mxu0 %v2551
          %2605 = vmatprep.subr.bf16.mxu0 %v2556
          %2606 = vmatpush1.bf16.msra.mxu0 %v2555
          %2607 = vmatprep.subr.bf16.mxu0 0
          %2608 = vmatpush1.bf16.msra.mxu0 0
          %2609 = vmatprep.subr.bf16.mxu0 0
          %2610 = vmatpush1.bf16.msra.mxu0 0
          %2611 = vmatprep.subr.bf16.mxu0 0
          %2612 = vmatpush1.bf16.msra.mxu0 0
          %2613 = vmatprep.subr.bf16.mxu0 0
          %2614 = vmatpush1.bf16.msra.mxu0 0
          %2615 = vmatprep.subr.bf16.mxu0 0
          %2616 = vmatpush1.bf16.msra.mxu0 0
          %2617 = vmatprep.subr.bf16.mxu0 0
          %2618 = vmatpush1.bf16.msra.mxu0 0
          %2619 = vmatprep.subr.bf16.mxu0 0
          %2620 = vmatpush1.bf16.msra.mxu0 0
          %2621 = vmatprep.subr.bf16.mxu0 0
          %2622 = vmatpush1.bf16.msra.mxu0 0
          %2623 = vmatprep.mubr.bf16.mxu0 0
          %2624 = vmatmul.mubr.bf16.gmra.mrb[0].mxu0 %v2398
          %v2625 = vpop.f32.mrb[0].mxu0
          %v2626 = vadd.f32 0.0, %v2625
          %v2627 = vpop.f32.mrb[0].mxu0
          %v2628 = vadd.f32 0.0, %v2627
          %v2629 = vpop.f32.mrb[0].mxu0
          %v2630 = vpop.f32.mrb[0].mxu0
          %2631 = vdwg.mxu0
          %2632 = vmatprep.subr.bf16.mxu0 %v2530
          %2633 = vmatpush1.bf16.msra.mxu0 %v2529
          %2634 = vmatprep.subr.bf16.mxu0 %v2534
          %2635 = vmatpush1.bf16.msra.mxu0 %v2533
          %2636 = vmatprep.subr.bf16.mxu0 %v2538
          %2637 = vmatpush1.bf16.msra.mxu0 %v2537
          %2638 = vmatprep.subr.bf16.mxu0 %v2542
          %2639 = vmatpush1.bf16.msra.mxu0 %v2541
          %2640 = vmatprep.subr.bf16.mxu0 %v2546
          %2641 = vmatpush1.bf16.msra.mxu0 %v2545
          %2642 = vmatprep.subr.bf16.mxu0 %v2550
          %2643 = vmatpush1.bf16.msra.mxu0 %v2549
          %2644 = vmatprep.subr.bf16.mxu0 %v2554
          %2645 = vmatpush1.bf16.msra.mxu0 %v2553
          %2646 = vmatprep.subr.bf16.mxu0 %v2558
          %2647 = vmatpush1.bf16.msra.mxu0 %v2557
          %2648 = vmatprep.subr.bf16.mxu0 0
          %2649 = vmatpush1.bf16.msra.mxu0 0
          %2650 = vmatprep.subr.bf16.mxu0 0
          %2651 = vmatpush1.bf16.msra.mxu0 0
          %2652 = vmatprep.subr.bf16.mxu0 0
          %2653 = vmatpush1.bf16.msra.mxu0 0
          %2654 = vmatprep.subr.bf16.mxu0 0
          %2655 = vmatpush1.bf16.msra.mxu0 0
          %2656 = vmatprep.subr.bf16.mxu0 0
          %2657 = vmatpush1.bf16.msra.mxu0 0
          %2658 = vmatprep.subr.bf16.mxu0 0
          %2659 = vmatpush1.bf16.msra.mxu0 0
          %2660 = vmatprep.subr.bf16.mxu0 0
          %2661 = vmatpush1.bf16.msra.mxu0 0
          %2662 = vmatprep.subr.bf16.mxu0 0
          %2663 = vmatpush1.bf16.msra.mxu0 0
          %2664 = vmatprep.mubr.bf16.mxu0 0
          %2665 = vmatmul.mubr.bf16.gmra.mrb[0].mxu0 %v2398
          %v2666 = vpop.f32.mrb[0].mxu0
          %v2667 = vadd.f32 0.0, %v2666
          %v2668 = vpop.f32.mrb[0].mxu0
          %v2669 = vadd.f32 0.0, %v2668
          %v2670 = vpop.f32.mrb[0].mxu0
          %v2671 = vpop.f32.mrb[0].mxu0
          %2672 = vdwg.mxu0
          %v2673 = vadd.f32 %v2393, %v2626
          %v2674 = vadd.f32 %v2394, %v2628
          %v2675 = vadd.f32 %v2395, %v2667
          %v2676 = vadd.f32 %v2396, %v2669
          %v2677 = vxor.u32 %v2673, 2147483648
          %v2678 = vmul.f32 %v2677, 1.442695
          %v2679 = vpow.pop %v2678
          %v2680 = vadd.f32 %v2679, 1.0
          %v2681 = vrcp.pop %v2680
          %v2682 = vmul.f32 1.0, %v2681
          %v2683 = vxor.u32 %v2674, 2147483648
          %v2684 = vmul.f32 %v2683, 1.442695
          %v2685 = vpow.pop %v2684
          %v2686 = vadd.f32 %v2685, 1.0
          %v2687 = vrcp.pop %v2686
          %v2688 = vmul.f32 1.0, %v2687
          %v2689 = vtanh.pop %v2675
          %v2690 = vxor.u32 %v2676, 2147483648
          %v2691 = vmul.f32 %v2690, 1.442695
          %v2692 = vpow.pop %v2691
          %v2693 = vadd.f32 %v2692, 1.0
          %v2694 = vrcp.pop %v2693
          %v2695 = vmul.f32 1.0, %v2694
          %v2696 = vld [vmem:[#allocation5] sm:$0xff]
          %v2697 = vmul.f32 %v2688, %v2696
          %v2698 = vmul.f32 %v2682, %v2689
          %v2699 = vadd.f32 %v2697, %v2698
          %v2700 = vtanh.pop %v2699
          %v2701 = vmul.f32 %v2695, %v2700
          %2702 = vst [vmem:[#allocation5] sm:$0xff] %v2699
          %2703 = vst [vmem:[#allocation4] sm:$0xff] %v2701
          %2704 = vst [vmem:[#allocation3 + $0x28] sm:$0xff] %v2701
          %v2705 = vld [vmem:[#allocation2 + $0xc0] sm:$0xff]
          %v2706 = vld [vmem:[#allocation2 + $0xc8] sm:$0xff]
          %v2707 = vld [vmem:[#allocation2 + $0xd0] sm:$0xff]
          %v2708 = vld [vmem:[#allocation2 + $0xd8] sm:$0xff]
          %v2709 = vld [vmem:[#allocation4] sm:$0xff]
          %v2710 = vpack.c.bf16 %v2709, %v2709
          %v2711 = vld [vmem:[%s2] sm:$0xff]
          %v2712 = vld [vmem:[%s2 + $0x8] sm:$0xff]
          %v2713 = vld [vmem:[%s2 + $0x10] sm:$0xff]
          %v2714 = vld [vmem:[%s2 + $0x18] sm:$0xff]
          %v2715 = vld [vmem:[%s2 + $0x20] sm:$0xff]
          %v2716 = vld [vmem:[%s2 + $0x28] sm:$0xff]
          %v2717 = vld [vmem:[%s2 + $0x30] sm:$0xff]
          %v2718 = vld [vmem:[%s2 + $0x38] sm:$0xff]
          %v2719 = vld [vmem:[%s2 + $0x40] sm:$0xff]
          %v2720 = vld [vmem:[%s2 + $0x48] sm:$0xff]
          %v2721 = vld [vmem:[%s2 + $0x50] sm:$0xff]
          %v2722 = vld [vmem:[%s2 + $0x58] sm:$0xff]
          %v2723 = vld [vmem:[%s2 + $0x60] sm:$0xff]
          %v2724 = vld [vmem:[%s2 + $0x68] sm:$0xff]
          %v2725 = vld [vmem:[%s2 + $0x70] sm:$0xff]
          %v2726 = vld [vmem:[%s2 + $0x78] sm:$0xff]
          %v2727 = vld [vmem:[%s2 + $0x80] sm:$0xff]
          %v2728 = vld [vmem:[%s2 + $0x88] sm:$0xff]
          %v2729 = vld [vmem:[%s2 + $0x90] sm:$0xff]
          %v2730 = vld [vmem:[%s2 + $0x98] sm:$0xff]
          %v2731 = vld [vmem:[%s2 + $0xa0] sm:$0xff]
          %v2732 = vld [vmem:[%s2 + $0xa8] sm:$0xff]
          %v2733 = vld [vmem:[%s2 + $0xb0] sm:$0xff]
          %v2734 = vld [vmem:[%s2 + $0xb8] sm:$0xff]
          %v2735 = vld [vmem:[%s2 + $0xc0] sm:$0xff]
          %v2736 = vld [vmem:[%s2 + $0xc8] sm:$0xff]
          %v2737 = vld [vmem:[%s2 + $0xd0] sm:$0xff]
          %v2738 = vld [vmem:[%s2 + $0xd8] sm:$0xff]
          %v2739 = vld [vmem:[%s2 + $0xe0] sm:$0xff]
          %v2740 = vld [vmem:[%s2 + $0xe8] sm:$0xff]
          %v2741 = vld [vmem:[%s2 + $0xf0] sm:$0xff]
          %v2742 = vld [vmem:[%s2 + $0xf8] sm:$0xff]
          %v2775 = vunpack.c.l.b16 %v2711
          %v2776 = vunpack.c.h.b16 %v2711
          %v2777 = vunpack.c.l.b16 %v2712
          %v2778 = vunpack.c.h.b16 %v2712
          %v2779 = vunpack.c.l.b16 %v2713
          %v2780 = vunpack.c.h.b16 %v2713
          %v2781 = vunpack.c.l.b16 %v2714
          %v2782 = vunpack.c.h.b16 %v2714
          %v2783 = vunpack.c.l.b16 %v2715
          %v2784 = vunpack.c.h.b16 %v2715
          %v2785 = vunpack.c.l.b16 %v2716
          %v2786 = vunpack.c.h.b16 %v2716
          %v2787 = vunpack.c.l.b16 %v2717
          %v2788 = vunpack.c.h.b16 %v2717
          %v2789 = vunpack.c.l.b16 %v2718
          %v2790 = vunpack.c.h.b16 %v2718
          %v2791 = vunpack.c.l.b16 %v2719
          %v2792 = vunpack.c.h.b16 %v2719
          %v2793 = vunpack.c.l.b16 %v2720
          %v2794 = vunpack.c.h.b16 %v2720
          %v2795 = vunpack.c.l.b16 %v2721
          %v2796 = vunpack.c.h.b16 %v2721
          %v2797 = vunpack.c.l.b16 %v2722
          %v2798 = vunpack.c.h.b16 %v2722
          %v2799 = vunpack.c.l.b16 %v2723
          %v2800 = vunpack.c.h.b16 %v2723
          %v2801 = vunpack.c.l.b16 %v2724
          %v2802 = vunpack.c.h.b16 %v2724
          %v2803 = vunpack.c.l.b16 %v2725
          %v2804 = vunpack.c.h.b16 %v2725
          %v2805 = vunpack.c.l.b16 %v2726
          %v2806 = vunpack.c.h.b16 %v2726
          %v2807 = vunpack.c.l.b16 %v2727
          %v2808 = vunpack.c.h.b16 %v2727
          %v2809 = vunpack.c.l.b16 %v2728
          %v2810 = vunpack.c.h.b16 %v2728
          %v2811 = vunpack.c.l.b16 %v2729
          %v2812 = vunpack.c.h.b16 %v2729
          %v2813 = vunpack.c.l.b16 %v2730
          %v2814 = vunpack.c.h.b16 %v2730
          %v2815 = vunpack.c.l.b16 %v2731
          %v2816 = vunpack.c.h.b16 %v2731
          %v2817 = vunpack.c.l.b16 %v2732
          %v2818 = vunpack.c.h.b16 %v2732
          %v2819 = vunpack.c.l.b16 %v2733
          %v2820 = vunpack.c.h.b16 %v2733
          %v2821 = vunpack.c.l.b16 %v2734
          %v2822 = vunpack.c.h.b16 %v2734
          %v2823 = vunpack.c.l.b16 %v2735
          %v2824 = vunpack.c.h.b16 %v2735
          %v2825 = vunpack.c.l.b16 %v2736
          %v2826 = vunpack.c.h.b16 %v2736
          %v2827 = vunpack.c.l.b16 %v2737
          %v2828 = vunpack.c.h.b16 %v2737
          %v2829 = vunpack.c.l.b16 %v2738
          %v2830 = vunpack.c.h.b16 %v2738
          %v2831 = vunpack.c.l.b16 %v2739
          %v2832 = vunpack.c.h.b16 %v2739
          %v2833 = vunpack.c.l.b16 %v2740
          %v2834 = vunpack.c.h.b16 %v2740
          %v2835 = vunpack.c.l.b16 %v2741
          %v2836 = vunpack.c.h.b16 %v2741
          %v2837 = vunpack.c.l.b16 %v2742
          %v2838 = vunpack.c.h.b16 %v2742
          %v2839 = vpack.c.b16 %v2779, %v2775
          %v2840 = vpack.c.b16 %v2780, %v2776
          %v2841 = vpack.c.b16 %v2781, %v2777
          %v2842 = vpack.c.b16 %v2782, %v2778
          %v2843 = vpack.c.b16 %v2787, %v2783
          %v2844 = vpack.c.b16 %v2788, %v2784
          %v2845 = vpack.c.b16 %v2789, %v2785
          %v2846 = vpack.c.b16 %v2790, %v2786
          %v2847 = vpack.c.b16 %v2795, %v2791
          %v2848 = vpack.c.b16 %v2796, %v2792
          %v2849 = vpack.c.b16 %v2797, %v2793
          %v2850 = vpack.c.b16 %v2798, %v2794
          %v2851 = vpack.c.b16 %v2803, %v2799
          %v2852 = vpack.c.b16 %v2804, %v2800
          %v2853 = vpack.c.b16 %v2805, %v2801
          %v2854 = vpack.c.b16 %v2806, %v2802
          %v2855 = vpack.c.b16 %v2811, %v2807
          %v2856 = vpack.c.b16 %v2812, %v2808
          %v2857 = vpack.c.b16 %v2813, %v2809
          %v2858 = vpack.c.b16 %v2814, %v2810
          %v2859 = vpack.c.b16 %v2819, %v2815
          %v2860 = vpack.c.b16 %v2820, %v2816
          %v2861 = vpack.c.b16 %v2821, %v2817
          %v2862 = vpack.c.b16 %v2822, %v2818
          %v2863 = vpack.c.b16 %v2827, %v2823
          %v2864 = vpack.c.b16 %v2828, %v2824
          %v2865 = vpack.c.b16 %v2829, %v2825
          %v2866 = vpack.c.b16 %v2830, %v2826
          %v2867 = vpack.c.b16 %v2835, %v2831
          %v2868 = vpack.c.b16 %v2836, %v2832
          %v2869 = vpack.c.b16 %v2837, %v2833
          %v2870 = vpack.c.b16 %v2838, %v2834
          %2903 = vmatprep.subr.bf16.mxu0 %v2840
          %2904 = vmatpush1.bf16.msra.mxu0 %v2839
          %2905 = vmatprep.subr.bf16.mxu0 %v2844
          %2906 = vmatpush1.bf16.msra.mxu0 %v2843
          %2907 = vmatprep.subr.bf16.mxu0 %v2848
          %2908 = vmatpush1.bf16.msra.mxu0 %v2847
          %2909 = vmatprep.subr.bf16.mxu0 %v2852
          %2910 = vmatpush1.bf16.msra.mxu0 %v2851
          %2911 = vmatprep.subr.bf16.mxu0 %v2856
          %2912 = vmatpush1.bf16.msra.mxu0 %v2855
          %2913 = vmatprep.subr.bf16.mxu0 %v2860
          %2914 = vmatpush1.bf16.msra.mxu0 %v2859
          %2915 = vmatprep.subr.bf16.mxu0 %v2864
          %2916 = vmatpush1.bf16.msra.mxu0 %v2863
          %2917 = vmatprep.subr.bf16.mxu0 %v2868
          %2918 = vmatpush1.bf16.msra.mxu0 %v2867
          %2919 = vmatprep.subr.bf16.mxu0 0
          %2920 = vmatpush1.bf16.msra.mxu0 0
          %2921 = vmatprep.subr.bf16.mxu0 0
          %2922 = vmatpush1.bf16.msra.mxu0 0
          %2923 = vmatprep.subr.bf16.mxu0 0
          %2924 = vmatpush1.bf16.msra.mxu0 0
          %2925 = vmatprep.subr.bf16.mxu0 0
          %2926 = vmatpush1.bf16.msra.mxu0 0
          %2927 = vmatprep.subr.bf16.mxu0 0
          %2928 = vmatpush1.bf16.msra.mxu0 0
          %2929 = vmatprep.subr.bf16.mxu0 0
          %2930 = vmatpush1.bf16.msra.mxu0 0
          %2931 = vmatprep.subr.bf16.mxu0 0
          %2932 = vmatpush1.bf16.msra.mxu0 0
          %2933 = vmatprep.subr.bf16.mxu0 0
          %2934 = vmatpush1.bf16.msra.mxu0 0
          %2935 = vmatprep.mubr.bf16.mxu0 0
          %2936 = vmatmul.mubr.bf16.gmra.mrb[0].mxu0 %v2710
          %v2937 = vpop.f32.mrb[0].mxu0
          %v2938 = vadd.f32 0.0, %v2937
          %v2939 = vpop.f32.mrb[0].mxu0
          %v2940 = vadd.f32 0.0, %v2939
          %v2941 = vpop.f32.mrb[0].mxu0
          %v2942 = vpop.f32.mrb[0].mxu0
          %2943 = vdwg.mxu0
          %2944 = vmatprep.subr.bf16.mxu0 %v2842
          %2945 = vmatpush1.bf16.msra.mxu0 %v2841
          %2946 = vmatprep.subr.bf16.mxu0 %v2846
          %2947 = vmatpush1.bf16.msra.mxu0 %v2845
          %2948 = vmatprep.subr.bf16.mxu0 %v2850
          %2949 = vmatpush1.bf16.msra.mxu0 %v2849
          %2950 = vmatprep.subr.bf16.mxu0 %v2854
          %2951 = vmatpush1.bf16.msra.mxu0 %v2853
          %2952 = vmatprep.subr.bf16.mxu0 %v2858
          %2953 = vmatpush1.bf16.msra.mxu0 %v2857
          %2954 = vmatprep.subr.bf16.mxu0 %v2862
          %2955 = vmatpush1.bf16.msra.mxu0 %v2861
          %2956 = vmatprep.subr.bf16.mxu0 %v2866
          %2957 = vmatpush1.bf16.msra.mxu0 %v2865
          %2958 = vmatprep.subr.bf16.mxu0 %v2870
          %2959 = vmatpush1.bf16.msra.mxu0 %v2869
          %2960 = vmatprep.subr.bf16.mxu0 0
          %2961 = vmatpush1.bf16.msra.mxu0 0
          %2962 = vmatprep.subr.bf16.mxu0 0
          %2963 = vmatpush1.bf16.msra.mxu0 0
          %2964 = vmatprep.subr.bf16.mxu0 0
          %2965 = vmatpush1.bf16.msra.mxu0 0
          %2966 = vmatprep.subr.bf16.mxu0 0
          %2967 = vmatpush1.bf16.msra.mxu0 0
          %2968 = vmatprep.subr.bf16.mxu0 0
          %2969 = vmatpush1.bf16.msra.mxu0 0
          %2970 = vmatprep.subr.bf16.mxu0 0
          %2971 = vmatpush1.bf16.msra.mxu0 0
          %2972 = vmatprep.subr.bf16.mxu0 0
          %2973 = vmatpush1.bf16.msra.mxu0 0
          %2974 = vmatprep.subr.bf16.mxu0 0
          %2975 = vmatpush1.bf16.msra.mxu0 0
          %2976 = vmatprep.mubr.bf16.mxu0 0
          %2977 = vmatmul.mubr.bf16.gmra.mrb[0].mxu0 %v2710
          %v2978 = vpop.f32.mrb[0].mxu0
          %v2979 = vadd.f32 0.0, %v2978
          %v2980 = vpop.f32.mrb[0].mxu0
          %v2981 = vadd.f32 0.0, %v2980
          %v2982 = vpop.f32.mrb[0].mxu0
          %v2983 = vpop.f32.mrb[0].mxu0
          %2984 = vdwg.mxu0
          %v2985 = vadd.f32 %v2705, %v2938
          %v2986 = vadd.f32 %v2706, %v2940
          %v2987 = vadd.f32 %v2707, %v2979
          %v2988 = vadd.f32 %v2708, %v2981
          %v2989 = vxor.u32 %v2985, 2147483648
          %v2990 = vmul.f32 %v2989, 1.442695
          %v2991 = vpow.pop %v2990
          %v2992 = vadd.f32 %v2991, 1.0
          %v2993 = vrcp.pop %v2992
          %v2994 = vmul.f32 1.0, %v2993
          %v2995 = vxor.u32 %v2986, 2147483648
          %v2996 = vmul.f32 %v2995, 1.442695
          %v2997 = vpow.pop %v2996
          %v2998 = vadd.f32 %v2997, 1.0
          %v2999 = vrcp.pop %v2998
          %v3000 = vmul.f32 1.0, %v2999
          %v3001 = vtanh.pop %v2987
          %v3002 = vxor.u32 %v2988, 2147483648
          %v3003 = vmul.f32 %v3002, 1.442695
          %v3004 = vpow.pop %v3003
          %v3005 = vadd.f32 %v3004, 1.0
          %v3006 = vrcp.pop %v3005
          %v3007 = vmul.f32 1.0, %v3006
          %v3008 = vld [vmem:[#allocation5] sm:$0xff]
          %v3009 = vmul.f32 %v3000, %v3008
          %v3010 = vmul.f32 %v2994, %v3001
          %v3011 = vadd.f32 %v3009, %v3010
          %v3012 = vtanh.pop %v3011
          %v3013 = vmul.f32 %v3007, %v3012
          %3014 = vst [vmem:[#allocation5] sm:$0xff] %v3011
          %3015 = vst [vmem:[#allocation4] sm:$0xff] %v3013
          %3016 = vst [vmem:[#allocation3 + $0x30] sm:$0xff] %v3013
        $region71: #{recognet_forward.3} parent=62 // pred_fallthru
          _
        %v3017 = vld [vmem:[#allocation3] sm:$0xff]
        %v3018 = vld [vmem:[#allocation3 + $0x8] sm:$0xff]
        %v3019 = vld [vmem:[#allocation3 + $0x10] sm:$0xff]
        %v3020 = vld [vmem:[#allocation3 + $0x18] sm:$0xff]
        %v3021 = vld [vmem:[#allocation3 + $0x20] sm:$0xff]
        %v3022 = vld [vmem:[#allocation3 + $0x28] sm:$0xff]
        %v3023 = vld [vmem:[#allocation3 + $0x30] sm:$0xff]
        %v3024 = vpack.c.bf16 %v3018, %v3017
        %v3025 = vpack.c.bf16 %v3020, %v3019
        %v3026 = vpack.c.bf16 %v3022, %v3021
        %v3027 = vpack.c.bf16 %v3023, %v3023
        %v3028 = vld [vmem:[%s376] sm:$0xff]
        %v3029 = vld [vmem:[%s376 + $0x8] sm:$0xff]
        %v3030 = vld [vmem:[%s376 + $0x10] sm:$0xff]
        %v3031 = vld [vmem:[%s376 + $0x18] sm:$0xff]
        %v3032 = vld [vmem:[%s376 + $0x20] sm:$0xff]
        %v3033 = vld [vmem:[%s376 + $0x28] sm:$0xff]
        %v3034 = vld [vmem:[%s376 + $0x30] sm:$0xff]
        %v3035 = vld [vmem:[%s376 + $0x38] sm:$0xff]
        %v3036 = vld [vmem:[%s376 + $0x40] sm:$0xff]
        %v3037 = vld [vmem:[%s376 + $0x48] sm:$0xff]
        %v3038 = vld [vmem:[%s376 + $0x50] sm:$0xff]
        %v3039 = vld [vmem:[%s376 + $0x58] sm:$0xff]
        %v3040 = vld [vmem:[%s376 + $0x60] sm:$0xff]
        %v3041 = vld [vmem:[%s376 + $0x68] sm:$0xff]
        %v3042 = vld [vmem:[%s376 + $0x70] sm:$0xff]
        %v3043 = vld [vmem:[%s376 + $0x78] sm:$0xff]
        %v3044 = vld [vmem:[%s376 + $0x80] sm:$0xff]
        %v3045 = vld [vmem:[%s376 + $0x88] sm:$0xff]
        %v3046 = vld [vmem:[%s376 + $0x90] sm:$0xff]
        %v3047 = vld [vmem:[%s376 + $0x98] sm:$0xff]
        %v3048 = vld [vmem:[%s376 + $0xa0] sm:$0xff]
        %v3049 = vld [vmem:[%s376 + $0xa8] sm:$0xff]
        %v3050 = vld [vmem:[%s376 + $0xb0] sm:$0xff]
        %v3051 = vld [vmem:[%s376 + $0xb8] sm:$0xff]
        %v3052 = vld [vmem:[%s376 + $0xc0] sm:$0xff]
        %v3053 = vld [vmem:[%s376 + $0xc8] sm:$0xff]
        %v3054 = vld [vmem:[%s376 + $0xd0] sm:$0xff]
        %v3055 = vld [vmem:[%s376 + $0xd8] sm:$0xff]
        %v3056 = vld [vmem:[%s376 + $0xe0] sm:$0xff]
        %v3057 = vld [vmem:[%s376 + $0xe8] sm:$0xff]
        %v3058 = vld [vmem:[%s376 + $0xf0] sm:$0xff]
        %v3059 = vld [vmem:[%s376 + $0xf8] sm:$0xff]
        %v3060 = vld [vmem:[%s376 + $0x100] sm:$0xff]
        %v3061 = vld [vmem:[%s376 + $0x108] sm:$0xff]
        %v3062 = vld [vmem:[%s376 + $0x110] sm:$0xff]
        %v3063 = vld [vmem:[%s376 + $0x118] sm:$0xff]
        %v3064 = vld [vmem:[%s376 + $0x120] sm:$0xff]
        %v3065 = vld [vmem:[%s376 + $0x128] sm:$0xff]
        %v3066 = vld [vmem:[%s376 + $0x130] sm:$0xff]
        %v3067 = vld [vmem:[%s376 + $0x138] sm:$0xff]
        %v3068 = vld [vmem:[%s376 + $0x140] sm:$0xff]
        %v3069 = vld [vmem:[%s376 + $0x148] sm:$0xff]
        %v3070 = vld [vmem:[%s376 + $0x150] sm:$0xff]
        %v3071 = vld [vmem:[%s376 + $0x158] sm:$0xff]
        %v3072 = vld [vmem:[%s376 + $0x160] sm:$0xff]
        %v3073 = vld [vmem:[%s376 + $0x168] sm:$0xff]
        %v3074 = vld [vmem:[%s376 + $0x170] sm:$0xff]
        %v3075 = vld [vmem:[%s376 + $0x178] sm:$0xff]
        %v3076 = vld [vmem:[%s376 + $0x180] sm:$0xff]
        %v3077 = vld [vmem:[%s376 + $0x188] sm:$0xff]
        %v3078 = vld [vmem:[%s376 + $0x190] sm:$0xff]
        %v3079 = vld [vmem:[%s376 + $0x198] sm:$0xff]
        %v3080 = vld [vmem:[%s376 + $0x1a0] sm:$0xff]
        %v3081 = vld [vmem:[%s376 + $0x1a8] sm:$0xff]
        %v3082 = vld [vmem:[%s376 + $0x1b0] sm:$0xff]
        %v3083 = vld [vmem:[%s376 + $0x1b8] sm:$0xff]
        %v3084 = vld [vmem:[%s376 + $0x1c0] sm:$0xff]
        %v3085 = vld [vmem:[%s376 + $0x1c8] sm:$0xff]
        %v3086 = vld [vmem:[%s376 + $0x1d0] sm:$0xff]
        %v3087 = vld [vmem:[%s376 + $0x1d8] sm:$0xff]
        %v3088 = vld [vmem:[%s376 + $0x1e0] sm:$0xff]
        %v3089 = vld [vmem:[%s376 + $0x1e8] sm:$0xff]
        %v3090 = vld [vmem:[%s376 + $0x1f0] sm:$0xff]
        %v3091 = vld [vmem:[%s376 + $0x1f8] sm:$0xff]
        %v3092 = vld [vmem:[%s410] sm:$0xff]
        %v3094 = vlaneseq
        %v3095 = vshrl.u32 %v3094, 7
        %v3096 = vsub.s32 0, %v3095
        %v3097 = vrot.slane %v3092, %v3096
        %v3098 = vlaneseq
        %v3099 = vshrl.u32 %v3098, 7
        %v3100 = vsub.s32 1, %v3099
        %v3101 = vrot.slane %v3092, %v3100
        %v3102 = vlaneseq
        %v3103 = vshrl.u32 %v3102, 7
        %v3104 = vsub.s32 2, %v3103
        %v3105 = vrot.slane %v3092, %v3104
        %v3106 = vlaneseq
        %v3107 = vshrl.u32 %v3106, 7
        %v3108 = vsub.s32 3, %v3107
        %v3109 = vrot.slane %v3092, %v3108
        %v3110 = vlaneseq
        %v3111 = vshrl.u32 %v3110, 7
        %v3112 = vsub.s32 4, %v3111
        %v3113 = vrot.slane %v3092, %v3112
        %v3114 = vlaneseq
        %v3115 = vshrl.u32 %v3114, 7
        %v3116 = vsub.s32 5, %v3115
        %v3117 = vrot.slane %v3092, %v3116
        %v3118 = vlaneseq
        %v3119 = vshrl.u32 %v3118, 7
        %v3120 = vsub.s32 6, %v3119
        %v3121 = vrot.slane %v3092, %v3120
        %v3122 = vlaneseq
        %v3123 = vshrl.u32 %v3122, 7
        %v3124 = vsub.s32 7, %v3123
        %v3125 = vrot.slane %v3092, %v3124
        %v3198 = vunpack.c.l.b16 %v3028
        %v3199 = vunpack.c.h.b16 %v3028
        %v3200 = vunpack.c.l.b16 %v3029
        %v3201 = vunpack.c.h.b16 %v3029
        %v3202 = vunpack.c.l.b16 %v3030
        %v3203 = vunpack.c.h.b16 %v3030
        %v3204 = vunpack.c.l.b16 %v3031
        %v3205 = vunpack.c.h.b16 %v3031
        %v3206 = vunpack.c.l.b16 %v3032
        %v3207 = vunpack.c.h.b16 %v3032
        %v3208 = vunpack.c.l.b16 %v3033
        %v3209 = vunpack.c.h.b16 %v3033
        %v3210 = vunpack.c.l.b16 %v3034
        %v3211 = vunpack.c.h.b16 %v3034
        %v3212 = vunpack.c.l.b16 %v3035
        %v3213 = vunpack.c.h.b16 %v3035
        %v3214 = vunpack.c.l.b16 %v3036
        %v3215 = vunpack.c.h.b16 %v3036
        %v3216 = vunpack.c.l.b16 %v3037
        %v3217 = vunpack.c.h.b16 %v3037
        %v3218 = vunpack.c.l.b16 %v3038
        %v3219 = vunpack.c.h.b16 %v3038
        %v3220 = vunpack.c.l.b16 %v3039
        %v3221 = vunpack.c.h.b16 %v3039
        %v3222 = vunpack.c.l.b16 %v3040
        %v3223 = vunpack.c.h.b16 %v3040
        %v3224 = vunpack.c.l.b16 %v3041
        %v3225 = vunpack.c.h.b16 %v3041
        %v3226 = vunpack.c.l.b16 %v3042
        %v3227 = vunpack.c.h.b16 %v3042
        %v3228 = vunpack.c.l.b16 %v3043
        %v3229 = vunpack.c.h.b16 %v3043
        %v3230 = vunpack.c.l.b16 %v3044
        %v3231 = vunpack.c.h.b16 %v3044
        %v3232 = vunpack.c.l.b16 %v3045
        %v3233 = vunpack.c.h.b16 %v3045
        %v3234 = vunpack.c.l.b16 %v3046
        %v3235 = vunpack.c.h.b16 %v3046
        %v3236 = vunpack.c.l.b16 %v3047
        %v3237 = vunpack.c.h.b16 %v3047
        %v3238 = vunpack.c.l.b16 %v3048
        %v3239 = vunpack.c.h.b16 %v3048
        %v3240 = vunpack.c.l.b16 %v3049
        %v3241 = vunpack.c.h.b16 %v3049
        %v3242 = vunpack.c.l.b16 %v3050
        %v3243 = vunpack.c.h.b16 %v3050
        %v3244 = vunpack.c.l.b16 %v3051
        %v3245 = vunpack.c.h.b16 %v3051
        %v3246 = vunpack.c.l.b16 %v3052
        %v3247 = vunpack.c.h.b16 %v3052
        %v3248 = vunpack.c.l.b16 %v3053
        %v3249 = vunpack.c.h.b16 %v3053
        %v3250 = vunpack.c.l.b16 %v3054
        %v3251 = vunpack.c.h.b16 %v3054
        %v3252 = vunpack.c.l.b16 %v3055
        %v3253 = vunpack.c.h.b16 %v3055
        %v3254 = vunpack.c.l.b16 %v3056
        %v3255 = vunpack.c.h.b16 %v3056
        %v3256 = vunpack.c.l.b16 %v3057
        %v3257 = vunpack.c.h.b16 %v3057
        %v3258 = vunpack.c.l.b16 %v3058
        %v3259 = vunpack.c.h.b16 %v3058
        %v3260 = vunpack.c.l.b16 %v3059
        %v3261 = vunpack.c.h.b16 %v3059
        %v3262 = vunpack.c.l.b16 %v3060
        %v3263 = vunpack.c.h.b16 %v3060
        %v3264 = vunpack.c.l.b16 %v3061
        %v3265 = vunpack.c.h.b16 %v3061
        %v3266 = vunpack.c.l.b16 %v3062
        %v3267 = vunpack.c.h.b16 %v3062
        %v3268 = vunpack.c.l.b16 %v3063
        %v3269 = vunpack.c.h.b16 %v3063
        %v3270 = vunpack.c.l.b16 %v3064
        %v3271 = vunpack.c.h.b16 %v3064
        %v3272 = vunpack.c.l.b16 %v3065
        %v3273 = vunpack.c.h.b16 %v3065
        %v3274 = vunpack.c.l.b16 %v3066
        %v3275 = vunpack.c.h.b16 %v3066
        %v3276 = vunpack.c.l.b16 %v3067
        %v3277 = vunpack.c.h.b16 %v3067
        %v3278 = vunpack.c.l.b16 %v3068
        %v3279 = vunpack.c.h.b16 %v3068
        %v3280 = vunpack.c.l.b16 %v3069
        %v3281 = vunpack.c.h.b16 %v3069
        %v3282 = vunpack.c.l.b16 %v3070
        %v3283 = vunpack.c.h.b16 %v3070
        %v3284 = vunpack.c.l.b16 %v3071
        %v3285 = vunpack.c.h.b16 %v3071
        %v3286 = vunpack.c.l.b16 %v3072
        %v3287 = vunpack.c.h.b16 %v3072
        %v3288 = vunpack.c.l.b16 %v3073
        %v3289 = vunpack.c.h.b16 %v3073
        %v3290 = vunpack.c.l.b16 %v3074
        %v3291 = vunpack.c.h.b16 %v3074
        %v3292 = vunpack.c.l.b16 %v3075
        %v3293 = vunpack.c.h.b16 %v3075
        %v3294 = vunpack.c.l.b16 %v3076
        %v3295 = vunpack.c.h.b16 %v3076
        %v3296 = vunpack.c.l.b16 %v3077
        %v3297 = vunpack.c.h.b16 %v3077
        %v3298 = vunpack.c.l.b16 %v3078
        %v3299 = vunpack.c.h.b16 %v3078
        %v3300 = vunpack.c.l.b16 %v3079
        %v3301 = vunpack.c.h.b16 %v3079
        %v3302 = vunpack.c.l.b16 %v3080
        %v3303 = vunpack.c.h.b16 %v3080
        %v3304 = vunpack.c.l.b16 %v3081
        %v3305 = vunpack.c.h.b16 %v3081
        %v3306 = vunpack.c.l.b16 %v3082
        %v3307 = vunpack.c.h.b16 %v3082
        %v3308 = vunpack.c.l.b16 %v3083
        %v3309 = vunpack.c.h.b16 %v3083
        %v3310 = vunpack.c.l.b16 %v3084
        %v3311 = vunpack.c.h.b16 %v3084
        %v3312 = vunpack.c.l.b16 %v3085
        %v3313 = vunpack.c.h.b16 %v3085
        %v3314 = vunpack.c.l.b16 %v3086
        %v3315 = vunpack.c.h.b16 %v3086
        %v3316 = vunpack.c.l.b16 %v3087
        %v3317 = vunpack.c.h.b16 %v3087
        %v3318 = vunpack.c.l.b16 %v3088
        %v3319 = vunpack.c.h.b16 %v3088
        %v3320 = vunpack.c.l.b16 %v3089
        %v3321 = vunpack.c.h.b16 %v3089
        %v3322 = vunpack.c.l.b16 %v3090
        %v3323 = vunpack.c.h.b16 %v3090
        %v3324 = vunpack.c.l.b16 %v3091
        %v3325 = vunpack.c.h.b16 %v3091
        %v3326 = vpack.c.b16 %v3206, %v3198
        %v3327 = vpack.c.b16 %v3207, %v3199
        %v3328 = vpack.c.b16 %v3208, %v3200
        %v3329 = vpack.c.b16 %v3209, %v3201
        %v3330 = vpack.c.b16 %v3210, %v3202
        %v3331 = vpack.c.b16 %v3211, %v3203
        %v3332 = vpack.c.b16 %v3212, %v3204
        %v3333 = vpack.c.b16 %v3213, %v3205
        %v3334 = vpack.c.b16 %v3222, %v3214
        %v3335 = vpack.c.b16 %v3223, %v3215
        %v3336 = vpack.c.b16 %v3224, %v3216
        %v3337 = vpack.c.b16 %v3225, %v3217
        %v3338 = vpack.c.b16 %v3226, %v3218
        %v3339 = vpack.c.b16 %v3227, %v3219
        %v3340 = vpack.c.b16 %v3228, %v3220
        %v3341 = vpack.c.b16 %v3229, %v3221
        %v3342 = vpack.c.b16 %v3238, %v3230
        %v3343 = vpack.c.b16 %v3239, %v3231
        %v3344 = vpack.c.b16 %v3240, %v3232
        %v3345 = vpack.c.b16 %v3241, %v3233
        %v3346 = vpack.c.b16 %v3242, %v3234
        %v3347 = vpack.c.b16 %v3243, %v3235
        %v3348 = vpack.c.b16 %v3244, %v3236
        %v3349 = vpack.c.b16 %v3245, %v3237
        %v3350 = vpack.c.b16 %v3254, %v3246
        %v3351 = vpack.c.b16 %v3255, %v3247
        %v3352 = vpack.c.b16 %v3256, %v3248
        %v3353 = vpack.c.b16 %v3257, %v3249
        %v3354 = vpack.c.b16 %v3258, %v3250
        %v3355 = vpack.c.b16 %v3259, %v3251
        %v3356 = vpack.c.b16 %v3260, %v3252
        %v3357 = vpack.c.b16 %v3261, %v3253
        %v3358 = vpack.c.b16 %v3270, %v3262
        %v3359 = vpack.c.b16 %v3271, %v3263
        %v3360 = vpack.c.b16 %v3272, %v3264
        %v3361 = vpack.c.b16 %v3273, %v3265
        %v3362 = vpack.c.b16 %v3274, %v3266
        %v3363 = vpack.c.b16 %v3275, %v3267
        %v3364 = vpack.c.b16 %v3276, %v3268
        %v3365 = vpack.c.b16 %v3277, %v3269
        %v3366 = vpack.c.b16 %v3286, %v3278
        %v3367 = vpack.c.b16 %v3287, %v3279
        %v3368 = vpack.c.b16 %v3288, %v3280
        %v3369 = vpack.c.b16 %v3289, %v3281
        %v3370 = vpack.c.b16 %v3290, %v3282
        %v3371 = vpack.c.b16 %v3291, %v3283
        %v3372 = vpack.c.b16 %v3292, %v3284
        %v3373 = vpack.c.b16 %v3293, %v3285
        %v3374 = vpack.c.b16 %v3302, %v3294
        %v3375 = vpack.c.b16 %v3303, %v3295
        %v3376 = vpack.c.b16 %v3304, %v3296
        %v3377 = vpack.c.b16 %v3305, %v3297
        %v3378 = vpack.c.b16 %v3306, %v3298
        %v3379 = vpack.c.b16 %v3307, %v3299
        %v3380 = vpack.c.b16 %v3308, %v3300
        %v3381 = vpack.c.b16 %v3309, %v3301
        %v3382 = vpack.c.b16 %v3318, %v3310
        %v3383 = vpack.c.b16 %v3319, %v3311
        %v3384 = vpack.c.b16 %v3320, %v3312
        %v3385 = vpack.c.b16 %v3321, %v3313
        %v3386 = vpack.c.b16 %v3322, %v3314
        %v3387 = vpack.c.b16 %v3323, %v3315
        %v3388 = vpack.c.b16 %v3324, %v3316
        %v3389 = vpack.c.b16 %v3325, %v3317
        %3454 = vmatprep.subr.bf16.mxu0 %v3327
        %3455 = vmatpush1.bf16.msra.mxu0 %v3326
        %3456 = vmatprep.subr.bf16.mxu0 %v3335
        %3457 = vmatpush1.bf16.msra.mxu0 %v3334
        %3458 = vmatprep.subr.bf16.mxu0 %v3343
        %3459 = vmatpush1.bf16.msra.mxu0 %v3342
        %3460 = vmatprep.subr.bf16.mxu0 %v3351
        %3461 = vmatpush1.bf16.msra.mxu0 %v3350
        %3462 = vmatprep.subr.bf16.mxu0 %v3359
        %3463 = vmatpush1.bf16.msra.mxu0 %v3358
        %3464 = vmatprep.subr.bf16.mxu0 %v3367
        %3465 = vmatpush1.bf16.msra.mxu0 %v3366
        %3466 = vmatprep.subr.bf16.mxu0 %v3375
        %3467 = vmatpush1.bf16.msra.mxu0 %v3374
        %3468 = vmatprep.subr.bf16.mxu0 %v3383
        %3469 = vmatpush1.bf16.msra.mxu0 %v3382
        %3470 = vmatprep.subr.bf16.mxu0 0
        %3471 = vmatpush1.bf16.msra.mxu0 0
        %3472 = vmatprep.subr.bf16.mxu0 0
        %3473 = vmatpush1.bf16.msra.mxu0 0
        %3474 = vmatprep.subr.bf16.mxu0 0
        %3475 = vmatpush1.bf16.msra.mxu0 0
        %3476 = vmatprep.subr.bf16.mxu0 0
        %3477 = vmatpush1.bf16.msra.mxu0 0
        %3478 = vmatprep.subr.bf16.mxu0 0
        %3479 = vmatpush1.bf16.msra.mxu0 0
        %3480 = vmatprep.subr.bf16.mxu0 0
        %3481 = vmatpush1.bf16.msra.mxu0 0
        %3482 = vmatprep.subr.bf16.mxu0 0
        %3483 = vmatpush1.bf16.msra.mxu0 0
        %3484 = vmatprep.subr.bf16.mxu0 0
        %3485 = vmatpush1.bf16.msra.mxu0 0
        %3486 = vmatprep.mubr.bf16.mxu0 0
        %3487 = vmatmul.mubr.bf16.gmra.mrb[0].mxu0 %v3024
        %v3488 = vpop.f32.mrb[0].mxu0
        %v3489 = vadd.f32 %v3097, %v3488
        %v3490 = vpop.f32.mrb[0].mxu0
        %v3491 = vadd.f32 %v3101, %v3490
        %v3492 = vpop.f32.mrb[0].mxu0
        %v3493 = vadd.f32 %v3097, %v3492
        %v3494 = vpop.f32.mrb[0].mxu0
        %v3495 = vadd.f32 %v3101, %v3494
        %3496 = vmatprep.mubr.bf16.mxu0 0
        %3497 = vmatmul.mubr.bf16.gmra.mrb[0].mxu0 %v3025
        %v3498 = vpop.f32.mrb[0].mxu0
        %v3499 = vadd.f32 %v3097, %v3498
        %v3500 = vpop.f32.mrb[0].mxu0
        %v3501 = vadd.f32 %v3101, %v3500
        %v3502 = vpop.f32.mrb[0].mxu0
        %v3503 = vadd.f32 %v3097, %v3502
        %v3504 = vpop.f32.mrb[0].mxu0
        %v3505 = vadd.f32 %v3101, %v3504
        %3506 = vmatprep.mubr.bf16.mxu0 0
        %3507 = vmatmul.mubr.bf16.gmra.mrb[0].mxu0 %v3026
        %v3508 = vpop.f32.mrb[0].mxu0
        %v3509 = vadd.f32 %v3097, %v3508
        %v3510 = vpop.f32.mrb[0].mxu0
        %v3511 = vadd.f32 %v3101, %v3510
        %v3512 = vpop.f32.mrb[0].mxu0
        %v3513 = vadd.f32 %v3097, %v3512
        %v3514 = vpop.f32.mrb[0].mxu0
        %v3515 = vadd.f32 %v3101, %v3514
        %3516 = vmatprep.mubr.bf16.mxu0 0
        %3517 = vmatmul.mubr.bf16.gmra.mrb[0].mxu0 %v3027
        %v3518 = vpop.f32.mrb[0].mxu0
        %v3519 = vadd.f32 %v3097, %v3518
        %v3520 = vpop.f32.mrb[0].mxu0
        %v3521 = vadd.f32 %v3101, %v3520
        %v3522 = vpop.f32.mrb[0].mxu0
        %v3523 = vpop.f32.mrb[0].mxu0
        %3524 = vdwg.mxu0
        %3525 = vmatprep.subr.bf16.mxu0 %v3329
        %3526 = vmatpush1.bf16.msra.mxu0 %v3328
        %3527 = vmatprep.subr.bf16.mxu0 %v3337
        %3528 = vmatpush1.bf16.msra.mxu0 %v3336
        %3529 = vmatprep.subr.bf16.mxu0 %v3345
        %3530 = vmatpush1.bf16.msra.mxu0 %v3344
        %3531 = vmatprep.subr.bf16.mxu0 %v3353
        %3532 = vmatpush1.bf16.msra.mxu0 %v3352
        %3533 = vmatprep.subr.bf16.mxu0 %v3361
        %3534 = vmatpush1.bf16.msra.mxu0 %v3360
        %3535 = vmatprep.subr.bf16.mxu0 %v3369
        %3536 = vmatpush1.bf16.msra.mxu0 %v3368
        %3537 = vmatprep.subr.bf16.mxu0 %v3377
        %3538 = vmatpush1.bf16.msra.mxu0 %v3376
        %3539 = vmatprep.subr.bf16.mxu0 %v3385
        %3540 = vmatpush1.bf16.msra.mxu0 %v3384
        %3541 = vmatprep.subr.bf16.mxu0 0
        %3542 = vmatpush1.bf16.msra.mxu0 0
        %3543 = vmatprep.subr.bf16.mxu0 0
        %3544 = vmatpush1.bf16.msra.mxu0 0
        %3545 = vmatprep.subr.bf16.mxu0 0
        %3546 = vmatpush1.bf16.msra.mxu0 0
        %3547 = vmatprep.subr.bf16.mxu0 0
        %3548 = vmatpush1.bf16.msra.mxu0 0
        %3549 = vmatprep.subr.bf16.mxu0 0
        %3550 = vmatpush1.bf16.msra.mxu0 0
        %3551 = vmatprep.subr.bf16.mxu0 0
        %3552 = vmatpush1.bf16.msra.mxu0 0
        %3553 = vmatprep.subr.bf16.mxu0 0
        %3554 = vmatpush1.bf16.msra.mxu0 0
        %3555 = vmatprep.subr.bf16.mxu0 0
        %3556 = vmatpush1.bf16.msra.mxu0 0
        %3557 = vmatprep.mubr.bf16.mxu0 0
        %3558 = vmatmul.mubr.bf16.gmra.mrb[0].mxu0 %v3024
        %v3559 = vpop.f32.mrb[0].mxu0
        %v3560 = vadd.f32 %v3105, %v3559
        %v3561 = vpop.f32.mrb[0].mxu0
        %v3562 = vadd.f32 %v3109, %v3561
        %v3563 = vpop.f32.mrb[0].mxu0
        %v3564 = vadd.f32 %v3105, %v3563
        %v3565 = vpop.f32.mrb[0].mxu0
        %v3566 = vadd.f32 %v3109, %v3565
        %3567 = vmatprep.mubr.bf16.mxu0 0
        %3568 = vmatmul.mubr.bf16.gmra.mrb[0].mxu0 %v3025
        %v3569 = vpop.f32.mrb[0].mxu0
        %v3570 = vadd.f32 %v3105, %v3569
        %v3571 = vpop.f32.mrb[0].mxu0
        %v3572 = vadd.f32 %v3109, %v3571
        %v3573 = vpop.f32.mrb[0].mxu0
        %v3574 = vadd.f32 %v3105, %v3573
        %v3575 = vpop.f32.mrb[0].mxu0
        %v3576 = vadd.f32 %v3109, %v3575
        %3577 = vmatprep.mubr.bf16.mxu0 0
        %3578 = vmatmul.mubr.bf16.gmra.mrb[0].mxu0 %v3026
        %v3579 = vpop.f32.mrb[0].mxu0
        %v3580 = vadd.f32 %v3105, %v3579
        %v3581 = vpop.f32.mrb[0].mxu0
        %v3582 = vadd.f32 %v3109, %v3581
        %v3583 = vpop.f32.mrb[0].mxu0
        %v3584 = vadd.f32 %v3105, %v3583
        %v3585 = vpop.f32.mrb[0].mxu0
        %v3586 = vadd.f32 %v3109, %v3585
        %3587 = vmatprep.mubr.bf16.mxu0 0
        %3588 = vmatmul.mubr.bf16.gmra.mrb[0].mxu0 %v3027
        %v3589 = vpop.f32.mrb[0].mxu0
        %v3590 = vadd.f32 %v3105, %v3589
        %v3591 = vpop.f32.mrb[0].mxu0
        %v3592 = vadd.f32 %v3109, %v3591
        %v3593 = vpop.f32.mrb[0].mxu0
        %v3594 = vpop.f32.mrb[0].mxu0
        %3595 = vdwg.mxu0
        %3596 = vmatprep.subr.bf16.mxu0 %v3331
        %3597 = vmatpush1.bf16.msra.mxu0 %v3330
        %3598 = vmatprep.subr.bf16.mxu0 %v3339
        %3599 = vmatpush1.bf16.msra.mxu0 %v3338
        %3600 = vmatprep.subr.bf16.mxu0 %v3347
        %3601 = vmatpush1.bf16.msra.mxu0 %v3346
        %3602 = vmatprep.subr.bf16.mxu0 %v3355
        %3603 = vmatpush1.bf16.msra.mxu0 %v3354
        %3604 = vmatprep.subr.bf16.mxu0 %v3363
        %3605 = vmatpush1.bf16.msra.mxu0 %v3362
        %3606 = vmatprep.subr.bf16.mxu0 %v3371
        %3607 = vmatpush1.bf16.msra.mxu0 %v3370
        %3608 = vmatprep.subr.bf16.mxu0 %v3379
        %3609 = vmatpush1.bf16.msra.mxu0 %v3378
        %3610 = vmatprep.subr.bf16.mxu0 %v3387
        %3611 = vmatpush1.bf16.msra.mxu0 %v3386
        %3612 = vmatprep.subr.bf16.mxu0 0
        %3613 = vmatpush1.bf16.msra.mxu0 0
        %3614 = vmatprep.subr.bf16.mxu0 0
        %3615 = vmatpush1.bf16.msra.mxu0 0
        %3616 = vmatprep.subr.bf16.mxu0 0
        %3617 = vmatpush1.bf16.msra.mxu0 0
        %3618 = vmatprep.subr.bf16.mxu0 0
        %3619 = vmatpush1.bf16.msra.mxu0 0
        %3620 = vmatprep.subr.bf16.mxu0 0
        %3621 = vmatpush1.bf16.msra.mxu0 0
        %3622 = vmatprep.subr.bf16.mxu0 0
        %3623 = vmatpush1.bf16.msra.mxu0 0
        %3624 = vmatprep.subr.bf16.mxu0 0
        %3625 = vmatpush1.bf16.msra.mxu0 0
        %3626 = vmatprep.subr.bf16.mxu0 0
        %3627 = vmatpush1.bf16.msra.mxu0 0
        %3628 = vmatprep.mubr.bf16.mxu0 0
        %3629 = vmatmul.mubr.bf16.gmra.mrb[0].mxu0 %v3024
        %v3630 = vpop.f32.mrb[0].mxu0
        %v3631 = vadd.f32 %v3113, %v3630
        %v3632 = vpop.f32.mrb[0].mxu0
        %v3633 = vadd.f32 %v3117, %v3632
        %v3634 = vpop.f32.mrb[0].mxu0
        %v3635 = vadd.f32 %v3113, %v3634
        %v3636 = vpop.f32.mrb[0].mxu0
        %v3637 = vadd.f32 %v3117, %v3636
        %3638 = vmatprep.mubr.bf16.mxu0 0
        %3639 = vmatmul.mubr.bf16.gmra.mrb[0].mxu0 %v3025
        %v3640 = vpop.f32.mrb[0].mxu0
        %v3641 = vadd.f32 %v3113, %v3640
        %v3642 = vpop.f32.mrb[0].mxu0
        %v3643 = vadd.f32 %v3117, %v3642
        %v3644 = vpop.f32.mrb[0].mxu0
        %v3645 = vadd.f32 %v3113, %v3644
        %v3646 = vpop.f32.mrb[0].mxu0
        %v3647 = vadd.f32 %v3117, %v3646
        %3648 = vmatprep.mubr.bf16.mxu0 0
        %3649 = vmatmul.mubr.bf16.gmra.mrb[0].mxu0 %v3026
        %v3650 = vpop.f32.mrb[0].mxu0
        %v3651 = vadd.f32 %v3113, %v3650
        %v3652 = vpop.f32.mrb[0].mxu0
        %v3653 = vadd.f32 %v3117, %v3652
        %v3654 = vpop.f32.mrb[0].mxu0
        %v3655 = vadd.f32 %v3113, %v3654
        %v3656 = vpop.f32.mrb[0].mxu0
        %v3657 = vadd.f32 %v3117, %v3656
        %3658 = vmatprep.mubr.bf16.mxu0 0
        %3659 = vmatmul.mubr.bf16.gmra.mrb[0].mxu0 %v3027
        %v3660 = vpop.f32.mrb[0].mxu0
        %v3661 = vadd.f32 %v3113, %v3660
        %v3662 = vpop.f32.mrb[0].mxu0
        %v3663 = vadd.f32 %v3117, %v3662
        %v3664 = vpop.f32.mrb[0].mxu0
        %v3665 = vpop.f32.mrb[0].mxu0
        %3666 = vdwg.mxu0
        %3667 = vmatprep.subr.bf16.mxu0 %v3333
        %3668 = vmatpush1.bf16.msra.mxu0 %v3332
        %3669 = vmatprep.subr.bf16.mxu0 %v3341
        %3670 = vmatpush1.bf16.msra.mxu0 %v3340
        %3671 = vmatprep.subr.bf16.mxu0 %v3349
        %3672 = vmatpush1.bf16.msra.mxu0 %v3348
        %3673 = vmatprep.subr.bf16.mxu0 %v3357
        %3674 = vmatpush1.bf16.msra.mxu0 %v3356
        %3675 = vmatprep.subr.bf16.mxu0 %v3365
        %3676 = vmatpush1.bf16.msra.mxu0 %v3364
        %3677 = vmatprep.subr.bf16.mxu0 %v3373
        %3678 = vmatpush1.bf16.msra.mxu0 %v3372
        %3679 = vmatprep.subr.bf16.mxu0 %v3381
        %3680 = vmatpush1.bf16.msra.mxu0 %v3380
        %3681 = vmatprep.subr.bf16.mxu0 %v3389
        %3682 = vmatpush1.bf16.msra.mxu0 %v3388
        %3683 = vmatprep.subr.bf16.mxu0 0
        %3684 = vmatpush1.bf16.msra.mxu0 0
        %3685 = vmatprep.subr.bf16.mxu0 0
        %3686 = vmatpush1.bf16.msra.mxu0 0
        %3687 = vmatprep.subr.bf16.mxu0 0
        %3688 = vmatpush1.bf16.msra.mxu0 0
        %3689 = vmatprep.subr.bf16.mxu0 0
        %3690 = vmatpush1.bf16.msra.mxu0 0
        %3691 = vmatprep.subr.bf16.mxu0 0
        %3692 = vmatpush1.bf16.msra.mxu0 0
        %3693 = vmatprep.subr.bf16.mxu0 0
        %3694 = vmatpush1.bf16.msra.mxu0 0
        %3695 = vmatprep.subr.bf16.mxu0 0
        %3696 = vmatpush1.bf16.msra.mxu0 0
        %3697 = vmatprep.subr.bf16.mxu0 0
        %3698 = vmatpush1.bf16.msra.mxu0 0
        %3699 = vmatprep.mubr.bf16.mxu0 0
        %3700 = vmatmul.mubr.bf16.gmra.mrb[0].mxu0 %v3024
        %v3701 = vpop.f32.mrb[0].mxu0
        %v3702 = vadd.f32 %v3121, %v3701
        %v3703 = vpop.f32.mrb[0].mxu0
        %v3704 = vadd.f32 %v3125, %v3703
        %v3705 = vpop.f32.mrb[0].mxu0
        %v3706 = vadd.f32 %v3121, %v3705
        %v3707 = vpop.f32.mrb[0].mxu0
        %v3708 = vadd.f32 %v3125, %v3707
        %3709 = vmatprep.mubr.bf16.mxu0 0
        %3710 = vmatmul.mubr.bf16.gmra.mrb[0].mxu0 %v3025
        %v3711 = vpop.f32.mrb[0].mxu0
        %v3712 = vadd.f32 %v3121, %v3711
        %v3713 = vpop.f32.mrb[0].mxu0
        %v3714 = vadd.f32 %v3125, %v3713
        %v3715 = vpop.f32.mrb[0].mxu0
        %v3716 = vadd.f32 %v3121, %v3715
        %v3717 = vpop.f32.mrb[0].mxu0
        %v3718 = vadd.f32 %v3125, %v3717
        %3719 = vmatprep.mubr.bf16.mxu0 0
        %3720 = vmatmul.mubr.bf16.gmra.mrb[0].mxu0 %v3026
        %v3721 = vpop.f32.mrb[0].mxu0
        %v3722 = vadd.f32 %v3121, %v3721
        %v3723 = vpop.f32.mrb[0].mxu0
        %v3724 = vadd.f32 %v3125, %v3723
        %v3725 = vpop.f32.mrb[0].mxu0
        %v3726 = vadd.f32 %v3121, %v3725
        %v3727 = vpop.f32.mrb[0].mxu0
        %v3728 = vadd.f32 %v3125, %v3727
        %3729 = vmatprep.mubr.bf16.mxu0 0
        %3730 = vmatmul.mubr.bf16.gmra.mrb[0].mxu0 %v3027
        %v3731 = vpop.f32.mrb[0].mxu0
        %v3732 = vadd.f32 %v3121, %v3731
        %v3733 = vpop.f32.mrb[0].mxu0
        %v3734 = vadd.f32 %v3125, %v3733
        %v3735 = vpop.f32.mrb[0].mxu0
        %v3736 = vpop.f32.mrb[0].mxu0
        %3737 = vdwg.mxu0
        %3738 = vst [vmem:[%s405] sm:$0xff] %v3489
        %3739 = vst [vmem:[%s405 + $0x8] sm:$0xff] %v3491
        %3740 = vst [vmem:[%s405 + $0x10] sm:$0xff] %v3560
        %3741 = vst [vmem:[%s405 + $0x18] sm:$0xff] %v3562
        %3742 = vst [vmem:[%s405 + $0x20] sm:$0xff] %v3631
        %3743 = vst [vmem:[%s405 + $0x28] sm:$0xff] %v3633
        %3744 = vst [vmem:[%s405 + $0x30] sm:$0xff] %v3702
        %3745 = vst [vmem:[%s405 + $0x38] sm:$0xff] %v3704
        %3746 = vst [vmem:[%s405 + $0x40] sm:$0xff] %v3493
        %3747 = vst [vmem:[%s405 + $0x48] sm:$0xff] %v3495
        %3748 = vst [vmem:[%s405 + $0x50] sm:$0xff] %v3564
        %3749 = vst [vmem:[%s405 + $0x58] sm:$0xff] %v3566
        %3750 = vst [vmem:[%s405 + $0x60] sm:$0xff] %v3635
        %3751 = vst [vmem:[%s405 + $0x68] sm:$0xff] %v3637
        %3752 = vst [vmem:[%s405 + $0x70] sm:$0xff] %v3706
        %3753 = vst [vmem:[%s405 + $0x78] sm:$0xff] %v3708
        %3754 = vst [vmem:[%s405 + $0x80] sm:$0xff] %v3499
        %3755 = vst [vmem:[%s405 + $0x88] sm:$0xff] %v3501
        %3756 = vst [vmem:[%s405 + $0x90] sm:$0xff] %v3570
        %3757 = vst [vmem:[%s405 + $0x98] sm:$0xff] %v3572
        %3758 = vst [vmem:[%s405 + $0xa0] sm:$0xff] %v3641
        %3759 = vst [vmem:[%s405 + $0xa8] sm:$0xff] %v3643
        %3760 = vst [vmem:[%s405 + $0xb0] sm:$0xff] %v3712
        %3761 = vst [vmem:[%s405 + $0xb8] sm:$0xff] %v3714
        %3762 = vst [vmem:[%s405 + $0xc0] sm:$0xff] %v3503
        %3763 = vst [vmem:[%s405 + $0xc8] sm:$0xff] %v3505
        %3764 = vst [vmem:[%s405 + $0xd0] sm:$0xff] %v3574
        %3765 = vst [vmem:[%s405 + $0xd8] sm:$0xff] %v3576
        %3766 = vst [vmem:[%s405 + $0xe0] sm:$0xff] %v3645
        %3767 = vst [vmem:[%s405 + $0xe8] sm:$0xff] %v3647
        %3768 = vst [vmem:[%s405 + $0xf0] sm:$0xff] %v3716
        %3769 = vst [vmem:[%s405 + $0xf8] sm:$0xff] %v3718
        %3770 = vst [vmem:[%s405 + $0x100] sm:$0xff] %v3509
        %3771 = vst [vmem:[%s405 + $0x108] sm:$0xff] %v3511
        %3772 = vst [vmem:[%s405 + $0x110] sm:$0xff] %v3580
        %3773 = vst [vmem:[%s405 + $0x118] sm:$0xff] %v3582
        %3774 = vst [vmem:[%s405 + $0x120] sm:$0xff] %v3651
        %3775 = vst [vmem:[%s405 + $0x128] sm:$0xff] %v3653
        %3776 = vst [vmem:[%s405 + $0x130] sm:$0xff] %v3722
        %3777 = vst [vmem:[%s405 + $0x138] sm:$0xff] %v3724
        %3778 = vst [vmem:[%s405 + $0x140] sm:$0xff] %v3513
        %3779 = vst [vmem:[%s405 + $0x148] sm:$0xff] %v3515
        %3780 = vst [vmem:[%s405 + $0x150] sm:$0xff] %v3584
        %3781 = vst [vmem:[%s405 + $0x158] sm:$0xff] %v3586
        %3782 = vst [vmem:[%s405 + $0x160] sm:$0xff] %v3655
        %3783 = vst [vmem:[%s405 + $0x168] sm:$0xff] %v3657
        %3784 = vst [vmem:[%s405 + $0x170] sm:$0xff] %v3726
        %3785 = vst [vmem:[%s405 + $0x178] sm:$0xff] %v3728
        %3786 = vst [vmem:[%s405 + $0x180] sm:$0xff] %v3519
        %3787 = vst [vmem:[%s405 + $0x188] sm:$0xff] %v3521
        %3788 = vst [vmem:[%s405 + $0x190] sm:$0xff] %v3590
        %3789 = vst [vmem:[%s405 + $0x198] sm:$0xff] %v3592
        %3790 = vst [vmem:[%s405 + $0x1a0] sm:$0xff] %v3661
        %3791 = vst [vmem:[%s405 + $0x1a8] sm:$0xff] %v3663
        %3792 = vst [vmem:[%s405 + $0x1b0] sm:$0xff] %v3732
        %3793 = vst [vmem:[%s405 + $0x1b8] sm:$0xff] %v3734
        %s3794 = sand.u32 %s161, 1
        %s3795 = sand.u32 %s161, 1
        %s3796 = smul.addr %s3795, 448
        %s3797 = scalar_lea.vmem [#allocation7], %s3796
        // Predicated region
        $region72: #{recognet_forward.3} parent=62 // pred_check
          %p3798 = pneg %p171
        $region73: #{recognet_forward.3} parent=62 // pred_check_branch
          %3800 = sbr.rel (%p3798) target = $region75
        $region74: #{recognet_forward.3} parent=62 // pred_region
          %s3801 = smul.u32 8, %s17
          %s3802 = smul.addr %s3801, 8
          %s3803 = scalar_lea.vmem %s6, %s3802
          // Predicated region
          $region76: #{recognet_forward.3} parent=74 // pred_check
            _
          $region77: #{recognet_forward.3} parent=74 // pred_check_branch
            %3805 = sbr.rel (0) target = $region79
          $region78: #{recognet_forward.3} parent=74 // pred_region
            // Predicated region
            $region80: #{recognet_forward.3} parent=78 // pred_check
              _
            $region81: #{recognet_forward.3} parent=78 // pred_check_branch
              %3807 = sbr.rel (0) target = $region83
            $region82: #{recognet_forward.3} parent=78 // pred_region
              loop: start=0, step=1, limit=1
              $region84: #{recognet_forward.3} parent=82 // loop_pre_header
                _
              $region85: #{recognet_forward.3} parent=82 // loop_header
                %s3809 = sphi 0, %s3813
                %p3810 = scmp.ge.s32.totalorder %s3809, 1
                %s3814 = sphi %s3797, %s3797
                %s3815 = sphi %s3803, %s3803
              $region86: #{recognet_forward.3} parent=82 // loop_header_branch
                %3812 = sbr.rel (%p3810) target = $region90
              $region87: #{recognet_forward.3} parent=82 // loop_body
                %v3816 = vld [vmem:[%s3814] sm:$0xff]
                %3817 = vst [vmem:[%s3815] sm:$0xff] %v3816
                %v3818 = vld [vmem:[%s3814 + $0x8] sm:$0xff]
                %3819 = vst [vmem:[%s3815 + $0x8] sm:$0xff] %v3818
                %v3820 = vld [vmem:[%s3814 + $0x10] sm:$0xff]
                %3821 = vst [vmem:[%s3815 + $0x10] sm:$0xff] %v3820
                %v3822 = vld [vmem:[%s3814 + $0x18] sm:$0xff]
                %3823 = vst [vmem:[%s3815 + $0x18] sm:$0xff] %v3822
                %v3824 = vld [vmem:[%s3814 + $0x20] sm:$0xff]
                %3825 = vst [vmem:[%s3815 + $0x20] sm:$0xff] %v3824
                %v3826 = vld [vmem:[%s3814 + $0x28] sm:$0xff]
                %3827 = vst [vmem:[%s3815 + $0x28] sm:$0xff] %v3826
                %v3828 = vld [vmem:[%s3814 + $0x30] sm:$0xff]
                %3829 = vst [vmem:[%s3815 + $0x30] sm:$0xff] %v3828
                %v3830 = vld [vmem:[%s3814 + $0x38] sm:$0xff]
                %3831 = vst [vmem:[%s3815 + $0x38] sm:$0xff] %v3830
                %v3832 = vld [vmem:[%s3814 + $0x40] sm:$0xff]
                %3833 = vst [vmem:[%s3815 + $0x80] sm:$0xff] %v3832
                %v3834 = vld [vmem:[%s3814 + $0x48] sm:$0xff]
                %3835 = vst [vmem:[%s3815 + $0x88] sm:$0xff] %v3834
                %v3836 = vld [vmem:[%s3814 + $0x50] sm:$0xff]
                %3837 = vst [vmem:[%s3815 + $0x90] sm:$0xff] %v3836
                %v3838 = vld [vmem:[%s3814 + $0x58] sm:$0xff]
                %3839 = vst [vmem:[%s3815 + $0x98] sm:$0xff] %v3838
                %v3840 = vld [vmem:[%s3814 + $0x60] sm:$0xff]
                %3841 = vst [vmem:[%s3815 + $0xa0] sm:$0xff] %v3840
                %v3842 = vld [vmem:[%s3814 + $0x68] sm:$0xff]
                %3843 = vst [vmem:[%s3815 + $0xa8] sm:$0xff] %v3842
                %v3844 = vld [vmem:[%s3814 + $0x70] sm:$0xff]
                %3845 = vst [vmem:[%s3815 + $0xb0] sm:$0xff] %v3844
                %v3846 = vld [vmem:[%s3814 + $0x78] sm:$0xff]
                %3847 = vst [vmem:[%s3815 + $0xb8] sm:$0xff] %v3846
                %v3848 = vld [vmem:[%s3814 + $0x80] sm:$0xff]
                %3849 = vst [vmem:[%s3815 + $0x100] sm:$0xff] %v3848
                %v3850 = vld [vmem:[%s3814 + $0x88] sm:$0xff]
                %3851 = vst [vmem:[%s3815 + $0x108] sm:$0xff] %v3850
                %v3852 = vld [vmem:[%s3814 + $0x90] sm:$0xff]
                %3853 = vst [vmem:[%s3815 + $0x110] sm:$0xff] %v3852
                %v3854 = vld [vmem:[%s3814 + $0x98] sm:$0xff]
                %3855 = vst [vmem:[%s3815 + $0x118] sm:$0xff] %v3854
                %v3856 = vld [vmem:[%s3814 + $0xa0] sm:$0xff]
                %3857 = vst [vmem:[%s3815 + $0x120] sm:$0xff] %v3856
                %v3858 = vld [vmem:[%s3814 + $0xa8] sm:$0xff]
                %3859 = vst [vmem:[%s3815 + $0x128] sm:$0xff] %v3858
                %v3860 = vld [vmem:[%s3814 + $0xb0] sm:$0xff]
                %3861 = vst [vmem:[%s3815 + $0x130] sm:$0xff] %v3860
                %v3862 = vld [vmem:[%s3814 + $0xb8] sm:$0xff]
                %3863 = vst [vmem:[%s3815 + $0x138] sm:$0xff] %v3862
                %v3864 = vld [vmem:[%s3814 + $0xc0] sm:$0xff]
                %3865 = vst [vmem:[%s3815 + $0x180] sm:$0xff] %v3864
                %v3866 = vld [vmem:[%s3814 + $0xc8] sm:$0xff]
                %3867 = vst [vmem:[%s3815 + $0x188] sm:$0xff] %v3866
                %v3868 = vld [vmem:[%s3814 + $0xd0] sm:$0xff]
                %3869 = vst [vmem:[%s3815 + $0x190] sm:$0xff] %v3868
                %v3870 = vld [vmem:[%s3814 + $0xd8] sm:$0xff]
                %3871 = vst [vmem:[%s3815 + $0x198] sm:$0xff] %v3870
                %v3872 = vld [vmem:[%s3814 + $0xe0] sm:$0xff]
                %3873 = vst [vmem:[%s3815 + $0x1a0] sm:$0xff] %v3872
                %v3874 = vld [vmem:[%s3814 + $0xe8] sm:$0xff]
                %3875 = vst [vmem:[%s3815 + $0x1a8] sm:$0xff] %v3874
                %v3876 = vld [vmem:[%s3814 + $0xf0] sm:$0xff]
                %3877 = vst [vmem:[%s3815 + $0x1b0] sm:$0xff] %v3876
                %v3878 = vld [vmem:[%s3814 + $0xf8] sm:$0xff]
                %3879 = vst [vmem:[%s3815 + $0x1b8] sm:$0xff] %v3878
                %v3880 = vld [vmem:[%s3814 + $0x100] sm:$0xff]
                %3881 = vst [vmem:[%s3815 + $0x200] sm:$0xff] %v3880
                %v3882 = vld [vmem:[%s3814 + $0x108] sm:$0xff]
                %3883 = vst [vmem:[%s3815 + $0x208] sm:$0xff] %v3882
                %v3884 = vld [vmem:[%s3814 + $0x110] sm:$0xff]
                %3885 = vst [vmem:[%s3815 + $0x210] sm:$0xff] %v3884
                %v3886 = vld [vmem:[%s3814 + $0x118] sm:$0xff]
                %3887 = vst [vmem:[%s3815 + $0x218] sm:$0xff] %v3886
                %v3888 = vld [vmem:[%s3814 + $0x120] sm:$0xff]
                %3889 = vst [vmem:[%s3815 + $0x220] sm:$0xff] %v3888
                %v3890 = vld [vmem:[%s3814 + $0x128] sm:$0xff]
                %3891 = vst [vmem:[%s3815 + $0x228] sm:$0xff] %v3890
                %v3892 = vld [vmem:[%s3814 + $0x130] sm:$0xff]
                %3893 = vst [vmem:[%s3815 + $0x230] sm:$0xff] %v3892
                %v3894 = vld [vmem:[%s3814 + $0x138] sm:$0xff]
                %3895 = vst [vmem:[%s3815 + $0x238] sm:$0xff] %v3894
                %v3896 = vld [vmem:[%s3814 + $0x140] sm:$0xff]
                %3897 = vst [vmem:[%s3815 + $0x280] sm:$0xff] %v3896
                %v3898 = vld [vmem:[%s3814 + $0x148] sm:$0xff]
                %3899 = vst [vmem:[%s3815 + $0x288] sm:$0xff] %v3898
                %v3900 = vld [vmem:[%s3814 + $0x150] sm:$0xff]
                %3901 = vst [vmem:[%s3815 + $0x290] sm:$0xff] %v3900
                %v3902 = vld [vmem:[%s3814 + $0x158] sm:$0xff]
                %3903 = vst [vmem:[%s3815 + $0x298] sm:$0xff] %v3902
                %v3904 = vld [vmem:[%s3814 + $0x160] sm:$0xff]
                %3905 = vst [vmem:[%s3815 + $0x2a0] sm:$0xff] %v3904
                %v3906 = vld [vmem:[%s3814 + $0x168] sm:$0xff]
                %3907 = vst [vmem:[%s3815 + $0x2a8] sm:$0xff] %v3906
                %v3908 = vld [vmem:[%s3814 + $0x170] sm:$0xff]
                %3909 = vst [vmem:[%s3815 + $0x2b0] sm:$0xff] %v3908
                %v3910 = vld [vmem:[%s3814 + $0x178] sm:$0xff]
                %3911 = vst [vmem:[%s3815 + $0x2b8] sm:$0xff] %v3910
                %v3912 = vld [vmem:[%s3814 + $0x180] sm:$0xff]
                %3913 = vst [vmem:[%s3815 + $0x300] sm:$0xff] %v3912
                %v3914 = vld [vmem:[%s3814 + $0x188] sm:$0xff]
                %3915 = vst [vmem:[%s3815 + $0x308] sm:$0xff] %v3914
                %v3916 = vld [vmem:[%s3814 + $0x190] sm:$0xff]
                %3917 = vst [vmem:[%s3815 + $0x310] sm:$0xff] %v3916
                %v3918 = vld [vmem:[%s3814 + $0x198] sm:$0xff]
                %3919 = vst [vmem:[%s3815 + $0x318] sm:$0xff] %v3918
                %v3920 = vld [vmem:[%s3814 + $0x1a0] sm:$0xff]
                %3921 = vst [vmem:[%s3815 + $0x320] sm:$0xff] %v3920
                %v3922 = vld [vmem:[%s3814 + $0x1a8] sm:$0xff]
                %3923 = vst [vmem:[%s3815 + $0x328] sm:$0xff] %v3922
                %v3924 = vld [vmem:[%s3814 + $0x1b0] sm:$0xff]
                %3925 = vst [vmem:[%s3815 + $0x330] sm:$0xff] %v3924
                %v3926 = vld [vmem:[%s3814 + $0x1b8] sm:$0xff]
                %3927 = vst [vmem:[%s3815 + $0x338] sm:$0xff] %v3926
              $region88: #{recognet_forward.3} parent=82 // loop_footer
                %s3813 = sadd.s32 1, %s3809
              $region89: #{recognet_forward.3} parent=82 // loop_footer_branch
                %3808 = sbr.rel target = $region85
              $region90: #{recognet_forward.3} parent=82 // loop_exit
                _
            $region83: #{recognet_forward.3} parent=78 // pred_fallthru
              _
            // Predicated region
            $region91: #{recognet_forward.3} parent=78 // pred_check
              _
            $region92: #{recognet_forward.3} parent=78 // pred_check_branch
              %3929 = sbr.rel target = $region94
            $region93: #{recognet_forward.3} parent=78 // pred_region
              _
            $region94: #{recognet_forward.3} parent=78 // pred_fallthru
              _
          $region79: #{recognet_forward.3} parent=74 // pred_fallthru
            _
          %3930 = vnop
        $region75: #{recognet_forward.3} parent=62 // pred_fallthru
          _
      $region63: #{recognet_forward.3} parent=5 // pred_fallthru
        _
      %p3931 = scmp.le.s32.totalorder 2, %s12
      // Predicated region
      $region95: #{recognet_forward.3} parent=5 // pred_check
        %p3932 = pneg %p3931
      $region96: #{recognet_forward.3} parent=5 // pred_check_branch
        %3934 = sbr.rel (%p3932) target = $region98
      $region97: #{recognet_forward.3} parent=5 // pred_region
        %s3935 = ssub.s32 %s12, 2
        // Predicated region
        $region99: #{recognet_forward.3} parent=97 // pred_check
          %p3936 = pneg %p177
        $region100: #{recognet_forward.3} parent=97 // pred_check_branch
          %3938 = sbr.rel (%p3936) target = $region102
        $region101: #{recognet_forward.3} parent=97 // pred_region
          %s3939 = sand.u32 %s162, 1
          %s3940 = sand.u32 %s162, 1
          %s3941 = smul.addr %s3940, 448
          %s3942 = scalar_lea.vmem [#allocation7], %s3941
        $region102: #{recognet_forward.3} parent=97 // pred_fallthru
          _
      $region98: #{recognet_forward.3} parent=5 // pred_fallthru
        _
    $region6: #{recognet_forward.3} parent=1 // loop_footer
      %s16 = sadd.s32 1, %s12
    $region7: #{recognet_forward.3} parent=1 // loop_footer_branch
      %11 = sbr.rel target = $region3
    $region8: #{recognet_forward.3} parent=1 // loop_exit
      _

</llo_original>
